<compile_context>
chip_gen: v6e
topology: v6e:2x2x1
jax: 0.10.0
libtpu: 0.0.40
codegen_flags: <defaults>
</compile_context>

<pallas_src>
import functools

import jax
import jax.numpy as jnp
from jax.experimental import pallas as pl
from jax.experimental.pallas import tpu as pltpu


# ----------------------------------------------------------------------------
# Single fused kernel: conv blocks + multiscale concat + depth output heads
# ----------------------------------------------------------------------------
def _rim_init_fused_kernel(x_ref, w_ref, b_ref, o_ref, pad_ref, col_ref, cat_ref,
                           *, H, W, nb, blocks, head):
    """blocks: tuple of (dil, cin, cout, w_row_off, b_col_off, cat_col_off|-1)
       head:   (Ct, DC, w_row_off, b_col_off)"""
    M = nb * H * W
    act = x_ref[...].astype(jnp.float32)                        # (nb, H, W, Cin)

    for (d, cin, cout, wr, bc, catc) in blocks:
        Hp, Wp = H + 2 * d, W + 2 * d

        # ---- replication ("edge") padding via scratch stores ----------------
        pad_ref[:, d:d + H, d:d + W, :cin] = act                 # interior
        if d > 0:
            pad_ref[:, d:d + H, 0:d, :cin] = jnp.broadcast_to(
                act[:, :, 0:1, :], (nb, H, d, cin))              # left cols
            pad_ref[:, d:d + H, W + d:Wp, :cin] = jnp.broadcast_to(
                act[:, :, W - 1:W, :], (nb, H, d, cin))          # right cols
            # top/bottom rows are replicated from the already-padded first/last
            # interior rows, which also fills the corners correctly.
            top = pad_ref[:, d:d + 1, 0:Wp, :cin]
            bot = pad_ref[:, H + d - 1:H + d, 0:Wp, :cin]
            pad_ref[:, 0:d, 0:Wp, :cin] = jnp.broadcast_to(top, (nb, d, Wp, cin))
            pad_ref[:, H + d:Hp, 0:Wp, :cin] = jnp.broadcast_to(bot, (nb, d, Wp, cin))

        # ---- im2col: 9 shifted windows stored at static lane offsets --------
        for ky in range(3):
            for kx in range(3):
                k = ky * 3 + kx
                col_ref[:, :, :, k * cin:(k + 1) * cin] = \
                    pad_ref[:, ky * d:ky * d + H, kx * d:kx * d + W, :cin]
        patches = col_ref[:, :, :, :9 * cin].reshape(M, 9 * cin)

        # ---- 3x3 dilated conv as one matmul + bias + relu --------------------
        w = w_ref[wr:wr + 9 * cin, :cout]                        # (9*cin, cout)
        y = jnp.dot(patches, w, preferred_element_type=jnp.float32)
        y = jnp.maximum(y + b_ref[:, bc:bc + cout], 0.0)         # (M, cout)

        act = y.reshape(nb, H, W, cout)
        if catc >= 0:                                            # kept for multiscale
            cat_ref[:, catc:catc + cout] = y

    # ---- fused depth 1x1 heads ------------------------------------------------
    ct, dc, wr_h, bc_h = head
    xcat = cat_ref[:, :ct]                                       # (M, Ct)
    w_h = w_ref[wr_h:wr_h + ct, :dc]                             # (Ct, depth*out_ch)
    yout = jnp.dot(xcat, w_h, preferred_element_type=jnp.float32)
    yout = jnp.maximum(yout + b_ref[:, bc_h:bc_h + dc], 0.0)     # (M, DC)

    # Lane-dense store: (nb, DC, H*W) puts the spatial axis on the lanes.
    o_ref[...] = jnp.transpose(yout.reshape(nb, H * W, dc), (0, 2, 1)).astype(o_ref.dtype)


# ----------------------------------------------------------------------------
# Batch-block picker: fold images into matmul-M, keep grid >= 2 for v7x's 2 TCs
# ----------------------------------------------------------------------------
def _pick_batch_block(N, cap=8):
    best = 1
    for nb in range(1, min(N, cap) + 1):
        if N % nb == 0 and (N // nb) >= 2:
            best = nb
    return best


# ----------------------------------------------------------------------------
# Full RIMInit forward (PyTorch-layout wrapper around the fused kernel)
# ----------------------------------------------------------------------------
def rim_init_forward(x_nchw, params, *, depth, multiscale_depth, batch_block=None):
    x = jnp.transpose(x_nchw, (0, 2, 3, 1)).astype(jnp.float32)  # NCHW -> NHWC
    N, H, W, Cin = x.shape
    conv_blocks = params["conv_blocks"]
    n_blocks = len(conv_blocks)

    out_w = params["out_w"]                                       # (depth, Ct, out_ch)
    out_b = params["out_b"]                                       # (depth, 1, out_ch)
    depth_, Ct, out_ch = out_w.shape
    DC = depth_ * out_ch

    nb = batch_block or _pick_batch_block(N)
    assert N % nb == 0

    couts = [int(w.shape[3]) for (w, _, _) in conv_blocks]
    cins = [int(w.shape[2]) for (w, _, _) in conv_blocks]
    dils = [int(d) for (_, _, d) in conv_blocks]
    wcol = max(couts + [DC])
    bseg = ((max(couts + [DC]) + 127) // 128) * 128               # lane-aligned bias segments

    # ---- pack all weights into one row-padded slab + all biases into one row
    w_parts, b_parts, blocks_meta = [], [], []
    wr = 0
    cat_off = 0
    first_kept = n_blocks - multiscale_depth
    for i, (w, b, _dil) in enumerate(conv_blocks):
        cin, cout = cins[i], couts[i]
        k2d = w.reshape(9 * cin, cout)                            # (ky,kx,c) row order
        rp = ((9 * cin + 7) // 8) * 8                             # sublane-aligned row offsets
        w_parts.append(jnp.pad(k2d, ((0, rp - 9 * cin), (0, wcol - cout))))
        b_parts.append(jnp.pad(b.reshape(1, cout), ((0, 0), (0, bseg - cout))))
        catc = -1
        if i >= first_kept:
            catc = cat_off
            cat_off += cout
        blocks_meta.append((dils[i], cin, cout, wr, i * bseg, catc))
        wr += rp

    # fused depth heads: (Ct, depth*out_ch), column j = (d, oc) with d = j // out_ch
    w_head = jnp.transpose(out_w, (1, 0, 2)).reshape(Ct, DC)
    b_head = jnp.transpose(out_b, (1, 0, 2)).reshape(1, DC)
    rp_h = ((Ct + 7) // 8) * 8
    w_parts.append(jnp.pad(w_head, ((0, rp_h - Ct), (0, wcol - DC))))
    b_parts.append(jnp.pad(b_head, ((0, 0), (0, bseg - DC))))
    head_meta = (int(Ct), int(DC), wr, n_blocks * bseg)

    w_slab = jnp.concatenate(w_parts, axis=0)                     # (sum rows_pad, wcol)
    b_slab = jnp.concatenate(b_parts, axis=1)                     # (1, (n_blocks+1)*bseg)

    kernel = functools.partial(
        _rim_init_fused_kernel, H=H, W=W, nb=nb,
        blocks=tuple(blocks_meta), head=head_meta)

    cin_max = max(cins)
    dmax = max(dils)

    out = pl.pallas_call(
        kernel,
        out_shape=jax.ShapeDtypeStruct((N, DC, H * W), x.dtype),
        grid=(N // nb,),
        in_specs=[
            pl.BlockSpec((nb, H, W, Cin), lambda n: (n, 0, 0, 0)),
            pl.BlockSpec(w_slab.shape, lambda n: (0, 0)),
            pl.BlockSpec(b_slab.shape, lambda n: (0, 0)),
        ],
        out_specs=pl.BlockSpec((nb, DC, H * W), lambda n: (n, 0, 0)),
        scratch_shapes=[
            pltpu.VMEM((nb, H + 2 * dmax, W + 2 * dmax, cin_max), jnp.float32),  # edge-pad
            pltpu.VMEM((nb, H, W, 9 * cin_max), jnp.float32),                    # im2col
            pltpu.VMEM((nb * H * W, Ct), jnp.float32),                           # multiscale cat
        ],
        compiler_params=pltpu.CompilerParams(
            dimension_semantics=("parallel",),
            vmem_limit_bytes=32 * 1024 * 1024,
        ),
    )(x, w_slab, b_slab)

    # (N, depth*out_ch, H*W) -> (N, depth, out_ch, H, W) -> (N, out_ch, H, W, depth)
    out = out.reshape(N, depth_, out_ch, H, W)
    return jnp.transpose(out, (0, 2, 3, 4, 1))


# ----------------------------------------------------------------------------
# Pure-JAX reference (for the correctness check of the Pallas path)
# ----------------------------------------------------------------------------
def rim_init_reference(x_nchw, params, *, depth, multiscale_depth):
    x = jnp.transpose(x_nchw, (0, 2, 3, 1))
    feats = []
    for (w, b, dil) in params["conv_blocks"]:
        xp = jnp.pad(x, ((0, 0), (dil, dil), (dil, dil), (0, 0)), mode="edge")
        y = jax.lax.conv_general_dilated(
            xp, w, window_strides=(1, 1), padding="VALID",
            rhs_dilation=(dil, dil),
            dimension_numbers=("NHWC", "HWIO", "NHWC"),
        )
        x = jax.nn.relu(y + b.reshape(1, 1, 1, -1))
        feats.append(x)
    if multiscale_depth > 1:
        x = jnp.concatenate(feats[-multiscale_depth:], axis=-1)
    outs = []
    for d in range(depth):
        y = jnp.einsum("nhwc,co->nhwo", x, params["out_w"][d])
        y = y + params["out_b"][d].reshape(1, 1, 1, -1)
        outs.append(jax.nn.relu(y))
    y = jnp.stack(outs, axis=-1)               # (N, H, W, C, depth)
    return jnp.transpose(y, (0, 3, 1, 2, 4))   # (N, C, H, W, depth)


# ----------------------------------------------------------------------------
# Deterministic parameter initialization (shapes from RIMInit.__init__)
# ----------------------------------------------------------------------------
def init_params(key, x_ch, out_ch, channels, dilations, depth, multiscale_depth):
    params = {"conv_blocks": []}
    tch = x_ch
    for ch, dil in zip(channels, dilations):
        key, kw, kb = jax.random.split(key, 3)
        w = 0.1 * jax.random.normal(kw, (3, 3, tch, ch), jnp.float32)   # HWIO
        b = 0.05 * jax.random.normal(kb, (ch,), jnp.float32)
        params["conv_blocks"].append((w, b, dil))
        tch = ch
    tch_out = int(sum(channels[-multiscale_depth:]))
    key, kw, kb = jax.random.split(key, 3)
    params["out_w"] = 0.1 * jax.random.normal(kw, (depth, tch_out, out_ch), jnp.float32)
    params["out_b"] = 0.05 * jax.random.normal(kb, (depth, 1, out_ch), jnp.float32)
    return params


if __name__ == "__main__":
    # Small config consistent with the module: RIMInit(x_ch=4, out_ch=16,
    # channels=(8, 8, 16, 16), dilations=(1, 1, 2, 4), depth=2, multiscale_depth=2)
    x_ch, out_ch = 4, 16
    channels = (8, 8, 16, 16)
    dilations = (1, 1, 2, 4)
    depth, multiscale_depth = 2, 2
    N, H, W = 2, 16, 16

    key = jax.random.PRNGKey(0)
    key, kx = jax.random.split(key)
    x = jax.random.normal(kx, (N, x_ch, H, W), jnp.float32)  # NCHW, like PyTorch

    params = init_params(key, x_ch, out_ch, channels, dilations, depth, multiscale_depth)

    out = rim_init_forward(x, params, depth=depth, multiscale_depth=multiscale_depth)
    out = jax.block_until_ready(out)

    ref = rim_init_reference(x, params, depth=depth, multiscale_depth=multiscale_depth)
    ref = jax.block_until_ready(ref)

    assert out.shape == (N, out_ch, H, W, depth), out.shape
    assert jnp.allclose(out, ref, atol=1e-4, rtol=1e-4), float(jnp.max(jnp.abs(out - ref)))

    print("KERNEL_OK")
</pallas_src>

<mosaic_0001>
module attributes {stable_mosaic.version = 11 : i64} {
  func.func @_rim_init_fused_kernel(%arg0: i32, %arg1: memref<1x16x16x4xf32, #tpu.memory_space<vmem>>, %arg2: memref<360x32xf32, #tpu.memory_space<vmem>>, %arg3: memref<1x640xf32, #tpu.memory_space<vmem>>, %arg4: memref<1x32x256xf32, #tpu.memory_space<vmem>>, %arg5: memref<1x24x24x16xf32, #tpu.memory_space<vmem>>, %arg6: memref<1x16x16x144xf32, #tpu.memory_space<vmem>>, %arg7: memref<256x32xf32, #tpu.memory_space<vmem>>) attributes {dimension_semantics = [#tpu.dimension_semantics<parallel>], iteration_bounds = array<i64: 2>, scalar_prefetch = 0 : i64, scratch_operands = 3 : i64, tpu.core_type = #tpu.core_type<tc>, window_params = [{transform_indices = @transform_0, window_bounds = array<i64: 1, 16, 16, 4>}, {pipeline_mode = #tpu.pipeline_mode<synchronous>, transform_indices = @transform_1, window_bounds = array<i64: 360, 32>}, {pipeline_mode = #tpu.pipeline_mode<synchronous>, transform_indices = @transform_2, window_bounds = array<i64: 1, 640>}, {transform_indices = @transform_3, window_bounds = array<i64: 1, 32, 256>}]} {
    %c0 = arith.constant 0 : index
    %c0_0 = arith.constant 0 : index
    %c0_1 = arith.constant 0 : index
    %c0_2 = arith.constant 0 : index
    %0 = vector.load %arg1[%c0, %c0_0, %c0_1, %c0_2] : memref<1x16x16x4xf32, #tpu.memory_space<vmem>>, vector<1x16x16x4xf32>
    %c0_3 = arith.constant 0 : index
    %c1 = arith.constant 1 : index
    %c1_4 = arith.constant 1 : index
    %c0_5 = arith.constant 0 : index
    %1 = vector.load %arg5[%c0_3, %c1, %c1_4, %c0_5] : memref<1x24x24x16xf32, #tpu.memory_space<vmem>>, vector<1x16x16x4xf32>
    tpu.vector_store %arg5[%c0_3, %c1, %c1_4, %c0_5], %0 {strides = array<i32>} : memref<1x24x24x16xf32, #tpu.memory_space<vmem>>, vector<1x16x16x4xf32>,
    %2 = vector.extract_strided_slice %0 {offsets = [0, 0, 0, 0], sizes = [1, 16, 1, 4], strides = [1, 1, 1, 1]} : vector<1x16x16x4xf32> to vector<1x16x1x4xf32>
    %c0_6 = arith.constant 0 : index
    %c1_7 = arith.constant 1 : index
    %c0_8 = arith.constant 0 : index
    %c0_9 = arith.constant 0 : index
    %3 = vector.load %arg5[%c0_6, %c1_7, %c0_8, %c0_9] : memref<1x24x24x16xf32, #tpu.memory_space<vmem>>, vector<1x16x1x4xf32>
    tpu.vector_store %arg5[%c0_6, %c1_7, %c0_8, %c0_9], %2 {strides = array<i32>} : memref<1x24x24x16xf32, #tpu.memory_space<vmem>>, vector<1x16x1x4xf32>,
    %4 = vector.extract_strided_slice %0 {offsets = [0, 0, 15, 0], sizes = [1, 16, 1, 4], strides = [1, 1, 1, 1]} : vector<1x16x16x4xf32> to vector<1x16x1x4xf32>
    %c0_10 = arith.constant 0 : index
    %c1_11 = arith.constant 1 : index
    %c17 = arith.constant 17 : index
    %c0_12 = arith.constant 0 : index
    %5 = vector.load %arg5[%c0_10, %c1_11, %c17, %c0_12] : memref<1x24x24x16xf32, #tpu.memory_space<vmem>>, vector<1x16x1x4xf32>
    tpu.vector_store %arg5[%c0_10, %c1_11, %c17, %c0_12], %4 {strides = array<i32>} : memref<1x24x24x16xf32, #tpu.memory_space<vmem>>, vector<1x16x1x4xf32>,
    %c0_13 = arith.constant 0 : index
    %c1_14 = arith.constant 1 : index
    %c0_15 = arith.constant 0 : index
    %c0_16 = arith.constant 0 : index
    %6 = vector.load %arg5[%c0_13, %c1_14, %c0_15, %c0_16] : memref<1x24x24x16xf32, #tpu.memory_space<vmem>>, vector<1x1x18x4xf32>
    %c0_17 = arith.constant 0 : index
    %c16 = arith.constant 16 : index
    %c0_18 = arith.constant 0 : index
    %c0_19 = arith.constant 0 : index
    %7 = vector.load %arg5[%c0_17, %c16, %c0_18, %c0_19] : memref<1x24x24x16xf32, #tpu.memory_space<vmem>>, vector<1x1x18x4xf32>
    %c0_20 = arith.constant 0 : index
    %c0_21 = arith.constant 0 : index
    %c0_22 = arith.constant 0 : index
    %c0_23 = arith.constant 0 : index
    %8 = vector.load %arg5[%c0_20, %c0_21, %c0_22, %c0_23] : memref<1x24x24x16xf32, #tpu.memory_space<vmem>>, vector<1x1x18x4xf32>
    tpu.vector_store %arg5[%c0_20, %c0_21, %c0_22, %c0_23], %6 {strides = array<i32>} : memref<1x24x24x16xf32, #tpu.memory_space<vmem>>, vector<1x1x18x4xf32>,
    %c0_24 = arith.constant 0 : index
    %c17_25 = arith.constant 17 : index
    %c0_26 = arith.constant 0 : index
    %c0_27 = arith.constant 0 : index
    %9 = vector.load %arg5[%c0_24, %c17_25, %c0_26, %c0_27] : memref<1x24x24x16xf32, #tpu.memory_space<vmem>>, vector<1x1x18x4xf32>
    tpu.vector_store %arg5[%c0_24, %c17_25, %c0_26, %c0_27], %7 {strides = array<i32>} : memref<1x24x24x16xf32, #tpu.memory_space<vmem>>, vector<1x1x18x4xf32>,
    %c0_28 = arith.constant 0 : index
    %c0_29 = arith.constant 0 : index
    %c0_30 = arith.constant 0 : index
    %c0_31 = arith.constant 0 : index
    %10 = vector.load %arg5[%c0_28, %c0_29, %c0_30, %c0_31] : memref<1x24x24x16xf32, #tpu.memory_space<vmem>>, vector<1x16x16x4xf32>
    %c0_32 = arith.constant 0 : index
    %c0_33 = arith.constant 0 : index
    %c0_34 = arith.constant 0 : index
    %c0_35 = arith.constant 0 : index
    %11 = vector.load %arg6[%c0_32, %c0_33, %c0_34, %c0_35] : memref<1x16x16x144xf32, #tpu.memory_space<vmem>>, vector<1x16x16x4xf32>
    tpu.vector_store %arg6[%c0_32, %c0_33, %c0_34, %c0_35], %10 {strides = array<i32>} : memref<1x16x16x144xf32, #tpu.memory_space<vmem>>, vector<1x16x16x4xf32>,
    %c0_36 = arith.constant 0 : index
    %c0_37 = arith.constant 0 : index
    %c1_38 = arith.constant 1 : index
    %c0_39 = arith.constant 0 : index
    %12 = vector.load %arg5[%c0_36, %c0_37, %c1_38, %c0_39] : memref<1x24x24x16xf32, #tpu.memory_space<vmem>>, vector<1x16x16x4xf32>
    %c0_40 = arith.constant 0 : index
    %c0_41 = arith.constant 0 : index
    %c0_42 = arith.constant 0 : index
    %c4 = arith.constant 4 : index
    %13 = vector.load %arg6[%c0_40, %c0_41, %c0_42, %c4] : memref<1x16x16x144xf32, #tpu.memory_space<vmem>>, vector<1x16x16x4xf32>
    tpu.vector_store %arg6[%c0_40, %c0_41, %c0_42, %c4], %12 {strides = array<i32>} : memref<1x16x16x144xf32, #tpu.memory_space<vmem>>, vector<1x16x16x4xf32>,
    %c0_43 = arith.constant 0 : index
    %c0_44 = arith.constant 0 : index
    %c2 = arith.constant 2 : index
    %c0_45 = arith.constant 0 : index
    %14 = vector.load %arg5[%c0_43, %c0_44, %c2, %c0_45] : memref<1x24x24x16xf32, #tpu.memory_space<vmem>>, vector<1x16x16x4xf32>
    %c0_46 = arith.constant 0 : index
    %c0_47 = arith.constant 0 : index
    %c0_48 = arith.constant 0 : index
    %c8 = arith.constant 8 : index
    %15 = vector.load %arg6[%c0_46, %c0_47, %c0_48, %c8] : memref<1x16x16x144xf32, #tpu.memory_space<vmem>>, vector<1x16x16x4xf32>
    tpu.vector_store %arg6[%c0_46, %c0_47, %c0_48, %c8], %14 {strides = array<i32>} : memref<1x16x16x144xf32, #tpu.memory_space<vmem>>, vector<1x16x16x4xf32>,
    %c0_49 = arith.constant 0 : index
    %c1_50 = arith.constant 1 : index
    %c0_51 = arith.constant 0 : index
    %c0_52 = arith.constant 0 : index
    %16 = vector.load %arg5[%c0_49, %c1_50, %c0_51, %c0_52] : memref<1x24x24x16xf32, #tpu.memory_space<vmem>>, vector<1x16x16x4xf32>
    %c0_53 = arith.constant 0 : index
    %c0_54 = arith.constant 0 : index
    %c0_55 = arith.constant 0 : index
    %c12 = arith.constant 12 : index
    %17 = vector.load %arg6[%c0_53, %c0_54, %c0_55, %c12] : memref<1x16x16x144xf32, #tpu.memory_space<vmem>>, vector<1x16x16x4xf32>
    tpu.vector_store %arg6[%c0_53, %c0_54, %c0_55, %c12], %16 {strides = array<i32>} : memref<1x16x16x144xf32, #tpu.memory_space<vmem>>, vector<1x16x16x4xf32>,
    %c0_56 = arith.constant 0 : index
    %c1_57 = arith.constant 1 : index
    %c1_58 = arith.constant 1 : index
    %c0_59 = arith.constant 0 : index
    %18 = vector.load %arg5[%c0_56, %c1_57, %c1_58, %c0_59] : memref<1x24x24x16xf32, #tpu.memory_space<vmem>>, vector<1x16x16x4xf32>
    %c0_60 = arith.constant 0 : index
    %c0_61 = arith.constant 0 : index
    %c0_62 = arith.constant 0 : index
    %c16_63 = arith.constant 16 : index
    %19 = vector.load %arg6[%c0_60, %c0_61, %c0_62, %c16_63] : memref<1x16x16x144xf32, #tpu.memory_space<vmem>>, vector<1x16x16x4xf32>
    tpu.vector_store %arg6[%c0_60, %c0_61, %c0_62, %c16_63], %18 {strides = array<i32>} : memref<1x16x16x144xf32, #tpu.memory_space<vmem>>, vector<1x16x16x4xf32>,
    %c0_64 = arith.constant 0 : index
    %c1_65 = arith.constant 1 : index
    %c2_66 = arith.constant 2 : index
    %c0_67 = arith.constant 0 : index
    %20 = vector.load %arg5[%c0_64, %c1_65, %c2_66, %c0_67] : memref<1x24x24x16xf32, #tpu.memory_space<vmem>>, vector<1x16x16x4xf32>
    %c0_68 = arith.constant 0 : index
    %c0_69 = arith.constant 0 : index
    %c0_70 = arith.constant 0 : index
    %c20 = arith.constant 20 : index
    %21 = vector.load %arg6[%c0_68, %c0_69, %c0_70, %c20] : memref<1x16x16x144xf32, #tpu.memory_space<vmem>>, vector<1x16x16x4xf32>
    tpu.vector_store %arg6[%c0_68, %c0_69, %c0_70, %c20], %20 {strides = array<i32>} : memref<1x16x16x144xf32, #tpu.memory_space<vmem>>, vector<1x16x16x4xf32>,
    %c0_71 = arith.constant 0 : index
    %c2_72 = arith.constant 2 : index
    %c0_73 = arith.constant 0 : index
    %c0_74 = arith.constant 0 : index
    %22 = vector.load %arg5[%c0_71, %c2_72, %c0_73, %c0_74] : memref<1x24x24x16xf32, #tpu.memory_space<vmem>>, vector<1x16x16x4xf32>
    %c0_75 = arith.constant 0 : index
    %c0_76 = arith.constant 0 : index
    %c0_77 = arith.constant 0 : index
    %c24 = arith.constant 24 : index
    %23 = vector.load %arg6[%c0_75, %c0_76, %c0_77, %c24] : memref<1x16x16x144xf32, #tpu.memory_space<vmem>>, vector<1x16x16x4xf32>
    tpu.vector_store %arg6[%c0_75, %c0_76, %c0_77, %c24], %22 {strides = array<i32>} : memref<1x16x16x144xf32, #tpu.memory_space<vmem>>, vector<1x16x16x4xf32>,
    %c0_78 = arith.constant 0 : index
    %c2_79 = arith.constant 2 : index
    %c1_80 = arith.constant 1 : index
    %c0_81 = arith.constant 0 : index
    %24 = vector.load %arg5[%c0_78, %c2_79, %c1_80, %c0_81] : memref<1x24x24x16xf32, #tpu.memory_space<vmem>>, vector<1x16x16x4xf32>
    %c0_82 = arith.constant 0 : index
    %c0_83 = arith.constant 0 : index
    %c0_84 = arith.constant 0 : index
    %c28 = arith.constant 28 : index
    %25 = vector.load %arg6[%c0_82, %c0_83, %c0_84, %c28] : memref<1x16x16x144xf32, #tpu.memory_space<vmem>>, vector<1x16x16x4xf32>
    tpu.vector_store %arg6[%c0_82, %c0_83, %c0_84, %c28], %24 {strides = array<i32>} : memref<1x16x16x144xf32, #tpu.memory_space<vmem>>, vector<1x16x16x4xf32>,
    %c0_85 = arith.constant 0 : index
    %c2_86 = arith.constant 2 : index
    %c2_87 = arith.constant 2 : index
    %c0_88 = arith.constant 0 : index
    %26 = vector.load %arg5[%c0_85, %c2_86, %c2_87, %c0_88] : memref<1x24x24x16xf32, #tpu.memory_space<vmem>>, vector<1x16x16x4xf32>
    %c0_89 = arith.constant 0 : index
    %c0_90 = arith.constant 0 : index
    %c0_91 = arith.constant 0 : index
    %c32 = arith.constant 32 : index
    %27 = vector.load %arg6[%c0_89, %c0_90, %c0_91, %c32] : memref<1x16x16x144xf32, #tpu.memory_space<vmem>>, vector<1x16x16x4xf32>
    tpu.vector_store %arg6[%c0_89, %c0_90, %c0_91, %c32], %26 {strides = array<i32>} : memref<1x16x16x144xf32, #tpu.memory_space<vmem>>, vector<1x16x16x4xf32>,
    %c0_92 = arith.constant 0 : index
    %c0_93 = arith.constant 0 : index
    %c0_94 = arith.constant 0 : index
    %c0_95 = arith.constant 0 : index
    %28 = vector.load %arg6[%c0_92, %c0_93, %c0_94, %c0_95] : memref<1x16x16x144xf32, #tpu.memory_space<vmem>>, vector<1x16x16x36xf32>
    %29 = vector.shape_cast %28 : vector<1x16x16x36xf32> to vector<256x36xf32>
    %c0_96 = arith.constant 0 : index
    %c0_97 = arith.constant 0 : index
    %30 = vector.load %arg2[%c0_96, %c0_97] : memref<360x32xf32, #tpu.memory_space<vmem>>, vector<36x8xf32>
    %cst = arith.constant dense<0.000000e+00> : vector<256x8xf32>
    %31 = tpu.matmul %29, %30, %cst {dimension_numbers = #tpu.dot_dimension_numbers<[1], [0], [0], [1], [0, 0, 1, 1], [], []>} : vector<256x36xf32>, vector<36x8xf32>, vector<256x8xf32> -> vector<256x8xf32>
    %c0_98 = arith.constant 0 : index
    %c0_99 = arith.constant 0 : index
    %32 = vector.load %arg3[%c0_98, %c0_99] : memref<1x640xf32, #tpu.memory_space<vmem>>, vector<1x8xf32>
    %33 = vector.broadcast %32 : vector<1x8xf32> to vector<256x8xf32>
    %34 = arith.addf %31, %33 : vector<256x8xf32>
    %cst_100 = arith.constant 0.000000e+00 : f32
    %35 = vector.broadcast %cst_100 : f32 to vector<256x8xf32>
    %36 = arith.maximumf %34, %35 : vector<256x8xf32>
    %37 = vector.shape_cast %36 : vector<256x8xf32> to vector<1x16x16x8xf32>
    %c0_101 = arith.constant 0 : index
    %c1_102 = arith.constant 1 : index
    %c1_103 = arith.constant 1 : index
    %c0_104 = arith.constant 0 : index
    %38 = vector.load %arg5[%c0_101, %c1_102, %c1_103, %c0_104] : memref<1x24x24x16xf32, #tpu.memory_space<vmem>>, vector<1x16x16x8xf32>
    tpu.vector_store %arg5[%c0_101, %c1_102, %c1_103, %c0_104], %37 {strides = array<i32>} : memref<1x24x24x16xf32, #tpu.memory_space<vmem>>, vector<1x16x16x8xf32>,
    %39 = vector.extract_strided_slice %37 {offsets = [0, 0, 0, 0], sizes = [1, 16, 1, 8], strides = [1, 1, 1, 1]} : vector<1x16x16x8xf32> to vector<1x16x1x8xf32>
    %c0_105 = arith.constant 0 : index
    %c1_106 = arith.constant 1 : index
    %c0_107 = arith.constant 0 : index
    %c0_108 = arith.constant 0 : index
    %40 = vector.load %arg5[%c0_105, %c1_106, %c0_107, %c0_108] : memref<1x24x24x16xf32, #tpu.memory_space<vmem>>, vector<1x16x1x8xf32>
    tpu.vector_store %arg5[%c0_105, %c1_106, %c0_107, %c0_108], %39 {strides = array<i32>} : memref<1x24x24x16xf32, #tpu.memory_space<vmem>>, vector<1x16x1x8xf32>,
    %41 = vector.extract_strided_slice %37 {offsets = [0, 0, 15, 0], sizes = [1, 16, 1, 8], strides = [1, 1, 1, 1]} : vector<1x16x16x8xf32> to vector<1x16x1x8xf32>
    %c0_109 = arith.constant 0 : index
    %c1_110 = arith.constant 1 : index
    %c17_111 = arith.constant 17 : index
    %c0_112 = arith.constant 0 : index
    %42 = vector.load %arg5[%c0_109, %c1_110, %c17_111, %c0_112] : memref<1x24x24x16xf32, #tpu.memory_space<vmem>>, vector<1x16x1x8xf32>
    tpu.vector_store %arg5[%c0_109, %c1_110, %c17_111, %c0_112], %41 {strides = array<i32>} : memref<1x24x24x16xf32, #tpu.memory_space<vmem>>, vector<1x16x1x8xf32>,
    %c0_113 = arith.constant 0 : index
    %c1_114 = arith.constant 1 : index
    %c0_115 = arith.constant 0 : index
    %c0_116 = arith.constant 0 : index
    %43 = vector.load %arg5[%c0_113, %c1_114, %c0_115, %c0_116] : memref<1x24x24x16xf32, #tpu.memory_space<vmem>>, vector<1x1x18x8xf32>
    %c0_117 = arith.constant 0 : index
    %c16_118 = arith.constant 16 : index
    %c0_119 = arith.constant 0 : index
    %c0_120 = arith.constant 0 : index
    %44 = vector.load %arg5[%c0_117, %c16_118, %c0_119, %c0_120] : memref<1x24x24x16xf32, #tpu.memory_space<vmem>>, vector<1x1x18x8xf32>
    %c0_121 = arith.constant 0 : index
    %c0_122 = arith.constant 0 : index
    %c0_123 = arith.constant 0 : index
    %c0_124 = arith.constant 0 : index
    %45 = vector.load %arg5[%c0_121, %c0_122, %c0_123, %c0_124] : memref<1x24x24x16xf32, #tpu.memory_space<vmem>>, vector<1x1x18x8xf32>
    tpu.vector_store %arg5[%c0_121, %c0_122, %c0_123, %c0_124], %43 {strides = array<i32>} : memref<1x24x24x16xf32, #tpu.memory_space<vmem>>, vector<1x1x18x8xf32>,
    %c0_125 = arith.constant 0 : index
    %c17_126 = arith.constant 17 : index
    %c0_127 = arith.constant 0 : index
    %c0_128 = arith.constant 0 : index
    %46 = vector.load %arg5[%c0_125, %c17_126, %c0_127, %c0_128] : memref<1x24x24x16xf32, #tpu.memory_space<vmem>>, vector<1x1x18x8xf32>
    tpu.vector_store %arg5[%c0_125, %c17_126, %c0_127, %c0_128], %44 {strides = array<i32>} : memref<1x24x24x16xf32, #tpu.memory_space<vmem>>, vector<1x1x18x8xf32>,
    %c0_129 = arith.constant 0 : index
    %c0_130 = arith.constant 0 : index
    %c0_131 = arith.constant 0 : index
    %c0_132 = arith.constant 0 : index
    %47 = vector.load %arg5[%c0_129, %c0_130, %c0_131, %c0_132] : memref<1x24x24x16xf32, #tpu.memory_space<vmem>>, vector<1x16x16x8xf32>
    %c0_133 = arith.constant 0 : index
    %c0_134 = arith.constant 0 : index
    %c0_135 = arith.constant 0 : index
    %c0_136 = arith.constant 0 : index
    %48 = vector.load %arg6[%c0_133, %c0_134, %c0_135, %c0_136] : memref<1x16x16x144xf32, #tpu.memory_space<vmem>>, vector<1x16x16x8xf32>
    tpu.vector_store %arg6[%c0_133, %c0_134, %c0_135, %c0_136], %47 {strides = array<i32>} : memref<1x16x16x144xf32, #tpu.memory_space<vmem>>, vector<1x16x16x8xf32>,
    %c0_137 = arith.constant 0 : index
    %c0_138 = arith.constant 0 : index
    %c1_139 = arith.constant 1 : index
    %c0_140 = arith.constant 0 : index
    %49 = vector.load %arg5[%c0_137, %c0_138, %c1_139, %c0_140] : memref<1x24x24x16xf32, #tpu.memory_space<vmem>>, vector<1x16x16x8xf32>
    %c0_141 = arith.constant 0 : index
    %c0_142 = arith.constant 0 : index
    %c0_143 = arith.constant 0 : index
    %c8_144 = arith.constant 8 : index
    %50 = vector.load %arg6[%c0_141, %c0_142, %c0_143, %c8_144] : memref<1x16x16x144xf32, #tpu.memory_space<vmem>>, vector<1x16x16x8xf32>
    tpu.vector_store %arg6[%c0_141, %c0_142, %c0_143, %c8_144], %49 {strides = array<i32>} : memref<1x16x16x144xf32, #tpu.memory_space<vmem>>, vector<1x16x16x8xf32>,
    %c0_145 = arith.constant 0 : index
    %c0_146 = arith.constant 0 : index
    %c2_147 = arith.constant 2 : index
    %c0_148 = arith.constant 0 : index
    %51 = vector.load %arg5[%c0_145, %c0_146, %c2_147, %c0_148] : memref<1x24x24x16xf32, #tpu.memory_space<vmem>>, vector<1x16x16x8xf32>
    %c0_149 = arith.constant 0 : index
    %c0_150 = arith.constant 0 : index
    %c0_151 = arith.constant 0 : index
    %c16_152 = arith.constant 16 : index
    %52 = vector.load %arg6[%c0_149, %c0_150, %c0_151, %c16_152] : memref<1x16x16x144xf32, #tpu.memory_space<vmem>>, vector<1x16x16x8xf32>
    tpu.vector_store %arg6[%c0_149, %c0_150, %c0_151, %c16_152], %51 {strides = array<i32>} : memref<1x16x16x144xf32, #tpu.memory_space<vmem>>, vector<1x16x16x8xf32>,
    %c0_153 = arith.constant 0 : index
    %c1_154 = arith.constant 1 : index
    %c0_155 = arith.constant 0 : index
    %c0_156 = arith.constant 0 : index
    %53 = vector.load %arg5[%c0_153, %c1_154, %c0_155, %c0_156] : memref<1x24x24x16xf32, #tpu.memory_space<vmem>>, vector<1x16x16x8xf32>
    %c0_157 = arith.constant 0 : index
    %c0_158 = arith.constant 0 : index
    %c0_159 = arith.constant 0 : index
    %c24_160 = arith.constant 24 : index
    %54 = vector.load %arg6[%c0_157, %c0_158, %c0_159, %c24_160] : memref<1x16x16x144xf32, #tpu.memory_space<vmem>>, vector<1x16x16x8xf32>
    tpu.vector_store %arg6[%c0_157, %c0_158, %c0_159, %c24_160], %53 {strides = array<i32>} : memref<1x16x16x144xf32, #tpu.memory_space<vmem>>, vector<1x16x16x8xf32>,
    %c0_161 = arith.constant 0 : index
    %c1_162 = arith.constant 1 : index
    %c1_163 = arith.constant 1 : index
    %c0_164 = arith.constant 0 : index
    %55 = vector.load %arg5[%c0_161, %c1_162, %c1_163, %c0_164] : memref<1x24x24x16xf32, #tpu.memory_space<vmem>>, vector<1x16x16x8xf32>
    %c0_165 = arith.constant 0 : index
    %c0_166 = arith.constant 0 : index
    %c0_167 = arith.constant 0 : index
    %c32_168 = arith.constant 32 : index
    %56 = vector.load %arg6[%c0_165, %c0_166, %c0_167, %c32_168] : memref<1x16x16x144xf32, #tpu.memory_space<vmem>>, vector<1x16x16x8xf32>
    tpu.vector_store %arg6[%c0_165, %c0_166, %c0_167, %c32_168], %55 {strides = array<i32>} : memref<1x16x16x144xf32, #tpu.memory_space<vmem>>, vector<1x16x16x8xf32>,
    %c0_169 = arith.constant 0 : index
    %c1_170 = arith.constant 1 : index
    %c2_171 = arith.constant 2 : index
    %c0_172 = arith.constant 0 : index
    %57 = vector.load %arg5[%c0_169, %c1_170, %c2_171, %c0_172] : memref<1x24x24x16xf32, #tpu.memory_space<vmem>>, vector<1x16x16x8xf32>
    %c0_173 = arith.constant 0 : index
    %c0_174 = arith.constant 0 : index
    %c0_175 = arith.constant 0 : index
    %c40 = arith.constant 40 : index
    %58 = vector.load %arg6[%c0_173, %c0_174, %c0_175, %c40] : memref<1x16x16x144xf32, #tpu.memory_space<vmem>>, vector<1x16x16x8xf32>
    tpu.vector_store %arg6[%c0_173, %c0_174, %c0_175, %c40], %57 {strides = array<i32>} : memref<1x16x16x144xf32, #tpu.memory_space<vmem>>, vector<1x16x16x8xf32>,
    %c0_176 = arith.constant 0 : index
    %c2_177 = arith.constant 2 : index
    %c0_178 = arith.constant 0 : index
    %c0_179 = arith.constant 0 : index
    %59 = vector.load %arg5[%c0_176, %c2_177, %c0_178, %c0_179] : memref<1x24x24x16xf32, #tpu.memory_space<vmem>>, vector<1x16x16x8xf32>
    %c0_180 = arith.constant 0 : index
    %c0_181 = arith.constant 0 : index
    %c0_182 = arith.constant 0 : index
    %c48 = arith.constant 48 : index
    %60 = vector.load %arg6[%c0_180, %c0_181, %c0_182, %c48] : memref<1x16x16x144xf32, #tpu.memory_space<vmem>>, vector<1x16x16x8xf32>
    tpu.vector_store %arg6[%c0_180, %c0_181, %c0_182, %c48], %59 {strides = array<i32>} : memref<1x16x16x144xf32, #tpu.memory_space<vmem>>, vector<1x16x16x8xf32>,
    %c0_183 = arith.constant 0 : index
    %c2_184 = arith.constant 2 : index
    %c1_185 = arith.constant 1 : index
    %c0_186 = arith.constant 0 : index
    %61 = vector.load %arg5[%c0_183, %c2_184, %c1_185, %c0_186] : memref<1x24x24x16xf32, #tpu.memory_space<vmem>>, vector<1x16x16x8xf32>
    %c0_187 = arith.constant 0 : index
    %c0_188 = arith.constant 0 : index
    %c0_189 = arith.constant 0 : index
    %c56 = arith.constant 56 : index
    %62 = vector.load %arg6[%c0_187, %c0_188, %c0_189, %c56] : memref<1x16x16x144xf32, #tpu.memory_space<vmem>>, vector<1x16x16x8xf32>
    tpu.vector_store %arg6[%c0_187, %c0_188, %c0_189, %c56], %61 {strides = array<i32>} : memref<1x16x16x144xf32, #tpu.memory_space<vmem>>, vector<1x16x16x8xf32>,
    %c0_190 = arith.constant 0 : index
    %c2_191 = arith.constant 2 : index
    %c2_192 = arith.constant 2 : index
    %c0_193 = arith.constant 0 : index
    %63 = vector.load %arg5[%c0_190, %c2_191, %c2_192, %c0_193] : memref<1x24x24x16xf32, #tpu.memory_space<vmem>>, vector<1x16x16x8xf32>
    %c0_194 = arith.constant 0 : index
    %c0_195 = arith.constant 0 : index
    %c0_196 = arith.constant 0 : index
    %c64 = arith.constant 64 : index
    %64 = vector.load %arg6[%c0_194, %c0_195, %c0_196, %c64] : memref<1x16x16x144xf32, #tpu.memory_space<vmem>>, vector<1x16x16x8xf32>
    tpu.vector_store %arg6[%c0_194, %c0_195, %c0_196, %c64], %63 {strides = array<i32>} : memref<1x16x16x144xf32, #tpu.memory_space<vmem>>, vector<1x16x16x8xf32>,
    %c0_197 = arith.constant 0 : index
    %c0_198 = arith.constant 0 : index
    %c0_199 = arith.constant 0 : index
    %c0_200 = arith.constant 0 : index
    %65 = vector.load %arg6[%c0_197, %c0_198, %c0_199, %c0_200] : memref<1x16x16x144xf32, #tpu.memory_space<vmem>>, vector<1x16x16x72xf32>
    %66 = vector.shape_cast %65 : vector<1x16x16x72xf32> to vector<256x72xf32>
    %c40_201 = arith.constant 40 : index
    %c0_202 = arith.constant 0 : index
    %67 = vector.load %arg2[%c40_201, %c0_202] : memref<360x32xf32, #tpu.memory_space<vmem>>, vector<72x8xf32>
    %cst_203 = arith.constant dense<0.000000e+00> : vector<256x8xf32>
    %68 = tpu.matmul %66, %67, %cst_203 {dimension_numbers = #tpu.dot_dimension_numbers<[1], [0], [0], [1], [0, 0, 1, 1], [], []>} : vector<256x72xf32>, vector<72x8xf32>, vector<256x8xf32> -> vector<256x8xf32>
    %c0_204 = arith.constant 0 : index
    %c128 = arith.constant 128 : index
    %69 = vector.load %arg3[%c0_204, %c128] : memref<1x640xf32, #tpu.memory_space<vmem>>, vector<1x8xf32>
    %70 = vector.broadcast %69 : vector<1x8xf32> to vector<256x8xf32>
    %71 = arith.addf %68, %70 : vector<256x8xf32>
    %cst_205 = arith.constant 0.000000e+00 : f32
    %72 = vector.broadcast %cst_205 : f32 to vector<256x8xf32>
    %73 = arith.maximumf %71, %72 : vector<256x8xf32>
    %74 = vector.shape_cast %73 : vector<256x8xf32> to vector<1x16x16x8xf32>
    %c0_206 = arith.constant 0 : index
    %c2_207 = arith.constant 2 : index
    %c2_208 = arith.constant 2 : index
    %c0_209 = arith.constant 0 : index
    %75 = vector.load %arg5[%c0_206, %c2_207, %c2_208, %c0_209] : memref<1x24x24x16xf32, #tpu.memory_space<vmem>>, vector<1x16x16x8xf32>
    tpu.vector_store %arg5[%c0_206, %c2_207, %c2_208, %c0_209], %74 {strides = array<i32>} : memref<1x24x24x16xf32, #tpu.memory_space<vmem>>, vector<1x16x16x8xf32>,
    %76 = vector.extract_strided_slice %74 {offsets = [0, 0, 0, 0], sizes = [1, 16, 1, 8], strides = [1, 1, 1, 1]} : vector<1x16x16x8xf32> to vector<1x16x1x8xf32>
    %77 = vector.shape_cast %76 : vector<1x16x1x8xf32> to vector<1x16x1x8xf32>
    %78 = vector.broadcast %77 : vector<1x16x1x8xf32> to vector<1x16x2x8xf32>
    %c0_210 = arith.constant 0 : index
    %c2_211 = arith.constant 2 : index
    %c0_212 = arith.constant 0 : index
    %c0_213 = arith.constant 0 : index
    %79 = vector.load %arg5[%c0_210, %c2_211, %c0_212, %c0_213] : memref<1x24x24x16xf32, #tpu.memory_space<vmem>>, vector<1x16x2x8xf32>
    tpu.vector_store %arg5[%c0_210, %c2_211, %c0_212, %c0_213], %78 {strides = array<i32>} : memref<1x24x24x16xf32, #tpu.memory_space<vmem>>, vector<1x16x2x8xf32>,
    %80 = vector.extract_strided_slice %74 {offsets = [0, 0, 15, 0], sizes = [1, 16, 1, 8], strides = [1, 1, 1, 1]} : vector<1x16x16x8xf32> to vector<1x16x1x8xf32>
    %81 = vector.shape_cast %80 : vector<1x16x1x8xf32> to vector<1x16x1x8xf32>
    %82 = vector.broadcast %81 : vector<1x16x1x8xf32> to vector<1x16x2x8xf32>
    %c0_214 = arith.constant 0 : index
    %c2_215 = arith.constant 2 : index
    %c18 = arith.constant 18 : index
    %c0_216 = arith.constant 0 : index
    %83 = vector.load %arg5[%c0_214, %c2_215, %c18, %c0_216] : memref<1x24x24x16xf32, #tpu.memory_space<vmem>>, vector<1x16x2x8xf32>
    tpu.vector_store %arg5[%c0_214, %c2_215, %c18, %c0_216], %82 {strides = array<i32>} : memref<1x24x24x16xf32, #tpu.memory_space<vmem>>, vector<1x16x2x8xf32>,
    %c0_217 = arith.constant 0 : index
    %c2_218 = arith.constant 2 : index
    %c0_219 = arith.constant 0 : index
    %c0_220 = arith.constant 0 : index
    %84 = vector.load %arg5[%c0_217, %c2_218, %c0_219, %c0_220] : memref<1x24x24x16xf32, #tpu.memory_space<vmem>>, vector<1x1x20x8xf32>
    %c0_221 = arith.constant 0 : index
    %c17_222 = arith.constant 17 : index
    %c0_223 = arith.constant 0 : index
    %c0_224 = arith.constant 0 : index
    %85 = vector.load %arg5[%c0_221, %c17_222, %c0_223, %c0_224] : memref<1x24x24x16xf32, #tpu.memory_space<vmem>>, vector<1x1x20x8xf32>
    %86 = vector.shape_cast %84 : vector<1x1x20x8xf32> to vector<1x1x20x8xf32>
    %87 = vector.broadcast %86 : vector<1x1x20x8xf32> to vector<1x2x20x8xf32>
    %c0_225 = arith.constant 0 : index
    %c0_226 = arith.constant 0 : index
    %c0_227 = arith.constant 0 : index
    %c0_228 = arith.constant 0 : index
    %88 = vector.load %arg5[%c0_225, %c0_226, %c0_227, %c0_228] : memref<1x24x24x16xf32, #tpu.memory_space<vmem>>, vector<1x2x20x8xf32>
    tpu.vector_store %arg5[%c0_225, %c0_226, %c0_227, %c0_228], %87 {strides = array<i32>} : memref<1x24x24x16xf32, #tpu.memory_space<vmem>>, vector<1x2x20x8xf32>,
    %89 = vector.shape_cast %85 : vector<1x1x20x8xf32> to vector<1x1x20x8xf32>
    %90 = vector.broadcast %89 : vector<1x1x20x8xf32> to vector<1x2x20x8xf32>
    %c0_229 = arith.constant 0 : index
    %c18_230 = arith.constant 18 : index
    %c0_231 = arith.constant 0 : index
    %c0_232 = arith.constant 0 : index
    %91 = vector.load %arg5[%c0_229, %c18_230, %c0_231, %c0_232] : memref<1x24x24x16xf32, #tpu.memory_space<vmem>>, vector<1x2x20x8xf32>
    tpu.vector_store %arg5[%c0_229, %c18_230, %c0_231, %c0_232], %90 {strides = array<i32>} : memref<1x24x24x16xf32, #tpu.memory_space<vmem>>, vector<1x2x20x8xf32>,
    %c0_233 = arith.constant 0 : index
    %c0_234 = arith.constant 0 : index
    %c0_235 = arith.constant 0 : index
    %c0_236 = arith.constant 0 : index
    %92 = vector.load %arg5[%c0_233, %c0_234, %c0_235, %c0_236] : memref<1x24x24x16xf32, #tpu.memory_space<vmem>>, vector<1x16x16x8xf32>
    %c0_237 = arith.constant 0 : index
    %c0_238 = arith.constant 0 : index
    %c0_239 = arith.constant 0 : index
    %c0_240 = arith.constant 0 : index
    %93 = vector.load %arg6[%c0_237, %c0_238, %c0_239, %c0_240] : memref<1x16x16x144xf32, #tpu.memory_space<vmem>>, vector<1x16x16x8xf32>
    tpu.vector_store %arg6[%c0_237, %c0_238, %c0_239, %c0_240], %92 {strides = array<i32>} : memref<1x16x16x144xf32, #tpu.memory_space<vmem>>, vector<1x16x16x8xf32>,
    %c0_241 = arith.constant 0 : index
    %c0_242 = arith.constant 0 : index
    %c2_243 = arith.constant 2 : index
    %c0_244 = arith.constant 0 : index
    %94 = vector.load %arg5[%c0_241, %c0_242, %c2_243, %c0_244] : memref<1x24x24x16xf32, #tpu.memory_space<vmem>>, vector<1x16x16x8xf32>
    %c0_245 = arith.constant 0 : index
    %c0_246 = arith.constant 0 : index
    %c0_247 = arith.constant 0 : index
    %c8_248 = arith.constant 8 : index
    %95 = vector.load %arg6[%c0_245, %c0_246, %c0_247, %c8_248] : memref<1x16x16x144xf32, #tpu.memory_space<vmem>>, vector<1x16x16x8xf32>
    tpu.vector_store %arg6[%c0_245, %c0_246, %c0_247, %c8_248], %94 {strides = array<i32>} : memref<1x16x16x144xf32, #tpu.memory_space<vmem>>, vector<1x16x16x8xf32>,
    %c0_249 = arith.constant 0 : index
    %c0_250 = arith.constant 0 : index
    %c4_251 = arith.constant 4 : index
    %c0_252 = arith.constant 0 : index
    %96 = vector.load %arg5[%c0_249, %c0_250, %c4_251, %c0_252] : memref<1x24x24x16xf32, #tpu.memory_space<vmem>>, vector<1x16x16x8xf32>
    %c0_253 = arith.constant 0 : index
    %c0_254 = arith.constant 0 : index
    %c0_255 = arith.constant 0 : index
    %c16_256 = arith.constant 16 : index
    %97 = vector.load %arg6[%c0_253, %c0_254, %c0_255, %c16_256] : memref<1x16x16x144xf32, #tpu.memory_space<vmem>>, vector<1x16x16x8xf32>
    tpu.vector_store %arg6[%c0_253, %c0_254, %c0_255, %c16_256], %96 {strides = array<i32>} : memref<1x16x16x144xf32, #tpu.memory_space<vmem>>, vector<1x16x16x8xf32>,
    %c0_257 = arith.constant 0 : index
    %c2_258 = arith.constant 2 : index
    %c0_259 = arith.constant 0 : index
    %c0_260 = arith.constant 0 : index
    %98 = vector.load %arg5[%c0_257, %c2_258, %c0_259, %c0_260] : memref<1x24x24x16xf32, #tpu.memory_space<vmem>>, vector<1x16x16x8xf32>
    %c0_261 = arith.constant 0 : index
    %c0_262 = arith.constant 0 : index
    %c0_263 = arith.constant 0 : index
    %c24_264 = arith.constant 24 : index
    %99 = vector.load %arg6[%c0_261, %c0_262, %c0_263, %c24_264] : memref<1x16x16x144xf32, #tpu.memory_space<vmem>>, vector<1x16x16x8xf32>
    tpu.vector_store %arg6[%c0_261, %c0_262, %c0_263, %c24_264], %98 {strides = array<i32>} : memref<1x16x16x144xf32, #tpu.memory_space<vmem>>, vector<1x16x16x8xf32>,
    %c0_265 = arith.constant 0 : index
    %c2_266 = arith.constant 2 : index
    %c2_267 = arith.constant 2 : index
    %c0_268 = arith.constant 0 : index
    %100 = vector.load %arg5[%c0_265, %c2_266, %c2_267, %c0_268] : memref<1x24x24x16xf32, #tpu.memory_space<vmem>>, vector<1x16x16x8xf32>
    %c0_269 = arith.constant 0 : index
    %c0_270 = arith.constant 0 : index
    %c0_271 = arith.constant 0 : index
    %c32_272 = arith.constant 32 : index
    %101 = vector.load %arg6[%c0_269, %c0_270, %c0_271, %c32_272] : memref<1x16x16x144xf32, #tpu.memory_space<vmem>>, vector<1x16x16x8xf32>
    tpu.vector_store %arg6[%c0_269, %c0_270, %c0_271, %c32_272], %100 {strides = array<i32>} : memref<1x16x16x144xf32, #tpu.memory_space<vmem>>, vector<1x16x16x8xf32>,
    %c0_273 = arith.constant 0 : index
    %c2_274 = arith.constant 2 : index
    %c4_275 = arith.constant 4 : index
    %c0_276 = arith.constant 0 : index
    %102 = vector.load %arg5[%c0_273, %c2_274, %c4_275, %c0_276] : memref<1x24x24x16xf32, #tpu.memory_space<vmem>>, vector<1x16x16x8xf32>
    %c0_277 = arith.constant 0 : index
    %c0_278 = arith.constant 0 : index
    %c0_279 = arith.constant 0 : index
    %c40_280 = arith.constant 40 : index
    %103 = vector.load %arg6[%c0_277, %c0_278, %c0_279, %c40_280] : memref<1x16x16x144xf32, #tpu.memory_space<vmem>>, vector<1x16x16x8xf32>
    tpu.vector_store %arg6[%c0_277, %c0_278, %c0_279, %c40_280], %102 {strides = array<i32>} : memref<1x16x16x144xf32, #tpu.memory_space<vmem>>, vector<1x16x16x8xf32>,
    %c0_281 = arith.constant 0 : index
    %c4_282 = arith.constant 4 : index
    %c0_283 = arith.constant 0 : index
    %c0_284 = arith.constant 0 : index
    %104 = vector.load %arg5[%c0_281, %c4_282, %c0_283, %c0_284] : memref<1x24x24x16xf32, #tpu.memory_space<vmem>>, vector<1x16x16x8xf32>
    %c0_285 = arith.constant 0 : index
    %c0_286 = arith.constant 0 : index
    %c0_287 = arith.constant 0 : index
    %c48_288 = arith.constant 48 : index
    %105 = vector.load %arg6[%c0_285, %c0_286, %c0_287, %c48_288] : memref<1x16x16x144xf32, #tpu.memory_space<vmem>>, vector<1x16x16x8xf32>
    tpu.vector_store %arg6[%c0_285, %c0_286, %c0_287, %c48_288], %104 {strides = array<i32>} : memref<1x16x16x144xf32, #tpu.memory_space<vmem>>, vector<1x16x16x8xf32>,
    %c0_289 = arith.constant 0 : index
    %c4_290 = arith.constant 4 : index
    %c2_291 = arith.constant 2 : index
    %c0_292 = arith.constant 0 : index
    %106 = vector.load %arg5[%c0_289, %c4_290, %c2_291, %c0_292] : memref<1x24x24x16xf32, #tpu.memory_space<vmem>>, vector<1x16x16x8xf32>
    %c0_293 = arith.constant 0 : index
    %c0_294 = arith.constant 0 : index
    %c0_295 = arith.constant 0 : index
    %c56_296 = arith.constant 56 : index
    %107 = vector.load %arg6[%c0_293, %c0_294, %c0_295, %c56_296] : memref<1x16x16x144xf32, #tpu.memory_space<vmem>>, vector<1x16x16x8xf32>
    tpu.vector_store %arg6[%c0_293, %c0_294, %c0_295, %c56_296], %106 {strides = array<i32>} : memref<1x16x16x144xf32, #tpu.memory_space<vmem>>, vector<1x16x16x8xf32>,
    %c0_297 = arith.constant 0 : index
    %c4_298 = arith.constant 4 : index
    %c4_299 = arith.constant 4 : index
    %c0_300 = arith.constant 0 : index
    %108 = vector.load %arg5[%c0_297, %c4_298, %c4_299, %c0_300] : memref<1x24x24x16xf32, #tpu.memory_space<vmem>>, vector<1x16x16x8xf32>
    %c0_301 = arith.constant 0 : index
    %c0_302 = arith.constant 0 : index
    %c0_303 = arith.constant 0 : index
    %c64_304 = arith.constant 64 : index
    %109 = vector.load %arg6[%c0_301, %c0_302, %c0_303, %c64_304] : memref<1x16x16x144xf32, #tpu.memory_space<vmem>>, vector<1x16x16x8xf32>
    tpu.vector_store %arg6[%c0_301, %c0_302, %c0_303, %c64_304], %108 {strides = array<i32>} : memref<1x16x16x144xf32, #tpu.memory_space<vmem>>, vector<1x16x16x8xf32>,
    %c0_305 = arith.constant 0 : index
    %c0_306 = arith.constant 0 : index
    %c0_307 = arith.constant 0 : index
    %c0_308 = arith.constant 0 : index
    %110 = vector.load %arg6[%c0_305, %c0_306, %c0_307, %c0_308] : memref<1x16x16x144xf32, #tpu.memory_space<vmem>>, vector<1x16x16x72xf32>
    %111 = vector.shape_cast %110 : vector<1x16x16x72xf32> to vector<256x72xf32>
    %c112 = arith.constant 112 : index
    %c0_309 = arith.constant 0 : index
    %112 = vector.load %arg2[%c112, %c0_309] : memref<360x32xf32, #tpu.memory_space<vmem>>, vector<72x16xf32>
    %cst_310 = arith.constant dense<0.000000e+00> : vector<256x16xf32>
    %113 = tpu.matmul %111, %112, %cst_310 {dimension_numbers = #tpu.dot_dimension_numbers<[1], [0], [0], [1], [0, 0, 1, 1], [], []>} : vector<256x72xf32>, vector<72x16xf32>, vector<256x16xf32> -> vector<256x16xf32>
    %c0_311 = arith.constant 0 : index
    %c256 = arith.constant 256 : index
    %114 = vector.load %arg3[%c0_311, %c256] : memref<1x640xf32, #tpu.memory_space<vmem>>, vector<1x16xf32>
    %115 = vector.broadcast %114 : vector<1x16xf32> to vector<256x16xf32>
    %116 = arith.addf %113, %115 : vector<256x16xf32>
    %cst_312 = arith.constant 0.000000e+00 : f32
    %117 = vector.broadcast %cst_312 : f32 to vector<256x16xf32>
    %118 = arith.maximumf %116, %117 : vector<256x16xf32>
    %119 = vector.shape_cast %118 : vector<256x16xf32> to vector<1x16x16x16xf32>
    %c0_313 = arith.constant 0 : index
    %c0_314 = arith.constant 0 : index
    %120 = vector.load %arg7[%c0_313, %c0_314] : memref<256x32xf32, #tpu.memory_space<vmem>>, vector<256x16xf32>
    tpu.vector_store %arg7[%c0_313, %c0_314], %118 {strides = array<i32>} : memref<256x32xf32, #tpu.memory_space<vmem>>, vector<256x16xf32>,
    %c0_315 = arith.constant 0 : index
    %c4_316 = arith.constant 4 : index
    %c4_317 = arith.constant 4 : index
    %c0_318 = arith.constant 0 : index
    %121 = vector.load %arg5[%c0_315, %c4_316, %c4_317, %c0_318] : memref<1x24x24x16xf32, #tpu.memory_space<vmem>>, vector<1x16x16x16xf32>
    tpu.vector_store %arg5[%c0_315, %c4_316, %c4_317, %c0_318], %119 {strides = array<i32>} : memref<1x24x24x16xf32, #tpu.memory_space<vmem>>, vector<1x16x16x16xf32>,
    %122 = vector.extract_strided_slice %119 {offsets = [0, 0, 0, 0], sizes = [1, 16, 1, 16], strides = [1, 1, 1, 1]} : vector<1x16x16x16xf32> to vector<1x16x1x16xf32>
    %123 = vector.shape_cast %122 : vector<1x16x1x16xf32> to vector<1x16x1x16xf32>
    %124 = vector.broadcast %123 : vector<1x16x1x16xf32> to vector<1x16x4x16xf32>
    %c0_319 = arith.constant 0 : index
    %c4_320 = arith.constant 4 : index
    %c0_321 = arith.constant 0 : index
    %c0_322 = arith.constant 0 : index
    %125 = vector.load %arg5[%c0_319, %c4_320, %c0_321, %c0_322] : memref<1x24x24x16xf32, #tpu.memory_space<vmem>>, vector<1x16x4x16xf32>
    tpu.vector_store %arg5[%c0_319, %c4_320, %c0_321, %c0_322], %124 {strides = array<i32>} : memref<1x24x24x16xf32, #tpu.memory_space<vmem>>, vector<1x16x4x16xf32>,
    %126 = vector.extract_strided_slice %119 {offsets = [0, 0, 15, 0], sizes = [1, 16, 1, 16], strides = [1, 1, 1, 1]} : vector<1x16x16x16xf32> to vector<1x16x1x16xf32>
    %127 = vector.shape_cast %126 : vector<1x16x1x16xf32> to vector<1x16x1x16xf32>
    %128 = vector.broadcast %127 : vector<1x16x1x16xf32> to vector<1x16x4x16xf32>
    %c0_323 = arith.constant 0 : index
    %c4_324 = arith.constant 4 : index
    %c20_325 = arith.constant 20 : index
    %c0_326 = arith.constant 0 : index
    %129 = vector.load %arg5[%c0_323, %c4_324, %c20_325, %c0_326] : memref<1x24x24x16xf32, #tpu.memory_space<vmem>>, vector<1x16x4x16xf32>
    tpu.vector_store %arg5[%c0_323, %c4_324, %c20_325, %c0_326], %128 {strides = array<i32>} : memref<1x24x24x16xf32, #tpu.memory_space<vmem>>, vector<1x16x4x16xf32>,
    %c0_327 = arith.constant 0 : index
    %c4_328 = arith.constant 4 : index
    %c0_329 = arith.constant 0 : index
    %c0_330 = arith.constant 0 : index
    %130 = vector.load %arg5[%c0_327, %c4_328, %c0_329, %c0_330] : memref<1x24x24x16xf32, #tpu.memory_space<vmem>>, vector<1x1x24x16xf32>
    %c0_331 = arith.constant 0 : index
    %c19 = arith.constant 19 : index
    %c0_332 = arith.constant 0 : index
    %c0_333 = arith.constant 0 : index
    %131 = vector.load %arg5[%c0_331, %c19, %c0_332, %c0_333] : memref<1x24x24x16xf32, #tpu.memory_space<vmem>>, vector<1x1x24x16xf32>
    %132 = vector.shape_cast %130 : vector<1x1x24x16xf32> to vector<1x1x24x16xf32>
    %133 = vector.broadcast %132 : vector<1x1x24x16xf32> to vector<1x4x24x16xf32>
    %c0_334 = arith.constant 0 : index
    %c0_335 = arith.constant 0 : index
    %c0_336 = arith.constant 0 : index
    %c0_337 = arith.constant 0 : index
    %134 = vector.load %arg5[%c0_334, %c0_335, %c0_336, %c0_337] : memref<1x24x24x16xf32, #tpu.memory_space<vmem>>, vector<1x4x24x16xf32>
    tpu.vector_store %arg5[%c0_334, %c0_335, %c0_336, %c0_337], %133 {strides = array<i32>} : memref<1x24x24x16xf32, #tpu.memory_space<vmem>>, vector<1x4x24x16xf32>,
    %135 = vector.shape_cast %131 : vector<1x1x24x16xf32> to vector<1x1x24x16xf32>
    %136 = vector.broadcast %135 : vector<1x1x24x16xf32> to vector<1x4x24x16xf32>
    %c0_338 = arith.constant 0 : index
    %c20_339 = arith.constant 20 : index
    %c0_340 = arith.constant 0 : index
    %c0_341 = arith.constant 0 : index
    %137 = vector.load %arg5[%c0_338, %c20_339, %c0_340, %c0_341] : memref<1x24x24x16xf32, #tpu.memory_space<vmem>>, vector<1x4x24x16xf32>
    tpu.vector_store %arg5[%c0_338, %c20_339, %c0_340, %c0_341], %136 {strides = array<i32>} : memref<1x24x24x16xf32, #tpu.memory_space<vmem>>, vector<1x4x24x16xf32>,
    %c0_342 = arith.constant 0 : index
    %c0_343 = arith.constant 0 : index
    %c0_344 = arith.constant 0 : index
    %c0_345 = arith.constant 0 : index
    %138 = vector.load %arg5[%c0_342, %c0_343, %c0_344, %c0_345] : memref<1x24x24x16xf32, #tpu.memory_space<vmem>>, vector<1x16x16x16xf32>
    %c0_346 = arith.constant 0 : index
    %c0_347 = arith.constant 0 : index
    %c0_348 = arith.constant 0 : index
    %c0_349 = arith.constant 0 : index
    %139 = vector.load %arg6[%c0_346, %c0_347, %c0_348, %c0_349] : memref<1x16x16x144xf32, #tpu.memory_space<vmem>>, vector<1x16x16x16xf32>
    tpu.vector_store %arg6[%c0_346, %c0_347, %c0_348, %c0_349], %138 {strides = array<i32>} : memref<1x16x16x144xf32, #tpu.memory_space<vmem>>, vector<1x16x16x16xf32>,
    %c0_350 = arith.constant 0 : index
    %c0_351 = arith.constant 0 : index
    %c4_352 = arith.constant 4 : index
    %c0_353 = arith.constant 0 : index
    %140 = vector.load %arg5[%c0_350, %c0_351, %c4_352, %c0_353] : memref<1x24x24x16xf32, #tpu.memory_space<vmem>>, vector<1x16x16x16xf32>
    %c0_354 = arith.constant 0 : index
    %c0_355 = arith.constant 0 : index
    %c0_356 = arith.constant 0 : index
    %c16_357 = arith.constant 16 : index
    %141 = vector.load %arg6[%c0_354, %c0_355, %c0_356, %c16_357] : memref<1x16x16x144xf32, #tpu.memory_space<vmem>>, vector<1x16x16x16xf32>
    tpu.vector_store %arg6[%c0_354, %c0_355, %c0_356, %c16_357], %140 {strides = array<i32>} : memref<1x16x16x144xf32, #tpu.memory_space<vmem>>, vector<1x16x16x16xf32>,
    %c0_358 = arith.constant 0 : index
    %c0_359 = arith.constant 0 : index
    %c8_360 = arith.constant 8 : index
    %c0_361 = arith.constant 0 : index
    %142 = vector.load %arg5[%c0_358, %c0_359, %c8_360, %c0_361] : memref<1x24x24x16xf32, #tpu.memory_space<vmem>>, vector<1x16x16x16xf32>
    %c0_362 = arith.constant 0 : index
    %c0_363 = arith.constant 0 : index
    %c0_364 = arith.constant 0 : index
    %c32_365 = arith.constant 32 : index
    %143 = vector.load %arg6[%c0_362, %c0_363, %c0_364, %c32_365] : memref<1x16x16x144xf32, #tpu.memory_space<vmem>>, vector<1x16x16x16xf32>
    tpu.vector_store %arg6[%c0_362, %c0_363, %c0_364, %c32_365], %142 {strides = array<i32>} : memref<1x16x16x144xf32, #tpu.memory_space<vmem>>, vector<1x16x16x16xf32>,
    %c0_366 = arith.constant 0 : index
    %c4_367 = arith.constant 4 : index
    %c0_368 = arith.constant 0 : index
    %c0_369 = arith.constant 0 : index
    %144 = vector.load %arg5[%c0_366, %c4_367, %c0_368, %c0_369] : memref<1x24x24x16xf32, #tpu.memory_space<vmem>>, vector<1x16x16x16xf32>
    %c0_370 = arith.constant 0 : index
    %c0_371 = arith.constant 0 : index
    %c0_372 = arith.constant 0 : index
    %c48_373 = arith.constant 48 : index
    %145 = vector.load %arg6[%c0_370, %c0_371, %c0_372, %c48_373] : memref<1x16x16x144xf32, #tpu.memory_space<vmem>>, vector<1x16x16x16xf32>
    tpu.vector_store %arg6[%c0_370, %c0_371, %c0_372, %c48_373], %144 {strides = array<i32>} : memref<1x16x16x144xf32, #tpu.memory_space<vmem>>, vector<1x16x16x16xf32>,
    %c0_374 = arith.constant 0 : index
    %c4_375 = arith.constant 4 : index
    %c4_376 = arith.constant 4 : index
    %c0_377 = arith.constant 0 : index
    %146 = vector.load %arg5[%c0_374, %c4_375, %c4_376, %c0_377] : memref<1x24x24x16xf32, #tpu.memory_space<vmem>>, vector<1x16x16x16xf32>
    %c0_378 = arith.constant 0 : index
    %c0_379 = arith.constant 0 : index
    %c0_380 = arith.constant 0 : index
    %c64_381 = arith.constant 64 : index
    %147 = vector.load %arg6[%c0_378, %c0_379, %c0_380, %c64_381] : memref<1x16x16x144xf32, #tpu.memory_space<vmem>>, vector<1x16x16x16xf32>
    tpu.vector_store %arg6[%c0_378, %c0_379, %c0_380, %c64_381], %146 {strides = array<i32>} : memref<1x16x16x144xf32, #tpu.memory_space<vmem>>, vector<1x16x16x16xf32>,
    %c0_382 = arith.constant 0 : index
    %c4_383 = arith.constant 4 : index
    %c8_384 = arith.constant 8 : index
    %c0_385 = arith.constant 0 : index
    %148 = vector.load %arg5[%c0_382, %c4_383, %c8_384, %c0_385] : memref<1x24x24x16xf32, #tpu.memory_space<vmem>>, vector<1x16x16x16xf32>
    %c0_386 = arith.constant 0 : index
    %c0_387 = arith.constant 0 : index
    %c0_388 = arith.constant 0 : index
    %c80 = arith.constant 80 : index
    %149 = vector.load %arg6[%c0_386, %c0_387, %c0_388, %c80] : memref<1x16x16x144xf32, #tpu.memory_space<vmem>>, vector<1x16x16x16xf32>
    tpu.vector_store %arg6[%c0_386, %c0_387, %c0_388, %c80], %148 {strides = array<i32>} : memref<1x16x16x144xf32, #tpu.memory_space<vmem>>, vector<1x16x16x16xf32>,
    %c0_389 = arith.constant 0 : index
    %c8_390 = arith.constant 8 : index
    %c0_391 = arith.constant 0 : index
    %c0_392 = arith.constant 0 : index
    %150 = vector.load %arg5[%c0_389, %c8_390, %c0_391, %c0_392] : memref<1x24x24x16xf32, #tpu.memory_space<vmem>>, vector<1x16x16x16xf32>
    %c0_393 = arith.constant 0 : index
    %c0_394 = arith.constant 0 : index
    %c0_395 = arith.constant 0 : index
    %c96 = arith.constant 96 : index
    %151 = vector.load %arg6[%c0_393, %c0_394, %c0_395, %c96] : memref<1x16x16x144xf32, #tpu.memory_space<vmem>>, vector<1x16x16x16xf32>
    tpu.vector_store %arg6[%c0_393, %c0_394, %c0_395, %c96], %150 {strides = array<i32>} : memref<1x16x16x144xf32, #tpu.memory_space<vmem>>, vector<1x16x16x16xf32>,
    %c0_396 = arith.constant 0 : index
    %c8_397 = arith.constant 8 : index
    %c4_398 = arith.constant 4 : index
    %c0_399 = arith.constant 0 : index
    %152 = vector.load %arg5[%c0_396, %c8_397, %c4_398, %c0_399] : memref<1x24x24x16xf32, #tpu.memory_space<vmem>>, vector<1x16x16x16xf32>
    %c0_400 = arith.constant 0 : index
    %c0_401 = arith.constant 0 : index
    %c0_402 = arith.constant 0 : index
    %c112_403 = arith.constant 112 : index
    %153 = vector.load %arg6[%c0_400, %c0_401, %c0_402, %c112_403] : memref<1x16x16x144xf32, #tpu.memory_space<vmem>>, vector<1x16x16x16xf32>
    tpu.vector_store %arg6[%c0_400, %c0_401, %c0_402, %c112_403], %152 {strides = array<i32>} : memref<1x16x16x144xf32, #tpu.memory_space<vmem>>, vector<1x16x16x16xf32>,
    %c0_404 = arith.constant 0 : index
    %c8_405 = arith.constant 8 : index
    %c8_406 = arith.constant 8 : index
    %c0_407 = arith.constant 0 : index
    %154 = vector.load %arg5[%c0_404, %c8_405, %c8_406, %c0_407] : memref<1x24x24x16xf32, #tpu.memory_space<vmem>>, vector<1x16x16x16xf32>
    %c0_408 = arith.constant 0 : index
    %c0_409 = arith.constant 0 : index
    %c0_410 = arith.constant 0 : index
    %c128_411 = arith.constant 128 : index
    %155 = vector.load %arg6[%c0_408, %c0_409, %c0_410, %c128_411] : memref<1x16x16x144xf32, #tpu.memory_space<vmem>>, vector<1x16x16x16xf32>
    tpu.vector_store %arg6[%c0_408, %c0_409, %c0_410, %c128_411], %154 {strides = array<i32>} : memref<1x16x16x144xf32, #tpu.memory_space<vmem>>, vector<1x16x16x16xf32>,
    %c0_412 = arith.constant 0 : index
    %c0_413 = arith.constant 0 : index
    %c0_414 = arith.constant 0 : index
    %c0_415 = arith.constant 0 : index
    %156 = vector.load %arg6[%c0_412, %c0_413, %c0_414, %c0_415] : memref<1x16x16x144xf32, #tpu.memory_space<vmem>>, vector<1x16x16x144xf32>
    %157 = vector.shape_cast %156 : vector<1x16x16x144xf32> to vector<256x144xf32>
    %c184 = arith.constant 184 : index
    %c0_416 = arith.constant 0 : index
    %158 = vector.load %arg2[%c184, %c0_416] : memref<360x32xf32, #tpu.memory_space<vmem>>, vector<144x16xf32>
    %cst_417 = arith.constant dense<0.000000e+00> : vector<256x16xf32>
    %159 = tpu.matmul %157, %158, %cst_417 {dimension_numbers = #tpu.dot_dimension_numbers<[1], [0], [0], [1], [0, 0, 1, 1], [], []>} : vector<256x144xf32>, vector<144x16xf32>, vector<256x16xf32> -> vector<256x16xf32>
    %c0_418 = arith.constant 0 : index
    %c384 = arith.constant 384 : index
    %160 = vector.load %arg3[%c0_418, %c384] : memref<1x640xf32, #tpu.memory_space<vmem>>, vector<1x16xf32>
    %161 = vector.broadcast %160 : vector<1x16xf32> to vector<256x16xf32>
    %162 = arith.addf %159, %161 : vector<256x16xf32>
    %cst_419 = arith.constant 0.000000e+00 : f32
    %163 = vector.broadcast %cst_419 : f32 to vector<256x16xf32>
    %164 = arith.maximumf %162, %163 : vector<256x16xf32>
    %c0_420 = arith.constant 0 : index
    %c16_421 = arith.constant 16 : index
    %165 = vector.load %arg7[%c0_420, %c16_421] : memref<256x32xf32, #tpu.memory_space<vmem>>, vector<256x16xf32>
    tpu.vector_store %arg7[%c0_420, %c16_421], %164 {strides = array<i32>} : memref<256x32xf32, #tpu.memory_space<vmem>>, vector<256x16xf32>,
    %c0_422 = arith.constant 0 : index
    %c0_423 = arith.constant 0 : index
    %166 = vector.load %arg7[%c0_422, %c0_423] : memref<256x32xf32, #tpu.memory_space<vmem>>, vector<256x32xf32>
    %c328 = arith.constant 328 : index
    %c0_424 = arith.constant 0 : index
    %167 = vector.load %arg2[%c328, %c0_424] : memref<360x32xf32, #tpu.memory_space<vmem>>, vector<32x32xf32>
    %cst_425 = arith.constant dense<0.000000e+00> : vector<256x32xf32>
    %168 = tpu.matmul %166, %167, %cst_425 {dimension_numbers = #tpu.dot_dimension_numbers<[1], [0], [0], [1], [0, 0, 1, 1], [], []>} : vector<256x32xf32>, vector<32x32xf32>, vector<256x32xf32> -> vector<256x32xf32>
    %c0_426 = arith.constant 0 : index
    %c512 = arith.constant 512 : index
    %169 = vector.load %arg3[%c0_426, %c512] : memref<1x640xf32, #tpu.memory_space<vmem>>, vector<1x32xf32>
    %170 = vector.broadcast %169 : vector<1x32xf32> to vector<256x32xf32>
    %171 = arith.addf %168, %170 : vector<256x32xf32>
    %cst_427 = arith.constant 0.000000e+00 : f32
    %172 = vector.broadcast %cst_427 : f32 to vector<256x32xf32>
    %173 = arith.maximumf %171, %172 : vector<256x32xf32>
    %174 = vector.shape_cast %173 : vector<256x32xf32> to vector<1x256x32xf32>
    %175 = tpu.transpose %174, [0, 2, 1] : vector<1x256x32xf32> -> vector<1x32x256xf32>
    %c0_428 = arith.constant 0 : index
    %c0_429 = arith.constant 0 : index
    %c0_430 = arith.constant 0 : index
    %176 = vector.load %arg4[%c0_428, %c0_429, %c0_430] : memref<1x32x256xf32, #tpu.memory_space<vmem>>, vector<1x32x256xf32>
    tpu.vector_store %arg4[%c0_428, %c0_429, %c0_430], %175 {strides = array<i32>} : memref<1x32x256xf32, #tpu.memory_space<vmem>>, vector<1x32x256xf32>,
    return
  }
  func.func @transform_0(%arg0: i32) -> (i32, i32, i32, i32) {
    %c0_i32 = arith.constant 0 : i32
    %c0_i32_0 = arith.constant 0 : i32
    %c0_i32_1 = arith.constant 0 : i32
    %c0_i32_2 = arith.constant 0 : i32
    return %arg0, %c0_i32, %c0_i32_0, %c0_i32_1 : i32, i32, i32, i32
  }
  func.func @transform_1(%arg0: i32) -> (i32, i32) {
    %c0_i32 = arith.constant 0 : i32
    %c0_i32_0 = arith.constant 0 : i32
    %c0_i32_1 = arith.constant 0 : i32
    return %c0_i32, %c0_i32_0 : i32, i32
  }
  func.func @transform_2(%arg0: i32) -> (i32, i32) {
    %c0_i32 = arith.constant 0 : i32
    %c0_i32_0 = arith.constant 0 : i32
    %c0_i32_1 = arith.constant 0 : i32
    return %c0_i32, %c0_i32_0 : i32, i32
  }
  func.func @transform_3(%arg0: i32) -> (i32, i32, i32) {
    %c0_i32 = arith.constant 0 : i32
    %c0_i32_0 = arith.constant 0 : i32
    %c0_i32_1 = arith.constant 0 : i32
    return %arg0, %c0_i32, %c0_i32_0 : i32, i32, i32
  }
}

</mosaic_0001>

<llo_original>
// kernel: tpu_custom_call.1
$region0: #{tpu_custom_call.1}
  #allocation0 [shape = 'u32[]', space=smem, size = 0x4, offset = 0x4, fixed_abs, tag = 'smem constant byte address 0x4 - core index']
  #allocation1 [shape = 'u32[144,128]{1,0:T(1,128)}', space=vmem, size = 0x12000, scoped, tag = 'internal scratch']
  #allocation2 [shape = 'f32[1,24,24,16]{3,2,1,0:T(8,128)}', space=vmem, size = 0x48000, scoped, tag = 'scratch operand']
  #allocation3 [shape = 'f32[1,16,16,144]{3,2,1,0:T(8,128)}', space=vmem, size = 0x40000, scoped, tag = 'scratch operand']
  #allocation4 [shape = 'f32[256,32]{1,0:T(8,128)}', space=vmem, size = 0x20000, scoped, tag = 'scratch operand']
  %s0 = inlined_call_operand.vmem [shape: f32[2,16,16,4], index: 0, kind: input, shape index: {}]
  %s1 = inlined_call_operand.vmem [shape: f32[360,32], index: 1, kind: input, shape index: {}]
  %s2 = inlined_call_operand.vmem [shape: f32[1,640], index: 2, kind: input, shape index: {}]
  %s3 = inlined_call_operand.hbm [shape: f32[2,32,256], index: 3, kind: output, shape index: {}]
  %s4 = sld [smem:[#allocation0]]
  $region45: #{tpu_custom_call.1} parent=0
    _
  %s6 = ssub.s32 1, %s4
  %s7 = scalar_select 0, %s6, %s4
  $region1: #{tpu_custom_call.1} parent=0
    #allocation5 [shape = 'u8[65536]{0}', space=vmem, size = 0x10000, scoped, tag = 'output window, operand 0']
    #allocation6 [shape = 's32[2]{0}', space=sflag, size = 0x8, scoped, tag = 'scoped memory for tpu_custom_call.1']
    %8 = vsyncpa [#allocation6], 0
    %s9 = scalar_lea.sflag [#allocation6], 1
    %10 = vsyncpa %s9, 0
    loop: start=0, step=1, limit=4
    $region2: #{tpu_custom_call.1} parent=1 // loop_pre_header
      _
    $region3: #{tpu_custom_call.1} parent=1 // loop_header
      %s12 = sphi 0, %s16
      %p13 = scmp.ge.s32.totalorder %s12, 4
      %s22 = sphi 0, %s24
      %s25 = sphi 0, %s22
      %s26 = sphi 0, %s25
      %s42 = sphi 0, %s26
      %s46 = sphi 0, %s46
      %s48 = sphi 0, %s46
      %s49 = sphi 0, %s48
      %s63 = sphi 0, %s49
      %s67 = sphi 0, %s67
      %s69 = sphi 0, %s67
      %s70 = sphi 0, %s69
      %s84 = sphi 0, %s70
      %s90 = sphi 0, %s92
      %s93 = sphi 0, %s90
      %s94 = sphi 0, %s93
      %s110 = sphi 0, %s94
    $region4: #{tpu_custom_call.1} parent=1 // loop_header_branch
      %15 = sbr.rel (%p13) target = $region8
    $region5: #{tpu_custom_call.1} parent=1 // loop_body
      %s17 = ssub.s32 %s12, 1
      %s18 = ssub.s32 %s12, 2
      %s19 = sadd.s32 %s12, 1
      %s20 = ssub.s32 %s12, %s19
      %p21 = scmp.eq.s32.totalorder %s20, 0
      %s23 = sadd.s32 %s22, 1
      %s24 = scalar_select %p21, %s22, %s23
      %p27 = pneg %p21
      %p28 = scmp.eq.s32.totalorder %s12, 1
      %p29 = por %p27, %p28
      %p30 = scmp.ne.s32.totalorder %s22, %s25
      %p31 = scmp.eq.s32.totalorder %s12, 0
      %p32 = por %p30, %p31
      %p33 = scmp.ne.s32.totalorder %s22, %s25
      %p34 = scmp.eq.s32.totalorder %s17, 1
      %p35 = por %p33, %p34
      %p36 = scmp.ne.s32.totalorder %s25, %s26
      %p37 = scmp.eq.s32.totalorder %s17, 0
      %p38 = por %p36, %p37
      %p39 = scmp.ne.s32.totalorder %s25, %s26
      %p40 = scmp.eq.s32.totalorder %s18, 1
      %p41 = por %p39, %p40
      %p43 = scmp.ne.s32.totalorder %s26, %s42
      %p44 = scmp.eq.s32.totalorder %s18, 0
      %p45 = por %p43, %p44
      %s47 = sadd.s32 %s46, 1
      %p50 = scmp.eq.s32.totalorder %s12, 1
      %p51 = scmp.ne.s32.totalorder %s46, %s48
      %p52 = scmp.eq.s32.totalorder %s12, 0
      %p53 = por %p51, %p52
      %p54 = scmp.ne.s32.totalorder %s46, %s48
      %p55 = scmp.eq.s32.totalorder %s17, 1
      %p56 = por %p54, %p55
      %p57 = scmp.ne.s32.totalorder %s48, %s49
      %p58 = scmp.eq.s32.totalorder %s17, 0
      %p59 = por %p57, %p58
      %p60 = scmp.ne.s32.totalorder %s48, %s49
      %p61 = scmp.eq.s32.totalorder %s18, 1
      %p62 = por %p60, %p61
      %p64 = scmp.ne.s32.totalorder %s49, %s63
      %p65 = scmp.eq.s32.totalorder %s18, 0
      %p66 = por %p64, %p65
      %s68 = sadd.s32 %s67, 1
      %p71 = scmp.eq.s32.totalorder %s12, 1
      %p72 = scmp.ne.s32.totalorder %s67, %s69
      %p73 = scmp.eq.s32.totalorder %s12, 0
      %p74 = por %p72, %p73
      %p75 = scmp.ne.s32.totalorder %s67, %s69
      %p76 = scmp.eq.s32.totalorder %s17, 1
      %p77 = por %p75, %p76
      %p78 = scmp.ne.s32.totalorder %s69, %s70
      %p79 = scmp.eq.s32.totalorder %s17, 0
      %p80 = por %p78, %p79
      %p81 = scmp.ne.s32.totalorder %s69, %s70
      %p82 = scmp.eq.s32.totalorder %s18, 1
      %p83 = por %p81, %p82
      %p85 = scmp.ne.s32.totalorder %s70, %s84
      %p86 = scmp.eq.s32.totalorder %s18, 0
      %p87 = por %p85, %p86
      %s88 = ssub.s32 %s12, %s19
      %p89 = scmp.eq.s32.totalorder %s88, 0
      %s91 = sadd.s32 %s90, 1
      %s92 = scalar_select %p89, %s90, %s91
      %p95 = pneg %p89
      %p96 = scmp.eq.s32.totalorder %s12, 1
      %p97 = por %p95, %p96
      %p98 = scmp.ne.s32.totalorder %s90, %s93
      %p99 = scmp.eq.s32.totalorder %s12, 0
      %p100 = por %p98, %p99
      %p101 = scmp.ne.s32.totalorder %s90, %s93
      %p102 = scmp.eq.s32.totalorder %s17, 1
      %p103 = por %p101, %p102
      %p104 = scmp.ne.s32.totalorder %s93, %s94
      %p105 = scmp.eq.s32.totalorder %s17, 0
      %p106 = por %p104, %p105
      %p107 = scmp.ne.s32.totalorder %s93, %s94
      %p108 = scmp.eq.s32.totalorder %s18, 1
      %p109 = por %p107, %p108
      %p111 = scmp.ne.s32.totalorder %s94, %s110
      %p112 = scmp.eq.s32.totalorder %s18, 0
      %p113 = por %p111, %p112
      %p114 = scmp.le.s32.totalorder 1, %s12
      %p115 = scmp.lt.s32.totalorder %s12, 3
      %p116 = pnand %p114, %p115
      %p117 = pneg %p116
      // Predicated region
      $region9: #{tpu_custom_call.1} parent=5 // pred_check
        _
      $region10: #{tpu_custom_call.1} parent=5 // pred_check_branch
        %119 = sbr.rel (%p116) target = $region12
      $region11: #{tpu_custom_call.1} parent=5 // pred_region
        %s120 = ssub.s32 %s12, 1
        // Predicated region
        $region13: #{tpu_custom_call.1} parent=11 // pred_check
          %p121 = pneg %p59
        $region14: #{tpu_custom_call.1} parent=11 // pred_check_branch
          %123 = sbr.rel (%p121) target = $region16
        $region15: #{tpu_custom_call.1} parent=11 // pred_region
          _
        $region16: #{tpu_custom_call.1} parent=11 // pred_fallthru
          _
        // Predicated region
        $region17: #{tpu_custom_call.1} parent=11 // pred_check
          %p124 = pneg %p80
        $region18: #{tpu_custom_call.1} parent=11 // pred_check_branch
          %126 = sbr.rel (%p124) target = $region20
        $region19: #{tpu_custom_call.1} parent=11 // pred_region
          _
        $region20: #{tpu_custom_call.1} parent=11 // pred_fallthru
          _
      $region12: #{tpu_custom_call.1} parent=5 // pred_fallthru
        _
      %p127 = scmp.lt.s32.totalorder %s12, 2
      // Predicated region
      $region21: #{tpu_custom_call.1} parent=5 // pred_check
        %p128 = pneg %p127
      $region22: #{tpu_custom_call.1} parent=5 // pred_check_branch
        %130 = sbr.rel (%p128) target = $region24
      $region23: #{tpu_custom_call.1} parent=5 // pred_region
        // Predicated region
        $region25: #{tpu_custom_call.1} parent=23 // pred_check
          %p131 = pneg %p32
        $region26: #{tpu_custom_call.1} parent=23 // pred_check_branch
          %133 = sbr.rel (%p131) target = $region28
        $region27: #{tpu_custom_call.1} parent=23 // pred_region
          %p134 = scmp.lt.s32.totalorder %s12, 1
          %s135 = scalar_select %p134, %s12, 1
          %s136 = smul.addr %s135, 32
          %s137 = smul.addr %s136, 8
          %s138 = scalar_lea.vmem %s0, %s137
        $region28: #{tpu_custom_call.1} parent=23 // pred_fallthru
          _
      $region24: #{tpu_custom_call.1} parent=5 // pred_fallthru
        _
      %p139 = scmp.le.s32.totalorder 1, %s12
      %p140 = scmp.lt.s32.totalorder %s12, 3
      %p141 = pnand %p139, %p140
      %p142 = pneg %p141
      // Predicated region
      $region29: #{tpu_custom_call.1} parent=5 // pred_check
        _
      $region30: #{tpu_custom_call.1} parent=5 // pred_check_branch
        %144 = sbr.rel (%p141) target = $region32
      $region31: #{tpu_custom_call.1} parent=5 // pred_region
        %s145 = ssub.s32 %s12, 1
        %p146 = scmp.lt.s32.totalorder %s17, 1
        %s147 = scalar_select %p146, %s17, 1
        %s148 = smul.addr %s147, 32
        %s149 = smul.addr %s148, 8
        %s150 = scalar_lea.vmem %s0, %s149
        %p151 = pneg %p38
        %p152 = pneg %p35
        %p153 = pneg %p59
        %p154 = pneg %p56
        %p155 = pneg %p80
        %p156 = pneg %p77
        %p157 = pneg %p106
        %p158 = pneg %p103
        %s159 = sand.u32 %s93, 1
        %s160 = scalar_lea.sflag [#allocation6], %s159
        %s161 = sand.u32 %s93, 1
        %s162 = smul.addr %s161, 64
        %s163 = scalar_lea.vmem [#allocation5], %s162
        %p164 = scmp.lt.s32.totalorder %s17, 1
        %s165 = scalar_select %p164, %s17, 1
        %s166 = smul.addr %s165, 32
        %s167 = smul.addr %s166, 8
        %s168 = scalar_lea.vmem %s0, %s167
        %v169 = vld [vmem:[%s168] sm:$0xff]
        %v170 = vld [vmem:[%s168 + $0x8] sm:$0xff]
        %v171 = vld [vmem:[%s168 + $0x10] sm:$0xff]
        %v172 = vld [vmem:[%s168 + $0x18] sm:$0xff]
        %v173 = vld [vmem:[%s168 + $0x20] sm:$0xff]
        %v174 = vld [vmem:[%s168 + $0x28] sm:$0xff]
        %v175 = vld [vmem:[%s168 + $0x30] sm:$0xff]
        %v176 = vld [vmem:[%s168 + $0x38] sm:$0xff]
        %v177 = vld [vmem:[%s168 + $0x40] sm:$0xff]
        %v178 = vld [vmem:[%s168 + $0x48] sm:$0xff]
        %v179 = vld [vmem:[%s168 + $0x50] sm:$0xff]
        %v180 = vld [vmem:[%s168 + $0x58] sm:$0xff]
        %v181 = vld [vmem:[%s168 + $0x60] sm:$0xff]
        %v182 = vld [vmem:[%s168 + $0x68] sm:$0xff]
        %v183 = vld [vmem:[%s168 + $0x70] sm:$0xff]
        %v184 = vld [vmem:[%s168 + $0x78] sm:$0xff]
        %v185 = vld [vmem:[%s168 + $0x80] sm:$0xff]
        %v186 = vld [vmem:[%s168 + $0x88] sm:$0xff]
        %v187 = vld [vmem:[%s168 + $0x90] sm:$0xff]
        %v188 = vld [vmem:[%s168 + $0x98] sm:$0xff]
        %v189 = vld [vmem:[%s168 + $0xa0] sm:$0xff]
        %v190 = vld [vmem:[%s168 + $0xa8] sm:$0xff]
        %v191 = vld [vmem:[%s168 + $0xb0] sm:$0xff]
        %v192 = vld [vmem:[%s168 + $0xb8] sm:$0xff]
        %v193 = vld [vmem:[%s168 + $0xc0] sm:$0xff]
        %v194 = vld [vmem:[%s168 + $0xc8] sm:$0xff]
        %v195 = vld [vmem:[%s168 + $0xd0] sm:$0xff]
        %v196 = vld [vmem:[%s168 + $0xd8] sm:$0xff]
        %v197 = vld [vmem:[%s168 + $0xe0] sm:$0xff]
        %v198 = vld [vmem:[%s168 + $0xe8] sm:$0xff]
        %v199 = vld [vmem:[%s168 + $0xf0] sm:$0xff]
        %v200 = vld [vmem:[%s168 + $0xf8] sm:$0xff]
        %s201 = scalar_lea.vmem [#allocation2], 24
        %vm202 = vcmask 31744
        %203 = vst.msk [vmem:[%s201 + $0x1] sm:$0xff] %vm202, %v169
        %204 = vst.msk [vmem:[%s201 + $0x9] sm:$0xff] %vm202, %v170
        %205 = vst.msk [vmem:[%s201 + $0x19] sm:$0xff] %vm202, %v171
        %206 = vst.msk [vmem:[%s201 + $0x21] sm:$0xff] %vm202, %v172
        %207 = vst.msk [vmem:[%s201 + $0x31] sm:$0xff] %vm202, %v173
        %208 = vst.msk [vmem:[%s201 + $0x39] sm:$0xff] %vm202, %v174
        %209 = vst.msk [vmem:[%s201 + $0x49] sm:$0xff] %vm202, %v175
        %210 = vst.msk [vmem:[%s201 + $0x51] sm:$0xff] %vm202, %v176
        %211 = vst.msk [vmem:[%s201 + $0x61] sm:$0xff] %vm202, %v177
        %212 = vst.msk [vmem:[%s201 + $0x69] sm:$0xff] %vm202, %v178
        %213 = vst.msk [vmem:[%s201 + $0x79] sm:$0xff] %vm202, %v179
        %214 = vst.msk [vmem:[%s201 + $0x81] sm:$0xff] %vm202, %v180
        %215 = vst.msk [vmem:[%s201 + $0x91] sm:$0xff] %vm202, %v181
        %216 = vst.msk [vmem:[%s201 + $0x99] sm:$0xff] %vm202, %v182
        %217 = vst.msk [vmem:[%s201 + $0xa9] sm:$0xff] %vm202, %v183
        %218 = vst.msk [vmem:[%s201 + $0xb1] sm:$0xff] %vm202, %v184
        %219 = vst.msk [vmem:[%s201 + $0xc1] sm:$0xff] %vm202, %v185
        %220 = vst.msk [vmem:[%s201 + $0xc9] sm:$0xff] %vm202, %v186
        %221 = vst.msk [vmem:[%s201 + $0xd9] sm:$0xff] %vm202, %v187
        %222 = vst.msk [vmem:[%s201 + $0xe1] sm:$0xff] %vm202, %v188
        %223 = vst.msk [vmem:[%s201 + $0xf1] sm:$0xff] %vm202, %v189
        %224 = vst.msk [vmem:[%s201 + $0xf9] sm:$0xff] %vm202, %v190
        %225 = vst.msk [vmem:[%s201 + $0x109] sm:$0xff] %vm202, %v191
        %226 = vst.msk [vmem:[%s201 + $0x111] sm:$0xff] %vm202, %v192
        %227 = vst.msk [vmem:[%s201 + $0x121] sm:$0xff] %vm202, %v193
        %228 = vst.msk [vmem:[%s201 + $0x129] sm:$0xff] %vm202, %v194
        %229 = vst.msk [vmem:[%s201 + $0x139] sm:$0xff] %vm202, %v195
        %230 = vst.msk [vmem:[%s201 + $0x141] sm:$0xff] %vm202, %v196
        %231 = vst.msk [vmem:[%s201 + $0x151] sm:$0xff] %vm202, %v197
        %232 = vst.msk [vmem:[%s201 + $0x159] sm:$0xff] %vm202, %v198
        %233 = vst.msk [vmem:[%s201 + $0x169] sm:$0xff] %vm202, %v199
        %234 = vst.msk [vmem:[%s201 + $0x171] sm:$0xff] %vm202, %v200
        %vm235 = vcmask 24576
        %236 = vst.msk [vmem:[%s201] sm:$0x1] %vm235, %v169
        %237 = vst.msk [vmem:[%s201 + $0x18] sm:$0x1] %vm235, %v171
        %238 = vst.msk [vmem:[%s201 + $0x30] sm:$0x1] %vm235, %v173
        %239 = vst.msk [vmem:[%s201 + $0x48] sm:$0x1] %vm235, %v175
        %240 = vst.msk [vmem:[%s201 + $0x60] sm:$0x1] %vm235, %v177
        %241 = vst.msk [vmem:[%s201 + $0x78] sm:$0x1] %vm235, %v179
        %242 = vst.msk [vmem:[%s201 + $0x90] sm:$0x1] %vm235, %v181
        %243 = vst.msk [vmem:[%s201 + $0xa8] sm:$0x1] %vm235, %v183
        %244 = vst.msk [vmem:[%s201 + $0xc0] sm:$0x1] %vm235, %v185
        %245 = vst.msk [vmem:[%s201 + $0xd8] sm:$0x1] %vm235, %v187
        %246 = vst.msk [vmem:[%s201 + $0xf0] sm:$0x1] %vm235, %v189
        %247 = vst.msk [vmem:[%s201 + $0x108] sm:$0x1] %vm235, %v191
        %248 = vst.msk [vmem:[%s201 + $0x120] sm:$0x1] %vm235, %v193
        %249 = vst.msk [vmem:[%s201 + $0x138] sm:$0x1] %vm235, %v195
        %250 = vst.msk [vmem:[%s201 + $0x150] sm:$0x1] %vm235, %v197
        %251 = vst.msk [vmem:[%s201 + $0x168] sm:$0x1] %vm235, %v199
        %vm252 = vcmask 31751
        %253 = vst.msk [vmem:[%s201 + $0xa] sm:$0x80] %vm252, %v170
        %254 = vst.msk [vmem:[%s201 + $0x22] sm:$0x80] %vm252, %v172
        %255 = vst.msk [vmem:[%s201 + $0x3a] sm:$0x80] %vm252, %v174
        %256 = vst.msk [vmem:[%s201 + $0x52] sm:$0x80] %vm252, %v176
        %257 = vst.msk [vmem:[%s201 + $0x6a] sm:$0x80] %vm252, %v178
        %258 = vst.msk [vmem:[%s201 + $0x82] sm:$0x80] %vm252, %v180
        %259 = vst.msk [vmem:[%s201 + $0x9a] sm:$0x80] %vm252, %v182
        %260 = vst.msk [vmem:[%s201 + $0xb2] sm:$0x80] %vm252, %v184
        %261 = vst.msk [vmem:[%s201 + $0xca] sm:$0x80] %vm252, %v186
        %262 = vst.msk [vmem:[%s201 + $0xe2] sm:$0x80] %vm252, %v188
        %263 = vst.msk [vmem:[%s201 + $0xfa] sm:$0x80] %vm252, %v190
        %264 = vst.msk [vmem:[%s201 + $0x112] sm:$0x80] %vm252, %v192
        %265 = vst.msk [vmem:[%s201 + $0x12a] sm:$0x80] %vm252, %v194
        %266 = vst.msk [vmem:[%s201 + $0x142] sm:$0x80] %vm252, %v196
        %267 = vst.msk [vmem:[%s201 + $0x15a] sm:$0x80] %vm252, %v198
        %268 = vst.msk [vmem:[%s201 + $0x172] sm:$0x80] %vm252, %v200
        %v269 = vld [vmem:[%s201] sm:$0xff]
        %v270 = vld [vmem:[%s201 + $0x8] sm:$0xff]
        %v271 = vld [vmem:[%s201 + $0x10] sm:$0x3]
        %s272 = scalar_lea.vmem [#allocation2], 384
        %v273 = vld [vmem:[%s272] sm:$0xff]
        %v274 = vld [vmem:[%s272 + $0x8] sm:$0xff]
        %v275 = vld [vmem:[%s272 + $0x10] sm:$0x3]
        %276 = vst.msk [vmem:[#allocation2] sm:$0xff] %vm202, %v269
        %277 = vst.msk [vmem:[#allocation2 + $0x8] sm:$0xff] %vm202, %v270
        %vm278 = vcmask 25600
        %279 = vst.msk [vmem:[#allocation2 + $0x10] sm:$0x3] %vm278, %v271
        %s280 = scalar_lea.vmem [#allocation2], 408
        %281 = vst.msk [vmem:[%s280] sm:$0xff] %vm202, %v273
        %282 = vst.msk [vmem:[%s280 + $0x8] sm:$0xff] %vm202, %v274
        %283 = vst.msk [vmem:[%s280 + $0x10] sm:$0x3] %vm278, %v275
        %v284 = vld [vmem:[#allocation2] sm:$0xff]
        %v285 = vld [vmem:[#allocation2 + $0x8] sm:$0xff]
        %v286 = vld [vmem:[#allocation2 + $0x18] sm:$0xff]
        %v287 = vld [vmem:[#allocation2 + $0x20] sm:$0xff]
        %v288 = vld [vmem:[#allocation2 + $0x30] sm:$0xff]
        %v289 = vld [vmem:[#allocation2 + $0x38] sm:$0xff]
        %v290 = vld [vmem:[#allocation2 + $0x48] sm:$0xff]
        %v291 = vld [vmem:[#allocation2 + $0x50] sm:$0xff]
        %v292 = vld [vmem:[#allocation2 + $0x60] sm:$0xff]
        %v293 = vld [vmem:[#allocation2 + $0x68] sm:$0xff]
        %v294 = vld [vmem:[#allocation2 + $0x78] sm:$0xff]
        %v295 = vld [vmem:[#allocation2 + $0x80] sm:$0xff]
        %v296 = vld [vmem:[#allocation2 + $0x90] sm:$0xff]
        %v297 = vld [vmem:[#allocation2 + $0x98] sm:$0xff]
        %v298 = vld [vmem:[#allocation2 + $0xa8] sm:$0xff]
        %v299 = vld [vmem:[#allocation2 + $0xb0] sm:$0xff]
        %v300 = vld [vmem:[#allocation2 + $0xc0] sm:$0xff]
        %v301 = vld [vmem:[#allocation2 + $0xc8] sm:$0xff]
        %v302 = vld [vmem:[#allocation2 + $0xd8] sm:$0xff]
        %v303 = vld [vmem:[#allocation2 + $0xe0] sm:$0xff]
        %v304 = vld [vmem:[#allocation2 + $0xf0] sm:$0xff]
        %v305 = vld [vmem:[#allocation2 + $0xf8] sm:$0xff]
        %v306 = vld [vmem:[#allocation2 + $0x108] sm:$0xff]
        %v307 = vld [vmem:[#allocation2 + $0x110] sm:$0xff]
        %v308 = vld [vmem:[#allocation2 + $0x120] sm:$0xff]
        %v309 = vld [vmem:[#allocation2 + $0x128] sm:$0xff]
        %v310 = vld [vmem:[#allocation2 + $0x138] sm:$0xff]
        %v311 = vld [vmem:[#allocation2 + $0x140] sm:$0xff]
        %v312 = vld [vmem:[#allocation2 + $0x150] sm:$0xff]
        %v313 = vld [vmem:[#allocation2 + $0x158] sm:$0xff]
        %v314 = vld [vmem:[#allocation2 + $0x168] sm:$0xff]
        %v315 = vld [vmem:[#allocation2 + $0x170] sm:$0xff]
        %316 = vst.msk [vmem:[#allocation3] sm:$0xff] %vm202, %v284
        %317 = vst.msk [vmem:[#allocation3 + $0x10] sm:$0xff] %vm202, %v285
        %318 = vst.msk [vmem:[#allocation3 + $0x20] sm:$0xff] %vm202, %v286
        %319 = vst.msk [vmem:[#allocation3 + $0x30] sm:$0xff] %vm202, %v287
        %320 = vst.msk [vmem:[#allocation3 + $0x40] sm:$0xff] %vm202, %v288
        %321 = vst.msk [vmem:[#allocation3 + $0x50] sm:$0xff] %vm202, %v289
        %322 = vst.msk [vmem:[#allocation3 + $0x60] sm:$0xff] %vm202, %v290
        %323 = vst.msk [vmem:[#allocation3 + $0x70] sm:$0xff] %vm202, %v291
        %324 = vst.msk [vmem:[#allocation3 + $0x80] sm:$0xff] %vm202, %v292
        %325 = vst.msk [vmem:[#allocation3 + $0x90] sm:$0xff] %vm202, %v293
        %326 = vst.msk [vmem:[#allocation3 + $0xa0] sm:$0xff] %vm202, %v294
        %327 = vst.msk [vmem:[#allocation3 + $0xb0] sm:$0xff] %vm202, %v295
        %328 = vst.msk [vmem:[#allocation3 + $0xc0] sm:$0xff] %vm202, %v296
        %329 = vst.msk [vmem:[#allocation3 + $0xd0] sm:$0xff] %vm202, %v297
        %330 = vst.msk [vmem:[#allocation3 + $0xe0] sm:$0xff] %vm202, %v298
        %331 = vst.msk [vmem:[#allocation3 + $0xf0] sm:$0xff] %vm202, %v299
        %332 = vst.msk [vmem:[#allocation3 + $0x100] sm:$0xff] %vm202, %v300
        %333 = vst.msk [vmem:[#allocation3 + $0x110] sm:$0xff] %vm202, %v301
        %334 = vst.msk [vmem:[#allocation3 + $0x120] sm:$0xff] %vm202, %v302
        %335 = vst.msk [vmem:[#allocation3 + $0x130] sm:$0xff] %vm202, %v303
        %336 = vst.msk [vmem:[#allocation3 + $0x140] sm:$0xff] %vm202, %v304
        %337 = vst.msk [vmem:[#allocation3 + $0x150] sm:$0xff] %vm202, %v305
        %338 = vst.msk [vmem:[#allocation3 + $0x160] sm:$0xff] %vm202, %v306
        %339 = vst.msk [vmem:[#allocation3 + $0x170] sm:$0xff] %vm202, %v307
        %340 = vst.msk [vmem:[#allocation3 + $0x180] sm:$0xff] %vm202, %v308
        %341 = vst.msk [vmem:[#allocation3 + $0x190] sm:$0xff] %vm202, %v309
        %342 = vst.msk [vmem:[#allocation3 + $0x1a0] sm:$0xff] %vm202, %v310
        %343 = vst.msk [vmem:[#allocation3 + $0x1b0] sm:$0xff] %vm202, %v311
        %344 = vst.msk [vmem:[#allocation3 + $0x1c0] sm:$0xff] %vm202, %v312
        %345 = vst.msk [vmem:[#allocation3 + $0x1d0] sm:$0xff] %vm202, %v313
        %346 = vst.msk [vmem:[#allocation3 + $0x1e0] sm:$0xff] %vm202, %v314
        %347 = vst.msk [vmem:[#allocation3 + $0x1f0] sm:$0xff] %vm202, %v315
        %v348 = vld [vmem:[#allocation2 + $0x1] sm:$0xff]
        %v349 = vld [vmem:[#allocation2 + $0x9] sm:$0xff]
        %v350 = vld [vmem:[#allocation2 + $0x19] sm:$0xff]
        %v351 = vld [vmem:[#allocation2 + $0x21] sm:$0xff]
        %v352 = vld [vmem:[#allocation2 + $0x31] sm:$0xff]
        %v353 = vld [vmem:[#allocation2 + $0x39] sm:$0xff]
        %v354 = vld [vmem:[#allocation2 + $0x49] sm:$0xff]
        %v355 = vld [vmem:[#allocation2 + $0x51] sm:$0xff]
        %v356 = vld [vmem:[#allocation2 + $0x61] sm:$0xff]
        %v357 = vld [vmem:[#allocation2 + $0x69] sm:$0xff]
        %v358 = vld [vmem:[#allocation2 + $0x79] sm:$0xff]
        %v359 = vld [vmem:[#allocation2 + $0x81] sm:$0xff]
        %v360 = vld [vmem:[#allocation2 + $0x91] sm:$0xff]
        %v361 = vld [vmem:[#allocation2 + $0x99] sm:$0xff]
        %v362 = vld [vmem:[#allocation2 + $0xa9] sm:$0xff]
        %v363 = vld [vmem:[#allocation2 + $0xb1] sm:$0xff]
        %v364 = vld [vmem:[#allocation2 + $0xc1] sm:$0xff]
        %v365 = vld [vmem:[#allocation2 + $0xc9] sm:$0xff]
        %v366 = vld [vmem:[#allocation2 + $0xd9] sm:$0xff]
        %v367 = vld [vmem:[#allocation2 + $0xe1] sm:$0xff]
        %v368 = vld [vmem:[#allocation2 + $0xf1] sm:$0xff]
        %v369 = vld [vmem:[#allocation2 + $0xf9] sm:$0xff]
        %v370 = vld [vmem:[#allocation2 + $0x109] sm:$0xff]
        %v371 = vld [vmem:[#allocation2 + $0x111] sm:$0xff]
        %v372 = vld [vmem:[#allocation2 + $0x121] sm:$0xff]
        %v373 = vld [vmem:[#allocation2 + $0x129] sm:$0xff]
        %v374 = vld [vmem:[#allocation2 + $0x139] sm:$0xff]
        %v375 = vld [vmem:[#allocation2 + $0x141] sm:$0xff]
        %v376 = vld [vmem:[#allocation2 + $0x151] sm:$0xff]
        %v377 = vld [vmem:[#allocation2 + $0x159] sm:$0xff]
        %v378 = vld [vmem:[#allocation2 + $0x169] sm:$0xff]
        %v379 = vld [vmem:[#allocation2 + $0x171] sm:$0xff]
        %412 = vrot.lane.b32.xlu0 %v348, 4
        %v413 = vpop.permute.xlu0 %412
        %414 = vrot.lane.b32.xlu0 %v349, 4
        %v415 = vpop.permute.xlu0 %414
        %416 = vrot.lane.b32.xlu0 %v350, 4
        %v417 = vpop.permute.xlu0 %416
        %418 = vrot.lane.b32.xlu0 %v351, 4
        %v419 = vpop.permute.xlu0 %418
        %420 = vrot.lane.b32.xlu0 %v352, 4
        %v421 = vpop.permute.xlu0 %420
        %422 = vrot.lane.b32.xlu0 %v353, 4
        %v423 = vpop.permute.xlu0 %422
        %424 = vrot.lane.b32.xlu0 %v354, 4
        %v425 = vpop.permute.xlu0 %424
        %426 = vrot.lane.b32.xlu0 %v355, 4
        %v427 = vpop.permute.xlu0 %426
        %428 = vrot.lane.b32.xlu0 %v356, 4
        %v429 = vpop.permute.xlu0 %428
        %430 = vrot.lane.b32.xlu0 %v357, 4
        %v431 = vpop.permute.xlu0 %430
        %432 = vrot.lane.b32.xlu0 %v358, 4
        %v433 = vpop.permute.xlu0 %432
        %434 = vrot.lane.b32.xlu0 %v359, 4
        %v435 = vpop.permute.xlu0 %434
        %436 = vrot.lane.b32.xlu0 %v360, 4
        %v437 = vpop.permute.xlu0 %436
        %438 = vrot.lane.b32.xlu0 %v361, 4
        %v439 = vpop.permute.xlu0 %438
        %440 = vrot.lane.b32.xlu0 %v362, 4
        %v441 = vpop.permute.xlu0 %440
        %442 = vrot.lane.b32.xlu0 %v363, 4
        %v443 = vpop.permute.xlu0 %442
        %444 = vrot.lane.b32.xlu0 %v364, 4
        %v445 = vpop.permute.xlu0 %444
        %446 = vrot.lane.b32.xlu0 %v365, 4
        %v447 = vpop.permute.xlu0 %446
        %448 = vrot.lane.b32.xlu0 %v366, 4
        %v449 = vpop.permute.xlu0 %448
        %450 = vrot.lane.b32.xlu0 %v367, 4
        %v451 = vpop.permute.xlu0 %450
        %452 = vrot.lane.b32.xlu0 %v368, 4
        %v453 = vpop.permute.xlu0 %452
        %454 = vrot.lane.b32.xlu0 %v369, 4
        %v455 = vpop.permute.xlu0 %454
        %456 = vrot.lane.b32.xlu0 %v370, 4
        %v457 = vpop.permute.xlu0 %456
        %458 = vrot.lane.b32.xlu0 %v371, 4
        %v459 = vpop.permute.xlu0 %458
        %460 = vrot.lane.b32.xlu0 %v372, 4
        %v461 = vpop.permute.xlu0 %460
        %462 = vrot.lane.b32.xlu0 %v373, 4
        %v463 = vpop.permute.xlu0 %462
        %464 = vrot.lane.b32.xlu0 %v374, 4
        %v465 = vpop.permute.xlu0 %464
        %466 = vrot.lane.b32.xlu0 %v375, 4
        %v467 = vpop.permute.xlu0 %466
        %468 = vrot.lane.b32.xlu0 %v376, 4
        %v469 = vpop.permute.xlu0 %468
        %470 = vrot.lane.b32.xlu0 %v377, 4
        %v471 = vpop.permute.xlu0 %470
        %472 = vrot.lane.b32.xlu0 %v378, 4
        %v473 = vpop.permute.xlu0 %472
        %474 = vrot.lane.b32.xlu0 %v379, 4
        %v475 = vpop.permute.xlu0 %474
        %vm508 = vcmask 64544
        %509 = vst.msk [vmem:[#allocation3] sm:$0xff] %vm508, %v413
        %510 = vst.msk [vmem:[#allocation3 + $0x10] sm:$0xff] %vm508, %v415
        %511 = vst.msk [vmem:[#allocation3 + $0x20] sm:$0xff] %vm508, %v417
        %512 = vst.msk [vmem:[#allocation3 + $0x30] sm:$0xff] %vm508, %v419
        %513 = vst.msk [vmem:[#allocation3 + $0x40] sm:$0xff] %vm508, %v421
        %514 = vst.msk [vmem:[#allocation3 + $0x50] sm:$0xff] %vm508, %v423
        %515 = vst.msk [vmem:[#allocation3 + $0x60] sm:$0xff] %vm508, %v425
        %516 = vst.msk [vmem:[#allocation3 + $0x70] sm:$0xff] %vm508, %v427
        %517 = vst.msk [vmem:[#allocation3 + $0x80] sm:$0xff] %vm508, %v429
        %518 = vst.msk [vmem:[#allocation3 + $0x90] sm:$0xff] %vm508, %v431
        %519 = vst.msk [vmem:[#allocation3 + $0xa0] sm:$0xff] %vm508, %v433
        %520 = vst.msk [vmem:[#allocation3 + $0xb0] sm:$0xff] %vm508, %v435
        %521 = vst.msk [vmem:[#allocation3 + $0xc0] sm:$0xff] %vm508, %v437
        %522 = vst.msk [vmem:[#allocation3 + $0xd0] sm:$0xff] %vm508, %v439
        %523 = vst.msk [vmem:[#allocation3 + $0xe0] sm:$0xff] %vm508, %v441
        %524 = vst.msk [vmem:[#allocation3 + $0xf0] sm:$0xff] %vm508, %v443
        %525 = vst.msk [vmem:[#allocation3 + $0x100] sm:$0xff] %vm508, %v445
        %526 = vst.msk [vmem:[#allocation3 + $0x110] sm:$0xff] %vm508, %v447
        %527 = vst.msk [vmem:[#allocation3 + $0x120] sm:$0xff] %vm508, %v449
        %528 = vst.msk [vmem:[#allocation3 + $0x130] sm:$0xff] %vm508, %v451
        %529 = vst.msk [vmem:[#allocation3 + $0x140] sm:$0xff] %vm508, %v453
        %530 = vst.msk [vmem:[#allocation3 + $0x150] sm:$0xff] %vm508, %v455
        %531 = vst.msk [vmem:[#allocation3 + $0x160] sm:$0xff] %vm508, %v457
        %532 = vst.msk [vmem:[#allocation3 + $0x170] sm:$0xff] %vm508, %v459
        %533 = vst.msk [vmem:[#allocation3 + $0x180] sm:$0xff] %vm508, %v461
        %534 = vst.msk [vmem:[#allocation3 + $0x190] sm:$0xff] %vm508, %v463
        %535 = vst.msk [vmem:[#allocation3 + $0x1a0] sm:$0xff] %vm508, %v465
        %536 = vst.msk [vmem:[#allocation3 + $0x1b0] sm:$0xff] %vm508, %v467
        %537 = vst.msk [vmem:[#allocation3 + $0x1c0] sm:$0xff] %vm508, %v469
        %538 = vst.msk [vmem:[#allocation3 + $0x1d0] sm:$0xff] %vm508, %v471
        %539 = vst.msk [vmem:[#allocation3 + $0x1e0] sm:$0xff] %vm508, %v473
        %540 = vst.msk [vmem:[#allocation3 + $0x1f0] sm:$0xff] %vm508, %v475
        %v541 = vld [vmem:[#allocation2 + $0x2] sm:$0xff]
        %v542 = vld [vmem:[#allocation2 + $0xa] sm:$0xff]
        %v543 = vld [vmem:[#allocation2 + $0x1a] sm:$0xff]
        %v544 = vld [vmem:[#allocation2 + $0x22] sm:$0xff]
        %v545 = vld [vmem:[#allocation2 + $0x32] sm:$0xff]
        %v546 = vld [vmem:[#allocation2 + $0x3a] sm:$0xff]
        %v547 = vld [vmem:[#allocation2 + $0x4a] sm:$0xff]
        %v548 = vld [vmem:[#allocation2 + $0x52] sm:$0xff]
        %v549 = vld [vmem:[#allocation2 + $0x62] sm:$0xff]
        %v550 = vld [vmem:[#allocation2 + $0x6a] sm:$0xff]
        %v551 = vld [vmem:[#allocation2 + $0x7a] sm:$0xff]
        %v552 = vld [vmem:[#allocation2 + $0x82] sm:$0xff]
        %v553 = vld [vmem:[#allocation2 + $0x92] sm:$0xff]
        %v554 = vld [vmem:[#allocation2 + $0x9a] sm:$0xff]
        %v555 = vld [vmem:[#allocation2 + $0xaa] sm:$0xff]
        %v556 = vld [vmem:[#allocation2 + $0xb2] sm:$0xff]
        %v557 = vld [vmem:[#allocation2 + $0xc2] sm:$0xff]
        %v558 = vld [vmem:[#allocation2 + $0xca] sm:$0xff]
        %v559 = vld [vmem:[#allocation2 + $0xda] sm:$0xff]
        %v560 = vld [vmem:[#allocation2 + $0xe2] sm:$0xff]
        %v561 = vld [vmem:[#allocation2 + $0xf2] sm:$0xff]
        %v562 = vld [vmem:[#allocation2 + $0xfa] sm:$0xff]
        %v563 = vld [vmem:[#allocation2 + $0x10a] sm:$0xff]
        %v564 = vld [vmem:[#allocation2 + $0x112] sm:$0xff]
        %v565 = vld [vmem:[#allocation2 + $0x122] sm:$0xff]
        %v566 = vld [vmem:[#allocation2 + $0x12a] sm:$0xff]
        %v567 = vld [vmem:[#allocation2 + $0x13a] sm:$0xff]
        %v568 = vld [vmem:[#allocation2 + $0x142] sm:$0xff]
        %v569 = vld [vmem:[#allocation2 + $0x152] sm:$0xff]
        %v570 = vld [vmem:[#allocation2 + $0x15a] sm:$0xff]
        %v571 = vld [vmem:[#allocation2 + $0x16a] sm:$0xff]
        %v572 = vld [vmem:[#allocation2 + $0x172] sm:$0xff]
        %605 = vrot.lane.b32.xlu0 %v541, 8
        %v606 = vpop.permute.xlu0 %605
        %607 = vrot.lane.b32.xlu0 %v542, 8
        %v608 = vpop.permute.xlu0 %607
        %609 = vrot.lane.b32.xlu0 %v543, 8
        %v610 = vpop.permute.xlu0 %609
        %611 = vrot.lane.b32.xlu0 %v544, 8
        %v612 = vpop.permute.xlu0 %611
        %613 = vrot.lane.b32.xlu0 %v545, 8
        %v614 = vpop.permute.xlu0 %613
        %615 = vrot.lane.b32.xlu0 %v546, 8
        %v616 = vpop.permute.xlu0 %615
        %617 = vrot.lane.b32.xlu0 %v547, 8
        %v618 = vpop.permute.xlu0 %617
        %619 = vrot.lane.b32.xlu0 %v548, 8
        %v620 = vpop.permute.xlu0 %619
        %621 = vrot.lane.b32.xlu0 %v549, 8
        %v622 = vpop.permute.xlu0 %621
        %623 = vrot.lane.b32.xlu0 %v550, 8
        %v624 = vpop.permute.xlu0 %623
        %625 = vrot.lane.b32.xlu0 %v551, 8
        %v626 = vpop.permute.xlu0 %625
        %627 = vrot.lane.b32.xlu0 %v552, 8
        %v628 = vpop.permute.xlu0 %627
        %629 = vrot.lane.b32.xlu0 %v553, 8
        %v630 = vpop.permute.xlu0 %629
        %631 = vrot.lane.b32.xlu0 %v554, 8
        %v632 = vpop.permute.xlu0 %631
        %633 = vrot.lane.b32.xlu0 %v555, 8
        %v634 = vpop.permute.xlu0 %633
        %635 = vrot.lane.b32.xlu0 %v556, 8
        %v636 = vpop.permute.xlu0 %635
        %637 = vrot.lane.b32.xlu0 %v557, 8
        %v638 = vpop.permute.xlu0 %637
        %639 = vrot.lane.b32.xlu0 %v558, 8
        %v640 = vpop.permute.xlu0 %639
        %641 = vrot.lane.b32.xlu0 %v559, 8
        %v642 = vpop.permute.xlu0 %641
        %643 = vrot.lane.b32.xlu0 %v560, 8
        %v644 = vpop.permute.xlu0 %643
        %645 = vrot.lane.b32.xlu0 %v561, 8
        %v646 = vpop.permute.xlu0 %645
        %647 = vrot.lane.b32.xlu0 %v562, 8
        %v648 = vpop.permute.xlu0 %647
        %649 = vrot.lane.b32.xlu0 %v563, 8
        %v650 = vpop.permute.xlu0 %649
        %651 = vrot.lane.b32.xlu0 %v564, 8
        %v652 = vpop.permute.xlu0 %651
        %653 = vrot.lane.b32.xlu0 %v565, 8
        %v654 = vpop.permute.xlu0 %653
        %655 = vrot.lane.b32.xlu0 %v566, 8
        %v656 = vpop.permute.xlu0 %655
        %657 = vrot.lane.b32.xlu0 %v567, 8
        %v658 = vpop.permute.xlu0 %657
        %659 = vrot.lane.b32.xlu0 %v568, 8
        %v660 = vpop.permute.xlu0 %659
        %661 = vrot.lane.b32.xlu0 %v569, 8
        %v662 = vpop.permute.xlu0 %661
        %663 = vrot.lane.b32.xlu0 %v570, 8
        %v664 = vpop.permute.xlu0 %663
        %665 = vrot.lane.b32.xlu0 %v571, 8
        %v666 = vpop.permute.xlu0 %665
        %667 = vrot.lane.b32.xlu0 %v572, 8
        %v668 = vpop.permute.xlu0 %667
        %vm701 = vcmask 97344
        %702 = vst.msk [vmem:[#allocation3] sm:$0xff] %vm701, %v606
        %703 = vst.msk [vmem:[#allocation3 + $0x10] sm:$0xff] %vm701, %v608
        %704 = vst.msk [vmem:[#allocation3 + $0x20] sm:$0xff] %vm701, %v610
        %705 = vst.msk [vmem:[#allocation3 + $0x30] sm:$0xff] %vm701, %v612
        %706 = vst.msk [vmem:[#allocation3 + $0x40] sm:$0xff] %vm701, %v614
        %707 = vst.msk [vmem:[#allocation3 + $0x50] sm:$0xff] %vm701, %v616
        %708 = vst.msk [vmem:[#allocation3 + $0x60] sm:$0xff] %vm701, %v618
        %709 = vst.msk [vmem:[#allocation3 + $0x70] sm:$0xff] %vm701, %v620
        %710 = vst.msk [vmem:[#allocation3 + $0x80] sm:$0xff] %vm701, %v622
        %711 = vst.msk [vmem:[#allocation3 + $0x90] sm:$0xff] %vm701, %v624
        %712 = vst.msk [vmem:[#allocation3 + $0xa0] sm:$0xff] %vm701, %v626
        %713 = vst.msk [vmem:[#allocation3 + $0xb0] sm:$0xff] %vm701, %v628
        %714 = vst.msk [vmem:[#allocation3 + $0xc0] sm:$0xff] %vm701, %v630
        %715 = vst.msk [vmem:[#allocation3 + $0xd0] sm:$0xff] %vm701, %v632
        %716 = vst.msk [vmem:[#allocation3 + $0xe0] sm:$0xff] %vm701, %v634
        %717 = vst.msk [vmem:[#allocation3 + $0xf0] sm:$0xff] %vm701, %v636
        %718 = vst.msk [vmem:[#allocation3 + $0x100] sm:$0xff] %vm701, %v638
        %719 = vst.msk [vmem:[#allocation3 + $0x110] sm:$0xff] %vm701, %v640
        %720 = vst.msk [vmem:[#allocation3 + $0x120] sm:$0xff] %vm701, %v642
        %721 = vst.msk [vmem:[#allocation3 + $0x130] sm:$0xff] %vm701, %v644
        %722 = vst.msk [vmem:[#allocation3 + $0x140] sm:$0xff] %vm701, %v646
        %723 = vst.msk [vmem:[#allocation3 + $0x150] sm:$0xff] %vm701, %v648
        %724 = vst.msk [vmem:[#allocation3 + $0x160] sm:$0xff] %vm701, %v650
        %725 = vst.msk [vmem:[#allocation3 + $0x170] sm:$0xff] %vm701, %v652
        %726 = vst.msk [vmem:[#allocation3 + $0x180] sm:$0xff] %vm701, %v654
        %727 = vst.msk [vmem:[#allocation3 + $0x190] sm:$0xff] %vm701, %v656
        %728 = vst.msk [vmem:[#allocation3 + $0x1a0] sm:$0xff] %vm701, %v658
        %729 = vst.msk [vmem:[#allocation3 + $0x1b0] sm:$0xff] %vm701, %v660
        %730 = vst.msk [vmem:[#allocation3 + $0x1c0] sm:$0xff] %vm701, %v662
        %731 = vst.msk [vmem:[#allocation3 + $0x1d0] sm:$0xff] %vm701, %v664
        %732 = vst.msk [vmem:[#allocation3 + $0x1e0] sm:$0xff] %vm701, %v666
        %733 = vst.msk [vmem:[#allocation3 + $0x1f0] sm:$0xff] %vm701, %v668
        %v734 = vld [vmem:[%s201] sm:$0xff]
        %v735 = vld [vmem:[%s201 + $0x8] sm:$0xff]
        %v736 = vld [vmem:[%s201 + $0x18] sm:$0xff]
        %v737 = vld [vmem:[%s201 + $0x20] sm:$0xff]
        %v738 = vld [vmem:[%s201 + $0x30] sm:$0xff]
        %v739 = vld [vmem:[%s201 + $0x38] sm:$0xff]
        %v740 = vld [vmem:[%s201 + $0x48] sm:$0xff]
        %v741 = vld [vmem:[%s201 + $0x50] sm:$0xff]
        %v742 = vld [vmem:[%s201 + $0x60] sm:$0xff]
        %v743 = vld [vmem:[%s201 + $0x68] sm:$0xff]
        %v744 = vld [vmem:[%s201 + $0x78] sm:$0xff]
        %v745 = vld [vmem:[%s201 + $0x80] sm:$0xff]
        %v746 = vld [vmem:[%s201 + $0x90] sm:$0xff]
        %v747 = vld [vmem:[%s201 + $0x98] sm:$0xff]
        %v748 = vld [vmem:[%s201 + $0xa8] sm:$0xff]
        %v749 = vld [vmem:[%s201 + $0xb0] sm:$0xff]
        %v750 = vld [vmem:[%s201 + $0xc0] sm:$0xff]
        %v751 = vld [vmem:[%s201 + $0xc8] sm:$0xff]
        %v752 = vld [vmem:[%s201 + $0xd8] sm:$0xff]
        %v753 = vld [vmem:[%s201 + $0xe0] sm:$0xff]
        %v754 = vld [vmem:[%s201 + $0xf0] sm:$0xff]
        %v755 = vld [vmem:[%s201 + $0xf8] sm:$0xff]
        %v756 = vld [vmem:[%s201 + $0x108] sm:$0xff]
        %v757 = vld [vmem:[%s201 + $0x110] sm:$0xff]
        %v758 = vld [vmem:[%s201 + $0x120] sm:$0xff]
        %v759 = vld [vmem:[%s201 + $0x128] sm:$0xff]
        %v760 = vld [vmem:[%s201 + $0x138] sm:$0xff]
        %v761 = vld [vmem:[%s201 + $0x140] sm:$0xff]
        %v762 = vld [vmem:[%s201 + $0x150] sm:$0xff]
        %v763 = vld [vmem:[%s201 + $0x158] sm:$0xff]
        %v764 = vld [vmem:[%s201 + $0x168] sm:$0xff]
        %v765 = vld [vmem:[%s201 + $0x170] sm:$0xff]
        %798 = vrot.lane.b32.xlu0 %v734, 12
        %v799 = vpop.permute.xlu0 %798
        %800 = vrot.lane.b32.xlu0 %v735, 12
        %v801 = vpop.permute.xlu0 %800
        %802 = vrot.lane.b32.xlu0 %v736, 12
        %v803 = vpop.permute.xlu0 %802
        %804 = vrot.lane.b32.xlu0 %v737, 12
        %v805 = vpop.permute.xlu0 %804
        %806 = vrot.lane.b32.xlu0 %v738, 12
        %v807 = vpop.permute.xlu0 %806
        %808 = vrot.lane.b32.xlu0 %v739, 12
        %v809 = vpop.permute.xlu0 %808
        %810 = vrot.lane.b32.xlu0 %v740, 12
        %v811 = vpop.permute.xlu0 %810
        %812 = vrot.lane.b32.xlu0 %v741, 12
        %v813 = vpop.permute.xlu0 %812
        %814 = vrot.lane.b32.xlu0 %v742, 12
        %v815 = vpop.permute.xlu0 %814
        %816 = vrot.lane.b32.xlu0 %v743, 12
        %v817 = vpop.permute.xlu0 %816
        %818 = vrot.lane.b32.xlu0 %v744, 12
        %v819 = vpop.permute.xlu0 %818
        %820 = vrot.lane.b32.xlu0 %v745, 12
        %v821 = vpop.permute.xlu0 %820
        %822 = vrot.lane.b32.xlu0 %v746, 12
        %v823 = vpop.permute.xlu0 %822
        %824 = vrot.lane.b32.xlu0 %v747, 12
        %v825 = vpop.permute.xlu0 %824
        %826 = vrot.lane.b32.xlu0 %v748, 12
        %v827 = vpop.permute.xlu0 %826
        %828 = vrot.lane.b32.xlu0 %v749, 12
        %v829 = vpop.permute.xlu0 %828
        %830 = vrot.lane.b32.xlu0 %v750, 12
        %v831 = vpop.permute.xlu0 %830
        %832 = vrot.lane.b32.xlu0 %v751, 12
        %v833 = vpop.permute.xlu0 %832
        %834 = vrot.lane.b32.xlu0 %v752, 12
        %v835 = vpop.permute.xlu0 %834
        %836 = vrot.lane.b32.xlu0 %v753, 12
        %v837 = vpop.permute.xlu0 %836
        %838 = vrot.lane.b32.xlu0 %v754, 12
        %v839 = vpop.permute.xlu0 %838
        %840 = vrot.lane.b32.xlu0 %v755, 12
        %v841 = vpop.permute.xlu0 %840
        %842 = vrot.lane.b32.xlu0 %v756, 12
        %v843 = vpop.permute.xlu0 %842
        %844 = vrot.lane.b32.xlu0 %v757, 12
        %v845 = vpop.permute.xlu0 %844
        %846 = vrot.lane.b32.xlu0 %v758, 12
        %v847 = vpop.permute.xlu0 %846
        %848 = vrot.lane.b32.xlu0 %v759, 12
        %v849 = vpop.permute.xlu0 %848
        %850 = vrot.lane.b32.xlu0 %v760, 12
        %v851 = vpop.permute.xlu0 %850
        %852 = vrot.lane.b32.xlu0 %v761, 12
        %v853 = vpop.permute.xlu0 %852
        %854 = vrot.lane.b32.xlu0 %v762, 12
        %v855 = vpop.permute.xlu0 %854
        %856 = vrot.lane.b32.xlu0 %v763, 12
        %v857 = vpop.permute.xlu0 %856
        %858 = vrot.lane.b32.xlu0 %v764, 12
        %v859 = vpop.permute.xlu0 %858
        %860 = vrot.lane.b32.xlu0 %v765, 12
        %v861 = vpop.permute.xlu0 %860
        %vm894 = vcmask 130144
        %895 = vst.msk [vmem:[#allocation3] sm:$0xff] %vm894, %v799
        %896 = vst.msk [vmem:[#allocation3 + $0x10] sm:$0xff] %vm894, %v801
        %897 = vst.msk [vmem:[#allocation3 + $0x20] sm:$0xff] %vm894, %v803
        %898 = vst.msk [vmem:[#allocation3 + $0x30] sm:$0xff] %vm894, %v805
        %899 = vst.msk [vmem:[#allocation3 + $0x40] sm:$0xff] %vm894, %v807
        %900 = vst.msk [vmem:[#allocation3 + $0x50] sm:$0xff] %vm894, %v809
        %901 = vst.msk [vmem:[#allocation3 + $0x60] sm:$0xff] %vm894, %v811
        %902 = vst.msk [vmem:[#allocation3 + $0x70] sm:$0xff] %vm894, %v813
        %903 = vst.msk [vmem:[#allocation3 + $0x80] sm:$0xff] %vm894, %v815
        %904 = vst.msk [vmem:[#allocation3 + $0x90] sm:$0xff] %vm894, %v817
        %905 = vst.msk [vmem:[#allocation3 + $0xa0] sm:$0xff] %vm894, %v819
        %906 = vst.msk [vmem:[#allocation3 + $0xb0] sm:$0xff] %vm894, %v821
        %907 = vst.msk [vmem:[#allocation3 + $0xc0] sm:$0xff] %vm894, %v823
        %908 = vst.msk [vmem:[#allocation3 + $0xd0] sm:$0xff] %vm894, %v825
        %909 = vst.msk [vmem:[#allocation3 + $0xe0] sm:$0xff] %vm894, %v827
        %910 = vst.msk [vmem:[#allocation3 + $0xf0] sm:$0xff] %vm894, %v829
        %911 = vst.msk [vmem:[#allocation3 + $0x100] sm:$0xff] %vm894, %v831
        %912 = vst.msk [vmem:[#allocation3 + $0x110] sm:$0xff] %vm894, %v833
        %913 = vst.msk [vmem:[#allocation3 + $0x120] sm:$0xff] %vm894, %v835
        %914 = vst.msk [vmem:[#allocation3 + $0x130] sm:$0xff] %vm894, %v837
        %915 = vst.msk [vmem:[#allocation3 + $0x140] sm:$0xff] %vm894, %v839
        %916 = vst.msk [vmem:[#allocation3 + $0x150] sm:$0xff] %vm894, %v841
        %917 = vst.msk [vmem:[#allocation3 + $0x160] sm:$0xff] %vm894, %v843
        %918 = vst.msk [vmem:[#allocation3 + $0x170] sm:$0xff] %vm894, %v845
        %919 = vst.msk [vmem:[#allocation3 + $0x180] sm:$0xff] %vm894, %v847
        %920 = vst.msk [vmem:[#allocation3 + $0x190] sm:$0xff] %vm894, %v849
        %921 = vst.msk [vmem:[#allocation3 + $0x1a0] sm:$0xff] %vm894, %v851
        %922 = vst.msk [vmem:[#allocation3 + $0x1b0] sm:$0xff] %vm894, %v853
        %923 = vst.msk [vmem:[#allocation3 + $0x1c0] sm:$0xff] %vm894, %v855
        %924 = vst.msk [vmem:[#allocation3 + $0x1d0] sm:$0xff] %vm894, %v857
        %925 = vst.msk [vmem:[#allocation3 + $0x1e0] sm:$0xff] %vm894, %v859
        %926 = vst.msk [vmem:[#allocation3 + $0x1f0] sm:$0xff] %vm894, %v861
        %v927 = vld [vmem:[%s201 + $0x1] sm:$0xff]
        %v928 = vld [vmem:[%s201 + $0x9] sm:$0xff]
        %v929 = vld [vmem:[%s201 + $0x19] sm:$0xff]
        %v930 = vld [vmem:[%s201 + $0x21] sm:$0xff]
        %v931 = vld [vmem:[%s201 + $0x31] sm:$0xff]
        %v932 = vld [vmem:[%s201 + $0x39] sm:$0xff]
        %v933 = vld [vmem:[%s201 + $0x49] sm:$0xff]
        %v934 = vld [vmem:[%s201 + $0x51] sm:$0xff]
        %v935 = vld [vmem:[%s201 + $0x61] sm:$0xff]
        %v936 = vld [vmem:[%s201 + $0x69] sm:$0xff]
        %v937 = vld [vmem:[%s201 + $0x79] sm:$0xff]
        %v938 = vld [vmem:[%s201 + $0x81] sm:$0xff]
        %v939 = vld [vmem:[%s201 + $0x91] sm:$0xff]
        %v940 = vld [vmem:[%s201 + $0x99] sm:$0xff]
        %v941 = vld [vmem:[%s201 + $0xa9] sm:$0xff]
        %v942 = vld [vmem:[%s201 + $0xb1] sm:$0xff]
        %v943 = vld [vmem:[%s201 + $0xc1] sm:$0xff]
        %v944 = vld [vmem:[%s201 + $0xc9] sm:$0xff]
        %v945 = vld [vmem:[%s201 + $0xd9] sm:$0xff]
        %v946 = vld [vmem:[%s201 + $0xe1] sm:$0xff]
        %v947 = vld [vmem:[%s201 + $0xf1] sm:$0xff]
        %v948 = vld [vmem:[%s201 + $0xf9] sm:$0xff]
        %v949 = vld [vmem:[%s201 + $0x109] sm:$0xff]
        %v950 = vld [vmem:[%s201 + $0x111] sm:$0xff]
        %v951 = vld [vmem:[%s201 + $0x121] sm:$0xff]
        %v952 = vld [vmem:[%s201 + $0x129] sm:$0xff]
        %v953 = vld [vmem:[%s201 + $0x139] sm:$0xff]
        %v954 = vld [vmem:[%s201 + $0x141] sm:$0xff]
        %v955 = vld [vmem:[%s201 + $0x151] sm:$0xff]
        %v956 = vld [vmem:[%s201 + $0x159] sm:$0xff]
        %v957 = vld [vmem:[%s201 + $0x169] sm:$0xff]
        %v958 = vld [vmem:[%s201 + $0x171] sm:$0xff]
        %991 = vrot.lane.b32.xlu0 %v927, 16
        %v992 = vpop.permute.xlu0 %991
        %993 = vrot.lane.b32.xlu0 %v928, 16
        %v994 = vpop.permute.xlu0 %993
        %995 = vrot.lane.b32.xlu0 %v929, 16
        %v996 = vpop.permute.xlu0 %995
        %997 = vrot.lane.b32.xlu0 %v930, 16
        %v998 = vpop.permute.xlu0 %997
        %999 = vrot.lane.b32.xlu0 %v931, 16
        %v1000 = vpop.permute.xlu0 %999
        %1001 = vrot.lane.b32.xlu0 %v932, 16
        %v1002 = vpop.permute.xlu0 %1001
        %1003 = vrot.lane.b32.xlu0 %v933, 16
        %v1004 = vpop.permute.xlu0 %1003
        %1005 = vrot.lane.b32.xlu0 %v934, 16
        %v1006 = vpop.permute.xlu0 %1005
        %1007 = vrot.lane.b32.xlu0 %v935, 16
        %v1008 = vpop.permute.xlu0 %1007
        %1009 = vrot.lane.b32.xlu0 %v936, 16
        %v1010 = vpop.permute.xlu0 %1009
        %1011 = vrot.lane.b32.xlu0 %v937, 16
        %v1012 = vpop.permute.xlu0 %1011
        %1013 = vrot.lane.b32.xlu0 %v938, 16
        %v1014 = vpop.permute.xlu0 %1013
        %1015 = vrot.lane.b32.xlu0 %v939, 16
        %v1016 = vpop.permute.xlu0 %1015
        %1017 = vrot.lane.b32.xlu0 %v940, 16
        %v1018 = vpop.permute.xlu0 %1017
        %1019 = vrot.lane.b32.xlu0 %v941, 16
        %v1020 = vpop.permute.xlu0 %1019
        %1021 = vrot.lane.b32.xlu0 %v942, 16
        %v1022 = vpop.permute.xlu0 %1021
        %1023 = vrot.lane.b32.xlu0 %v943, 16
        %v1024 = vpop.permute.xlu0 %1023
        %1025 = vrot.lane.b32.xlu0 %v944, 16
        %v1026 = vpop.permute.xlu0 %1025
        %1027 = vrot.lane.b32.xlu0 %v945, 16
        %v1028 = vpop.permute.xlu0 %1027
        %1029 = vrot.lane.b32.xlu0 %v946, 16
        %v1030 = vpop.permute.xlu0 %1029
        %1031 = vrot.lane.b32.xlu0 %v947, 16
        %v1032 = vpop.permute.xlu0 %1031
        %1033 = vrot.lane.b32.xlu0 %v948, 16
        %v1034 = vpop.permute.xlu0 %1033
        %1035 = vrot.lane.b32.xlu0 %v949, 16
        %v1036 = vpop.permute.xlu0 %1035
        %1037 = vrot.lane.b32.xlu0 %v950, 16
        %v1038 = vpop.permute.xlu0 %1037
        %1039 = vrot.lane.b32.xlu0 %v951, 16
        %v1040 = vpop.permute.xlu0 %1039
        %1041 = vrot.lane.b32.xlu0 %v952, 16
        %v1042 = vpop.permute.xlu0 %1041
        %1043 = vrot.lane.b32.xlu0 %v953, 16
        %v1044 = vpop.permute.xlu0 %1043
        %1045 = vrot.lane.b32.xlu0 %v954, 16
        %v1046 = vpop.permute.xlu0 %1045
        %1047 = vrot.lane.b32.xlu0 %v955, 16
        %v1048 = vpop.permute.xlu0 %1047
        %1049 = vrot.lane.b32.xlu0 %v956, 16
        %v1050 = vpop.permute.xlu0 %1049
        %1051 = vrot.lane.b32.xlu0 %v957, 16
        %v1052 = vpop.permute.xlu0 %1051
        %1053 = vrot.lane.b32.xlu0 %v958, 16
        %v1054 = vpop.permute.xlu0 %1053
        %vm1087 = vcmask 162944
        %1088 = vst.msk [vmem:[#allocation3] sm:$0xff] %vm1087, %v992
        %1089 = vst.msk [vmem:[#allocation3 + $0x10] sm:$0xff] %vm1087, %v994
        %1090 = vst.msk [vmem:[#allocation3 + $0x20] sm:$0xff] %vm1087, %v996
        %1091 = vst.msk [vmem:[#allocation3 + $0x30] sm:$0xff] %vm1087, %v998
        %1092 = vst.msk [vmem:[#allocation3 + $0x40] sm:$0xff] %vm1087, %v1000
        %1093 = vst.msk [vmem:[#allocation3 + $0x50] sm:$0xff] %vm1087, %v1002
        %1094 = vst.msk [vmem:[#allocation3 + $0x60] sm:$0xff] %vm1087, %v1004
        %1095 = vst.msk [vmem:[#allocation3 + $0x70] sm:$0xff] %vm1087, %v1006
        %1096 = vst.msk [vmem:[#allocation3 + $0x80] sm:$0xff] %vm1087, %v1008
        %1097 = vst.msk [vmem:[#allocation3 + $0x90] sm:$0xff] %vm1087, %v1010
        %1098 = vst.msk [vmem:[#allocation3 + $0xa0] sm:$0xff] %vm1087, %v1012
        %1099 = vst.msk [vmem:[#allocation3 + $0xb0] sm:$0xff] %vm1087, %v1014
        %1100 = vst.msk [vmem:[#allocation3 + $0xc0] sm:$0xff] %vm1087, %v1016
        %1101 = vst.msk [vmem:[#allocation3 + $0xd0] sm:$0xff] %vm1087, %v1018
        %1102 = vst.msk [vmem:[#allocation3 + $0xe0] sm:$0xff] %vm1087, %v1020
        %1103 = vst.msk [vmem:[#allocation3 + $0xf0] sm:$0xff] %vm1087, %v1022
        %1104 = vst.msk [vmem:[#allocation3 + $0x100] sm:$0xff] %vm1087, %v1024
        %1105 = vst.msk [vmem:[#allocation3 + $0x110] sm:$0xff] %vm1087, %v1026
        %1106 = vst.msk [vmem:[#allocation3 + $0x120] sm:$0xff] %vm1087, %v1028
        %1107 = vst.msk [vmem:[#allocation3 + $0x130] sm:$0xff] %vm1087, %v1030
        %1108 = vst.msk [vmem:[#allocation3 + $0x140] sm:$0xff] %vm1087, %v1032
        %1109 = vst.msk [vmem:[#allocation3 + $0x150] sm:$0xff] %vm1087, %v1034
        %1110 = vst.msk [vmem:[#allocation3 + $0x160] sm:$0xff] %vm1087, %v1036
        %1111 = vst.msk [vmem:[#allocation3 + $0x170] sm:$0xff] %vm1087, %v1038
        %1112 = vst.msk [vmem:[#allocation3 + $0x180] sm:$0xff] %vm1087, %v1040
        %1113 = vst.msk [vmem:[#allocation3 + $0x190] sm:$0xff] %vm1087, %v1042
        %1114 = vst.msk [vmem:[#allocation3 + $0x1a0] sm:$0xff] %vm1087, %v1044
        %1115 = vst.msk [vmem:[#allocation3 + $0x1b0] sm:$0xff] %vm1087, %v1046
        %1116 = vst.msk [vmem:[#allocation3 + $0x1c0] sm:$0xff] %vm1087, %v1048
        %1117 = vst.msk [vmem:[#allocation3 + $0x1d0] sm:$0xff] %vm1087, %v1050
        %1118 = vst.msk [vmem:[#allocation3 + $0x1e0] sm:$0xff] %vm1087, %v1052
        %1119 = vst.msk [vmem:[#allocation3 + $0x1f0] sm:$0xff] %vm1087, %v1054
        %v1120 = vld [vmem:[%s201 + $0x2] sm:$0xff]
        %v1121 = vld [vmem:[%s201 + $0xa] sm:$0xff]
        %v1122 = vld [vmem:[%s201 + $0x1a] sm:$0xff]
        %v1123 = vld [vmem:[%s201 + $0x22] sm:$0xff]
        %v1124 = vld [vmem:[%s201 + $0x32] sm:$0xff]
        %v1125 = vld [vmem:[%s201 + $0x3a] sm:$0xff]
        %v1126 = vld [vmem:[%s201 + $0x4a] sm:$0xff]
        %v1127 = vld [vmem:[%s201 + $0x52] sm:$0xff]
        %v1128 = vld [vmem:[%s201 + $0x62] sm:$0xff]
        %v1129 = vld [vmem:[%s201 + $0x6a] sm:$0xff]
        %v1130 = vld [vmem:[%s201 + $0x7a] sm:$0xff]
        %v1131 = vld [vmem:[%s201 + $0x82] sm:$0xff]
        %v1132 = vld [vmem:[%s201 + $0x92] sm:$0xff]
        %v1133 = vld [vmem:[%s201 + $0x9a] sm:$0xff]
        %v1134 = vld [vmem:[%s201 + $0xaa] sm:$0xff]
        %v1135 = vld [vmem:[%s201 + $0xb2] sm:$0xff]
        %v1136 = vld [vmem:[%s201 + $0xc2] sm:$0xff]
        %v1137 = vld [vmem:[%s201 + $0xca] sm:$0xff]
        %v1138 = vld [vmem:[%s201 + $0xda] sm:$0xff]
        %v1139 = vld [vmem:[%s201 + $0xe2] sm:$0xff]
        %v1140 = vld [vmem:[%s201 + $0xf2] sm:$0xff]
        %v1141 = vld [vmem:[%s201 + $0xfa] sm:$0xff]
        %v1142 = vld [vmem:[%s201 + $0x10a] sm:$0xff]
        %v1143 = vld [vmem:[%s201 + $0x112] sm:$0xff]
        %v1144 = vld [vmem:[%s201 + $0x122] sm:$0xff]
        %v1145 = vld [vmem:[%s201 + $0x12a] sm:$0xff]
        %v1146 = vld [vmem:[%s201 + $0x13a] sm:$0xff]
        %v1147 = vld [vmem:[%s201 + $0x142] sm:$0xff]
        %v1148 = vld [vmem:[%s201 + $0x152] sm:$0xff]
        %v1149 = vld [vmem:[%s201 + $0x15a] sm:$0xff]
        %v1150 = vld [vmem:[%s201 + $0x16a] sm:$0xff]
        %v1151 = vld [vmem:[%s201 + $0x172] sm:$0xff]
        %1184 = vrot.lane.b32.xlu0 %v1120, 20
        %v1185 = vpop.permute.xlu0 %1184
        %1186 = vrot.lane.b32.xlu0 %v1121, 20
        %v1187 = vpop.permute.xlu0 %1186
        %1188 = vrot.lane.b32.xlu0 %v1122, 20
        %v1189 = vpop.permute.xlu0 %1188
        %1190 = vrot.lane.b32.xlu0 %v1123, 20
        %v1191 = vpop.permute.xlu0 %1190
        %1192 = vrot.lane.b32.xlu0 %v1124, 20
        %v1193 = vpop.permute.xlu0 %1192
        %1194 = vrot.lane.b32.xlu0 %v1125, 20
        %v1195 = vpop.permute.xlu0 %1194
        %1196 = vrot.lane.b32.xlu0 %v1126, 20
        %v1197 = vpop.permute.xlu0 %1196
        %1198 = vrot.lane.b32.xlu0 %v1127, 20
        %v1199 = vpop.permute.xlu0 %1198
        %1200 = vrot.lane.b32.xlu0 %v1128, 20
        %v1201 = vpop.permute.xlu0 %1200
        %1202 = vrot.lane.b32.xlu0 %v1129, 20
        %v1203 = vpop.permute.xlu0 %1202
        %1204 = vrot.lane.b32.xlu0 %v1130, 20
        %v1205 = vpop.permute.xlu0 %1204
        %1206 = vrot.lane.b32.xlu0 %v1131, 20
        %v1207 = vpop.permute.xlu0 %1206
        %1208 = vrot.lane.b32.xlu0 %v1132, 20
        %v1209 = vpop.permute.xlu0 %1208
        %1210 = vrot.lane.b32.xlu0 %v1133, 20
        %v1211 = vpop.permute.xlu0 %1210
        %1212 = vrot.lane.b32.xlu0 %v1134, 20
        %v1213 = vpop.permute.xlu0 %1212
        %1214 = vrot.lane.b32.xlu0 %v1135, 20
        %v1215 = vpop.permute.xlu0 %1214
        %1216 = vrot.lane.b32.xlu0 %v1136, 20
        %v1217 = vpop.permute.xlu0 %1216
        %1218 = vrot.lane.b32.xlu0 %v1137, 20
        %v1219 = vpop.permute.xlu0 %1218
        %1220 = vrot.lane.b32.xlu0 %v1138, 20
        %v1221 = vpop.permute.xlu0 %1220
        %1222 = vrot.lane.b32.xlu0 %v1139, 20
        %v1223 = vpop.permute.xlu0 %1222
        %1224 = vrot.lane.b32.xlu0 %v1140, 20
        %v1225 = vpop.permute.xlu0 %1224
        %1226 = vrot.lane.b32.xlu0 %v1141, 20
        %v1227 = vpop.permute.xlu0 %1226
        %1228 = vrot.lane.b32.xlu0 %v1142, 20
        %v1229 = vpop.permute.xlu0 %1228
        %1230 = vrot.lane.b32.xlu0 %v1143, 20
        %v1231 = vpop.permute.xlu0 %1230
        %1232 = vrot.lane.b32.xlu0 %v1144, 20
        %v1233 = vpop.permute.xlu0 %1232
        %1234 = vrot.lane.b32.xlu0 %v1145, 20
        %v1235 = vpop.permute.xlu0 %1234
        %1236 = vrot.lane.b32.xlu0 %v1146, 20
        %v1237 = vpop.permute.xlu0 %1236
        %1238 = vrot.lane.b32.xlu0 %v1147, 20
        %v1239 = vpop.permute.xlu0 %1238
        %1240 = vrot.lane.b32.xlu0 %v1148, 20
        %v1241 = vpop.permute.xlu0 %1240
        %1242 = vrot.lane.b32.xlu0 %v1149, 20
        %v1243 = vpop.permute.xlu0 %1242
        %1244 = vrot.lane.b32.xlu0 %v1150, 20
        %v1245 = vpop.permute.xlu0 %1244
        %1246 = vrot.lane.b32.xlu0 %v1151, 20
        %v1247 = vpop.permute.xlu0 %1246
        %vm1280 = vcmask 195744
        %1281 = vst.msk [vmem:[#allocation3] sm:$0xff] %vm1280, %v1185
        %1282 = vst.msk [vmem:[#allocation3 + $0x10] sm:$0xff] %vm1280, %v1187
        %1283 = vst.msk [vmem:[#allocation3 + $0x20] sm:$0xff] %vm1280, %v1189
        %1284 = vst.msk [vmem:[#allocation3 + $0x30] sm:$0xff] %vm1280, %v1191
        %1285 = vst.msk [vmem:[#allocation3 + $0x40] sm:$0xff] %vm1280, %v1193
        %1286 = vst.msk [vmem:[#allocation3 + $0x50] sm:$0xff] %vm1280, %v1195
        %1287 = vst.msk [vmem:[#allocation3 + $0x60] sm:$0xff] %vm1280, %v1197
        %1288 = vst.msk [vmem:[#allocation3 + $0x70] sm:$0xff] %vm1280, %v1199
        %1289 = vst.msk [vmem:[#allocation3 + $0x80] sm:$0xff] %vm1280, %v1201
        %1290 = vst.msk [vmem:[#allocation3 + $0x90] sm:$0xff] %vm1280, %v1203
        %1291 = vst.msk [vmem:[#allocation3 + $0xa0] sm:$0xff] %vm1280, %v1205
        %1292 = vst.msk [vmem:[#allocation3 + $0xb0] sm:$0xff] %vm1280, %v1207
        %1293 = vst.msk [vmem:[#allocation3 + $0xc0] sm:$0xff] %vm1280, %v1209
        %1294 = vst.msk [vmem:[#allocation3 + $0xd0] sm:$0xff] %vm1280, %v1211
        %1295 = vst.msk [vmem:[#allocation3 + $0xe0] sm:$0xff] %vm1280, %v1213
        %1296 = vst.msk [vmem:[#allocation3 + $0xf0] sm:$0xff] %vm1280, %v1215
        %1297 = vst.msk [vmem:[#allocation3 + $0x100] sm:$0xff] %vm1280, %v1217
        %1298 = vst.msk [vmem:[#allocation3 + $0x110] sm:$0xff] %vm1280, %v1219
        %1299 = vst.msk [vmem:[#allocation3 + $0x120] sm:$0xff] %vm1280, %v1221
        %1300 = vst.msk [vmem:[#allocation3 + $0x130] sm:$0xff] %vm1280, %v1223
        %1301 = vst.msk [vmem:[#allocation3 + $0x140] sm:$0xff] %vm1280, %v1225
        %1302 = vst.msk [vmem:[#allocation3 + $0x150] sm:$0xff] %vm1280, %v1227
        %1303 = vst.msk [vmem:[#allocation3 + $0x160] sm:$0xff] %vm1280, %v1229
        %1304 = vst.msk [vmem:[#allocation3 + $0x170] sm:$0xff] %vm1280, %v1231
        %1305 = vst.msk [vmem:[#allocation3 + $0x180] sm:$0xff] %vm1280, %v1233
        %1306 = vst.msk [vmem:[#allocation3 + $0x190] sm:$0xff] %vm1280, %v1235
        %1307 = vst.msk [vmem:[#allocation3 + $0x1a0] sm:$0xff] %vm1280, %v1237
        %1308 = vst.msk [vmem:[#allocation3 + $0x1b0] sm:$0xff] %vm1280, %v1239
        %1309 = vst.msk [vmem:[#allocation3 + $0x1c0] sm:$0xff] %vm1280, %v1241
        %1310 = vst.msk [vmem:[#allocation3 + $0x1d0] sm:$0xff] %vm1280, %v1243
        %1311 = vst.msk [vmem:[#allocation3 + $0x1e0] sm:$0xff] %vm1280, %v1245
        %1312 = vst.msk [vmem:[#allocation3 + $0x1f0] sm:$0xff] %vm1280, %v1247
        %s1313 = scalar_lea.vmem [#allocation2], 48
        %v1314 = vld [vmem:[%s1313] sm:$0xff]
        %v1315 = vld [vmem:[%s1313 + $0x8] sm:$0xff]
        %v1316 = vld [vmem:[%s1313 + $0x18] sm:$0xff]
        %v1317 = vld [vmem:[%s1313 + $0x20] sm:$0xff]
        %v1318 = vld [vmem:[%s1313 + $0x30] sm:$0xff]
        %v1319 = vld [vmem:[%s1313 + $0x38] sm:$0xff]
        %v1320 = vld [vmem:[%s1313 + $0x48] sm:$0xff]
        %v1321 = vld [vmem:[%s1313 + $0x50] sm:$0xff]
        %v1322 = vld [vmem:[%s1313 + $0x60] sm:$0xff]
        %v1323 = vld [vmem:[%s1313 + $0x68] sm:$0xff]
        %v1324 = vld [vmem:[%s1313 + $0x78] sm:$0xff]
        %v1325 = vld [vmem:[%s1313 + $0x80] sm:$0xff]
        %v1326 = vld [vmem:[%s1313 + $0x90] sm:$0xff]
        %v1327 = vld [vmem:[%s1313 + $0x98] sm:$0xff]
        %v1328 = vld [vmem:[%s1313 + $0xa8] sm:$0xff]
        %v1329 = vld [vmem:[%s1313 + $0xb0] sm:$0xff]
        %v1330 = vld [vmem:[%s1313 + $0xc0] sm:$0xff]
        %v1331 = vld [vmem:[%s1313 + $0xc8] sm:$0xff]
        %v1332 = vld [vmem:[%s1313 + $0xd8] sm:$0xff]
        %v1333 = vld [vmem:[%s1313 + $0xe0] sm:$0xff]
        %v1334 = vld [vmem:[%s1313 + $0xf0] sm:$0xff]
        %v1335 = vld [vmem:[%s1313 + $0xf8] sm:$0xff]
        %v1336 = vld [vmem:[%s1313 + $0x108] sm:$0xff]
        %v1337 = vld [vmem:[%s1313 + $0x110] sm:$0xff]
        %v1338 = vld [vmem:[%s1313 + $0x120] sm:$0xff]
        %v1339 = vld [vmem:[%s1313 + $0x128] sm:$0xff]
        %v1340 = vld [vmem:[%s1313 + $0x138] sm:$0xff]
        %v1341 = vld [vmem:[%s1313 + $0x140] sm:$0xff]
        %v1342 = vld [vmem:[%s1313 + $0x150] sm:$0xff]
        %v1343 = vld [vmem:[%s1313 + $0x158] sm:$0xff]
        %v1344 = vld [vmem:[%s1313 + $0x168] sm:$0xff]
        %v1345 = vld [vmem:[%s1313 + $0x170] sm:$0xff]
        %1378 = vrot.lane.b32.xlu0 %v1314, 24
        %v1379 = vpop.permute.xlu0 %1378
        %1380 = vrot.lane.b32.xlu0 %v1315, 24
        %v1381 = vpop.permute.xlu0 %1380
        %1382 = vrot.lane.b32.xlu0 %v1316, 24
        %v1383 = vpop.permute.xlu0 %1382
        %1384 = vrot.lane.b32.xlu0 %v1317, 24
        %v1385 = vpop.permute.xlu0 %1384
        %1386 = vrot.lane.b32.xlu0 %v1318, 24
        %v1387 = vpop.permute.xlu0 %1386
        %1388 = vrot.lane.b32.xlu0 %v1319, 24
        %v1389 = vpop.permute.xlu0 %1388
        %1390 = vrot.lane.b32.xlu0 %v1320, 24
        %v1391 = vpop.permute.xlu0 %1390
        %1392 = vrot.lane.b32.xlu0 %v1321, 24
        %v1393 = vpop.permute.xlu0 %1392
        %1394 = vrot.lane.b32.xlu0 %v1322, 24
        %v1395 = vpop.permute.xlu0 %1394
        %1396 = vrot.lane.b32.xlu0 %v1323, 24
        %v1397 = vpop.permute.xlu0 %1396
        %1398 = vrot.lane.b32.xlu0 %v1324, 24
        %v1399 = vpop.permute.xlu0 %1398
        %1400 = vrot.lane.b32.xlu0 %v1325, 24
        %v1401 = vpop.permute.xlu0 %1400
        %1402 = vrot.lane.b32.xlu0 %v1326, 24
        %v1403 = vpop.permute.xlu0 %1402
        %1404 = vrot.lane.b32.xlu0 %v1327, 24
        %v1405 = vpop.permute.xlu0 %1404
        %1406 = vrot.lane.b32.xlu0 %v1328, 24
        %v1407 = vpop.permute.xlu0 %1406
        %1408 = vrot.lane.b32.xlu0 %v1329, 24
        %v1409 = vpop.permute.xlu0 %1408
        %1410 = vrot.lane.b32.xlu0 %v1330, 24
        %v1411 = vpop.permute.xlu0 %1410
        %1412 = vrot.lane.b32.xlu0 %v1331, 24
        %v1413 = vpop.permute.xlu0 %1412
        %1414 = vrot.lane.b32.xlu0 %v1332, 24
        %v1415 = vpop.permute.xlu0 %1414
        %1416 = vrot.lane.b32.xlu0 %v1333, 24
        %v1417 = vpop.permute.xlu0 %1416
        %1418 = vrot.lane.b32.xlu0 %v1334, 24
        %v1419 = vpop.permute.xlu0 %1418
        %1420 = vrot.lane.b32.xlu0 %v1335, 24
        %v1421 = vpop.permute.xlu0 %1420
        %1422 = vrot.lane.b32.xlu0 %v1336, 24
        %v1423 = vpop.permute.xlu0 %1422
        %1424 = vrot.lane.b32.xlu0 %v1337, 24
        %v1425 = vpop.permute.xlu0 %1424
        %1426 = vrot.lane.b32.xlu0 %v1338, 24
        %v1427 = vpop.permute.xlu0 %1426
        %1428 = vrot.lane.b32.xlu0 %v1339, 24
        %v1429 = vpop.permute.xlu0 %1428
        %1430 = vrot.lane.b32.xlu0 %v1340, 24
        %v1431 = vpop.permute.xlu0 %1430
        %1432 = vrot.lane.b32.xlu0 %v1341, 24
        %v1433 = vpop.permute.xlu0 %1432
        %1434 = vrot.lane.b32.xlu0 %v1342, 24
        %v1435 = vpop.permute.xlu0 %1434
        %1436 = vrot.lane.b32.xlu0 %v1343, 24
        %v1437 = vpop.permute.xlu0 %1436
        %1438 = vrot.lane.b32.xlu0 %v1344, 24
        %v1439 = vpop.permute.xlu0 %1438
        %1440 = vrot.lane.b32.xlu0 %v1345, 24
        %v1441 = vpop.permute.xlu0 %1440
        %vm1474 = vcmask 228544
        %1475 = vst.msk [vmem:[#allocation3] sm:$0xff] %vm1474, %v1379
        %1476 = vst.msk [vmem:[#allocation3 + $0x10] sm:$0xff] %vm1474, %v1381
        %1477 = vst.msk [vmem:[#allocation3 + $0x20] sm:$0xff] %vm1474, %v1383
        %1478 = vst.msk [vmem:[#allocation3 + $0x30] sm:$0xff] %vm1474, %v1385
        %1479 = vst.msk [vmem:[#allocation3 + $0x40] sm:$0xff] %vm1474, %v1387
        %1480 = vst.msk [vmem:[#allocation3 + $0x50] sm:$0xff] %vm1474, %v1389
        %1481 = vst.msk [vmem:[#allocation3 + $0x60] sm:$0xff] %vm1474, %v1391
        %1482 = vst.msk [vmem:[#allocation3 + $0x70] sm:$0xff] %vm1474, %v1393
        %1483 = vst.msk [vmem:[#allocation3 + $0x80] sm:$0xff] %vm1474, %v1395
        %1484 = vst.msk [vmem:[#allocation3 + $0x90] sm:$0xff] %vm1474, %v1397
        %1485 = vst.msk [vmem:[#allocation3 + $0xa0] sm:$0xff] %vm1474, %v1399
        %1486 = vst.msk [vmem:[#allocation3 + $0xb0] sm:$0xff] %vm1474, %v1401
        %1487 = vst.msk [vmem:[#allocation3 + $0xc0] sm:$0xff] %vm1474, %v1403
        %1488 = vst.msk [vmem:[#allocation3 + $0xd0] sm:$0xff] %vm1474, %v1405
        %1489 = vst.msk [vmem:[#allocation3 + $0xe0] sm:$0xff] %vm1474, %v1407
        %1490 = vst.msk [vmem:[#allocation3 + $0xf0] sm:$0xff] %vm1474, %v1409
        %1491 = vst.msk [vmem:[#allocation3 + $0x100] sm:$0xff] %vm1474, %v1411
        %1492 = vst.msk [vmem:[#allocation3 + $0x110] sm:$0xff] %vm1474, %v1413
        %1493 = vst.msk [vmem:[#allocation3 + $0x120] sm:$0xff] %vm1474, %v1415
        %1494 = vst.msk [vmem:[#allocation3 + $0x130] sm:$0xff] %vm1474, %v1417
        %1495 = vst.msk [vmem:[#allocation3 + $0x140] sm:$0xff] %vm1474, %v1419
        %1496 = vst.msk [vmem:[#allocation3 + $0x150] sm:$0xff] %vm1474, %v1421
        %1497 = vst.msk [vmem:[#allocation3 + $0x160] sm:$0xff] %vm1474, %v1423
        %1498 = vst.msk [vmem:[#allocation3 + $0x170] sm:$0xff] %vm1474, %v1425
        %1499 = vst.msk [vmem:[#allocation3 + $0x180] sm:$0xff] %vm1474, %v1427
        %1500 = vst.msk [vmem:[#allocation3 + $0x190] sm:$0xff] %vm1474, %v1429
        %1501 = vst.msk [vmem:[#allocation3 + $0x1a0] sm:$0xff] %vm1474, %v1431
        %1502 = vst.msk [vmem:[#allocation3 + $0x1b0] sm:$0xff] %vm1474, %v1433
        %1503 = vst.msk [vmem:[#allocation3 + $0x1c0] sm:$0xff] %vm1474, %v1435
        %1504 = vst.msk [vmem:[#allocation3 + $0x1d0] sm:$0xff] %vm1474, %v1437
        %1505 = vst.msk [vmem:[#allocation3 + $0x1e0] sm:$0xff] %vm1474, %v1439
        %1506 = vst.msk [vmem:[#allocation3 + $0x1f0] sm:$0xff] %vm1474, %v1441
        %v1507 = vld [vmem:[%s1313 + $0x1] sm:$0xff]
        %v1508 = vld [vmem:[%s1313 + $0x9] sm:$0xff]
        %v1509 = vld [vmem:[%s1313 + $0x19] sm:$0xff]
        %v1510 = vld [vmem:[%s1313 + $0x21] sm:$0xff]
        %v1511 = vld [vmem:[%s1313 + $0x31] sm:$0xff]
        %v1512 = vld [vmem:[%s1313 + $0x39] sm:$0xff]
        %v1513 = vld [vmem:[%s1313 + $0x49] sm:$0xff]
        %v1514 = vld [vmem:[%s1313 + $0x51] sm:$0xff]
        %v1515 = vld [vmem:[%s1313 + $0x61] sm:$0xff]
        %v1516 = vld [vmem:[%s1313 + $0x69] sm:$0xff]
        %v1517 = vld [vmem:[%s1313 + $0x79] sm:$0xff]
        %v1518 = vld [vmem:[%s1313 + $0x81] sm:$0xff]
        %v1519 = vld [vmem:[%s1313 + $0x91] sm:$0xff]
        %v1520 = vld [vmem:[%s1313 + $0x99] sm:$0xff]
        %v1521 = vld [vmem:[%s1313 + $0xa9] sm:$0xff]
        %v1522 = vld [vmem:[%s1313 + $0xb1] sm:$0xff]
        %v1523 = vld [vmem:[%s1313 + $0xc1] sm:$0xff]
        %v1524 = vld [vmem:[%s1313 + $0xc9] sm:$0xff]
        %v1525 = vld [vmem:[%s1313 + $0xd9] sm:$0xff]
        %v1526 = vld [vmem:[%s1313 + $0xe1] sm:$0xff]
        %v1527 = vld [vmem:[%s1313 + $0xf1] sm:$0xff]
        %v1528 = vld [vmem:[%s1313 + $0xf9] sm:$0xff]
        %v1529 = vld [vmem:[%s1313 + $0x109] sm:$0xff]
        %v1530 = vld [vmem:[%s1313 + $0x111] sm:$0xff]
        %v1531 = vld [vmem:[%s1313 + $0x121] sm:$0xff]
        %v1532 = vld [vmem:[%s1313 + $0x129] sm:$0xff]
        %v1533 = vld [vmem:[%s1313 + $0x139] sm:$0xff]
        %v1534 = vld [vmem:[%s1313 + $0x141] sm:$0xff]
        %v1535 = vld [vmem:[%s1313 + $0x151] sm:$0xff]
        %v1536 = vld [vmem:[%s1313 + $0x159] sm:$0xff]
        %v1537 = vld [vmem:[%s1313 + $0x169] sm:$0xff]
        %v1538 = vld [vmem:[%s1313 + $0x171] sm:$0xff]
        %1571 = vrot.lane.b32.xlu0 %v1507, 28
        %v1572 = vpop.permute.xlu0 %1571
        %1573 = vrot.lane.b32.xlu0 %v1508, 28
        %v1574 = vpop.permute.xlu0 %1573
        %1575 = vrot.lane.b32.xlu0 %v1509, 28
        %v1576 = vpop.permute.xlu0 %1575
        %1577 = vrot.lane.b32.xlu0 %v1510, 28
        %v1578 = vpop.permute.xlu0 %1577
        %1579 = vrot.lane.b32.xlu0 %v1511, 28
        %v1580 = vpop.permute.xlu0 %1579
        %1581 = vrot.lane.b32.xlu0 %v1512, 28
        %v1582 = vpop.permute.xlu0 %1581
        %1583 = vrot.lane.b32.xlu0 %v1513, 28
        %v1584 = vpop.permute.xlu0 %1583
        %1585 = vrot.lane.b32.xlu0 %v1514, 28
        %v1586 = vpop.permute.xlu0 %1585
        %1587 = vrot.lane.b32.xlu0 %v1515, 28
        %v1588 = vpop.permute.xlu0 %1587
        %1589 = vrot.lane.b32.xlu0 %v1516, 28
        %v1590 = vpop.permute.xlu0 %1589
        %1591 = vrot.lane.b32.xlu0 %v1517, 28
        %v1592 = vpop.permute.xlu0 %1591
        %1593 = vrot.lane.b32.xlu0 %v1518, 28
        %v1594 = vpop.permute.xlu0 %1593
        %1595 = vrot.lane.b32.xlu0 %v1519, 28
        %v1596 = vpop.permute.xlu0 %1595
        %1597 = vrot.lane.b32.xlu0 %v1520, 28
        %v1598 = vpop.permute.xlu0 %1597
        %1599 = vrot.lane.b32.xlu0 %v1521, 28
        %v1600 = vpop.permute.xlu0 %1599
        %1601 = vrot.lane.b32.xlu0 %v1522, 28
        %v1602 = vpop.permute.xlu0 %1601
        %1603 = vrot.lane.b32.xlu0 %v1523, 28
        %v1604 = vpop.permute.xlu0 %1603
        %1605 = vrot.lane.b32.xlu0 %v1524, 28
        %v1606 = vpop.permute.xlu0 %1605
        %1607 = vrot.lane.b32.xlu0 %v1525, 28
        %v1608 = vpop.permute.xlu0 %1607
        %1609 = vrot.lane.b32.xlu0 %v1526, 28
        %v1610 = vpop.permute.xlu0 %1609
        %1611 = vrot.lane.b32.xlu0 %v1527, 28
        %v1612 = vpop.permute.xlu0 %1611
        %1613 = vrot.lane.b32.xlu0 %v1528, 28
        %v1614 = vpop.permute.xlu0 %1613
        %1615 = vrot.lane.b32.xlu0 %v1529, 28
        %v1616 = vpop.permute.xlu0 %1615
        %1617 = vrot.lane.b32.xlu0 %v1530, 28
        %v1618 = vpop.permute.xlu0 %1617
        %1619 = vrot.lane.b32.xlu0 %v1531, 28
        %v1620 = vpop.permute.xlu0 %1619
        %1621 = vrot.lane.b32.xlu0 %v1532, 28
        %v1622 = vpop.permute.xlu0 %1621
        %1623 = vrot.lane.b32.xlu0 %v1533, 28
        %v1624 = vpop.permute.xlu0 %1623
        %1625 = vrot.lane.b32.xlu0 %v1534, 28
        %v1626 = vpop.permute.xlu0 %1625
        %1627 = vrot.lane.b32.xlu0 %v1535, 28
        %v1628 = vpop.permute.xlu0 %1627
        %1629 = vrot.lane.b32.xlu0 %v1536, 28
        %v1630 = vpop.permute.xlu0 %1629
        %1631 = vrot.lane.b32.xlu0 %v1537, 28
        %v1632 = vpop.permute.xlu0 %1631
        %1633 = vrot.lane.b32.xlu0 %v1538, 28
        %v1634 = vpop.permute.xlu0 %1633
        %vm1667 = vcmask 261344
        %1668 = vst.msk [vmem:[#allocation3] sm:$0xff] %vm1667, %v1572
        %1669 = vst.msk [vmem:[#allocation3 + $0x10] sm:$0xff] %vm1667, %v1574
        %1670 = vst.msk [vmem:[#allocation3 + $0x20] sm:$0xff] %vm1667, %v1576
        %1671 = vst.msk [vmem:[#allocation3 + $0x30] sm:$0xff] %vm1667, %v1578
        %1672 = vst.msk [vmem:[#allocation3 + $0x40] sm:$0xff] %vm1667, %v1580
        %1673 = vst.msk [vmem:[#allocation3 + $0x50] sm:$0xff] %vm1667, %v1582
        %1674 = vst.msk [vmem:[#allocation3 + $0x60] sm:$0xff] %vm1667, %v1584
        %1675 = vst.msk [vmem:[#allocation3 + $0x70] sm:$0xff] %vm1667, %v1586
        %1676 = vst.msk [vmem:[#allocation3 + $0x80] sm:$0xff] %vm1667, %v1588
        %1677 = vst.msk [vmem:[#allocation3 + $0x90] sm:$0xff] %vm1667, %v1590
        %1678 = vst.msk [vmem:[#allocation3 + $0xa0] sm:$0xff] %vm1667, %v1592
        %1679 = vst.msk [vmem:[#allocation3 + $0xb0] sm:$0xff] %vm1667, %v1594
        %1680 = vst.msk [vmem:[#allocation3 + $0xc0] sm:$0xff] %vm1667, %v1596
        %1681 = vst.msk [vmem:[#allocation3 + $0xd0] sm:$0xff] %vm1667, %v1598
        %1682 = vst.msk [vmem:[#allocation3 + $0xe0] sm:$0xff] %vm1667, %v1600
        %1683 = vst.msk [vmem:[#allocation3 + $0xf0] sm:$0xff] %vm1667, %v1602
        %1684 = vst.msk [vmem:[#allocation3 + $0x100] sm:$0xff] %vm1667, %v1604
        %1685 = vst.msk [vmem:[#allocation3 + $0x110] sm:$0xff] %vm1667, %v1606
        %1686 = vst.msk [vmem:[#allocation3 + $0x120] sm:$0xff] %vm1667, %v1608
        %1687 = vst.msk [vmem:[#allocation3 + $0x130] sm:$0xff] %vm1667, %v1610
        %1688 = vst.msk [vmem:[#allocation3 + $0x140] sm:$0xff] %vm1667, %v1612
        %1689 = vst.msk [vmem:[#allocation3 + $0x150] sm:$0xff] %vm1667, %v1614
        %1690 = vst.msk [vmem:[#allocation3 + $0x160] sm:$0xff] %vm1667, %v1616
        %1691 = vst.msk [vmem:[#allocation3 + $0x170] sm:$0xff] %vm1667, %v1618
        %1692 = vst.msk [vmem:[#allocation3 + $0x180] sm:$0xff] %vm1667, %v1620
        %1693 = vst.msk [vmem:[#allocation3 + $0x190] sm:$0xff] %vm1667, %v1622
        %1694 = vst.msk [vmem:[#allocation3 + $0x1a0] sm:$0xff] %vm1667, %v1624
        %1695 = vst.msk [vmem:[#allocation3 + $0x1b0] sm:$0xff] %vm1667, %v1626
        %1696 = vst.msk [vmem:[#allocation3 + $0x1c0] sm:$0xff] %vm1667, %v1628
        %1697 = vst.msk [vmem:[#allocation3 + $0x1d0] sm:$0xff] %vm1667, %v1630
        %1698 = vst.msk [vmem:[#allocation3 + $0x1e0] sm:$0xff] %vm1667, %v1632
        %1699 = vst.msk [vmem:[#allocation3 + $0x1f0] sm:$0xff] %vm1667, %v1634
        %v1700 = vld [vmem:[%s1313 + $0x2] sm:$0xff]
        %v1701 = vld [vmem:[%s1313 + $0xa] sm:$0xff]
        %v1702 = vld [vmem:[%s1313 + $0x1a] sm:$0xff]
        %v1703 = vld [vmem:[%s1313 + $0x22] sm:$0xff]
        %v1704 = vld [vmem:[%s1313 + $0x32] sm:$0xff]
        %v1705 = vld [vmem:[%s1313 + $0x3a] sm:$0xff]
        %v1706 = vld [vmem:[%s1313 + $0x4a] sm:$0xff]
        %v1707 = vld [vmem:[%s1313 + $0x52] sm:$0xff]
        %v1708 = vld [vmem:[%s1313 + $0x62] sm:$0xff]
        %v1709 = vld [vmem:[%s1313 + $0x6a] sm:$0xff]
        %v1710 = vld [vmem:[%s1313 + $0x7a] sm:$0xff]
        %v1711 = vld [vmem:[%s1313 + $0x82] sm:$0xff]
        %v1712 = vld [vmem:[%s1313 + $0x92] sm:$0xff]
        %v1713 = vld [vmem:[%s1313 + $0x9a] sm:$0xff]
        %v1714 = vld [vmem:[%s1313 + $0xaa] sm:$0xff]
        %v1715 = vld [vmem:[%s1313 + $0xb2] sm:$0xff]
        %v1716 = vld [vmem:[%s1313 + $0xc2] sm:$0xff]
        %v1717 = vld [vmem:[%s1313 + $0xca] sm:$0xff]
        %v1718 = vld [vmem:[%s1313 + $0xda] sm:$0xff]
        %v1719 = vld [vmem:[%s1313 + $0xe2] sm:$0xff]
        %v1720 = vld [vmem:[%s1313 + $0xf2] sm:$0xff]
        %v1721 = vld [vmem:[%s1313 + $0xfa] sm:$0xff]
        %v1722 = vld [vmem:[%s1313 + $0x10a] sm:$0xff]
        %v1723 = vld [vmem:[%s1313 + $0x112] sm:$0xff]
        %v1724 = vld [vmem:[%s1313 + $0x122] sm:$0xff]
        %v1725 = vld [vmem:[%s1313 + $0x12a] sm:$0xff]
        %v1726 = vld [vmem:[%s1313 + $0x13a] sm:$0xff]
        %v1727 = vld [vmem:[%s1313 + $0x142] sm:$0xff]
        %v1728 = vld [vmem:[%s1313 + $0x152] sm:$0xff]
        %v1729 = vld [vmem:[%s1313 + $0x15a] sm:$0xff]
        %v1730 = vld [vmem:[%s1313 + $0x16a] sm:$0xff]
        %v1731 = vld [vmem:[%s1313 + $0x172] sm:$0xff]
        %1764 = vrot.lane.b32.xlu0 %v1700, 32
        %v1765 = vpop.permute.xlu0 %1764
        %1766 = vrot.lane.b32.xlu0 %v1701, 32
        %v1767 = vpop.permute.xlu0 %1766
        %1768 = vrot.lane.b32.xlu0 %v1702, 32
        %v1769 = vpop.permute.xlu0 %1768
        %1770 = vrot.lane.b32.xlu0 %v1703, 32
        %v1771 = vpop.permute.xlu0 %1770
        %1772 = vrot.lane.b32.xlu0 %v1704, 32
        %v1773 = vpop.permute.xlu0 %1772
        %1774 = vrot.lane.b32.xlu0 %v1705, 32
        %v1775 = vpop.permute.xlu0 %1774
        %1776 = vrot.lane.b32.xlu0 %v1706, 32
        %v1777 = vpop.permute.xlu0 %1776
        %1778 = vrot.lane.b32.xlu0 %v1707, 32
        %v1779 = vpop.permute.xlu0 %1778
        %1780 = vrot.lane.b32.xlu0 %v1708, 32
        %v1781 = vpop.permute.xlu0 %1780
        %1782 = vrot.lane.b32.xlu0 %v1709, 32
        %v1783 = vpop.permute.xlu0 %1782
        %1784 = vrot.lane.b32.xlu0 %v1710, 32
        %v1785 = vpop.permute.xlu0 %1784
        %1786 = vrot.lane.b32.xlu0 %v1711, 32
        %v1787 = vpop.permute.xlu0 %1786
        %1788 = vrot.lane.b32.xlu0 %v1712, 32
        %v1789 = vpop.permute.xlu0 %1788
        %1790 = vrot.lane.b32.xlu0 %v1713, 32
        %v1791 = vpop.permute.xlu0 %1790
        %1792 = vrot.lane.b32.xlu0 %v1714, 32
        %v1793 = vpop.permute.xlu0 %1792
        %1794 = vrot.lane.b32.xlu0 %v1715, 32
        %v1795 = vpop.permute.xlu0 %1794
        %1796 = vrot.lane.b32.xlu0 %v1716, 32
        %v1797 = vpop.permute.xlu0 %1796
        %1798 = vrot.lane.b32.xlu0 %v1717, 32
        %v1799 = vpop.permute.xlu0 %1798
        %1800 = vrot.lane.b32.xlu0 %v1718, 32
        %v1801 = vpop.permute.xlu0 %1800
        %1802 = vrot.lane.b32.xlu0 %v1719, 32
        %v1803 = vpop.permute.xlu0 %1802
        %1804 = vrot.lane.b32.xlu0 %v1720, 32
        %v1805 = vpop.permute.xlu0 %1804
        %1806 = vrot.lane.b32.xlu0 %v1721, 32
        %v1807 = vpop.permute.xlu0 %1806
        %1808 = vrot.lane.b32.xlu0 %v1722, 32
        %v1809 = vpop.permute.xlu0 %1808
        %1810 = vrot.lane.b32.xlu0 %v1723, 32
        %v1811 = vpop.permute.xlu0 %1810
        %1812 = vrot.lane.b32.xlu0 %v1724, 32
        %v1813 = vpop.permute.xlu0 %1812
        %1814 = vrot.lane.b32.xlu0 %v1725, 32
        %v1815 = vpop.permute.xlu0 %1814
        %1816 = vrot.lane.b32.xlu0 %v1726, 32
        %v1817 = vpop.permute.xlu0 %1816
        %1818 = vrot.lane.b32.xlu0 %v1727, 32
        %v1819 = vpop.permute.xlu0 %1818
        %1820 = vrot.lane.b32.xlu0 %v1728, 32
        %v1821 = vpop.permute.xlu0 %1820
        %1822 = vrot.lane.b32.xlu0 %v1729, 32
        %v1823 = vpop.permute.xlu0 %1822
        %1824 = vrot.lane.b32.xlu0 %v1730, 32
        %v1825 = vpop.permute.xlu0 %1824
        %1826 = vrot.lane.b32.xlu0 %v1731, 32
        %v1827 = vpop.permute.xlu0 %1826
        %vm1860 = vcmask 294144
        %1861 = vst.msk [vmem:[#allocation3] sm:$0xff] %vm1860, %v1765
        %1862 = vst.msk [vmem:[#allocation3 + $0x10] sm:$0xff] %vm1860, %v1767
        %1863 = vst.msk [vmem:[#allocation3 + $0x20] sm:$0xff] %vm1860, %v1769
        %1864 = vst.msk [vmem:[#allocation3 + $0x30] sm:$0xff] %vm1860, %v1771
        %1865 = vst.msk [vmem:[#allocation3 + $0x40] sm:$0xff] %vm1860, %v1773
        %1866 = vst.msk [vmem:[#allocation3 + $0x50] sm:$0xff] %vm1860, %v1775
        %1867 = vst.msk [vmem:[#allocation3 + $0x60] sm:$0xff] %vm1860, %v1777
        %1868 = vst.msk [vmem:[#allocation3 + $0x70] sm:$0xff] %vm1860, %v1779
        %1869 = vst.msk [vmem:[#allocation3 + $0x80] sm:$0xff] %vm1860, %v1781
        %1870 = vst.msk [vmem:[#allocation3 + $0x90] sm:$0xff] %vm1860, %v1783
        %1871 = vst.msk [vmem:[#allocation3 + $0xa0] sm:$0xff] %vm1860, %v1785
        %1872 = vst.msk [vmem:[#allocation3 + $0xb0] sm:$0xff] %vm1860, %v1787
        %1873 = vst.msk [vmem:[#allocation3 + $0xc0] sm:$0xff] %vm1860, %v1789
        %1874 = vst.msk [vmem:[#allocation3 + $0xd0] sm:$0xff] %vm1860, %v1791
        %1875 = vst.msk [vmem:[#allocation3 + $0xe0] sm:$0xff] %vm1860, %v1793
        %1876 = vst.msk [vmem:[#allocation3 + $0xf0] sm:$0xff] %vm1860, %v1795
        %1877 = vst.msk [vmem:[#allocation3 + $0x100] sm:$0xff] %vm1860, %v1797
        %1878 = vst.msk [vmem:[#allocation3 + $0x110] sm:$0xff] %vm1860, %v1799
        %1879 = vst.msk [vmem:[#allocation3 + $0x120] sm:$0xff] %vm1860, %v1801
        %1880 = vst.msk [vmem:[#allocation3 + $0x130] sm:$0xff] %vm1860, %v1803
        %1881 = vst.msk [vmem:[#allocation3 + $0x140] sm:$0xff] %vm1860, %v1805
        %1882 = vst.msk [vmem:[#allocation3 + $0x150] sm:$0xff] %vm1860, %v1807
        %1883 = vst.msk [vmem:[#allocation3 + $0x160] sm:$0xff] %vm1860, %v1809
        %1884 = vst.msk [vmem:[#allocation3 + $0x170] sm:$0xff] %vm1860, %v1811
        %1885 = vst.msk [vmem:[#allocation3 + $0x180] sm:$0xff] %vm1860, %v1813
        %1886 = vst.msk [vmem:[#allocation3 + $0x190] sm:$0xff] %vm1860, %v1815
        %1887 = vst.msk [vmem:[#allocation3 + $0x1a0] sm:$0xff] %vm1860, %v1817
        %1888 = vst.msk [vmem:[#allocation3 + $0x1b0] sm:$0xff] %vm1860, %v1819
        %1889 = vst.msk [vmem:[#allocation3 + $0x1c0] sm:$0xff] %vm1860, %v1821
        %1890 = vst.msk [vmem:[#allocation3 + $0x1d0] sm:$0xff] %vm1860, %v1823
        %1891 = vst.msk [vmem:[#allocation3 + $0x1e0] sm:$0xff] %vm1860, %v1825
        %1892 = vst.msk [vmem:[#allocation3 + $0x1f0] sm:$0xff] %vm1860, %v1827
        %v1893 = vld [vmem:[#allocation3] sm:$0xff]
        %v1894 = vld [vmem:[#allocation3 + $0x10] sm:$0xff]
        %v1895 = vld [vmem:[#allocation3 + $0x20] sm:$0xff]
        %v1896 = vld [vmem:[#allocation3 + $0x30] sm:$0xff]
        %v1897 = vld [vmem:[#allocation3 + $0x40] sm:$0xff]
        %v1898 = vld [vmem:[#allocation3 + $0x50] sm:$0xff]
        %v1899 = vld [vmem:[#allocation3 + $0x60] sm:$0xff]
        %v1900 = vld [vmem:[#allocation3 + $0x70] sm:$0xff]
        %v1901 = vld [vmem:[#allocation3 + $0x80] sm:$0xff]
        %v1902 = vld [vmem:[#allocation3 + $0x90] sm:$0xff]
        %v1903 = vld [vmem:[#allocation3 + $0xa0] sm:$0xff]
        %v1904 = vld [vmem:[#allocation3 + $0xb0] sm:$0xff]
        %v1905 = vld [vmem:[#allocation3 + $0xc0] sm:$0xff]
        %v1906 = vld [vmem:[#allocation3 + $0xd0] sm:$0xff]
        %v1907 = vld [vmem:[#allocation3 + $0xe0] sm:$0xff]
        %v1908 = vld [vmem:[#allocation3 + $0xf0] sm:$0xff]
        %v1909 = vld [vmem:[#allocation3 + $0x100] sm:$0xff]
        %v1910 = vld [vmem:[#allocation3 + $0x110] sm:$0xff]
        %v1911 = vld [vmem:[#allocation3 + $0x120] sm:$0xff]
        %v1912 = vld [vmem:[#allocation3 + $0x130] sm:$0xff]
        %v1913 = vld [vmem:[#allocation3 + $0x140] sm:$0xff]
        %v1914 = vld [vmem:[#allocation3 + $0x150] sm:$0xff]
        %v1915 = vld [vmem:[#allocation3 + $0x160] sm:$0xff]
        %v1916 = vld [vmem:[#allocation3 + $0x170] sm:$0xff]
        %v1917 = vld [vmem:[#allocation3 + $0x180] sm:$0xff]
        %v1918 = vld [vmem:[#allocation3 + $0x190] sm:$0xff]
        %v1919 = vld [vmem:[#allocation3 + $0x1a0] sm:$0xff]
        %v1920 = vld [vmem:[#allocation3 + $0x1b0] sm:$0xff]
        %v1921 = vld [vmem:[#allocation3 + $0x1c0] sm:$0xff]
        %v1922 = vld [vmem:[#allocation3 + $0x1d0] sm:$0xff]
        %v1923 = vld [vmem:[#allocation3 + $0x1e0] sm:$0xff]
        %v1924 = vld [vmem:[#allocation3 + $0x1f0] sm:$0xff]
        %v1925 = vld [vmem:[%s1] sm:$0xff]
        %v1926 = vld [vmem:[%s1 + $0x8] sm:$0xff]
        %v1927 = vld [vmem:[%s1 + $0x10] sm:$0xff]
        %v1928 = vld [vmem:[%s1 + $0x18] sm:$0xff]
        %v1929 = vld [vmem:[%s1 + $0x20] sm:$0xf]
        %v1930 = vld [vmem:[%s2] sm:$0x1]
        %v1932 = vlaneseq
        %v1933 = vshrl.u32 %v1932, 7
        %v1934 = vsub.s32 0, %v1933
        %v1935 = vrot.slane %v1930, %v1934
        %vm1937 = vcmask 293888
        %v1939 = vsel %vm1937, %v1893, 0
        %v1942 = vsel %vm1937, %v1894, 0
        %v1945 = vsel %vm1937, %v1895, 0
        %v1948 = vsel %vm1937, %v1896, 0
        %v1951 = vsel %vm1937, %v1897, 0
        %v1954 = vsel %vm1937, %v1898, 0
        %v1957 = vsel %vm1937, %v1899, 0
        %v1960 = vsel %vm1937, %v1900, 0
        %v1963 = vsel %vm1937, %v1901, 0
        %v1966 = vsel %vm1937, %v1902, 0
        %v1969 = vsel %vm1937, %v1903, 0
        %v1972 = vsel %vm1937, %v1904, 0
        %v1975 = vsel %vm1937, %v1905, 0
        %v1978 = vsel %vm1937, %v1906, 0
        %v1981 = vsel %vm1937, %v1907, 0
        %v1984 = vsel %vm1937, %v1908, 0
        %v1987 = vsel %vm1937, %v1909, 0
        %v1990 = vsel %vm1937, %v1910, 0
        %v1993 = vsel %vm1937, %v1911, 0
        %v1996 = vsel %vm1937, %v1912, 0
        %v1999 = vsel %vm1937, %v1913, 0
        %v2002 = vsel %vm1937, %v1914, 0
        %v2005 = vsel %vm1937, %v1915, 0
        %v2008 = vsel %vm1937, %v1916, 0
        %v2011 = vsel %vm1937, %v1917, 0
        %v2014 = vsel %vm1937, %v1918, 0
        %v2017 = vsel %vm1937, %v1919, 0
        %v2020 = vsel %vm1937, %v1920, 0
        %v2023 = vsel %vm1937, %v1921, 0
        %v2026 = vsel %vm1937, %v1922, 0
        %v2029 = vsel %vm1937, %v1923, 0
        %v2032 = vsel %vm1937, %v1924, 0
        %vm2034 = vcmask 1043456
        %v2036 = vsel %vm2034, %v1929, 0
        %2038 = vmatprep.subr.mxu0 0.0
        %2039 = vmatpush1.msra.mxu0 0.0
        %2040 = vmatprep.subr.mxu0 0.0
        %2041 = vmatpush1.msra.mxu0 0.0
        %2042 = vmatprep.subr.mxu0 0.0
        %2043 = vmatpush1.msra.mxu0 0.0
        %2044 = vmatprep.subr.mxu0 0.0
        %2045 = vmatpush1.msra.mxu0 0.0
        %2046 = vmatprep.subr.mxu0 0.0
        %2047 = vmatpush1.msra.mxu0 0.0
        %2048 = vmatprep.subr.mxu0 0.0
        %2049 = vmatpush1.msra.mxu0 0.0
        %2050 = vmatprep.subr.mxu0 0.0
        %2051 = vmatpush1.msra.mxu0 0.0
        %2052 = vmatprep.subr.mxu0 0.0
        %2053 = vmatpush1.msra.mxu0 0.0
        %2054 = vmatprep.subr.mxu0 0.0
        %2055 = vmatpush1.msra.mxu0 0.0
        %2056 = vmatprep.subr.mxu0 0.0
        %2057 = vmatpush1.msra.mxu0 0.0
        %2058 = vmatprep.subr.mxu0 0.0
        %2059 = vmatpush1.msra.mxu0 0.0
        %2060 = vmatprep.subr.mxu0 0.0
        %2061 = vmatpush1.msra.mxu0 %v2036
        %2062 = vmatprep.subr.mxu0 0.0
        %2063 = vmatpush1.msra.mxu0 %v1928
        %2064 = vmatprep.subr.mxu0 0.0
        %2065 = vmatpush1.msra.mxu0 %v1927
        %2066 = vmatprep.subr.mxu0 0.0
        %2067 = vmatpush1.msra.mxu0 %v1926
        %2068 = vmatprep.subr.mxu0 0.0
        %2069 = vmatpush1.msra.mxu0 %v1925
        %2070 = vmatprep.subr.mxu0 0.0
        %2071 = vmatpush2.msra.mxu0 0.0
        %2072 = vmatprep.subr.mxu0 0.0
        %2073 = vmatpush2.msra.mxu0 0.0
        %2074 = vmatprep.subr.mxu0 0.0
        %2075 = vmatpush2.msra.mxu0 0.0
        %2076 = vmatprep.subr.mxu0 0.0
        %2077 = vmatpush2.msra.mxu0 0.0
        %2078 = vmatprep.subr.mxu0 0.0
        %2079 = vmatpush2.msra.mxu0 0.0
        %2080 = vmatprep.subr.mxu0 0.0
        %2081 = vmatpush2.msra.mxu0 0.0
        %2082 = vmatprep.subr.mxu0 0.0
        %2083 = vmatpush2.msra.mxu0 0.0
        %2084 = vmatprep.subr.mxu0 0.0
        %2085 = vmatpush2.msra.mxu0 0.0
        %2086 = vmatprep.subr.mxu0 0.0
        %2087 = vmatpush2.msra.mxu0 0.0
        %2088 = vmatprep.subr.mxu0 0.0
        %2089 = vmatpush2.msra.mxu0 0.0
        %2090 = vmatprep.subr.mxu0 0.0
        %2091 = vmatpush2.msra.mxu0 0.0
        %2092 = vmatprep.subr.mxu0 0.0
        %2093 = vmatpush2.msra.mxu0 0.0
        %2094 = vmatprep.subr.mxu0 0.0
        %2095 = vmatpush2.msra.mxu0 0.0
        %2096 = vmatprep.subr.mxu0 0.0
        %2097 = vmatpush2.msra.mxu0 0.0
        %2098 = vmatprep.subr.mxu0 0.0
        %2099 = vmatpush2.msra.mxu0 0.0
        %2100 = vmatprep.subr.mxu0 0.0
        %2101 = vmatpush2.msra.mxu0 0.0
        %2102 = vmatprep.mubr.f32.mxu0 0.0
        %2103 = vmatmul.mubr.f32.gmra.mxu0 %v1939
        %v2104 = vpop.f32.mrf.mxu0
        %v2105 = vadd.f32 %v1935, %v2104
        %v2106 = vpop.f32.mrf.mxu0
        %2107 = vmatprep.mubr.f32.mxu0 0.0
        %2108 = vmatmul.mubr.f32.gmra.mxu0 %v1942
        %v2109 = vpop.f32.mrf.mxu0
        %v2110 = vadd.f32 %v1935, %v2109
        %v2111 = vpop.f32.mrf.mxu0
        %2112 = vmatprep.mubr.f32.mxu0 0.0
        %2113 = vmatmul.mubr.f32.gmra.mxu0 %v1945
        %v2114 = vpop.f32.mrf.mxu0
        %v2115 = vadd.f32 %v1935, %v2114
        %v2116 = vpop.f32.mrf.mxu0
        %2117 = vmatprep.mubr.f32.mxu0 0.0
        %2118 = vmatmul.mubr.f32.gmra.mxu0 %v1948
        %v2119 = vpop.f32.mrf.mxu0
        %v2120 = vadd.f32 %v1935, %v2119
        %v2121 = vpop.f32.mrf.mxu0
        %2122 = vmatprep.mubr.f32.mxu0 0.0
        %2123 = vmatmul.mubr.f32.gmra.mxu0 %v1951
        %v2124 = vpop.f32.mrf.mxu0
        %v2125 = vadd.f32 %v1935, %v2124
        %v2126 = vpop.f32.mrf.mxu0
        %2127 = vmatprep.mubr.f32.mxu0 0.0
        %2128 = vmatmul.mubr.f32.gmra.mxu0 %v1954
        %v2129 = vpop.f32.mrf.mxu0
        %v2130 = vadd.f32 %v1935, %v2129
        %v2131 = vpop.f32.mrf.mxu0
        %2132 = vmatprep.mubr.f32.mxu0 0.0
        %2133 = vmatmul.mubr.f32.gmra.mxu0 %v1957
        %v2134 = vpop.f32.mrf.mxu0
        %v2135 = vadd.f32 %v1935, %v2134
        %v2136 = vpop.f32.mrf.mxu0
        %2137 = vmatprep.mubr.f32.mxu0 0.0
        %2138 = vmatmul.mubr.f32.gmra.mxu0 %v1960
        %v2139 = vpop.f32.mrf.mxu0
        %v2140 = vadd.f32 %v1935, %v2139
        %v2141 = vpop.f32.mrf.mxu0
        %2142 = vmatprep.mubr.f32.mxu0 0.0
        %2143 = vmatmul.mubr.f32.gmra.mxu0 %v1963
        %v2144 = vpop.f32.mrf.mxu0
        %v2145 = vadd.f32 %v1935, %v2144
        %v2146 = vpop.f32.mrf.mxu0
        %2147 = vmatprep.mubr.f32.mxu0 0.0
        %2148 = vmatmul.mubr.f32.gmra.mxu0 %v1966
        %v2149 = vpop.f32.mrf.mxu0
        %v2150 = vadd.f32 %v1935, %v2149
        %v2151 = vpop.f32.mrf.mxu0
        %2152 = vmatprep.mubr.f32.mxu0 0.0
        %2153 = vmatmul.mubr.f32.gmra.mxu0 %v1969
        %v2154 = vpop.f32.mrf.mxu0
        %v2155 = vadd.f32 %v1935, %v2154
        %v2156 = vpop.f32.mrf.mxu0
        %2157 = vmatprep.mubr.f32.mxu0 0.0
        %2158 = vmatmul.mubr.f32.gmra.mxu0 %v1972
        %v2159 = vpop.f32.mrf.mxu0
        %v2160 = vadd.f32 %v1935, %v2159
        %v2161 = vpop.f32.mrf.mxu0
        %2162 = vmatprep.mubr.f32.mxu0 0.0
        %2163 = vmatmul.mubr.f32.gmra.mxu0 %v1975
        %v2164 = vpop.f32.mrf.mxu0
        %v2165 = vadd.f32 %v1935, %v2164
        %v2166 = vpop.f32.mrf.mxu0
        %2167 = vmatprep.mubr.f32.mxu0 0.0
        %2168 = vmatmul.mubr.f32.gmra.mxu0 %v1978
        %v2169 = vpop.f32.mrf.mxu0
        %v2170 = vadd.f32 %v1935, %v2169
        %v2171 = vpop.f32.mrf.mxu0
        %2172 = vmatprep.mubr.f32.mxu0 0.0
        %2173 = vmatmul.mubr.f32.gmra.mxu0 %v1981
        %v2174 = vpop.f32.mrf.mxu0
        %v2175 = vadd.f32 %v1935, %v2174
        %v2176 = vpop.f32.mrf.mxu0
        %2177 = vmatprep.mubr.f32.mxu0 0.0
        %2178 = vmatmul.mubr.f32.gmra.mxu0 %v1984
        %v2179 = vpop.f32.mrf.mxu0
        %v2180 = vadd.f32 %v1935, %v2179
        %v2181 = vpop.f32.mrf.mxu0
        %2182 = vmatprep.mubr.f32.mxu0 0.0
        %2183 = vmatmul.mubr.f32.gmra.mxu0 %v1987
        %v2184 = vpop.f32.mrf.mxu0
        %v2185 = vadd.f32 %v1935, %v2184
        %v2186 = vpop.f32.mrf.mxu0
        %2187 = vmatprep.mubr.f32.mxu0 0.0
        %2188 = vmatmul.mubr.f32.gmra.mxu0 %v1990
        %v2189 = vpop.f32.mrf.mxu0
        %v2190 = vadd.f32 %v1935, %v2189
        %v2191 = vpop.f32.mrf.mxu0
        %2192 = vmatprep.mubr.f32.mxu0 0.0
        %2193 = vmatmul.mubr.f32.gmra.mxu0 %v1993
        %v2194 = vpop.f32.mrf.mxu0
        %v2195 = vadd.f32 %v1935, %v2194
        %v2196 = vpop.f32.mrf.mxu0
        %2197 = vmatprep.mubr.f32.mxu0 0.0
        %2198 = vmatmul.mubr.f32.gmra.mxu0 %v1996
        %v2199 = vpop.f32.mrf.mxu0
        %v2200 = vadd.f32 %v1935, %v2199
        %v2201 = vpop.f32.mrf.mxu0
        %2202 = vmatprep.mubr.f32.mxu0 0.0
        %2203 = vmatmul.mubr.f32.gmra.mxu0 %v1999
        %v2204 = vpop.f32.mrf.mxu0
        %v2205 = vadd.f32 %v1935, %v2204
        %v2206 = vpop.f32.mrf.mxu0
        %2207 = vmatprep.mubr.f32.mxu0 0.0
        %2208 = vmatmul.mubr.f32.gmra.mxu0 %v2002
        %v2209 = vpop.f32.mrf.mxu0
        %v2210 = vadd.f32 %v1935, %v2209
        %v2211 = vpop.f32.mrf.mxu0
        %2212 = vmatprep.mubr.f32.mxu0 0.0
        %2213 = vmatmul.mubr.f32.gmra.mxu0 %v2005
        %v2214 = vpop.f32.mrf.mxu0
        %v2215 = vadd.f32 %v1935, %v2214
        %v2216 = vpop.f32.mrf.mxu0
        %2217 = vmatprep.mubr.f32.mxu0 0.0
        %2218 = vmatmul.mubr.f32.gmra.mxu0 %v2008
        %v2219 = vpop.f32.mrf.mxu0
        %v2220 = vadd.f32 %v1935, %v2219
        %v2221 = vpop.f32.mrf.mxu0
        %2222 = vmatprep.mubr.f32.mxu0 0.0
        %2223 = vmatmul.mubr.f32.gmra.mxu0 %v2011
        %v2224 = vpop.f32.mrf.mxu0
        %v2225 = vadd.f32 %v1935, %v2224
        %v2226 = vpop.f32.mrf.mxu0
        %2227 = vmatprep.mubr.f32.mxu0 0.0
        %2228 = vmatmul.mubr.f32.gmra.mxu0 %v2014
        %v2229 = vpop.f32.mrf.mxu0
        %v2230 = vadd.f32 %v1935, %v2229
        %v2231 = vpop.f32.mrf.mxu0
        %2232 = vmatprep.mubr.f32.mxu0 0.0
        %2233 = vmatmul.mubr.f32.gmra.mxu0 %v2017
        %v2234 = vpop.f32.mrf.mxu0
        %v2235 = vadd.f32 %v1935, %v2234
        %v2236 = vpop.f32.mrf.mxu0
        %2237 = vmatprep.mubr.f32.mxu0 0.0
        %2238 = vmatmul.mubr.f32.gmra.mxu0 %v2020
        %v2239 = vpop.f32.mrf.mxu0
        %v2240 = vadd.f32 %v1935, %v2239
        %v2241 = vpop.f32.mrf.mxu0
        %2242 = vmatprep.mubr.f32.mxu0 0.0
        %2243 = vmatmul.mubr.f32.gmra.mxu0 %v2023
        %v2244 = vpop.f32.mrf.mxu0
        %v2245 = vadd.f32 %v1935, %v2244
        %v2246 = vpop.f32.mrf.mxu0
        %2247 = vmatprep.mubr.f32.mxu0 0.0
        %2248 = vmatmul.mubr.f32.gmra.mxu0 %v2026
        %v2249 = vpop.f32.mrf.mxu0
        %v2250 = vadd.f32 %v1935, %v2249
        %v2251 = vpop.f32.mrf.mxu0
        %2252 = vmatprep.mubr.f32.mxu0 0.0
        %2253 = vmatmul.mubr.f32.gmra.mxu0 %v2029
        %v2254 = vpop.f32.mrf.mxu0
        %v2255 = vadd.f32 %v1935, %v2254
        %v2256 = vpop.f32.mrf.mxu0
        %2257 = vmatprep.mubr.f32.mxu0 0.0
        %2258 = vmatmul.mubr.f32.gmra.mxu0 %v2032
        %v2259 = vpop.f32.mrf.mxu0
        %v2260 = vadd.f32 %v1935, %v2259
        %v2261 = vpop.f32.mrf.mxu0
        %2262 = vdwg.mxu0
        %v2263 = vmax.f32 %v2105, 0.0
        %v2264 = vmax.f32 %v2110, 0.0
        %v2265 = vmax.f32 %v2115, 0.0
        %v2266 = vmax.f32 %v2120, 0.0
        %v2267 = vmax.f32 %v2125, 0.0
        %v2268 = vmax.f32 %v2130, 0.0
        %v2269 = vmax.f32 %v2135, 0.0
        %v2270 = vmax.f32 %v2140, 0.0
        %v2271 = vmax.f32 %v2145, 0.0
        %v2272 = vmax.f32 %v2150, 0.0
        %v2273 = vmax.f32 %v2155, 0.0
        %v2274 = vmax.f32 %v2160, 0.0
        %v2275 = vmax.f32 %v2165, 0.0
        %v2276 = vmax.f32 %v2170, 0.0
        %v2277 = vmax.f32 %v2175, 0.0
        %v2278 = vmax.f32 %v2180, 0.0
        %v2279 = vmax.f32 %v2185, 0.0
        %v2280 = vmax.f32 %v2190, 0.0
        %v2281 = vmax.f32 %v2195, 0.0
        %v2282 = vmax.f32 %v2200, 0.0
        %v2283 = vmax.f32 %v2205, 0.0
        %v2284 = vmax.f32 %v2210, 0.0
        %v2285 = vmax.f32 %v2215, 0.0
        %v2286 = vmax.f32 %v2220, 0.0
        %v2287 = vmax.f32 %v2225, 0.0
        %v2288 = vmax.f32 %v2230, 0.0
        %v2289 = vmax.f32 %v2235, 0.0
        %v2290 = vmax.f32 %v2240, 0.0
        %v2291 = vmax.f32 %v2245, 0.0
        %v2292 = vmax.f32 %v2250, 0.0
        %v2293 = vmax.f32 %v2255, 0.0
        %v2294 = vmax.f32 %v2260, 0.0
        %vm2295 = vcmask 64512
        %2296 = vst.msk [vmem:[%s201 + $0x1] sm:$0xff] %vm2295, %v2263
        %2297 = vst.msk [vmem:[%s201 + $0x9] sm:$0xff] %vm2295, %v2264
        %2298 = vst.msk [vmem:[%s201 + $0x19] sm:$0xff] %vm2295, %v2265
        %2299 = vst.msk [vmem:[%s201 + $0x21] sm:$0xff] %vm2295, %v2266
        %2300 = vst.msk [vmem:[%s201 + $0x31] sm:$0xff] %vm2295, %v2267
        %2301 = vst.msk [vmem:[%s201 + $0x39] sm:$0xff] %vm2295, %v2268
        %2302 = vst.msk [vmem:[%s201 + $0x49] sm:$0xff] %vm2295, %v2269
        %2303 = vst.msk [vmem:[%s201 + $0x51] sm:$0xff] %vm2295, %v2270
        %2304 = vst.msk [vmem:[%s201 + $0x61] sm:$0xff] %vm2295, %v2271
        %2305 = vst.msk [vmem:[%s201 + $0x69] sm:$0xff] %vm2295, %v2272
        %2306 = vst.msk [vmem:[%s201 + $0x79] sm:$0xff] %vm2295, %v2273
        %2307 = vst.msk [vmem:[%s201 + $0x81] sm:$0xff] %vm2295, %v2274
        %2308 = vst.msk [vmem:[%s201 + $0x91] sm:$0xff] %vm2295, %v2275
        %2309 = vst.msk [vmem:[%s201 + $0x99] sm:$0xff] %vm2295, %v2276
        %2310 = vst.msk [vmem:[%s201 + $0xa9] sm:$0xff] %vm2295, %v2277
        %2311 = vst.msk [vmem:[%s201 + $0xb1] sm:$0xff] %vm2295, %v2278
        %2312 = vst.msk [vmem:[%s201 + $0xc1] sm:$0xff] %vm2295, %v2279
        %2313 = vst.msk [vmem:[%s201 + $0xc9] sm:$0xff] %vm2295, %v2280
        %2314 = vst.msk [vmem:[%s201 + $0xd9] sm:$0xff] %vm2295, %v2281
        %2315 = vst.msk [vmem:[%s201 + $0xe1] sm:$0xff] %vm2295, %v2282
        %2316 = vst.msk [vmem:[%s201 + $0xf1] sm:$0xff] %vm2295, %v2283
        %2317 = vst.msk [vmem:[%s201 + $0xf9] sm:$0xff] %vm2295, %v2284
        %2318 = vst.msk [vmem:[%s201 + $0x109] sm:$0xff] %vm2295, %v2285
        %2319 = vst.msk [vmem:[%s201 + $0x111] sm:$0xff] %vm2295, %v2286
        %2320 = vst.msk [vmem:[%s201 + $0x121] sm:$0xff] %vm2295, %v2287
        %2321 = vst.msk [vmem:[%s201 + $0x129] sm:$0xff] %vm2295, %v2288
        %2322 = vst.msk [vmem:[%s201 + $0x139] sm:$0xff] %vm2295, %v2289
        %2323 = vst.msk [vmem:[%s201 + $0x141] sm:$0xff] %vm2295, %v2290
        %2324 = vst.msk [vmem:[%s201 + $0x151] sm:$0xff] %vm2295, %v2291
        %2325 = vst.msk [vmem:[%s201 + $0x159] sm:$0xff] %vm2295, %v2292
        %2326 = vst.msk [vmem:[%s201 + $0x169] sm:$0xff] %vm2295, %v2293
        %2327 = vst.msk [vmem:[%s201 + $0x171] sm:$0xff] %vm2295, %v2294
        %vm2328 = vcmask 57344
        %2329 = vst.msk [vmem:[%s201] sm:$0x1] %vm2328, %v2263
        %2330 = vst.msk [vmem:[%s201 + $0x18] sm:$0x1] %vm2328, %v2265
        %2331 = vst.msk [vmem:[%s201 + $0x30] sm:$0x1] %vm2328, %v2267
        %2332 = vst.msk [vmem:[%s201 + $0x48] sm:$0x1] %vm2328, %v2269
        %2333 = vst.msk [vmem:[%s201 + $0x60] sm:$0x1] %vm2328, %v2271
        %2334 = vst.msk [vmem:[%s201 + $0x78] sm:$0x1] %vm2328, %v2273
        %2335 = vst.msk [vmem:[%s201 + $0x90] sm:$0x1] %vm2328, %v2275
        %2336 = vst.msk [vmem:[%s201 + $0xa8] sm:$0x1] %vm2328, %v2277
        %2337 = vst.msk [vmem:[%s201 + $0xc0] sm:$0x1] %vm2328, %v2279
        %2338 = vst.msk [vmem:[%s201 + $0xd8] sm:$0x1] %vm2328, %v2281
        %2339 = vst.msk [vmem:[%s201 + $0xf0] sm:$0x1] %vm2328, %v2283
        %2340 = vst.msk [vmem:[%s201 + $0x108] sm:$0x1] %vm2328, %v2285
        %2341 = vst.msk [vmem:[%s201 + $0x120] sm:$0x1] %vm2328, %v2287
        %2342 = vst.msk [vmem:[%s201 + $0x138] sm:$0x1] %vm2328, %v2289
        %2343 = vst.msk [vmem:[%s201 + $0x150] sm:$0x1] %vm2328, %v2291
        %2344 = vst.msk [vmem:[%s201 + $0x168] sm:$0x1] %vm2328, %v2293
        %vm2345 = vcmask 64519
        %2346 = vst.msk [vmem:[%s201 + $0xa] sm:$0x80] %vm2345, %v2264
        %2347 = vst.msk [vmem:[%s201 + $0x22] sm:$0x80] %vm2345, %v2266
        %2348 = vst.msk [vmem:[%s201 + $0x3a] sm:$0x80] %vm2345, %v2268
        %2349 = vst.msk [vmem:[%s201 + $0x52] sm:$0x80] %vm2345, %v2270
        %2350 = vst.msk [vmem:[%s201 + $0x6a] sm:$0x80] %vm2345, %v2272
        %2351 = vst.msk [vmem:[%s201 + $0x82] sm:$0x80] %vm2345, %v2274
        %2352 = vst.msk [vmem:[%s201 + $0x9a] sm:$0x80] %vm2345, %v2276
        %2353 = vst.msk [vmem:[%s201 + $0xb2] sm:$0x80] %vm2345, %v2278
        %2354 = vst.msk [vmem:[%s201 + $0xca] sm:$0x80] %vm2345, %v2280
        %2355 = vst.msk [vmem:[%s201 + $0xe2] sm:$0x80] %vm2345, %v2282
        %2356 = vst.msk [vmem:[%s201 + $0xfa] sm:$0x80] %vm2345, %v2284
        %2357 = vst.msk [vmem:[%s201 + $0x112] sm:$0x80] %vm2345, %v2286
        %2358 = vst.msk [vmem:[%s201 + $0x12a] sm:$0x80] %vm2345, %v2288
        %2359 = vst.msk [vmem:[%s201 + $0x142] sm:$0x80] %vm2345, %v2290
        %2360 = vst.msk [vmem:[%s201 + $0x15a] sm:$0x80] %vm2345, %v2292
        %2361 = vst.msk [vmem:[%s201 + $0x172] sm:$0x80] %vm2345, %v2294
        %v2362 = vld [vmem:[%s201] sm:$0xff]
        %v2363 = vld [vmem:[%s201 + $0x8] sm:$0xff]
        %v2364 = vld [vmem:[%s201 + $0x10] sm:$0x3]
        %v2365 = vld [vmem:[%s272] sm:$0xff]
        %v2366 = vld [vmem:[%s272 + $0x8] sm:$0xff]
        %v2367 = vld [vmem:[%s272 + $0x10] sm:$0x3]
        %2368 = vst.msk [vmem:[#allocation2] sm:$0xff] %vm2295, %v2362
        %2369 = vst.msk [vmem:[#allocation2 + $0x8] sm:$0xff] %vm2295, %v2363
        %vm2370 = vcmask 58368
        %2371 = vst.msk [vmem:[#allocation2 + $0x10] sm:$0x3] %vm2370, %v2364
        %2372 = vst.msk [vmem:[%s280] sm:$0xff] %vm2295, %v2365
        %2373 = vst.msk [vmem:[%s280 + $0x8] sm:$0xff] %vm2295, %v2366
        %2374 = vst.msk [vmem:[%s280 + $0x10] sm:$0x3] %vm2370, %v2367
        %v2375 = vld [vmem:[#allocation2] sm:$0xff]
        %v2376 = vld [vmem:[#allocation2 + $0x8] sm:$0xff]
        %v2377 = vld [vmem:[#allocation2 + $0x18] sm:$0xff]
        %v2378 = vld [vmem:[#allocation2 + $0x20] sm:$0xff]
        %v2379 = vld [vmem:[#allocation2 + $0x30] sm:$0xff]
        %v2380 = vld [vmem:[#allocation2 + $0x38] sm:$0xff]
        %v2381 = vld [vmem:[#allocation2 + $0x48] sm:$0xff]
        %v2382 = vld [vmem:[#allocation2 + $0x50] sm:$0xff]
        %v2383 = vld [vmem:[#allocation2 + $0x60] sm:$0xff]
        %v2384 = vld [vmem:[#allocation2 + $0x68] sm:$0xff]
        %v2385 = vld [vmem:[#allocation2 + $0x78] sm:$0xff]
        %v2386 = vld [vmem:[#allocation2 + $0x80] sm:$0xff]
        %v2387 = vld [vmem:[#allocation2 + $0x90] sm:$0xff]
        %v2388 = vld [vmem:[#allocation2 + $0x98] sm:$0xff]
        %v2389 = vld [vmem:[#allocation2 + $0xa8] sm:$0xff]
        %v2390 = vld [vmem:[#allocation2 + $0xb0] sm:$0xff]
        %v2391 = vld [vmem:[#allocation2 + $0xc0] sm:$0xff]
        %v2392 = vld [vmem:[#allocation2 + $0xc8] sm:$0xff]
        %v2393 = vld [vmem:[#allocation2 + $0xd8] sm:$0xff]
        %v2394 = vld [vmem:[#allocation2 + $0xe0] sm:$0xff]
        %v2395 = vld [vmem:[#allocation2 + $0xf0] sm:$0xff]
        %v2396 = vld [vmem:[#allocation2 + $0xf8] sm:$0xff]
        %v2397 = vld [vmem:[#allocation2 + $0x108] sm:$0xff]
        %v2398 = vld [vmem:[#allocation2 + $0x110] sm:$0xff]
        %v2399 = vld [vmem:[#allocation2 + $0x120] sm:$0xff]
        %v2400 = vld [vmem:[#allocation2 + $0x128] sm:$0xff]
        %v2401 = vld [vmem:[#allocation2 + $0x138] sm:$0xff]
        %v2402 = vld [vmem:[#allocation2 + $0x140] sm:$0xff]
        %v2403 = vld [vmem:[#allocation2 + $0x150] sm:$0xff]
        %v2404 = vld [vmem:[#allocation2 + $0x158] sm:$0xff]
        %v2405 = vld [vmem:[#allocation2 + $0x168] sm:$0xff]
        %v2406 = vld [vmem:[#allocation2 + $0x170] sm:$0xff]
        %2407 = vst.msk [vmem:[#allocation3] sm:$0xff] %vm2295, %v2375
        %2408 = vst.msk [vmem:[#allocation3 + $0x10] sm:$0xff] %vm2295, %v2376
        %2409 = vst.msk [vmem:[#allocation3 + $0x20] sm:$0xff] %vm2295, %v2377
        %2410 = vst.msk [vmem:[#allocation3 + $0x30] sm:$0xff] %vm2295, %v2378
        %2411 = vst.msk [vmem:[#allocation3 + $0x40] sm:$0xff] %vm2295, %v2379
        %2412 = vst.msk [vmem:[#allocation3 + $0x50] sm:$0xff] %vm2295, %v2380
        %2413 = vst.msk [vmem:[#allocation3 + $0x60] sm:$0xff] %vm2295, %v2381
        %2414 = vst.msk [vmem:[#allocation3 + $0x70] sm:$0xff] %vm2295, %v2382
        %2415 = vst.msk [vmem:[#allocation3 + $0x80] sm:$0xff] %vm2295, %v2383
        %2416 = vst.msk [vmem:[#allocation3 + $0x90] sm:$0xff] %vm2295, %v2384
        %2417 = vst.msk [vmem:[#allocation3 + $0xa0] sm:$0xff] %vm2295, %v2385
        %2418 = vst.msk [vmem:[#allocation3 + $0xb0] sm:$0xff] %vm2295, %v2386
        %2419 = vst.msk [vmem:[#allocation3 + $0xc0] sm:$0xff] %vm2295, %v2387
        %2420 = vst.msk [vmem:[#allocation3 + $0xd0] sm:$0xff] %vm2295, %v2388
        %2421 = vst.msk [vmem:[#allocation3 + $0xe0] sm:$0xff] %vm2295, %v2389
        %2422 = vst.msk [vmem:[#allocation3 + $0xf0] sm:$0xff] %vm2295, %v2390
        %2423 = vst.msk [vmem:[#allocation3 + $0x100] sm:$0xff] %vm2295, %v2391
        %2424 = vst.msk [vmem:[#allocation3 + $0x110] sm:$0xff] %vm2295, %v2392
        %2425 = vst.msk [vmem:[#allocation3 + $0x120] sm:$0xff] %vm2295, %v2393
        %2426 = vst.msk [vmem:[#allocation3 + $0x130] sm:$0xff] %vm2295, %v2394
        %2427 = vst.msk [vmem:[#allocation3 + $0x140] sm:$0xff] %vm2295, %v2395
        %2428 = vst.msk [vmem:[#allocation3 + $0x150] sm:$0xff] %vm2295, %v2396
        %2429 = vst.msk [vmem:[#allocation3 + $0x160] sm:$0xff] %vm2295, %v2397
        %2430 = vst.msk [vmem:[#allocation3 + $0x170] sm:$0xff] %vm2295, %v2398
        %2431 = vst.msk [vmem:[#allocation3 + $0x180] sm:$0xff] %vm2295, %v2399
        %2432 = vst.msk [vmem:[#allocation3 + $0x190] sm:$0xff] %vm2295, %v2400
        %2433 = vst.msk [vmem:[#allocation3 + $0x1a0] sm:$0xff] %vm2295, %v2401
        %2434 = vst.msk [vmem:[#allocation3 + $0x1b0] sm:$0xff] %vm2295, %v2402
        %2435 = vst.msk [vmem:[#allocation3 + $0x1c0] sm:$0xff] %vm2295, %v2403
        %2436 = vst.msk [vmem:[#allocation3 + $0x1d0] sm:$0xff] %vm2295, %v2404
        %2437 = vst.msk [vmem:[#allocation3 + $0x1e0] sm:$0xff] %vm2295, %v2405
        %2438 = vst.msk [vmem:[#allocation3 + $0x1f0] sm:$0xff] %vm2295, %v2406
        %v2439 = vld [vmem:[#allocation2 + $0x1] sm:$0xff]
        %v2440 = vld [vmem:[#allocation2 + $0x9] sm:$0xff]
        %v2441 = vld [vmem:[#allocation2 + $0x19] sm:$0xff]
        %v2442 = vld [vmem:[#allocation2 + $0x21] sm:$0xff]
        %v2443 = vld [vmem:[#allocation2 + $0x31] sm:$0xff]
        %v2444 = vld [vmem:[#allocation2 + $0x39] sm:$0xff]
        %v2445 = vld [vmem:[#allocation2 + $0x49] sm:$0xff]
        %v2446 = vld [vmem:[#allocation2 + $0x51] sm:$0xff]
        %v2447 = vld [vmem:[#allocation2 + $0x61] sm:$0xff]
        %v2448 = vld [vmem:[#allocation2 + $0x69] sm:$0xff]
        %v2449 = vld [vmem:[#allocation2 + $0x79] sm:$0xff]
        %v2450 = vld [vmem:[#allocation2 + $0x81] sm:$0xff]
        %v2451 = vld [vmem:[#allocation2 + $0x91] sm:$0xff]
        %v2452 = vld [vmem:[#allocation2 + $0x99] sm:$0xff]
        %v2453 = vld [vmem:[#allocation2 + $0xa9] sm:$0xff]
        %v2454 = vld [vmem:[#allocation2 + $0xb1] sm:$0xff]
        %v2455 = vld [vmem:[#allocation2 + $0xc1] sm:$0xff]
        %v2456 = vld [vmem:[#allocation2 + $0xc9] sm:$0xff]
        %v2457 = vld [vmem:[#allocation2 + $0xd9] sm:$0xff]
        %v2458 = vld [vmem:[#allocation2 + $0xe1] sm:$0xff]
        %v2459 = vld [vmem:[#allocation2 + $0xf1] sm:$0xff]
        %v2460 = vld [vmem:[#allocation2 + $0xf9] sm:$0xff]
        %v2461 = vld [vmem:[#allocation2 + $0x109] sm:$0xff]
        %v2462 = vld [vmem:[#allocation2 + $0x111] sm:$0xff]
        %v2463 = vld [vmem:[#allocation2 + $0x121] sm:$0xff]
        %v2464 = vld [vmem:[#allocation2 + $0x129] sm:$0xff]
        %v2465 = vld [vmem:[#allocation2 + $0x139] sm:$0xff]
        %v2466 = vld [vmem:[#allocation2 + $0x141] sm:$0xff]
        %v2467 = vld [vmem:[#allocation2 + $0x151] sm:$0xff]
        %v2468 = vld [vmem:[#allocation2 + $0x159] sm:$0xff]
        %v2469 = vld [vmem:[#allocation2 + $0x169] sm:$0xff]
        %v2470 = vld [vmem:[#allocation2 + $0x171] sm:$0xff]
        %2503 = vrot.lane.b32.xlu0 %v2439, 8
        %v2504 = vpop.permute.xlu0 %2503
        %2505 = vrot.lane.b32.xlu0 %v2440, 8
        %v2506 = vpop.permute.xlu0 %2505
        %2507 = vrot.lane.b32.xlu0 %v2441, 8
        %v2508 = vpop.permute.xlu0 %2507
        %2509 = vrot.lane.b32.xlu0 %v2442, 8
        %v2510 = vpop.permute.xlu0 %2509
        %2511 = vrot.lane.b32.xlu0 %v2443, 8
        %v2512 = vpop.permute.xlu0 %2511
        %2513 = vrot.lane.b32.xlu0 %v2444, 8
        %v2514 = vpop.permute.xlu0 %2513
        %2515 = vrot.lane.b32.xlu0 %v2445, 8
        %v2516 = vpop.permute.xlu0 %2515
        %2517 = vrot.lane.b32.xlu0 %v2446, 8
        %v2518 = vpop.permute.xlu0 %2517
        %2519 = vrot.lane.b32.xlu0 %v2447, 8
        %v2520 = vpop.permute.xlu0 %2519
        %2521 = vrot.lane.b32.xlu0 %v2448, 8
        %v2522 = vpop.permute.xlu0 %2521
        %2523 = vrot.lane.b32.xlu0 %v2449, 8
        %v2524 = vpop.permute.xlu0 %2523
        %2525 = vrot.lane.b32.xlu0 %v2450, 8
        %v2526 = vpop.permute.xlu0 %2525
        %2527 = vrot.lane.b32.xlu0 %v2451, 8
        %v2528 = vpop.permute.xlu0 %2527
        %2529 = vrot.lane.b32.xlu0 %v2452, 8
        %v2530 = vpop.permute.xlu0 %2529
        %2531 = vrot.lane.b32.xlu0 %v2453, 8
        %v2532 = vpop.permute.xlu0 %2531
        %2533 = vrot.lane.b32.xlu0 %v2454, 8
        %v2534 = vpop.permute.xlu0 %2533
        %2535 = vrot.lane.b32.xlu0 %v2455, 8
        %v2536 = vpop.permute.xlu0 %2535
        %2537 = vrot.lane.b32.xlu0 %v2456, 8
        %v2538 = vpop.permute.xlu0 %2537
        %2539 = vrot.lane.b32.xlu0 %v2457, 8
        %v2540 = vpop.permute.xlu0 %2539
        %2541 = vrot.lane.b32.xlu0 %v2458, 8
        %v2542 = vpop.permute.xlu0 %2541
        %2543 = vrot.lane.b32.xlu0 %v2459, 8
        %v2544 = vpop.permute.xlu0 %2543
        %2545 = vrot.lane.b32.xlu0 %v2460, 8
        %v2546 = vpop.permute.xlu0 %2545
        %2547 = vrot.lane.b32.xlu0 %v2461, 8
        %v2548 = vpop.permute.xlu0 %2547
        %2549 = vrot.lane.b32.xlu0 %v2462, 8
        %v2550 = vpop.permute.xlu0 %2549
        %2551 = vrot.lane.b32.xlu0 %v2463, 8
        %v2552 = vpop.permute.xlu0 %2551
        %2553 = vrot.lane.b32.xlu0 %v2464, 8
        %v2554 = vpop.permute.xlu0 %2553
        %2555 = vrot.lane.b32.xlu0 %v2465, 8
        %v2556 = vpop.permute.xlu0 %2555
        %2557 = vrot.lane.b32.xlu0 %v2466, 8
        %v2558 = vpop.permute.xlu0 %2557
        %2559 = vrot.lane.b32.xlu0 %v2467, 8
        %v2560 = vpop.permute.xlu0 %2559
        %2561 = vrot.lane.b32.xlu0 %v2468, 8
        %v2562 = vpop.permute.xlu0 %2561
        %2563 = vrot.lane.b32.xlu0 %v2469, 8
        %v2564 = vpop.permute.xlu0 %2563
        %2565 = vrot.lane.b32.xlu0 %v2470, 8
        %v2566 = vpop.permute.xlu0 %2565
        %vm2599 = vcmask 130112
        %2600 = vst.msk [vmem:[#allocation3] sm:$0xff] %vm2599, %v2504
        %2601 = vst.msk [vmem:[#allocation3 + $0x10] sm:$0xff] %vm2599, %v2506
        %2602 = vst.msk [vmem:[#allocation3 + $0x20] sm:$0xff] %vm2599, %v2508
        %2603 = vst.msk [vmem:[#allocation3 + $0x30] sm:$0xff] %vm2599, %v2510
        %2604 = vst.msk [vmem:[#allocation3 + $0x40] sm:$0xff] %vm2599, %v2512
        %2605 = vst.msk [vmem:[#allocation3 + $0x50] sm:$0xff] %vm2599, %v2514
        %2606 = vst.msk [vmem:[#allocation3 + $0x60] sm:$0xff] %vm2599, %v2516
        %2607 = vst.msk [vmem:[#allocation3 + $0x70] sm:$0xff] %vm2599, %v2518
        %2608 = vst.msk [vmem:[#allocation3 + $0x80] sm:$0xff] %vm2599, %v2520
        %2609 = vst.msk [vmem:[#allocation3 + $0x90] sm:$0xff] %vm2599, %v2522
        %2610 = vst.msk [vmem:[#allocation3 + $0xa0] sm:$0xff] %vm2599, %v2524
        %2611 = vst.msk [vmem:[#allocation3 + $0xb0] sm:$0xff] %vm2599, %v2526
        %2612 = vst.msk [vmem:[#allocation3 + $0xc0] sm:$0xff] %vm2599, %v2528
        %2613 = vst.msk [vmem:[#allocation3 + $0xd0] sm:$0xff] %vm2599, %v2530
        %2614 = vst.msk [vmem:[#allocation3 + $0xe0] sm:$0xff] %vm2599, %v2532
        %2615 = vst.msk [vmem:[#allocation3 + $0xf0] sm:$0xff] %vm2599, %v2534
        %2616 = vst.msk [vmem:[#allocation3 + $0x100] sm:$0xff] %vm2599, %v2536
        %2617 = vst.msk [vmem:[#allocation3 + $0x110] sm:$0xff] %vm2599, %v2538
        %2618 = vst.msk [vmem:[#allocation3 + $0x120] sm:$0xff] %vm2599, %v2540
        %2619 = vst.msk [vmem:[#allocation3 + $0x130] sm:$0xff] %vm2599, %v2542
        %2620 = vst.msk [vmem:[#allocation3 + $0x140] sm:$0xff] %vm2599, %v2544
        %2621 = vst.msk [vmem:[#allocation3 + $0x150] sm:$0xff] %vm2599, %v2546
        %2622 = vst.msk [vmem:[#allocation3 + $0x160] sm:$0xff] %vm2599, %v2548
        %2623 = vst.msk [vmem:[#allocation3 + $0x170] sm:$0xff] %vm2599, %v2550
        %2624 = vst.msk [vmem:[#allocation3 + $0x180] sm:$0xff] %vm2599, %v2552
        %2625 = vst.msk [vmem:[#allocation3 + $0x190] sm:$0xff] %vm2599, %v2554
        %2626 = vst.msk [vmem:[#allocation3 + $0x1a0] sm:$0xff] %vm2599, %v2556
        %2627 = vst.msk [vmem:[#allocation3 + $0x1b0] sm:$0xff] %vm2599, %v2558
        %2628 = vst.msk [vmem:[#allocation3 + $0x1c0] sm:$0xff] %vm2599, %v2560
        %2629 = vst.msk [vmem:[#allocation3 + $0x1d0] sm:$0xff] %vm2599, %v2562
        %2630 = vst.msk [vmem:[#allocation3 + $0x1e0] sm:$0xff] %vm2599, %v2564
        %2631 = vst.msk [vmem:[#allocation3 + $0x1f0] sm:$0xff] %vm2599, %v2566
        %v2632 = vld [vmem:[#allocation2 + $0x2] sm:$0xff]
        %v2633 = vld [vmem:[#allocation2 + $0xa] sm:$0xff]
        %v2634 = vld [vmem:[#allocation2 + $0x1a] sm:$0xff]
        %v2635 = vld [vmem:[#allocation2 + $0x22] sm:$0xff]
        %v2636 = vld [vmem:[#allocation2 + $0x32] sm:$0xff]
        %v2637 = vld [vmem:[#allocation2 + $0x3a] sm:$0xff]
        %v2638 = vld [vmem:[#allocation2 + $0x4a] sm:$0xff]
        %v2639 = vld [vmem:[#allocation2 + $0x52] sm:$0xff]
        %v2640 = vld [vmem:[#allocation2 + $0x62] sm:$0xff]
        %v2641 = vld [vmem:[#allocation2 + $0x6a] sm:$0xff]
        %v2642 = vld [vmem:[#allocation2 + $0x7a] sm:$0xff]
        %v2643 = vld [vmem:[#allocation2 + $0x82] sm:$0xff]
        %v2644 = vld [vmem:[#allocation2 + $0x92] sm:$0xff]
        %v2645 = vld [vmem:[#allocation2 + $0x9a] sm:$0xff]
        %v2646 = vld [vmem:[#allocation2 + $0xaa] sm:$0xff]
        %v2647 = vld [vmem:[#allocation2 + $0xb2] sm:$0xff]
        %v2648 = vld [vmem:[#allocation2 + $0xc2] sm:$0xff]
        %v2649 = vld [vmem:[#allocation2 + $0xca] sm:$0xff]
        %v2650 = vld [vmem:[#allocation2 + $0xda] sm:$0xff]
        %v2651 = vld [vmem:[#allocation2 + $0xe2] sm:$0xff]
        %v2652 = vld [vmem:[#allocation2 + $0xf2] sm:$0xff]
        %v2653 = vld [vmem:[#allocation2 + $0xfa] sm:$0xff]
        %v2654 = vld [vmem:[#allocation2 + $0x10a] sm:$0xff]
        %v2655 = vld [vmem:[#allocation2 + $0x112] sm:$0xff]
        %v2656 = vld [vmem:[#allocation2 + $0x122] sm:$0xff]
        %v2657 = vld [vmem:[#allocation2 + $0x12a] sm:$0xff]
        %v2658 = vld [vmem:[#allocation2 + $0x13a] sm:$0xff]
        %v2659 = vld [vmem:[#allocation2 + $0x142] sm:$0xff]
        %v2660 = vld [vmem:[#allocation2 + $0x152] sm:$0xff]
        %v2661 = vld [vmem:[#allocation2 + $0x15a] sm:$0xff]
        %v2662 = vld [vmem:[#allocation2 + $0x16a] sm:$0xff]
        %v2663 = vld [vmem:[#allocation2 + $0x172] sm:$0xff]
        %2696 = vrot.lane.b32.xlu0 %v2632, 16
        %v2697 = vpop.permute.xlu0 %2696
        %2698 = vrot.lane.b32.xlu0 %v2633, 16
        %v2699 = vpop.permute.xlu0 %2698
        %2700 = vrot.lane.b32.xlu0 %v2634, 16
        %v2701 = vpop.permute.xlu0 %2700
        %2702 = vrot.lane.b32.xlu0 %v2635, 16
        %v2703 = vpop.permute.xlu0 %2702
        %2704 = vrot.lane.b32.xlu0 %v2636, 16
        %v2705 = vpop.permute.xlu0 %2704
        %2706 = vrot.lane.b32.xlu0 %v2637, 16
        %v2707 = vpop.permute.xlu0 %2706
        %2708 = vrot.lane.b32.xlu0 %v2638, 16
        %v2709 = vpop.permute.xlu0 %2708
        %2710 = vrot.lane.b32.xlu0 %v2639, 16
        %v2711 = vpop.permute.xlu0 %2710
        %2712 = vrot.lane.b32.xlu0 %v2640, 16
        %v2713 = vpop.permute.xlu0 %2712
        %2714 = vrot.lane.b32.xlu0 %v2641, 16
        %v2715 = vpop.permute.xlu0 %2714
        %2716 = vrot.lane.b32.xlu0 %v2642, 16
        %v2717 = vpop.permute.xlu0 %2716
        %2718 = vrot.lane.b32.xlu0 %v2643, 16
        %v2719 = vpop.permute.xlu0 %2718
        %2720 = vrot.lane.b32.xlu0 %v2644, 16
        %v2721 = vpop.permute.xlu0 %2720
        %2722 = vrot.lane.b32.xlu0 %v2645, 16
        %v2723 = vpop.permute.xlu0 %2722
        %2724 = vrot.lane.b32.xlu0 %v2646, 16
        %v2725 = vpop.permute.xlu0 %2724
        %2726 = vrot.lane.b32.xlu0 %v2647, 16
        %v2727 = vpop.permute.xlu0 %2726
        %2728 = vrot.lane.b32.xlu0 %v2648, 16
        %v2729 = vpop.permute.xlu0 %2728
        %2730 = vrot.lane.b32.xlu0 %v2649, 16
        %v2731 = vpop.permute.xlu0 %2730
        %2732 = vrot.lane.b32.xlu0 %v2650, 16
        %v2733 = vpop.permute.xlu0 %2732
        %2734 = vrot.lane.b32.xlu0 %v2651, 16
        %v2735 = vpop.permute.xlu0 %2734
        %2736 = vrot.lane.b32.xlu0 %v2652, 16
        %v2737 = vpop.permute.xlu0 %2736
        %2738 = vrot.lane.b32.xlu0 %v2653, 16
        %v2739 = vpop.permute.xlu0 %2738
        %2740 = vrot.lane.b32.xlu0 %v2654, 16
        %v2741 = vpop.permute.xlu0 %2740
        %2742 = vrot.lane.b32.xlu0 %v2655, 16
        %v2743 = vpop.permute.xlu0 %2742
        %2744 = vrot.lane.b32.xlu0 %v2656, 16
        %v2745 = vpop.permute.xlu0 %2744
        %2746 = vrot.lane.b32.xlu0 %v2657, 16
        %v2747 = vpop.permute.xlu0 %2746
        %2748 = vrot.lane.b32.xlu0 %v2658, 16
        %v2749 = vpop.permute.xlu0 %2748
        %2750 = vrot.lane.b32.xlu0 %v2659, 16
        %v2751 = vpop.permute.xlu0 %2750
        %2752 = vrot.lane.b32.xlu0 %v2660, 16
        %v2753 = vpop.permute.xlu0 %2752
        %2754 = vrot.lane.b32.xlu0 %v2661, 16
        %v2755 = vpop.permute.xlu0 %2754
        %2756 = vrot.lane.b32.xlu0 %v2662, 16
        %v2757 = vpop.permute.xlu0 %2756
        %2758 = vrot.lane.b32.xlu0 %v2663, 16
        %v2759 = vpop.permute.xlu0 %2758
        %vm2792 = vcmask 195712
        %2793 = vst.msk [vmem:[#allocation3] sm:$0xff] %vm2792, %v2697
        %2794 = vst.msk [vmem:[#allocation3 + $0x10] sm:$0xff] %vm2792, %v2699
        %2795 = vst.msk [vmem:[#allocation3 + $0x20] sm:$0xff] %vm2792, %v2701
        %2796 = vst.msk [vmem:[#allocation3 + $0x30] sm:$0xff] %vm2792, %v2703
        %2797 = vst.msk [vmem:[#allocation3 + $0x40] sm:$0xff] %vm2792, %v2705
        %2798 = vst.msk [vmem:[#allocation3 + $0x50] sm:$0xff] %vm2792, %v2707
        %2799 = vst.msk [vmem:[#allocation3 + $0x60] sm:$0xff] %vm2792, %v2709
        %2800 = vst.msk [vmem:[#allocation3 + $0x70] sm:$0xff] %vm2792, %v2711
        %2801 = vst.msk [vmem:[#allocation3 + $0x80] sm:$0xff] %vm2792, %v2713
        %2802 = vst.msk [vmem:[#allocation3 + $0x90] sm:$0xff] %vm2792, %v2715
        %2803 = vst.msk [vmem:[#allocation3 + $0xa0] sm:$0xff] %vm2792, %v2717
        %2804 = vst.msk [vmem:[#allocation3 + $0xb0] sm:$0xff] %vm2792, %v2719
        %2805 = vst.msk [vmem:[#allocation3 + $0xc0] sm:$0xff] %vm2792, %v2721
        %2806 = vst.msk [vmem:[#allocation3 + $0xd0] sm:$0xff] %vm2792, %v2723
        %2807 = vst.msk [vmem:[#allocation3 + $0xe0] sm:$0xff] %vm2792, %v2725
        %2808 = vst.msk [vmem:[#allocation3 + $0xf0] sm:$0xff] %vm2792, %v2727
        %2809 = vst.msk [vmem:[#allocation3 + $0x100] sm:$0xff] %vm2792, %v2729
        %2810 = vst.msk [vmem:[#allocation3 + $0x110] sm:$0xff] %vm2792, %v2731
        %2811 = vst.msk [vmem:[#allocation3 + $0x120] sm:$0xff] %vm2792, %v2733
        %2812 = vst.msk [vmem:[#allocation3 + $0x130] sm:$0xff] %vm2792, %v2735
        %2813 = vst.msk [vmem:[#allocation3 + $0x140] sm:$0xff] %vm2792, %v2737
        %2814 = vst.msk [vmem:[#allocation3 + $0x150] sm:$0xff] %vm2792, %v2739
        %2815 = vst.msk [vmem:[#allocation3 + $0x160] sm:$0xff] %vm2792, %v2741
        %2816 = vst.msk [vmem:[#allocation3 + $0x170] sm:$0xff] %vm2792, %v2743
        %2817 = vst.msk [vmem:[#allocation3 + $0x180] sm:$0xff] %vm2792, %v2745
        %2818 = vst.msk [vmem:[#allocation3 + $0x190] sm:$0xff] %vm2792, %v2747
        %2819 = vst.msk [vmem:[#allocation3 + $0x1a0] sm:$0xff] %vm2792, %v2749
        %2820 = vst.msk [vmem:[#allocation3 + $0x1b0] sm:$0xff] %vm2792, %v2751
        %2821 = vst.msk [vmem:[#allocation3 + $0x1c0] sm:$0xff] %vm2792, %v2753
        %2822 = vst.msk [vmem:[#allocation3 + $0x1d0] sm:$0xff] %vm2792, %v2755
        %2823 = vst.msk [vmem:[#allocation3 + $0x1e0] sm:$0xff] %vm2792, %v2757
        %2824 = vst.msk [vmem:[#allocation3 + $0x1f0] sm:$0xff] %vm2792, %v2759
        %v2825 = vld [vmem:[%s201] sm:$0xff]
        %v2826 = vld [vmem:[%s201 + $0x8] sm:$0xff]
        %v2827 = vld [vmem:[%s201 + $0x18] sm:$0xff]
        %v2828 = vld [vmem:[%s201 + $0x20] sm:$0xff]
        %v2829 = vld [vmem:[%s201 + $0x30] sm:$0xff]
        %v2830 = vld [vmem:[%s201 + $0x38] sm:$0xff]
        %v2831 = vld [vmem:[%s201 + $0x48] sm:$0xff]
        %v2832 = vld [vmem:[%s201 + $0x50] sm:$0xff]
        %v2833 = vld [vmem:[%s201 + $0x60] sm:$0xff]
        %v2834 = vld [vmem:[%s201 + $0x68] sm:$0xff]
        %v2835 = vld [vmem:[%s201 + $0x78] sm:$0xff]
        %v2836 = vld [vmem:[%s201 + $0x80] sm:$0xff]
        %v2837 = vld [vmem:[%s201 + $0x90] sm:$0xff]
        %v2838 = vld [vmem:[%s201 + $0x98] sm:$0xff]
        %v2839 = vld [vmem:[%s201 + $0xa8] sm:$0xff]
        %v2840 = vld [vmem:[%s201 + $0xb0] sm:$0xff]
        %v2841 = vld [vmem:[%s201 + $0xc0] sm:$0xff]
        %v2842 = vld [vmem:[%s201 + $0xc8] sm:$0xff]
        %v2843 = vld [vmem:[%s201 + $0xd8] sm:$0xff]
        %v2844 = vld [vmem:[%s201 + $0xe0] sm:$0xff]
        %v2845 = vld [vmem:[%s201 + $0xf0] sm:$0xff]
        %v2846 = vld [vmem:[%s201 + $0xf8] sm:$0xff]
        %v2847 = vld [vmem:[%s201 + $0x108] sm:$0xff]
        %v2848 = vld [vmem:[%s201 + $0x110] sm:$0xff]
        %v2849 = vld [vmem:[%s201 + $0x120] sm:$0xff]
        %v2850 = vld [vmem:[%s201 + $0x128] sm:$0xff]
        %v2851 = vld [vmem:[%s201 + $0x138] sm:$0xff]
        %v2852 = vld [vmem:[%s201 + $0x140] sm:$0xff]
        %v2853 = vld [vmem:[%s201 + $0x150] sm:$0xff]
        %v2854 = vld [vmem:[%s201 + $0x158] sm:$0xff]
        %v2855 = vld [vmem:[%s201 + $0x168] sm:$0xff]
        %v2856 = vld [vmem:[%s201 + $0x170] sm:$0xff]
        %2889 = vrot.lane.b32.xlu0 %v2825, 24
        %v2890 = vpop.permute.xlu0 %2889
        %2891 = vrot.lane.b32.xlu0 %v2826, 24
        %v2892 = vpop.permute.xlu0 %2891
        %2893 = vrot.lane.b32.xlu0 %v2827, 24
        %v2894 = vpop.permute.xlu0 %2893
        %2895 = vrot.lane.b32.xlu0 %v2828, 24
        %v2896 = vpop.permute.xlu0 %2895
        %2897 = vrot.lane.b32.xlu0 %v2829, 24
        %v2898 = vpop.permute.xlu0 %2897
        %2899 = vrot.lane.b32.xlu0 %v2830, 24
        %v2900 = vpop.permute.xlu0 %2899
        %2901 = vrot.lane.b32.xlu0 %v2831, 24
        %v2902 = vpop.permute.xlu0 %2901
        %2903 = vrot.lane.b32.xlu0 %v2832, 24
        %v2904 = vpop.permute.xlu0 %2903
        %2905 = vrot.lane.b32.xlu0 %v2833, 24
        %v2906 = vpop.permute.xlu0 %2905
        %2907 = vrot.lane.b32.xlu0 %v2834, 24
        %v2908 = vpop.permute.xlu0 %2907
        %2909 = vrot.lane.b32.xlu0 %v2835, 24
        %v2910 = vpop.permute.xlu0 %2909
        %2911 = vrot.lane.b32.xlu0 %v2836, 24
        %v2912 = vpop.permute.xlu0 %2911
        %2913 = vrot.lane.b32.xlu0 %v2837, 24
        %v2914 = vpop.permute.xlu0 %2913
        %2915 = vrot.lane.b32.xlu0 %v2838, 24
        %v2916 = vpop.permute.xlu0 %2915
        %2917 = vrot.lane.b32.xlu0 %v2839, 24
        %v2918 = vpop.permute.xlu0 %2917
        %2919 = vrot.lane.b32.xlu0 %v2840, 24
        %v2920 = vpop.permute.xlu0 %2919
        %2921 = vrot.lane.b32.xlu0 %v2841, 24
        %v2922 = vpop.permute.xlu0 %2921
        %2923 = vrot.lane.b32.xlu0 %v2842, 24
        %v2924 = vpop.permute.xlu0 %2923
        %2925 = vrot.lane.b32.xlu0 %v2843, 24
        %v2926 = vpop.permute.xlu0 %2925
        %2927 = vrot.lane.b32.xlu0 %v2844, 24
        %v2928 = vpop.permute.xlu0 %2927
        %2929 = vrot.lane.b32.xlu0 %v2845, 24
        %v2930 = vpop.permute.xlu0 %2929
        %2931 = vrot.lane.b32.xlu0 %v2846, 24
        %v2932 = vpop.permute.xlu0 %2931
        %2933 = vrot.lane.b32.xlu0 %v2847, 24
        %v2934 = vpop.permute.xlu0 %2933
        %2935 = vrot.lane.b32.xlu0 %v2848, 24
        %v2936 = vpop.permute.xlu0 %2935
        %2937 = vrot.lane.b32.xlu0 %v2849, 24
        %v2938 = vpop.permute.xlu0 %2937
        %2939 = vrot.lane.b32.xlu0 %v2850, 24
        %v2940 = vpop.permute.xlu0 %2939
        %2941 = vrot.lane.b32.xlu0 %v2851, 24
        %v2942 = vpop.permute.xlu0 %2941
        %2943 = vrot.lane.b32.xlu0 %v2852, 24
        %v2944 = vpop.permute.xlu0 %2943
        %2945 = vrot.lane.b32.xlu0 %v2853, 24
        %v2946 = vpop.permute.xlu0 %2945
        %2947 = vrot.lane.b32.xlu0 %v2854, 24
        %v2948 = vpop.permute.xlu0 %2947
        %2949 = vrot.lane.b32.xlu0 %v2855, 24
        %v2950 = vpop.permute.xlu0 %2949
        %2951 = vrot.lane.b32.xlu0 %v2856, 24
        %v2952 = vpop.permute.xlu0 %2951
        %vm2985 = vcmask 261312
        %2986 = vst.msk [vmem:[#allocation3] sm:$0xff] %vm2985, %v2890
        %2987 = vst.msk [vmem:[#allocation3 + $0x10] sm:$0xff] %vm2985, %v2892
        %2988 = vst.msk [vmem:[#allocation3 + $0x20] sm:$0xff] %vm2985, %v2894
        %2989 = vst.msk [vmem:[#allocation3 + $0x30] sm:$0xff] %vm2985, %v2896
        %2990 = vst.msk [vmem:[#allocation3 + $0x40] sm:$0xff] %vm2985, %v2898
        %2991 = vst.msk [vmem:[#allocation3 + $0x50] sm:$0xff] %vm2985, %v2900
        %2992 = vst.msk [vmem:[#allocation3 + $0x60] sm:$0xff] %vm2985, %v2902
        %2993 = vst.msk [vmem:[#allocation3 + $0x70] sm:$0xff] %vm2985, %v2904
        %2994 = vst.msk [vmem:[#allocation3 + $0x80] sm:$0xff] %vm2985, %v2906
        %2995 = vst.msk [vmem:[#allocation3 + $0x90] sm:$0xff] %vm2985, %v2908
        %2996 = vst.msk [vmem:[#allocation3 + $0xa0] sm:$0xff] %vm2985, %v2910
        %2997 = vst.msk [vmem:[#allocation3 + $0xb0] sm:$0xff] %vm2985, %v2912
        %2998 = vst.msk [vmem:[#allocation3 + $0xc0] sm:$0xff] %vm2985, %v2914
        %2999 = vst.msk [vmem:[#allocation3 + $0xd0] sm:$0xff] %vm2985, %v2916
        %3000 = vst.msk [vmem:[#allocation3 + $0xe0] sm:$0xff] %vm2985, %v2918
        %3001 = vst.msk [vmem:[#allocation3 + $0xf0] sm:$0xff] %vm2985, %v2920
        %3002 = vst.msk [vmem:[#allocation3 + $0x100] sm:$0xff] %vm2985, %v2922
        %3003 = vst.msk [vmem:[#allocation3 + $0x110] sm:$0xff] %vm2985, %v2924
        %3004 = vst.msk [vmem:[#allocation3 + $0x120] sm:$0xff] %vm2985, %v2926
        %3005 = vst.msk [vmem:[#allocation3 + $0x130] sm:$0xff] %vm2985, %v2928
        %3006 = vst.msk [vmem:[#allocation3 + $0x140] sm:$0xff] %vm2985, %v2930
        %3007 = vst.msk [vmem:[#allocation3 + $0x150] sm:$0xff] %vm2985, %v2932
        %3008 = vst.msk [vmem:[#allocation3 + $0x160] sm:$0xff] %vm2985, %v2934
        %3009 = vst.msk [vmem:[#allocation3 + $0x170] sm:$0xff] %vm2985, %v2936
        %3010 = vst.msk [vmem:[#allocation3 + $0x180] sm:$0xff] %vm2985, %v2938
        %3011 = vst.msk [vmem:[#allocation3 + $0x190] sm:$0xff] %vm2985, %v2940
        %3012 = vst.msk [vmem:[#allocation3 + $0x1a0] sm:$0xff] %vm2985, %v2942
        %3013 = vst.msk [vmem:[#allocation3 + $0x1b0] sm:$0xff] %vm2985, %v2944
        %3014 = vst.msk [vmem:[#allocation3 + $0x1c0] sm:$0xff] %vm2985, %v2946
        %3015 = vst.msk [vmem:[#allocation3 + $0x1d0] sm:$0xff] %vm2985, %v2948
        %3016 = vst.msk [vmem:[#allocation3 + $0x1e0] sm:$0xff] %vm2985, %v2950
        %3017 = vst.msk [vmem:[#allocation3 + $0x1f0] sm:$0xff] %vm2985, %v2952
        %v3018 = vld [vmem:[%s201 + $0x1] sm:$0xff]
        %v3019 = vld [vmem:[%s201 + $0x9] sm:$0xff]
        %v3020 = vld [vmem:[%s201 + $0x19] sm:$0xff]
        %v3021 = vld [vmem:[%s201 + $0x21] sm:$0xff]
        %v3022 = vld [vmem:[%s201 + $0x31] sm:$0xff]
        %v3023 = vld [vmem:[%s201 + $0x39] sm:$0xff]
        %v3024 = vld [vmem:[%s201 + $0x49] sm:$0xff]
        %v3025 = vld [vmem:[%s201 + $0x51] sm:$0xff]
        %v3026 = vld [vmem:[%s201 + $0x61] sm:$0xff]
        %v3027 = vld [vmem:[%s201 + $0x69] sm:$0xff]
        %v3028 = vld [vmem:[%s201 + $0x79] sm:$0xff]
        %v3029 = vld [vmem:[%s201 + $0x81] sm:$0xff]
        %v3030 = vld [vmem:[%s201 + $0x91] sm:$0xff]
        %v3031 = vld [vmem:[%s201 + $0x99] sm:$0xff]
        %v3032 = vld [vmem:[%s201 + $0xa9] sm:$0xff]
        %v3033 = vld [vmem:[%s201 + $0xb1] sm:$0xff]
        %v3034 = vld [vmem:[%s201 + $0xc1] sm:$0xff]
        %v3035 = vld [vmem:[%s201 + $0xc9] sm:$0xff]
        %v3036 = vld [vmem:[%s201 + $0xd9] sm:$0xff]
        %v3037 = vld [vmem:[%s201 + $0xe1] sm:$0xff]
        %v3038 = vld [vmem:[%s201 + $0xf1] sm:$0xff]
        %v3039 = vld [vmem:[%s201 + $0xf9] sm:$0xff]
        %v3040 = vld [vmem:[%s201 + $0x109] sm:$0xff]
        %v3041 = vld [vmem:[%s201 + $0x111] sm:$0xff]
        %v3042 = vld [vmem:[%s201 + $0x121] sm:$0xff]
        %v3043 = vld [vmem:[%s201 + $0x129] sm:$0xff]
        %v3044 = vld [vmem:[%s201 + $0x139] sm:$0xff]
        %v3045 = vld [vmem:[%s201 + $0x141] sm:$0xff]
        %v3046 = vld [vmem:[%s201 + $0x151] sm:$0xff]
        %v3047 = vld [vmem:[%s201 + $0x159] sm:$0xff]
        %v3048 = vld [vmem:[%s201 + $0x169] sm:$0xff]
        %v3049 = vld [vmem:[%s201 + $0x171] sm:$0xff]
        %3082 = vrot.lane.b32.xlu0 %v3018, 32
        %v3083 = vpop.permute.xlu0 %3082
        %3084 = vrot.lane.b32.xlu0 %v3019, 32
        %v3085 = vpop.permute.xlu0 %3084
        %3086 = vrot.lane.b32.xlu0 %v3020, 32
        %v3087 = vpop.permute.xlu0 %3086
        %3088 = vrot.lane.b32.xlu0 %v3021, 32
        %v3089 = vpop.permute.xlu0 %3088
        %3090 = vrot.lane.b32.xlu0 %v3022, 32
        %v3091 = vpop.permute.xlu0 %3090
        %3092 = vrot.lane.b32.xlu0 %v3023, 32
        %v3093 = vpop.permute.xlu0 %3092
        %3094 = vrot.lane.b32.xlu0 %v3024, 32
        %v3095 = vpop.permute.xlu0 %3094
        %3096 = vrot.lane.b32.xlu0 %v3025, 32
        %v3097 = vpop.permute.xlu0 %3096
        %3098 = vrot.lane.b32.xlu0 %v3026, 32
        %v3099 = vpop.permute.xlu0 %3098
        %3100 = vrot.lane.b32.xlu0 %v3027, 32
        %v3101 = vpop.permute.xlu0 %3100
        %3102 = vrot.lane.b32.xlu0 %v3028, 32
        %v3103 = vpop.permute.xlu0 %3102
        %3104 = vrot.lane.b32.xlu0 %v3029, 32
        %v3105 = vpop.permute.xlu0 %3104
        %3106 = vrot.lane.b32.xlu0 %v3030, 32
        %v3107 = vpop.permute.xlu0 %3106
        %3108 = vrot.lane.b32.xlu0 %v3031, 32
        %v3109 = vpop.permute.xlu0 %3108
        %3110 = vrot.lane.b32.xlu0 %v3032, 32
        %v3111 = vpop.permute.xlu0 %3110
        %3112 = vrot.lane.b32.xlu0 %v3033, 32
        %v3113 = vpop.permute.xlu0 %3112
        %3114 = vrot.lane.b32.xlu0 %v3034, 32
        %v3115 = vpop.permute.xlu0 %3114
        %3116 = vrot.lane.b32.xlu0 %v3035, 32
        %v3117 = vpop.permute.xlu0 %3116
        %3118 = vrot.lane.b32.xlu0 %v3036, 32
        %v3119 = vpop.permute.xlu0 %3118
        %3120 = vrot.lane.b32.xlu0 %v3037, 32
        %v3121 = vpop.permute.xlu0 %3120
        %3122 = vrot.lane.b32.xlu0 %v3038, 32
        %v3123 = vpop.permute.xlu0 %3122
        %3124 = vrot.lane.b32.xlu0 %v3039, 32
        %v3125 = vpop.permute.xlu0 %3124
        %3126 = vrot.lane.b32.xlu0 %v3040, 32
        %v3127 = vpop.permute.xlu0 %3126
        %3128 = vrot.lane.b32.xlu0 %v3041, 32
        %v3129 = vpop.permute.xlu0 %3128
        %3130 = vrot.lane.b32.xlu0 %v3042, 32
        %v3131 = vpop.permute.xlu0 %3130
        %3132 = vrot.lane.b32.xlu0 %v3043, 32
        %v3133 = vpop.permute.xlu0 %3132
        %3134 = vrot.lane.b32.xlu0 %v3044, 32
        %v3135 = vpop.permute.xlu0 %3134
        %3136 = vrot.lane.b32.xlu0 %v3045, 32
        %v3137 = vpop.permute.xlu0 %3136
        %3138 = vrot.lane.b32.xlu0 %v3046, 32
        %v3139 = vpop.permute.xlu0 %3138
        %3140 = vrot.lane.b32.xlu0 %v3047, 32
        %v3141 = vpop.permute.xlu0 %3140
        %3142 = vrot.lane.b32.xlu0 %v3048, 32
        %v3143 = vpop.permute.xlu0 %3142
        %3144 = vrot.lane.b32.xlu0 %v3049, 32
        %v3145 = vpop.permute.xlu0 %3144
        %vm3178 = vcmask 326912
        %3179 = vst.msk [vmem:[#allocation3] sm:$0xff] %vm3178, %v3083
        %3180 = vst.msk [vmem:[#allocation3 + $0x10] sm:$0xff] %vm3178, %v3085
        %3181 = vst.msk [vmem:[#allocation3 + $0x20] sm:$0xff] %vm3178, %v3087
        %3182 = vst.msk [vmem:[#allocation3 + $0x30] sm:$0xff] %vm3178, %v3089
        %3183 = vst.msk [vmem:[#allocation3 + $0x40] sm:$0xff] %vm3178, %v3091
        %3184 = vst.msk [vmem:[#allocation3 + $0x50] sm:$0xff] %vm3178, %v3093
        %3185 = vst.msk [vmem:[#allocation3 + $0x60] sm:$0xff] %vm3178, %v3095
        %3186 = vst.msk [vmem:[#allocation3 + $0x70] sm:$0xff] %vm3178, %v3097
        %3187 = vst.msk [vmem:[#allocation3 + $0x80] sm:$0xff] %vm3178, %v3099
        %3188 = vst.msk [vmem:[#allocation3 + $0x90] sm:$0xff] %vm3178, %v3101
        %3189 = vst.msk [vmem:[#allocation3 + $0xa0] sm:$0xff] %vm3178, %v3103
        %3190 = vst.msk [vmem:[#allocation3 + $0xb0] sm:$0xff] %vm3178, %v3105
        %3191 = vst.msk [vmem:[#allocation3 + $0xc0] sm:$0xff] %vm3178, %v3107
        %3192 = vst.msk [vmem:[#allocation3 + $0xd0] sm:$0xff] %vm3178, %v3109
        %3193 = vst.msk [vmem:[#allocation3 + $0xe0] sm:$0xff] %vm3178, %v3111
        %3194 = vst.msk [vmem:[#allocation3 + $0xf0] sm:$0xff] %vm3178, %v3113
        %3195 = vst.msk [vmem:[#allocation3 + $0x100] sm:$0xff] %vm3178, %v3115
        %3196 = vst.msk [vmem:[#allocation3 + $0x110] sm:$0xff] %vm3178, %v3117
        %3197 = vst.msk [vmem:[#allocation3 + $0x120] sm:$0xff] %vm3178, %v3119
        %3198 = vst.msk [vmem:[#allocation3 + $0x130] sm:$0xff] %vm3178, %v3121
        %3199 = vst.msk [vmem:[#allocation3 + $0x140] sm:$0xff] %vm3178, %v3123
        %3200 = vst.msk [vmem:[#allocation3 + $0x150] sm:$0xff] %vm3178, %v3125
        %3201 = vst.msk [vmem:[#allocation3 + $0x160] sm:$0xff] %vm3178, %v3127
        %3202 = vst.msk [vmem:[#allocation3 + $0x170] sm:$0xff] %vm3178, %v3129
        %3203 = vst.msk [vmem:[#allocation3 + $0x180] sm:$0xff] %vm3178, %v3131
        %3204 = vst.msk [vmem:[#allocation3 + $0x190] sm:$0xff] %vm3178, %v3133
        %3205 = vst.msk [vmem:[#allocation3 + $0x1a0] sm:$0xff] %vm3178, %v3135
        %3206 = vst.msk [vmem:[#allocation3 + $0x1b0] sm:$0xff] %vm3178, %v3137
        %3207 = vst.msk [vmem:[#allocation3 + $0x1c0] sm:$0xff] %vm3178, %v3139
        %3208 = vst.msk [vmem:[#allocation3 + $0x1d0] sm:$0xff] %vm3178, %v3141
        %3209 = vst.msk [vmem:[#allocation3 + $0x1e0] sm:$0xff] %vm3178, %v3143
        %3210 = vst.msk [vmem:[#allocation3 + $0x1f0] sm:$0xff] %vm3178, %v3145
        %v3211 = vld [vmem:[%s201 + $0x2] sm:$0xff]
        %v3212 = vld [vmem:[%s201 + $0xa] sm:$0xff]
        %v3213 = vld [vmem:[%s201 + $0x1a] sm:$0xff]
        %v3214 = vld [vmem:[%s201 + $0x22] sm:$0xff]
        %v3215 = vld [vmem:[%s201 + $0x32] sm:$0xff]
        %v3216 = vld [vmem:[%s201 + $0x3a] sm:$0xff]
        %v3217 = vld [vmem:[%s201 + $0x4a] sm:$0xff]
        %v3218 = vld [vmem:[%s201 + $0x52] sm:$0xff]
        %v3219 = vld [vmem:[%s201 + $0x62] sm:$0xff]
        %v3220 = vld [vmem:[%s201 + $0x6a] sm:$0xff]
        %v3221 = vld [vmem:[%s201 + $0x7a] sm:$0xff]
        %v3222 = vld [vmem:[%s201 + $0x82] sm:$0xff]
        %v3223 = vld [vmem:[%s201 + $0x92] sm:$0xff]
        %v3224 = vld [vmem:[%s201 + $0x9a] sm:$0xff]
        %v3225 = vld [vmem:[%s201 + $0xaa] sm:$0xff]
        %v3226 = vld [vmem:[%s201 + $0xb2] sm:$0xff]
        %v3227 = vld [vmem:[%s201 + $0xc2] sm:$0xff]
        %v3228 = vld [vmem:[%s201 + $0xca] sm:$0xff]
        %v3229 = vld [vmem:[%s201 + $0xda] sm:$0xff]
        %v3230 = vld [vmem:[%s201 + $0xe2] sm:$0xff]
        %v3231 = vld [vmem:[%s201 + $0xf2] sm:$0xff]
        %v3232 = vld [vmem:[%s201 + $0xfa] sm:$0xff]
        %v3233 = vld [vmem:[%s201 + $0x10a] sm:$0xff]
        %v3234 = vld [vmem:[%s201 + $0x112] sm:$0xff]
        %v3235 = vld [vmem:[%s201 + $0x122] sm:$0xff]
        %v3236 = vld [vmem:[%s201 + $0x12a] sm:$0xff]
        %v3237 = vld [vmem:[%s201 + $0x13a] sm:$0xff]
        %v3238 = vld [vmem:[%s201 + $0x142] sm:$0xff]
        %v3239 = vld [vmem:[%s201 + $0x152] sm:$0xff]
        %v3240 = vld [vmem:[%s201 + $0x15a] sm:$0xff]
        %v3241 = vld [vmem:[%s201 + $0x16a] sm:$0xff]
        %v3242 = vld [vmem:[%s201 + $0x172] sm:$0xff]
        %3275 = vrot.lane.b32.xlu0 %v3211, 40
        %v3276 = vpop.permute.xlu0 %3275
        %3277 = vrot.lane.b32.xlu0 %v3212, 40
        %v3278 = vpop.permute.xlu0 %3277
        %3279 = vrot.lane.b32.xlu0 %v3213, 40
        %v3280 = vpop.permute.xlu0 %3279
        %3281 = vrot.lane.b32.xlu0 %v3214, 40
        %v3282 = vpop.permute.xlu0 %3281
        %3283 = vrot.lane.b32.xlu0 %v3215, 40
        %v3284 = vpop.permute.xlu0 %3283
        %3285 = vrot.lane.b32.xlu0 %v3216, 40
        %v3286 = vpop.permute.xlu0 %3285
        %3287 = vrot.lane.b32.xlu0 %v3217, 40
        %v3288 = vpop.permute.xlu0 %3287
        %3289 = vrot.lane.b32.xlu0 %v3218, 40
        %v3290 = vpop.permute.xlu0 %3289
        %3291 = vrot.lane.b32.xlu0 %v3219, 40
        %v3292 = vpop.permute.xlu0 %3291
        %3293 = vrot.lane.b32.xlu0 %v3220, 40
        %v3294 = vpop.permute.xlu0 %3293
        %3295 = vrot.lane.b32.xlu0 %v3221, 40
        %v3296 = vpop.permute.xlu0 %3295
        %3297 = vrot.lane.b32.xlu0 %v3222, 40
        %v3298 = vpop.permute.xlu0 %3297
        %3299 = vrot.lane.b32.xlu0 %v3223, 40
        %v3300 = vpop.permute.xlu0 %3299
        %3301 = vrot.lane.b32.xlu0 %v3224, 40
        %v3302 = vpop.permute.xlu0 %3301
        %3303 = vrot.lane.b32.xlu0 %v3225, 40
        %v3304 = vpop.permute.xlu0 %3303
        %3305 = vrot.lane.b32.xlu0 %v3226, 40
        %v3306 = vpop.permute.xlu0 %3305
        %3307 = vrot.lane.b32.xlu0 %v3227, 40
        %v3308 = vpop.permute.xlu0 %3307
        %3309 = vrot.lane.b32.xlu0 %v3228, 40
        %v3310 = vpop.permute.xlu0 %3309
        %3311 = vrot.lane.b32.xlu0 %v3229, 40
        %v3312 = vpop.permute.xlu0 %3311
        %3313 = vrot.lane.b32.xlu0 %v3230, 40
        %v3314 = vpop.permute.xlu0 %3313
        %3315 = vrot.lane.b32.xlu0 %v3231, 40
        %v3316 = vpop.permute.xlu0 %3315
        %3317 = vrot.lane.b32.xlu0 %v3232, 40
        %v3318 = vpop.permute.xlu0 %3317
        %3319 = vrot.lane.b32.xlu0 %v3233, 40
        %v3320 = vpop.permute.xlu0 %3319
        %3321 = vrot.lane.b32.xlu0 %v3234, 40
        %v3322 = vpop.permute.xlu0 %3321
        %3323 = vrot.lane.b32.xlu0 %v3235, 40
        %v3324 = vpop.permute.xlu0 %3323
        %3325 = vrot.lane.b32.xlu0 %v3236, 40
        %v3326 = vpop.permute.xlu0 %3325
        %3327 = vrot.lane.b32.xlu0 %v3237, 40
        %v3328 = vpop.permute.xlu0 %3327
        %3329 = vrot.lane.b32.xlu0 %v3238, 40
        %v3330 = vpop.permute.xlu0 %3329
        %3331 = vrot.lane.b32.xlu0 %v3239, 40
        %v3332 = vpop.permute.xlu0 %3331
        %3333 = vrot.lane.b32.xlu0 %v3240, 40
        %v3334 = vpop.permute.xlu0 %3333
        %3335 = vrot.lane.b32.xlu0 %v3241, 40
        %v3336 = vpop.permute.xlu0 %3335
        %3337 = vrot.lane.b32.xlu0 %v3242, 40
        %v3338 = vpop.permute.xlu0 %3337
        %vm3371 = vcmask 392512
        %3372 = vst.msk [vmem:[#allocation3] sm:$0xff] %vm3371, %v3276
        %3373 = vst.msk [vmem:[#allocation3 + $0x10] sm:$0xff] %vm3371, %v3278
        %3374 = vst.msk [vmem:[#allocation3 + $0x20] sm:$0xff] %vm3371, %v3280
        %3375 = vst.msk [vmem:[#allocation3 + $0x30] sm:$0xff] %vm3371, %v3282
        %3376 = vst.msk [vmem:[#allocation3 + $0x40] sm:$0xff] %vm3371, %v3284
        %3377 = vst.msk [vmem:[#allocation3 + $0x50] sm:$0xff] %vm3371, %v3286
        %3378 = vst.msk [vmem:[#allocation3 + $0x60] sm:$0xff] %vm3371, %v3288
        %3379 = vst.msk [vmem:[#allocation3 + $0x70] sm:$0xff] %vm3371, %v3290
        %3380 = vst.msk [vmem:[#allocation3 + $0x80] sm:$0xff] %vm3371, %v3292
        %3381 = vst.msk [vmem:[#allocation3 + $0x90] sm:$0xff] %vm3371, %v3294
        %3382 = vst.msk [vmem:[#allocation3 + $0xa0] sm:$0xff] %vm3371, %v3296
        %3383 = vst.msk [vmem:[#allocation3 + $0xb0] sm:$0xff] %vm3371, %v3298
        %3384 = vst.msk [vmem:[#allocation3 + $0xc0] sm:$0xff] %vm3371, %v3300
        %3385 = vst.msk [vmem:[#allocation3 + $0xd0] sm:$0xff] %vm3371, %v3302
        %3386 = vst.msk [vmem:[#allocation3 + $0xe0] sm:$0xff] %vm3371, %v3304
        %3387 = vst.msk [vmem:[#allocation3 + $0xf0] sm:$0xff] %vm3371, %v3306
        %3388 = vst.msk [vmem:[#allocation3 + $0x100] sm:$0xff] %vm3371, %v3308
        %3389 = vst.msk [vmem:[#allocation3 + $0x110] sm:$0xff] %vm3371, %v3310
        %3390 = vst.msk [vmem:[#allocation3 + $0x120] sm:$0xff] %vm3371, %v3312
        %3391 = vst.msk [vmem:[#allocation3 + $0x130] sm:$0xff] %vm3371, %v3314
        %3392 = vst.msk [vmem:[#allocation3 + $0x140] sm:$0xff] %vm3371, %v3316
        %3393 = vst.msk [vmem:[#allocation3 + $0x150] sm:$0xff] %vm3371, %v3318
        %3394 = vst.msk [vmem:[#allocation3 + $0x160] sm:$0xff] %vm3371, %v3320
        %3395 = vst.msk [vmem:[#allocation3 + $0x170] sm:$0xff] %vm3371, %v3322
        %3396 = vst.msk [vmem:[#allocation3 + $0x180] sm:$0xff] %vm3371, %v3324
        %3397 = vst.msk [vmem:[#allocation3 + $0x190] sm:$0xff] %vm3371, %v3326
        %3398 = vst.msk [vmem:[#allocation3 + $0x1a0] sm:$0xff] %vm3371, %v3328
        %3399 = vst.msk [vmem:[#allocation3 + $0x1b0] sm:$0xff] %vm3371, %v3330
        %3400 = vst.msk [vmem:[#allocation3 + $0x1c0] sm:$0xff] %vm3371, %v3332
        %3401 = vst.msk [vmem:[#allocation3 + $0x1d0] sm:$0xff] %vm3371, %v3334
        %3402 = vst.msk [vmem:[#allocation3 + $0x1e0] sm:$0xff] %vm3371, %v3336
        %3403 = vst.msk [vmem:[#allocation3 + $0x1f0] sm:$0xff] %vm3371, %v3338
        %v3404 = vld [vmem:[%s1313] sm:$0xff]
        %v3405 = vld [vmem:[%s1313 + $0x8] sm:$0xff]
        %v3406 = vld [vmem:[%s1313 + $0x18] sm:$0xff]
        %v3407 = vld [vmem:[%s1313 + $0x20] sm:$0xff]
        %v3408 = vld [vmem:[%s1313 + $0x30] sm:$0xff]
        %v3409 = vld [vmem:[%s1313 + $0x38] sm:$0xff]
        %v3410 = vld [vmem:[%s1313 + $0x48] sm:$0xff]
        %v3411 = vld [vmem:[%s1313 + $0x50] sm:$0xff]
        %v3412 = vld [vmem:[%s1313 + $0x60] sm:$0xff]
        %v3413 = vld [vmem:[%s1313 + $0x68] sm:$0xff]
        %v3414 = vld [vmem:[%s1313 + $0x78] sm:$0xff]
        %v3415 = vld [vmem:[%s1313 + $0x80] sm:$0xff]
        %v3416 = vld [vmem:[%s1313 + $0x90] sm:$0xff]
        %v3417 = vld [vmem:[%s1313 + $0x98] sm:$0xff]
        %v3418 = vld [vmem:[%s1313 + $0xa8] sm:$0xff]
        %v3419 = vld [vmem:[%s1313 + $0xb0] sm:$0xff]
        %v3420 = vld [vmem:[%s1313 + $0xc0] sm:$0xff]
        %v3421 = vld [vmem:[%s1313 + $0xc8] sm:$0xff]
        %v3422 = vld [vmem:[%s1313 + $0xd8] sm:$0xff]
        %v3423 = vld [vmem:[%s1313 + $0xe0] sm:$0xff]
        %v3424 = vld [vmem:[%s1313 + $0xf0] sm:$0xff]
        %v3425 = vld [vmem:[%s1313 + $0xf8] sm:$0xff]
        %v3426 = vld [vmem:[%s1313 + $0x108] sm:$0xff]
        %v3427 = vld [vmem:[%s1313 + $0x110] sm:$0xff]
        %v3428 = vld [vmem:[%s1313 + $0x120] sm:$0xff]
        %v3429 = vld [vmem:[%s1313 + $0x128] sm:$0xff]
        %v3430 = vld [vmem:[%s1313 + $0x138] sm:$0xff]
        %v3431 = vld [vmem:[%s1313 + $0x140] sm:$0xff]
        %v3432 = vld [vmem:[%s1313 + $0x150] sm:$0xff]
        %v3433 = vld [vmem:[%s1313 + $0x158] sm:$0xff]
        %v3434 = vld [vmem:[%s1313 + $0x168] sm:$0xff]
        %v3435 = vld [vmem:[%s1313 + $0x170] sm:$0xff]
        %3468 = vrot.lane.b32.xlu0 %v3404, 48
        %v3469 = vpop.permute.xlu0 %3468
        %3470 = vrot.lane.b32.xlu0 %v3405, 48
        %v3471 = vpop.permute.xlu0 %3470
        %3472 = vrot.lane.b32.xlu0 %v3406, 48
        %v3473 = vpop.permute.xlu0 %3472
        %3474 = vrot.lane.b32.xlu0 %v3407, 48
        %v3475 = vpop.permute.xlu0 %3474
        %3476 = vrot.lane.b32.xlu0 %v3408, 48
        %v3477 = vpop.permute.xlu0 %3476
        %3478 = vrot.lane.b32.xlu0 %v3409, 48
        %v3479 = vpop.permute.xlu0 %3478
        %3480 = vrot.lane.b32.xlu0 %v3410, 48
        %v3481 = vpop.permute.xlu0 %3480
        %3482 = vrot.lane.b32.xlu0 %v3411, 48
        %v3483 = vpop.permute.xlu0 %3482
        %3484 = vrot.lane.b32.xlu0 %v3412, 48
        %v3485 = vpop.permute.xlu0 %3484
        %3486 = vrot.lane.b32.xlu0 %v3413, 48
        %v3487 = vpop.permute.xlu0 %3486
        %3488 = vrot.lane.b32.xlu0 %v3414, 48
        %v3489 = vpop.permute.xlu0 %3488
        %3490 = vrot.lane.b32.xlu0 %v3415, 48
        %v3491 = vpop.permute.xlu0 %3490
        %3492 = vrot.lane.b32.xlu0 %v3416, 48
        %v3493 = vpop.permute.xlu0 %3492
        %3494 = vrot.lane.b32.xlu0 %v3417, 48
        %v3495 = vpop.permute.xlu0 %3494
        %3496 = vrot.lane.b32.xlu0 %v3418, 48
        %v3497 = vpop.permute.xlu0 %3496
        %3498 = vrot.lane.b32.xlu0 %v3419, 48
        %v3499 = vpop.permute.xlu0 %3498
        %3500 = vrot.lane.b32.xlu0 %v3420, 48
        %v3501 = vpop.permute.xlu0 %3500
        %3502 = vrot.lane.b32.xlu0 %v3421, 48
        %v3503 = vpop.permute.xlu0 %3502
        %3504 = vrot.lane.b32.xlu0 %v3422, 48
        %v3505 = vpop.permute.xlu0 %3504
        %3506 = vrot.lane.b32.xlu0 %v3423, 48
        %v3507 = vpop.permute.xlu0 %3506
        %3508 = vrot.lane.b32.xlu0 %v3424, 48
        %v3509 = vpop.permute.xlu0 %3508
        %3510 = vrot.lane.b32.xlu0 %v3425, 48
        %v3511 = vpop.permute.xlu0 %3510
        %3512 = vrot.lane.b32.xlu0 %v3426, 48
        %v3513 = vpop.permute.xlu0 %3512
        %3514 = vrot.lane.b32.xlu0 %v3427, 48
        %v3515 = vpop.permute.xlu0 %3514
        %3516 = vrot.lane.b32.xlu0 %v3428, 48
        %v3517 = vpop.permute.xlu0 %3516
        %3518 = vrot.lane.b32.xlu0 %v3429, 48
        %v3519 = vpop.permute.xlu0 %3518
        %3520 = vrot.lane.b32.xlu0 %v3430, 48
        %v3521 = vpop.permute.xlu0 %3520
        %3522 = vrot.lane.b32.xlu0 %v3431, 48
        %v3523 = vpop.permute.xlu0 %3522
        %3524 = vrot.lane.b32.xlu0 %v3432, 48
        %v3525 = vpop.permute.xlu0 %3524
        %3526 = vrot.lane.b32.xlu0 %v3433, 48
        %v3527 = vpop.permute.xlu0 %3526
        %3528 = vrot.lane.b32.xlu0 %v3434, 48
        %v3529 = vpop.permute.xlu0 %3528
        %3530 = vrot.lane.b32.xlu0 %v3435, 48
        %v3531 = vpop.permute.xlu0 %3530
        %vm3564 = vcmask 458112
        %3565 = vst.msk [vmem:[#allocation3] sm:$0xff] %vm3564, %v3469
        %3566 = vst.msk [vmem:[#allocation3 + $0x10] sm:$0xff] %vm3564, %v3471
        %3567 = vst.msk [vmem:[#allocation3 + $0x20] sm:$0xff] %vm3564, %v3473
        %3568 = vst.msk [vmem:[#allocation3 + $0x30] sm:$0xff] %vm3564, %v3475
        %3569 = vst.msk [vmem:[#allocation3 + $0x40] sm:$0xff] %vm3564, %v3477
        %3570 = vst.msk [vmem:[#allocation3 + $0x50] sm:$0xff] %vm3564, %v3479
        %3571 = vst.msk [vmem:[#allocation3 + $0x60] sm:$0xff] %vm3564, %v3481
        %3572 = vst.msk [vmem:[#allocation3 + $0x70] sm:$0xff] %vm3564, %v3483
        %3573 = vst.msk [vmem:[#allocation3 + $0x80] sm:$0xff] %vm3564, %v3485
        %3574 = vst.msk [vmem:[#allocation3 + $0x90] sm:$0xff] %vm3564, %v3487
        %3575 = vst.msk [vmem:[#allocation3 + $0xa0] sm:$0xff] %vm3564, %v3489
        %3576 = vst.msk [vmem:[#allocation3 + $0xb0] sm:$0xff] %vm3564, %v3491
        %3577 = vst.msk [vmem:[#allocation3 + $0xc0] sm:$0xff] %vm3564, %v3493
        %3578 = vst.msk [vmem:[#allocation3 + $0xd0] sm:$0xff] %vm3564, %v3495
        %3579 = vst.msk [vmem:[#allocation3 + $0xe0] sm:$0xff] %vm3564, %v3497
        %3580 = vst.msk [vmem:[#allocation3 + $0xf0] sm:$0xff] %vm3564, %v3499
        %3581 = vst.msk [vmem:[#allocation3 + $0x100] sm:$0xff] %vm3564, %v3501
        %3582 = vst.msk [vmem:[#allocation3 + $0x110] sm:$0xff] %vm3564, %v3503
        %3583 = vst.msk [vmem:[#allocation3 + $0x120] sm:$0xff] %vm3564, %v3505
        %3584 = vst.msk [vmem:[#allocation3 + $0x130] sm:$0xff] %vm3564, %v3507
        %3585 = vst.msk [vmem:[#allocation3 + $0x140] sm:$0xff] %vm3564, %v3509
        %3586 = vst.msk [vmem:[#allocation3 + $0x150] sm:$0xff] %vm3564, %v3511
        %3587 = vst.msk [vmem:[#allocation3 + $0x160] sm:$0xff] %vm3564, %v3513
        %3588 = vst.msk [vmem:[#allocation3 + $0x170] sm:$0xff] %vm3564, %v3515
        %3589 = vst.msk [vmem:[#allocation3 + $0x180] sm:$0xff] %vm3564, %v3517
        %3590 = vst.msk [vmem:[#allocation3 + $0x190] sm:$0xff] %vm3564, %v3519
        %3591 = vst.msk [vmem:[#allocation3 + $0x1a0] sm:$0xff] %vm3564, %v3521
        %3592 = vst.msk [vmem:[#allocation3 + $0x1b0] sm:$0xff] %vm3564, %v3523
        %3593 = vst.msk [vmem:[#allocation3 + $0x1c0] sm:$0xff] %vm3564, %v3525
        %3594 = vst.msk [vmem:[#allocation3 + $0x1d0] sm:$0xff] %vm3564, %v3527
        %3595 = vst.msk [vmem:[#allocation3 + $0x1e0] sm:$0xff] %vm3564, %v3529
        %3596 = vst.msk [vmem:[#allocation3 + $0x1f0] sm:$0xff] %vm3564, %v3531
        %v3597 = vld [vmem:[%s1313 + $0x1] sm:$0xff]
        %v3598 = vld [vmem:[%s1313 + $0x9] sm:$0xff]
        %v3599 = vld [vmem:[%s1313 + $0x19] sm:$0xff]
        %v3600 = vld [vmem:[%s1313 + $0x21] sm:$0xff]
        %v3601 = vld [vmem:[%s1313 + $0x31] sm:$0xff]
        %v3602 = vld [vmem:[%s1313 + $0x39] sm:$0xff]
        %v3603 = vld [vmem:[%s1313 + $0x49] sm:$0xff]
        %v3604 = vld [vmem:[%s1313 + $0x51] sm:$0xff]
        %v3605 = vld [vmem:[%s1313 + $0x61] sm:$0xff]
        %v3606 = vld [vmem:[%s1313 + $0x69] sm:$0xff]
        %v3607 = vld [vmem:[%s1313 + $0x79] sm:$0xff]
        %v3608 = vld [vmem:[%s1313 + $0x81] sm:$0xff]
        %v3609 = vld [vmem:[%s1313 + $0x91] sm:$0xff]
        %v3610 = vld [vmem:[%s1313 + $0x99] sm:$0xff]
        %v3611 = vld [vmem:[%s1313 + $0xa9] sm:$0xff]
        %v3612 = vld [vmem:[%s1313 + $0xb1] sm:$0xff]
        %v3613 = vld [vmem:[%s1313 + $0xc1] sm:$0xff]
        %v3614 = vld [vmem:[%s1313 + $0xc9] sm:$0xff]
        %v3615 = vld [vmem:[%s1313 + $0xd9] sm:$0xff]
        %v3616 = vld [vmem:[%s1313 + $0xe1] sm:$0xff]
        %v3617 = vld [vmem:[%s1313 + $0xf1] sm:$0xff]
        %v3618 = vld [vmem:[%s1313 + $0xf9] sm:$0xff]
        %v3619 = vld [vmem:[%s1313 + $0x109] sm:$0xff]
        %v3620 = vld [vmem:[%s1313 + $0x111] sm:$0xff]
        %v3621 = vld [vmem:[%s1313 + $0x121] sm:$0xff]
        %v3622 = vld [vmem:[%s1313 + $0x129] sm:$0xff]
        %v3623 = vld [vmem:[%s1313 + $0x139] sm:$0xff]
        %v3624 = vld [vmem:[%s1313 + $0x141] sm:$0xff]
        %v3625 = vld [vmem:[%s1313 + $0x151] sm:$0xff]
        %v3626 = vld [vmem:[%s1313 + $0x159] sm:$0xff]
        %v3627 = vld [vmem:[%s1313 + $0x169] sm:$0xff]
        %v3628 = vld [vmem:[%s1313 + $0x171] sm:$0xff]
        %3661 = vrot.lane.b32.xlu0 %v3597, 56
        %v3662 = vpop.permute.xlu0 %3661
        %3663 = vrot.lane.b32.xlu0 %v3598, 56
        %v3664 = vpop.permute.xlu0 %3663
        %3665 = vrot.lane.b32.xlu0 %v3599, 56
        %v3666 = vpop.permute.xlu0 %3665
        %3667 = vrot.lane.b32.xlu0 %v3600, 56
        %v3668 = vpop.permute.xlu0 %3667
        %3669 = vrot.lane.b32.xlu0 %v3601, 56
        %v3670 = vpop.permute.xlu0 %3669
        %3671 = vrot.lane.b32.xlu0 %v3602, 56
        %v3672 = vpop.permute.xlu0 %3671
        %3673 = vrot.lane.b32.xlu0 %v3603, 56
        %v3674 = vpop.permute.xlu0 %3673
        %3675 = vrot.lane.b32.xlu0 %v3604, 56
        %v3676 = vpop.permute.xlu0 %3675
        %3677 = vrot.lane.b32.xlu0 %v3605, 56
        %v3678 = vpop.permute.xlu0 %3677
        %3679 = vrot.lane.b32.xlu0 %v3606, 56
        %v3680 = vpop.permute.xlu0 %3679
        %3681 = vrot.lane.b32.xlu0 %v3607, 56
        %v3682 = vpop.permute.xlu0 %3681
        %3683 = vrot.lane.b32.xlu0 %v3608, 56
        %v3684 = vpop.permute.xlu0 %3683
        %3685 = vrot.lane.b32.xlu0 %v3609, 56
        %v3686 = vpop.permute.xlu0 %3685
        %3687 = vrot.lane.b32.xlu0 %v3610, 56
        %v3688 = vpop.permute.xlu0 %3687
        %3689 = vrot.lane.b32.xlu0 %v3611, 56
        %v3690 = vpop.permute.xlu0 %3689
        %3691 = vrot.lane.b32.xlu0 %v3612, 56
        %v3692 = vpop.permute.xlu0 %3691
        %3693 = vrot.lane.b32.xlu0 %v3613, 56
        %v3694 = vpop.permute.xlu0 %3693
        %3695 = vrot.lane.b32.xlu0 %v3614, 56
        %v3696 = vpop.permute.xlu0 %3695
        %3697 = vrot.lane.b32.xlu0 %v3615, 56
        %v3698 = vpop.permute.xlu0 %3697
        %3699 = vrot.lane.b32.xlu0 %v3616, 56
        %v3700 = vpop.permute.xlu0 %3699
        %3701 = vrot.lane.b32.xlu0 %v3617, 56
        %v3702 = vpop.permute.xlu0 %3701
        %3703 = vrot.lane.b32.xlu0 %v3618, 56
        %v3704 = vpop.permute.xlu0 %3703
        %3705 = vrot.lane.b32.xlu0 %v3619, 56
        %v3706 = vpop.permute.xlu0 %3705
        %3707 = vrot.lane.b32.xlu0 %v3620, 56
        %v3708 = vpop.permute.xlu0 %3707
        %3709 = vrot.lane.b32.xlu0 %v3621, 56
        %v3710 = vpop.permute.xlu0 %3709
        %3711 = vrot.lane.b32.xlu0 %v3622, 56
        %v3712 = vpop.permute.xlu0 %3711
        %3713 = vrot.lane.b32.xlu0 %v3623, 56
        %v3714 = vpop.permute.xlu0 %3713
        %3715 = vrot.lane.b32.xlu0 %v3624, 56
        %v3716 = vpop.permute.xlu0 %3715
        %3717 = vrot.lane.b32.xlu0 %v3625, 56
        %v3718 = vpop.permute.xlu0 %3717
        %3719 = vrot.lane.b32.xlu0 %v3626, 56
        %v3720 = vpop.permute.xlu0 %3719
        %3721 = vrot.lane.b32.xlu0 %v3627, 56
        %v3722 = vpop.permute.xlu0 %3721
        %3723 = vrot.lane.b32.xlu0 %v3628, 56
        %v3724 = vpop.permute.xlu0 %3723
        %vm3757 = vcmask 523712
        %3758 = vst.msk [vmem:[#allocation3] sm:$0xff] %vm3757, %v3662
        %3759 = vst.msk [vmem:[#allocation3 + $0x10] sm:$0xff] %vm3757, %v3664
        %3760 = vst.msk [vmem:[#allocation3 + $0x20] sm:$0xff] %vm3757, %v3666
        %3761 = vst.msk [vmem:[#allocation3 + $0x30] sm:$0xff] %vm3757, %v3668
        %3762 = vst.msk [vmem:[#allocation3 + $0x40] sm:$0xff] %vm3757, %v3670
        %3763 = vst.msk [vmem:[#allocation3 + $0x50] sm:$0xff] %vm3757, %v3672
        %3764 = vst.msk [vmem:[#allocation3 + $0x60] sm:$0xff] %vm3757, %v3674
        %3765 = vst.msk [vmem:[#allocation3 + $0x70] sm:$0xff] %vm3757, %v3676
        %3766 = vst.msk [vmem:[#allocation3 + $0x80] sm:$0xff] %vm3757, %v3678
        %3767 = vst.msk [vmem:[#allocation3 + $0x90] sm:$0xff] %vm3757, %v3680
        %3768 = vst.msk [vmem:[#allocation3 + $0xa0] sm:$0xff] %vm3757, %v3682
        %3769 = vst.msk [vmem:[#allocation3 + $0xb0] sm:$0xff] %vm3757, %v3684
        %3770 = vst.msk [vmem:[#allocation3 + $0xc0] sm:$0xff] %vm3757, %v3686
        %3771 = vst.msk [vmem:[#allocation3 + $0xd0] sm:$0xff] %vm3757, %v3688
        %3772 = vst.msk [vmem:[#allocation3 + $0xe0] sm:$0xff] %vm3757, %v3690
        %3773 = vst.msk [vmem:[#allocation3 + $0xf0] sm:$0xff] %vm3757, %v3692
        %3774 = vst.msk [vmem:[#allocation3 + $0x100] sm:$0xff] %vm3757, %v3694
        %3775 = vst.msk [vmem:[#allocation3 + $0x110] sm:$0xff] %vm3757, %v3696
        %3776 = vst.msk [vmem:[#allocation3 + $0x120] sm:$0xff] %vm3757, %v3698
        %3777 = vst.msk [vmem:[#allocation3 + $0x130] sm:$0xff] %vm3757, %v3700
        %3778 = vst.msk [vmem:[#allocation3 + $0x140] sm:$0xff] %vm3757, %v3702
        %3779 = vst.msk [vmem:[#allocation3 + $0x150] sm:$0xff] %vm3757, %v3704
        %3780 = vst.msk [vmem:[#allocation3 + $0x160] sm:$0xff] %vm3757, %v3706
        %3781 = vst.msk [vmem:[#allocation3 + $0x170] sm:$0xff] %vm3757, %v3708
        %3782 = vst.msk [vmem:[#allocation3 + $0x180] sm:$0xff] %vm3757, %v3710
        %3783 = vst.msk [vmem:[#allocation3 + $0x190] sm:$0xff] %vm3757, %v3712
        %3784 = vst.msk [vmem:[#allocation3 + $0x1a0] sm:$0xff] %vm3757, %v3714
        %3785 = vst.msk [vmem:[#allocation3 + $0x1b0] sm:$0xff] %vm3757, %v3716
        %3786 = vst.msk [vmem:[#allocation3 + $0x1c0] sm:$0xff] %vm3757, %v3718
        %3787 = vst.msk [vmem:[#allocation3 + $0x1d0] sm:$0xff] %vm3757, %v3720
        %3788 = vst.msk [vmem:[#allocation3 + $0x1e0] sm:$0xff] %vm3757, %v3722
        %3789 = vst.msk [vmem:[#allocation3 + $0x1f0] sm:$0xff] %vm3757, %v3724
        %v3790 = vld [vmem:[%s1313 + $0x2] sm:$0xff]
        %v3791 = vld [vmem:[%s1313 + $0xa] sm:$0xff]
        %v3792 = vld [vmem:[%s1313 + $0x1a] sm:$0xff]
        %v3793 = vld [vmem:[%s1313 + $0x22] sm:$0xff]
        %v3794 = vld [vmem:[%s1313 + $0x32] sm:$0xff]
        %v3795 = vld [vmem:[%s1313 + $0x3a] sm:$0xff]
        %v3796 = vld [vmem:[%s1313 + $0x4a] sm:$0xff]
        %v3797 = vld [vmem:[%s1313 + $0x52] sm:$0xff]
        %v3798 = vld [vmem:[%s1313 + $0x62] sm:$0xff]
        %v3799 = vld [vmem:[%s1313 + $0x6a] sm:$0xff]
        %v3800 = vld [vmem:[%s1313 + $0x7a] sm:$0xff]
        %v3801 = vld [vmem:[%s1313 + $0x82] sm:$0xff]
        %v3802 = vld [vmem:[%s1313 + $0x92] sm:$0xff]
        %v3803 = vld [vmem:[%s1313 + $0x9a] sm:$0xff]
        %v3804 = vld [vmem:[%s1313 + $0xaa] sm:$0xff]
        %v3805 = vld [vmem:[%s1313 + $0xb2] sm:$0xff]
        %v3806 = vld [vmem:[%s1313 + $0xc2] sm:$0xff]
        %v3807 = vld [vmem:[%s1313 + $0xca] sm:$0xff]
        %v3808 = vld [vmem:[%s1313 + $0xda] sm:$0xff]
        %v3809 = vld [vmem:[%s1313 + $0xe2] sm:$0xff]
        %v3810 = vld [vmem:[%s1313 + $0xf2] sm:$0xff]
        %v3811 = vld [vmem:[%s1313 + $0xfa] sm:$0xff]
        %v3812 = vld [vmem:[%s1313 + $0x10a] sm:$0xff]
        %v3813 = vld [vmem:[%s1313 + $0x112] sm:$0xff]
        %v3814 = vld [vmem:[%s1313 + $0x122] sm:$0xff]
        %v3815 = vld [vmem:[%s1313 + $0x12a] sm:$0xff]
        %v3816 = vld [vmem:[%s1313 + $0x13a] sm:$0xff]
        %v3817 = vld [vmem:[%s1313 + $0x142] sm:$0xff]
        %v3818 = vld [vmem:[%s1313 + $0x152] sm:$0xff]
        %v3819 = vld [vmem:[%s1313 + $0x15a] sm:$0xff]
        %v3820 = vld [vmem:[%s1313 + $0x16a] sm:$0xff]
        %v3821 = vld [vmem:[%s1313 + $0x172] sm:$0xff]
        %3854 = vrot.lane.b32.xlu0 %v3790, 64
        %v3855 = vpop.permute.xlu0 %3854
        %3856 = vrot.lane.b32.xlu0 %v3791, 64
        %v3857 = vpop.permute.xlu0 %3856
        %3858 = vrot.lane.b32.xlu0 %v3792, 64
        %v3859 = vpop.permute.xlu0 %3858
        %3860 = vrot.lane.b32.xlu0 %v3793, 64
        %v3861 = vpop.permute.xlu0 %3860
        %3862 = vrot.lane.b32.xlu0 %v3794, 64
        %v3863 = vpop.permute.xlu0 %3862
        %3864 = vrot.lane.b32.xlu0 %v3795, 64
        %v3865 = vpop.permute.xlu0 %3864
        %3866 = vrot.lane.b32.xlu0 %v3796, 64
        %v3867 = vpop.permute.xlu0 %3866
        %3868 = vrot.lane.b32.xlu0 %v3797, 64
        %v3869 = vpop.permute.xlu0 %3868
        %3870 = vrot.lane.b32.xlu0 %v3798, 64
        %v3871 = vpop.permute.xlu0 %3870
        %3872 = vrot.lane.b32.xlu0 %v3799, 64
        %v3873 = vpop.permute.xlu0 %3872
        %3874 = vrot.lane.b32.xlu0 %v3800, 64
        %v3875 = vpop.permute.xlu0 %3874
        %3876 = vrot.lane.b32.xlu0 %v3801, 64
        %v3877 = vpop.permute.xlu0 %3876
        %3878 = vrot.lane.b32.xlu0 %v3802, 64
        %v3879 = vpop.permute.xlu0 %3878
        %3880 = vrot.lane.b32.xlu0 %v3803, 64
        %v3881 = vpop.permute.xlu0 %3880
        %3882 = vrot.lane.b32.xlu0 %v3804, 64
        %v3883 = vpop.permute.xlu0 %3882
        %3884 = vrot.lane.b32.xlu0 %v3805, 64
        %v3885 = vpop.permute.xlu0 %3884
        %3886 = vrot.lane.b32.xlu0 %v3806, 64
        %v3887 = vpop.permute.xlu0 %3886
        %3888 = vrot.lane.b32.xlu0 %v3807, 64
        %v3889 = vpop.permute.xlu0 %3888
        %3890 = vrot.lane.b32.xlu0 %v3808, 64
        %v3891 = vpop.permute.xlu0 %3890
        %3892 = vrot.lane.b32.xlu0 %v3809, 64
        %v3893 = vpop.permute.xlu0 %3892
        %3894 = vrot.lane.b32.xlu0 %v3810, 64
        %v3895 = vpop.permute.xlu0 %3894
        %3896 = vrot.lane.b32.xlu0 %v3811, 64
        %v3897 = vpop.permute.xlu0 %3896
        %3898 = vrot.lane.b32.xlu0 %v3812, 64
        %v3899 = vpop.permute.xlu0 %3898
        %3900 = vrot.lane.b32.xlu0 %v3813, 64
        %v3901 = vpop.permute.xlu0 %3900
        %3902 = vrot.lane.b32.xlu0 %v3814, 64
        %v3903 = vpop.permute.xlu0 %3902
        %3904 = vrot.lane.b32.xlu0 %v3815, 64
        %v3905 = vpop.permute.xlu0 %3904
        %3906 = vrot.lane.b32.xlu0 %v3816, 64
        %v3907 = vpop.permute.xlu0 %3906
        %3908 = vrot.lane.b32.xlu0 %v3817, 64
        %v3909 = vpop.permute.xlu0 %3908
        %3910 = vrot.lane.b32.xlu0 %v3818, 64
        %v3911 = vpop.permute.xlu0 %3910
        %3912 = vrot.lane.b32.xlu0 %v3819, 64
        %v3913 = vpop.permute.xlu0 %3912
        %3914 = vrot.lane.b32.xlu0 %v3820, 64
        %v3915 = vpop.permute.xlu0 %3914
        %3916 = vrot.lane.b32.xlu0 %v3821, 64
        %v3917 = vpop.permute.xlu0 %3916
        %vm3950 = vcmask 589312
        %3951 = vst.msk [vmem:[#allocation3] sm:$0xff] %vm3950, %v3855
        %3952 = vst.msk [vmem:[#allocation3 + $0x10] sm:$0xff] %vm3950, %v3857
        %3953 = vst.msk [vmem:[#allocation3 + $0x20] sm:$0xff] %vm3950, %v3859
        %3954 = vst.msk [vmem:[#allocation3 + $0x30] sm:$0xff] %vm3950, %v3861
        %3955 = vst.msk [vmem:[#allocation3 + $0x40] sm:$0xff] %vm3950, %v3863
        %3956 = vst.msk [vmem:[#allocation3 + $0x50] sm:$0xff] %vm3950, %v3865
        %3957 = vst.msk [vmem:[#allocation3 + $0x60] sm:$0xff] %vm3950, %v3867
        %3958 = vst.msk [vmem:[#allocation3 + $0x70] sm:$0xff] %vm3950, %v3869
        %3959 = vst.msk [vmem:[#allocation3 + $0x80] sm:$0xff] %vm3950, %v3871
        %3960 = vst.msk [vmem:[#allocation3 + $0x90] sm:$0xff] %vm3950, %v3873
        %3961 = vst.msk [vmem:[#allocation3 + $0xa0] sm:$0xff] %vm3950, %v3875
        %3962 = vst.msk [vmem:[#allocation3 + $0xb0] sm:$0xff] %vm3950, %v3877
        %3963 = vst.msk [vmem:[#allocation3 + $0xc0] sm:$0xff] %vm3950, %v3879
        %3964 = vst.msk [vmem:[#allocation3 + $0xd0] sm:$0xff] %vm3950, %v3881
        %3965 = vst.msk [vmem:[#allocation3 + $0xe0] sm:$0xff] %vm3950, %v3883
        %3966 = vst.msk [vmem:[#allocation3 + $0xf0] sm:$0xff] %vm3950, %v3885
        %3967 = vst.msk [vmem:[#allocation3 + $0x100] sm:$0xff] %vm3950, %v3887
        %3968 = vst.msk [vmem:[#allocation3 + $0x110] sm:$0xff] %vm3950, %v3889
        %3969 = vst.msk [vmem:[#allocation3 + $0x120] sm:$0xff] %vm3950, %v3891
        %3970 = vst.msk [vmem:[#allocation3 + $0x130] sm:$0xff] %vm3950, %v3893
        %3971 = vst.msk [vmem:[#allocation3 + $0x140] sm:$0xff] %vm3950, %v3895
        %3972 = vst.msk [vmem:[#allocation3 + $0x150] sm:$0xff] %vm3950, %v3897
        %3973 = vst.msk [vmem:[#allocation3 + $0x160] sm:$0xff] %vm3950, %v3899
        %3974 = vst.msk [vmem:[#allocation3 + $0x170] sm:$0xff] %vm3950, %v3901
        %3975 = vst.msk [vmem:[#allocation3 + $0x180] sm:$0xff] %vm3950, %v3903
        %3976 = vst.msk [vmem:[#allocation3 + $0x190] sm:$0xff] %vm3950, %v3905
        %3977 = vst.msk [vmem:[#allocation3 + $0x1a0] sm:$0xff] %vm3950, %v3907
        %3978 = vst.msk [vmem:[#allocation3 + $0x1b0] sm:$0xff] %vm3950, %v3909
        %3979 = vst.msk [vmem:[#allocation3 + $0x1c0] sm:$0xff] %vm3950, %v3911
        %3980 = vst.msk [vmem:[#allocation3 + $0x1d0] sm:$0xff] %vm3950, %v3913
        %3981 = vst.msk [vmem:[#allocation3 + $0x1e0] sm:$0xff] %vm3950, %v3915
        %3982 = vst.msk [vmem:[#allocation3 + $0x1f0] sm:$0xff] %vm3950, %v3917
        %v3983 = vld [vmem:[#allocation3] sm:$0xff]
        %v3984 = vld [vmem:[#allocation3 + $0x10] sm:$0xff]
        %v3985 = vld [vmem:[#allocation3 + $0x20] sm:$0xff]
        %v3986 = vld [vmem:[#allocation3 + $0x30] sm:$0xff]
        %v3987 = vld [vmem:[#allocation3 + $0x40] sm:$0xff]
        %v3988 = vld [vmem:[#allocation3 + $0x50] sm:$0xff]
        %v3989 = vld [vmem:[#allocation3 + $0x60] sm:$0xff]
        %v3990 = vld [vmem:[#allocation3 + $0x70] sm:$0xff]
        %v3991 = vld [vmem:[#allocation3 + $0x80] sm:$0xff]
        %v3992 = vld [vmem:[#allocation3 + $0x90] sm:$0xff]
        %v3993 = vld [vmem:[#allocation3 + $0xa0] sm:$0xff]
        %v3994 = vld [vmem:[#allocation3 + $0xb0] sm:$0xff]
        %v3995 = vld [vmem:[#allocation3 + $0xc0] sm:$0xff]
        %v3996 = vld [vmem:[#allocation3 + $0xd0] sm:$0xff]
        %v3997 = vld [vmem:[#allocation3 + $0xe0] sm:$0xff]
        %v3998 = vld [vmem:[#allocation3 + $0xf0] sm:$0xff]
        %v3999 = vld [vmem:[#allocation3 + $0x100] sm:$0xff]
        %v4000 = vld [vmem:[#allocation3 + $0x110] sm:$0xff]
        %v4001 = vld [vmem:[#allocation3 + $0x120] sm:$0xff]
        %v4002 = vld [vmem:[#allocation3 + $0x130] sm:$0xff]
        %v4003 = vld [vmem:[#allocation3 + $0x140] sm:$0xff]
        %v4004 = vld [vmem:[#allocation3 + $0x150] sm:$0xff]
        %v4005 = vld [vmem:[#allocation3 + $0x160] sm:$0xff]
        %v4006 = vld [vmem:[#allocation3 + $0x170] sm:$0xff]
        %v4007 = vld [vmem:[#allocation3 + $0x180] sm:$0xff]
        %v4008 = vld [vmem:[#allocation3 + $0x190] sm:$0xff]
        %v4009 = vld [vmem:[#allocation3 + $0x1a0] sm:$0xff]
        %v4010 = vld [vmem:[#allocation3 + $0x1b0] sm:$0xff]
        %v4011 = vld [vmem:[#allocation3 + $0x1c0] sm:$0xff]
        %v4012 = vld [vmem:[#allocation3 + $0x1d0] sm:$0xff]
        %v4013 = vld [vmem:[#allocation3 + $0x1e0] sm:$0xff]
        %v4014 = vld [vmem:[#allocation3 + $0x1f0] sm:$0xff]
        %v4015 = vld [vmem:[%s1 + $0x28] sm:$0xff]
        %v4016 = vld [vmem:[%s1 + $0x30] sm:$0xff]
        %v4017 = vld [vmem:[%s1 + $0x38] sm:$0xff]
        %v4018 = vld [vmem:[%s1 + $0x40] sm:$0xff]
        %v4019 = vld [vmem:[%s1 + $0x48] sm:$0xff]
        %v4020 = vld [vmem:[%s1 + $0x50] sm:$0xff]
        %v4021 = vld [vmem:[%s1 + $0x58] sm:$0xff]
        %v4022 = vld [vmem:[%s1 + $0x60] sm:$0xff]
        %v4023 = vld [vmem:[%s1 + $0x68] sm:$0xff]
        %v4024 = vld [vmem:[%s2 + $0x1] sm:$0x1]
        %v4026 = vlaneseq
        %v4027 = vshrl.u32 %v4026, 7
        %v4028 = vsub.s32 0, %v4027
        %v4029 = vrot.slane %v4024, %v4028
        %vm4031 = vcmask 588800
        %v4033 = vsel %vm4031, %v3983, 0
        %v4036 = vsel %vm4031, %v3984, 0
        %v4039 = vsel %vm4031, %v3985, 0
        %v4042 = vsel %vm4031, %v3986, 0
        %v4045 = vsel %vm4031, %v3987, 0
        %v4048 = vsel %vm4031, %v3988, 0
        %v4051 = vsel %vm4031, %v3989, 0
        %v4054 = vsel %vm4031, %v3990, 0
        %v4057 = vsel %vm4031, %v3991, 0
        %v4060 = vsel %vm4031, %v3992, 0
        %v4063 = vsel %vm4031, %v3993, 0
        %v4066 = vsel %vm4031, %v3994, 0
        %v4069 = vsel %vm4031, %v3995, 0
        %v4072 = vsel %vm4031, %v3996, 0
        %v4075 = vsel %vm4031, %v3997, 0
        %v4078 = vsel %vm4031, %v3998, 0
        %v4081 = vsel %vm4031, %v3999, 0
        %v4084 = vsel %vm4031, %v4000, 0
        %v4087 = vsel %vm4031, %v4001, 0
        %v4090 = vsel %vm4031, %v4002, 0
        %v4093 = vsel %vm4031, %v4003, 0
        %v4096 = vsel %vm4031, %v4004, 0
        %v4099 = vsel %vm4031, %v4005, 0
        %v4102 = vsel %vm4031, %v4006, 0
        %v4105 = vsel %vm4031, %v4007, 0
        %v4108 = vsel %vm4031, %v4008, 0
        %v4111 = vsel %vm4031, %v4009, 0
        %v4114 = vsel %vm4031, %v4010, 0
        %v4117 = vsel %vm4031, %v4011, 0
        %v4120 = vsel %vm4031, %v4012, 0
        %v4123 = vsel %vm4031, %v4013, 0
        %v4126 = vsel %vm4031, %v4014, 0
        %4128 = vmatprep.subr.mxu0 0.0
        %4129 = vmatpush1.msra.mxu0 0.0
        %4130 = vmatprep.subr.mxu0 0.0
        %4131 = vmatpush1.msra.mxu0 0.0
        %4132 = vmatprep.subr.mxu0 0.0
        %4133 = vmatpush1.msra.mxu0 0.0
        %4134 = vmatprep.subr.mxu0 0.0
        %4135 = vmatpush1.msra.mxu0 0.0
        %4136 = vmatprep.subr.mxu0 0.0
        %4137 = vmatpush1.msra.mxu0 0.0
        %4138 = vmatprep.subr.mxu0 0.0
        %4139 = vmatpush1.msra.mxu0 0.0
        %4140 = vmatprep.subr.mxu0 0.0
        %4141 = vmatpush1.msra.mxu0 0.0
        %4142 = vmatprep.subr.mxu0 0.0
        %4143 = vmatpush1.msra.mxu0 %v4023
        %4144 = vmatprep.subr.mxu0 0.0
        %4145 = vmatpush1.msra.mxu0 %v4022
        %4146 = vmatprep.subr.mxu0 0.0
        %4147 = vmatpush1.msra.mxu0 %v4021
        %4148 = vmatprep.subr.mxu0 0.0
        %4149 = vmatpush1.msra.mxu0 %v4020
        %4150 = vmatprep.subr.mxu0 0.0
        %4151 = vmatpush1.msra.mxu0 %v4019
        %4152 = vmatprep.subr.mxu0 0.0
        %4153 = vmatpush1.msra.mxu0 %v4018
        %4154 = vmatprep.subr.mxu0 0.0
        %4155 = vmatpush1.msra.mxu0 %v4017
        %4156 = vmatprep.subr.mxu0 0.0
        %4157 = vmatpush1.msra.mxu0 %v4016
        %4158 = vmatprep.subr.mxu0 0.0
        %4159 = vmatpush1.msra.mxu0 %v4015
        %4160 = vmatprep.subr.mxu0 0.0
        %4161 = vmatpush2.msra.mxu0 0.0
        %4162 = vmatprep.subr.mxu0 0.0
        %4163 = vmatpush2.msra.mxu0 0.0
        %4164 = vmatprep.subr.mxu0 0.0
        %4165 = vmatpush2.msra.mxu0 0.0
        %4166 = vmatprep.subr.mxu0 0.0
        %4167 = vmatpush2.msra.mxu0 0.0
        %4168 = vmatprep.subr.mxu0 0.0
        %4169 = vmatpush2.msra.mxu0 0.0
        %4170 = vmatprep.subr.mxu0 0.0
        %4171 = vmatpush2.msra.mxu0 0.0
        %4172 = vmatprep.subr.mxu0 0.0
        %4173 = vmatpush2.msra.mxu0 0.0
        %4174 = vmatprep.subr.mxu0 0.0
        %4175 = vmatpush2.msra.mxu0 0.0
        %4176 = vmatprep.subr.mxu0 0.0
        %4177 = vmatpush2.msra.mxu0 0.0
        %4178 = vmatprep.subr.mxu0 0.0
        %4179 = vmatpush2.msra.mxu0 0.0
        %4180 = vmatprep.subr.mxu0 0.0
        %4181 = vmatpush2.msra.mxu0 0.0
        %4182 = vmatprep.subr.mxu0 0.0
        %4183 = vmatpush2.msra.mxu0 0.0
        %4184 = vmatprep.subr.mxu0 0.0
        %4185 = vmatpush2.msra.mxu0 0.0
        %4186 = vmatprep.subr.mxu0 0.0
        %4187 = vmatpush2.msra.mxu0 0.0
        %4188 = vmatprep.subr.mxu0 0.0
        %4189 = vmatpush2.msra.mxu0 0.0
        %4190 = vmatprep.subr.mxu0 0.0
        %4191 = vmatpush2.msra.mxu0 0.0
        %4192 = vmatprep.mubr.f32.mxu0 0.0
        %4193 = vmatmul.mubr.f32.gmra.mxu0 %v4033
        %v4194 = vpop.f32.mrf.mxu0
        %v4195 = vadd.f32 %v4029, %v4194
        %v4196 = vpop.f32.mrf.mxu0
        %4197 = vmatprep.mubr.f32.mxu0 0.0
        %4198 = vmatmul.mubr.f32.gmra.mxu0 %v4036
        %v4199 = vpop.f32.mrf.mxu0
        %v4200 = vadd.f32 %v4029, %v4199
        %v4201 = vpop.f32.mrf.mxu0
        %4202 = vmatprep.mubr.f32.mxu0 0.0
        %4203 = vmatmul.mubr.f32.gmra.mxu0 %v4039
        %v4204 = vpop.f32.mrf.mxu0
        %v4205 = vadd.f32 %v4029, %v4204
        %v4206 = vpop.f32.mrf.mxu0
        %4207 = vmatprep.mubr.f32.mxu0 0.0
        %4208 = vmatmul.mubr.f32.gmra.mxu0 %v4042
        %v4209 = vpop.f32.mrf.mxu0
        %v4210 = vadd.f32 %v4029, %v4209
        %v4211 = vpop.f32.mrf.mxu0
        %4212 = vmatprep.mubr.f32.mxu0 0.0
        %4213 = vmatmul.mubr.f32.gmra.mxu0 %v4045
        %v4214 = vpop.f32.mrf.mxu0
        %v4215 = vadd.f32 %v4029, %v4214
        %v4216 = vpop.f32.mrf.mxu0
        %4217 = vmatprep.mubr.f32.mxu0 0.0
        %4218 = vmatmul.mubr.f32.gmra.mxu0 %v4048
        %v4219 = vpop.f32.mrf.mxu0
        %v4220 = vadd.f32 %v4029, %v4219
        %v4221 = vpop.f32.mrf.mxu0
        %4222 = vmatprep.mubr.f32.mxu0 0.0
        %4223 = vmatmul.mubr.f32.gmra.mxu0 %v4051
        %v4224 = vpop.f32.mrf.mxu0
        %v4225 = vadd.f32 %v4029, %v4224
        %v4226 = vpop.f32.mrf.mxu0
        %4227 = vmatprep.mubr.f32.mxu0 0.0
        %4228 = vmatmul.mubr.f32.gmra.mxu0 %v4054
        %v4229 = vpop.f32.mrf.mxu0
        %v4230 = vadd.f32 %v4029, %v4229
        %v4231 = vpop.f32.mrf.mxu0
        %4232 = vmatprep.mubr.f32.mxu0 0.0
        %4233 = vmatmul.mubr.f32.gmra.mxu0 %v4057
        %v4234 = vpop.f32.mrf.mxu0
        %v4235 = vadd.f32 %v4029, %v4234
        %v4236 = vpop.f32.mrf.mxu0
        %4237 = vmatprep.mubr.f32.mxu0 0.0
        %4238 = vmatmul.mubr.f32.gmra.mxu0 %v4060
        %v4239 = vpop.f32.mrf.mxu0
        %v4240 = vadd.f32 %v4029, %v4239
        %v4241 = vpop.f32.mrf.mxu0
        %4242 = vmatprep.mubr.f32.mxu0 0.0
        %4243 = vmatmul.mubr.f32.gmra.mxu0 %v4063
        %v4244 = vpop.f32.mrf.mxu0
        %v4245 = vadd.f32 %v4029, %v4244
        %v4246 = vpop.f32.mrf.mxu0
        %4247 = vmatprep.mubr.f32.mxu0 0.0
        %4248 = vmatmul.mubr.f32.gmra.mxu0 %v4066
        %v4249 = vpop.f32.mrf.mxu0
        %v4250 = vadd.f32 %v4029, %v4249
        %v4251 = vpop.f32.mrf.mxu0
        %4252 = vmatprep.mubr.f32.mxu0 0.0
        %4253 = vmatmul.mubr.f32.gmra.mxu0 %v4069
        %v4254 = vpop.f32.mrf.mxu0
        %v4255 = vadd.f32 %v4029, %v4254
        %v4256 = vpop.f32.mrf.mxu0
        %4257 = vmatprep.mubr.f32.mxu0 0.0
        %4258 = vmatmul.mubr.f32.gmra.mxu0 %v4072
        %v4259 = vpop.f32.mrf.mxu0
        %v4260 = vadd.f32 %v4029, %v4259
        %v4261 = vpop.f32.mrf.mxu0
        %4262 = vmatprep.mubr.f32.mxu0 0.0
        %4263 = vmatmul.mubr.f32.gmra.mxu0 %v4075
        %v4264 = vpop.f32.mrf.mxu0
        %v4265 = vadd.f32 %v4029, %v4264
        %v4266 = vpop.f32.mrf.mxu0
        %4267 = vmatprep.mubr.f32.mxu0 0.0
        %4268 = vmatmul.mubr.f32.gmra.mxu0 %v4078
        %v4269 = vpop.f32.mrf.mxu0
        %v4270 = vadd.f32 %v4029, %v4269
        %v4271 = vpop.f32.mrf.mxu0
        %4272 = vmatprep.mubr.f32.mxu0 0.0
        %4273 = vmatmul.mubr.f32.gmra.mxu0 %v4081
        %v4274 = vpop.f32.mrf.mxu0
        %v4275 = vadd.f32 %v4029, %v4274
        %v4276 = vpop.f32.mrf.mxu0
        %4277 = vmatprep.mubr.f32.mxu0 0.0
        %4278 = vmatmul.mubr.f32.gmra.mxu0 %v4084
        %v4279 = vpop.f32.mrf.mxu0
        %v4280 = vadd.f32 %v4029, %v4279
        %v4281 = vpop.f32.mrf.mxu0
        %4282 = vmatprep.mubr.f32.mxu0 0.0
        %4283 = vmatmul.mubr.f32.gmra.mxu0 %v4087
        %v4284 = vpop.f32.mrf.mxu0
        %v4285 = vadd.f32 %v4029, %v4284
        %v4286 = vpop.f32.mrf.mxu0
        %4287 = vmatprep.mubr.f32.mxu0 0.0
        %4288 = vmatmul.mubr.f32.gmra.mxu0 %v4090
        %v4289 = vpop.f32.mrf.mxu0
        %v4290 = vadd.f32 %v4029, %v4289
        %v4291 = vpop.f32.mrf.mxu0
        %4292 = vmatprep.mubr.f32.mxu0 0.0
        %4293 = vmatmul.mubr.f32.gmra.mxu0 %v4093
        %v4294 = vpop.f32.mrf.mxu0
        %v4295 = vadd.f32 %v4029, %v4294
        %v4296 = vpop.f32.mrf.mxu0
        %4297 = vmatprep.mubr.f32.mxu0 0.0
        %4298 = vmatmul.mubr.f32.gmra.mxu0 %v4096
        %v4299 = vpop.f32.mrf.mxu0
        %v4300 = vadd.f32 %v4029, %v4299
        %v4301 = vpop.f32.mrf.mxu0
        %4302 = vmatprep.mubr.f32.mxu0 0.0
        %4303 = vmatmul.mubr.f32.gmra.mxu0 %v4099
        %v4304 = vpop.f32.mrf.mxu0
        %v4305 = vadd.f32 %v4029, %v4304
        %v4306 = vpop.f32.mrf.mxu0
        %4307 = vmatprep.mubr.f32.mxu0 0.0
        %4308 = vmatmul.mubr.f32.gmra.mxu0 %v4102
        %v4309 = vpop.f32.mrf.mxu0
        %v4310 = vadd.f32 %v4029, %v4309
        %v4311 = vpop.f32.mrf.mxu0
        %4312 = vmatprep.mubr.f32.mxu0 0.0
        %4313 = vmatmul.mubr.f32.gmra.mxu0 %v4105
        %v4314 = vpop.f32.mrf.mxu0
        %v4315 = vadd.f32 %v4029, %v4314
        %v4316 = vpop.f32.mrf.mxu0
        %4317 = vmatprep.mubr.f32.mxu0 0.0
        %4318 = vmatmul.mubr.f32.gmra.mxu0 %v4108
        %v4319 = vpop.f32.mrf.mxu0
        %v4320 = vadd.f32 %v4029, %v4319
        %v4321 = vpop.f32.mrf.mxu0
        %4322 = vmatprep.mubr.f32.mxu0 0.0
        %4323 = vmatmul.mubr.f32.gmra.mxu0 %v4111
        %v4324 = vpop.f32.mrf.mxu0
        %v4325 = vadd.f32 %v4029, %v4324
        %v4326 = vpop.f32.mrf.mxu0
        %4327 = vmatprep.mubr.f32.mxu0 0.0
        %4328 = vmatmul.mubr.f32.gmra.mxu0 %v4114
        %v4329 = vpop.f32.mrf.mxu0
        %v4330 = vadd.f32 %v4029, %v4329
        %v4331 = vpop.f32.mrf.mxu0
        %4332 = vmatprep.mubr.f32.mxu0 0.0
        %4333 = vmatmul.mubr.f32.gmra.mxu0 %v4117
        %v4334 = vpop.f32.mrf.mxu0
        %v4335 = vadd.f32 %v4029, %v4334
        %v4336 = vpop.f32.mrf.mxu0
        %4337 = vmatprep.mubr.f32.mxu0 0.0
        %4338 = vmatmul.mubr.f32.gmra.mxu0 %v4120
        %v4339 = vpop.f32.mrf.mxu0
        %v4340 = vadd.f32 %v4029, %v4339
        %v4341 = vpop.f32.mrf.mxu0
        %4342 = vmatprep.mubr.f32.mxu0 0.0
        %4343 = vmatmul.mubr.f32.gmra.mxu0 %v4123
        %v4344 = vpop.f32.mrf.mxu0
        %v4345 = vadd.f32 %v4029, %v4344
        %v4346 = vpop.f32.mrf.mxu0
        %4347 = vmatprep.mubr.f32.mxu0 0.0
        %4348 = vmatmul.mubr.f32.gmra.mxu0 %v4126
        %v4349 = vpop.f32.mrf.mxu0
        %v4350 = vadd.f32 %v4029, %v4349
        %v4351 = vpop.f32.mrf.mxu0
        %4352 = vdwg.mxu0
        %v4353 = vmax.f32 %v4195, 0.0
        %v4354 = vmax.f32 %v4200, 0.0
        %v4355 = vmax.f32 %v4205, 0.0
        %v4356 = vmax.f32 %v4210, 0.0
        %v4357 = vmax.f32 %v4215, 0.0
        %v4358 = vmax.f32 %v4220, 0.0
        %v4359 = vmax.f32 %v4225, 0.0
        %v4360 = vmax.f32 %v4230, 0.0
        %v4361 = vmax.f32 %v4235, 0.0
        %v4362 = vmax.f32 %v4240, 0.0
        %v4363 = vmax.f32 %v4245, 0.0
        %v4364 = vmax.f32 %v4250, 0.0
        %v4365 = vmax.f32 %v4255, 0.0
        %v4366 = vmax.f32 %v4260, 0.0
        %v4367 = vmax.f32 %v4265, 0.0
        %v4368 = vmax.f32 %v4270, 0.0
        %v4369 = vmax.f32 %v4275, 0.0
        %v4370 = vmax.f32 %v4280, 0.0
        %v4371 = vmax.f32 %v4285, 0.0
        %v4372 = vmax.f32 %v4290, 0.0
        %v4373 = vmax.f32 %v4295, 0.0
        %v4374 = vmax.f32 %v4300, 0.0
        %v4375 = vmax.f32 %v4305, 0.0
        %v4376 = vmax.f32 %v4310, 0.0
        %v4377 = vmax.f32 %v4315, 0.0
        %v4378 = vmax.f32 %v4320, 0.0
        %v4379 = vmax.f32 %v4325, 0.0
        %v4380 = vmax.f32 %v4330, 0.0
        %v4381 = vmax.f32 %v4335, 0.0
        %v4382 = vmax.f32 %v4340, 0.0
        %v4383 = vmax.f32 %v4345, 0.0
        %v4384 = vmax.f32 %v4350, 0.0
        %4385 = vst.msk [vmem:[%s1313 + $0x2] sm:$0xff] %vm2295, %v4353
        %4386 = vst.msk [vmem:[%s1313 + $0xa] sm:$0xff] %vm2295, %v4354
        %4387 = vst.msk [vmem:[%s1313 + $0x1a] sm:$0xff] %vm2295, %v4355
        %4388 = vst.msk [vmem:[%s1313 + $0x22] sm:$0xff] %vm2295, %v4356
        %4389 = vst.msk [vmem:[%s1313 + $0x32] sm:$0xff] %vm2295, %v4357
        %4390 = vst.msk [vmem:[%s1313 + $0x3a] sm:$0xff] %vm2295, %v4358
        %4391 = vst.msk [vmem:[%s1313 + $0x4a] sm:$0xff] %vm2295, %v4359
        %4392 = vst.msk [vmem:[%s1313 + $0x52] sm:$0xff] %vm2295, %v4360
        %4393 = vst.msk [vmem:[%s1313 + $0x62] sm:$0xff] %vm2295, %v4361
        %4394 = vst.msk [vmem:[%s1313 + $0x6a] sm:$0xff] %vm2295, %v4362
        %4395 = vst.msk [vmem:[%s1313 + $0x7a] sm:$0xff] %vm2295, %v4363
        %4396 = vst.msk [vmem:[%s1313 + $0x82] sm:$0xff] %vm2295, %v4364
        %4397 = vst.msk [vmem:[%s1313 + $0x92] sm:$0xff] %vm2295, %v4365
        %4398 = vst.msk [vmem:[%s1313 + $0x9a] sm:$0xff] %vm2295, %v4366
        %4399 = vst.msk [vmem:[%s1313 + $0xaa] sm:$0xff] %vm2295, %v4367
        %4400 = vst.msk [vmem:[%s1313 + $0xb2] sm:$0xff] %vm2295, %v4368
        %4401 = vst.msk [vmem:[%s1313 + $0xc2] sm:$0xff] %vm2295, %v4369
        %4402 = vst.msk [vmem:[%s1313 + $0xca] sm:$0xff] %vm2295, %v4370
        %4403 = vst.msk [vmem:[%s1313 + $0xda] sm:$0xff] %vm2295, %v4371
        %4404 = vst.msk [vmem:[%s1313 + $0xe2] sm:$0xff] %vm2295, %v4372
        %4405 = vst.msk [vmem:[%s1313 + $0xf2] sm:$0xff] %vm2295, %v4373
        %4406 = vst.msk [vmem:[%s1313 + $0xfa] sm:$0xff] %vm2295, %v4374
        %4407 = vst.msk [vmem:[%s1313 + $0x10a] sm:$0xff] %vm2295, %v4375
        %4408 = vst.msk [vmem:[%s1313 + $0x112] sm:$0xff] %vm2295, %v4376
        %4409 = vst.msk [vmem:[%s1313 + $0x122] sm:$0xff] %vm2295, %v4377
        %4410 = vst.msk [vmem:[%s1313 + $0x12a] sm:$0xff] %vm2295, %v4378
        %4411 = vst.msk [vmem:[%s1313 + $0x13a] sm:$0xff] %vm2295, %v4379
        %4412 = vst.msk [vmem:[%s1313 + $0x142] sm:$0xff] %vm2295, %v4380
        %4413 = vst.msk [vmem:[%s1313 + $0x152] sm:$0xff] %vm2295, %v4381
        %4414 = vst.msk [vmem:[%s1313 + $0x15a] sm:$0xff] %vm2295, %v4382
        %4415 = vst.msk [vmem:[%s1313 + $0x16a] sm:$0xff] %vm2295, %v4383
        %4416 = vst.msk [vmem:[%s1313 + $0x172] sm:$0xff] %vm2295, %v4384
        %v4417 = vlaneseq
        %v4418 = vshrl.u32 %v4417, 7
        %v4419 = vsub.s32 0, %v4418
        %v4420 = vrot.slane %v4353, %v4419
        %v4421 = vlaneseq
        %v4422 = vshrl.u32 %v4421, 7
        %v4423 = vsub.s32 0, %v4422
        %v4424 = vrot.slane %v4355, %v4423
        %v4425 = vlaneseq
        %v4426 = vshrl.u32 %v4425, 7
        %v4427 = vsub.s32 0, %v4426
        %v4428 = vrot.slane %v4357, %v4427
        %v4429 = vlaneseq
        %v4430 = vshrl.u32 %v4429, 7
        %v4431 = vsub.s32 0, %v4430
        %v4432 = vrot.slane %v4359, %v4431
        %v4433 = vlaneseq
        %v4434 = vshrl.u32 %v4433, 7
        %v4435 = vsub.s32 0, %v4434
        %v4436 = vrot.slane %v4361, %v4435
        %v4437 = vlaneseq
        %v4438 = vshrl.u32 %v4437, 7
        %v4439 = vsub.s32 0, %v4438
        %v4440 = vrot.slane %v4363, %v4439
        %v4441 = vlaneseq
        %v4442 = vshrl.u32 %v4441, 7
        %v4443 = vsub.s32 0, %v4442
        %v4444 = vrot.slane %v4365, %v4443
        %v4445 = vlaneseq
        %v4446 = vshrl.u32 %v4445, 7
        %v4447 = vsub.s32 0, %v4446
        %v4448 = vrot.slane %v4367, %v4447
        %v4449 = vlaneseq
        %v4450 = vshrl.u32 %v4449, 7
        %v4451 = vsub.s32 0, %v4450
        %v4452 = vrot.slane %v4369, %v4451
        %v4453 = vlaneseq
        %v4454 = vshrl.u32 %v4453, 7
        %v4455 = vsub.s32 0, %v4454
        %v4456 = vrot.slane %v4371, %v4455
        %v4457 = vlaneseq
        %v4458 = vshrl.u32 %v4457, 7
        %v4459 = vsub.s32 0, %v4458
        %v4460 = vrot.slane %v4373, %v4459
        %v4461 = vlaneseq
        %v4462 = vshrl.u32 %v4461, 7
        %v4463 = vsub.s32 0, %v4462
        %v4464 = vrot.slane %v4375, %v4463
        %v4465 = vlaneseq
        %v4466 = vshrl.u32 %v4465, 7
        %v4467 = vsub.s32 0, %v4466
        %v4468 = vrot.slane %v4377, %v4467
        %v4469 = vlaneseq
        %v4470 = vshrl.u32 %v4469, 7
        %v4471 = vsub.s32 0, %v4470
        %v4472 = vrot.slane %v4379, %v4471
        %v4473 = vlaneseq
        %v4474 = vshrl.u32 %v4473, 7
        %v4475 = vsub.s32 0, %v4474
        %v4476 = vrot.slane %v4381, %v4475
        %v4477 = vlaneseq
        %v4478 = vshrl.u32 %v4477, 7
        %v4479 = vsub.s32 0, %v4478
        %v4480 = vrot.slane %v4383, %v4479
        %4481 = vst.msk [vmem:[%s1313] sm:$0x3] %vm2370, %v4420
        %4482 = vst.msk [vmem:[%s1313 + $0x18] sm:$0x3] %vm2370, %v4424
        %4483 = vst.msk [vmem:[%s1313 + $0x30] sm:$0x3] %vm2370, %v4428
        %4484 = vst.msk [vmem:[%s1313 + $0x48] sm:$0x3] %vm2370, %v4432
        %4485 = vst.msk [vmem:[%s1313 + $0x60] sm:$0x3] %vm2370, %v4436
        %4486 = vst.msk [vmem:[%s1313 + $0x78] sm:$0x3] %vm2370, %v4440
        %4487 = vst.msk [vmem:[%s1313 + $0x90] sm:$0x3] %vm2370, %v4444
        %4488 = vst.msk [vmem:[%s1313 + $0xa8] sm:$0x3] %vm2370, %v4448
        %4489 = vst.msk [vmem:[%s1313 + $0xc0] sm:$0x3] %vm2370, %v4452
        %4490 = vst.msk [vmem:[%s1313 + $0xd8] sm:$0x3] %vm2370, %v4456
        %4491 = vst.msk [vmem:[%s1313 + $0xf0] sm:$0x3] %vm2370, %v4460
        %4492 = vst.msk [vmem:[%s1313 + $0x108] sm:$0x3] %vm2370, %v4464
        %4493 = vst.msk [vmem:[%s1313 + $0x120] sm:$0x3] %vm2370, %v4468
        %4494 = vst.msk [vmem:[%s1313 + $0x138] sm:$0x3] %vm2370, %v4472
        %4495 = vst.msk [vmem:[%s1313 + $0x150] sm:$0x3] %vm2370, %v4476
        %4496 = vst.msk [vmem:[%s1313 + $0x168] sm:$0x3] %vm2370, %v4480
        %v4497 = vlaneseq
        %v4498 = vshrl.u32 %v4497, 7
        %v4499 = vsub.s32 7, %v4498
        %v4500 = vrot.slane %v4354, %v4499
        %v4501 = vlaneseq
        %v4502 = vshrl.u32 %v4501, 7
        %v4503 = vsub.s32 7, %v4502
        %v4504 = vrot.slane %v4356, %v4503
        %v4505 = vlaneseq
        %v4506 = vshrl.u32 %v4505, 7
        %v4507 = vsub.s32 7, %v4506
        %v4508 = vrot.slane %v4358, %v4507
        %v4509 = vlaneseq
        %v4510 = vshrl.u32 %v4509, 7
        %v4511 = vsub.s32 7, %v4510
        %v4512 = vrot.slane %v4360, %v4511
        %v4513 = vlaneseq
        %v4514 = vshrl.u32 %v4513, 7
        %v4515 = vsub.s32 7, %v4514
        %v4516 = vrot.slane %v4362, %v4515
        %v4517 = vlaneseq
        %v4518 = vshrl.u32 %v4517, 7
        %v4519 = vsub.s32 7, %v4518
        %v4520 = vrot.slane %v4364, %v4519
        %v4521 = vlaneseq
        %v4522 = vshrl.u32 %v4521, 7
        %v4523 = vsub.s32 7, %v4522
        %v4524 = vrot.slane %v4366, %v4523
        %v4525 = vlaneseq
        %v4526 = vshrl.u32 %v4525, 7
        %v4527 = vsub.s32 7, %v4526
        %v4528 = vrot.slane %v4368, %v4527
        %v4529 = vlaneseq
        %v4530 = vshrl.u32 %v4529, 7
        %v4531 = vsub.s32 7, %v4530
        %v4532 = vrot.slane %v4370, %v4531
        %v4533 = vlaneseq
        %v4534 = vshrl.u32 %v4533, 7
        %v4535 = vsub.s32 7, %v4534
        %v4536 = vrot.slane %v4372, %v4535
        %v4537 = vlaneseq
        %v4538 = vshrl.u32 %v4537, 7
        %v4539 = vsub.s32 7, %v4538
        %v4540 = vrot.slane %v4374, %v4539
        %v4541 = vlaneseq
        %v4542 = vshrl.u32 %v4541, 7
        %v4543 = vsub.s32 7, %v4542
        %v4544 = vrot.slane %v4376, %v4543
        %v4545 = vlaneseq
        %v4546 = vshrl.u32 %v4545, 7
        %v4547 = vsub.s32 7, %v4546
        %v4548 = vrot.slane %v4378, %v4547
        %v4549 = vlaneseq
        %v4550 = vshrl.u32 %v4549, 7
        %v4551 = vsub.s32 7, %v4550
        %v4552 = vrot.slane %v4380, %v4551
        %v4553 = vlaneseq
        %v4554 = vshrl.u32 %v4553, 7
        %v4555 = vsub.s32 7, %v4554
        %v4556 = vrot.slane %v4382, %v4555
        %v4557 = vlaneseq
        %v4558 = vshrl.u32 %v4557, 7
        %v4559 = vsub.s32 7, %v4558
        %v4560 = vrot.slane %v4384, %v4559
        %4561 = vst.msk [vmem:[%s1313 + $0x12] sm:$0x3] %vm2370, %v4500
        %4562 = vst.msk [vmem:[%s1313 + $0x2a] sm:$0x3] %vm2370, %v4504
        %4563 = vst.msk [vmem:[%s1313 + $0x42] sm:$0x3] %vm2370, %v4508
        %4564 = vst.msk [vmem:[%s1313 + $0x5a] sm:$0x3] %vm2370, %v4512
        %4565 = vst.msk [vmem:[%s1313 + $0x72] sm:$0x3] %vm2370, %v4516
        %4566 = vst.msk [vmem:[%s1313 + $0x8a] sm:$0x3] %vm2370, %v4520
        %4567 = vst.msk [vmem:[%s1313 + $0xa2] sm:$0x3] %vm2370, %v4524
        %4568 = vst.msk [vmem:[%s1313 + $0xba] sm:$0x3] %vm2370, %v4528
        %4569 = vst.msk [vmem:[%s1313 + $0xd2] sm:$0x3] %vm2370, %v4532
        %4570 = vst.msk [vmem:[%s1313 + $0xea] sm:$0x3] %vm2370, %v4536
        %4571 = vst.msk [vmem:[%s1313 + $0x102] sm:$0x3] %vm2370, %v4540
        %4572 = vst.msk [vmem:[%s1313 + $0x11a] sm:$0x3] %vm2370, %v4544
        %4573 = vst.msk [vmem:[%s1313 + $0x132] sm:$0x3] %vm2370, %v4548
        %4574 = vst.msk [vmem:[%s1313 + $0x14a] sm:$0x3] %vm2370, %v4552
        %4575 = vst.msk [vmem:[%s1313 + $0x162] sm:$0x3] %vm2370, %v4556
        %4576 = vst.msk [vmem:[%s1313 + $0x17a] sm:$0x3] %vm2370, %v4560
        %v4577 = vld [vmem:[%s1313] sm:$0xff]
        %v4578 = vld [vmem:[%s1313 + $0x8] sm:$0xff]
        %v4579 = vld [vmem:[%s1313 + $0x10] sm:$0xf]
        %v4580 = vld [vmem:[%s280] sm:$0xff]
        %v4581 = vld [vmem:[%s280 + $0x8] sm:$0xff]
        %v4582 = vld [vmem:[%s280 + $0x10] sm:$0xf]
        %4583 = vst.msk [vmem:[#allocation2] sm:$0xff] %vm2295, %v4577
        %4584 = vst.msk [vmem:[#allocation2 + $0x8] sm:$0xff] %vm2295, %v4578
        %vm4585 = vcmask 60416
        %4586 = vst.msk [vmem:[#allocation2 + $0x10] sm:$0xf] %vm4585, %v4579
        %4587 = vst.msk [vmem:[#allocation2 + $0x18] sm:$0xff] %vm2295, %v4577
        %4588 = vst.msk [vmem:[#allocation2 + $0x20] sm:$0xff] %vm2295, %v4578
        %4589 = vst.msk [vmem:[#allocation2 + $0x28] sm:$0xf] %vm4585, %v4579
        %s4590 = scalar_lea.vmem [#allocation2], 432
        %4591 = vst.msk [vmem:[%s4590] sm:$0xff] %vm2295, %v4580
        %4592 = vst.msk [vmem:[%s4590 + $0x8] sm:$0xff] %vm2295, %v4581
        %4593 = vst.msk [vmem:[%s4590 + $0x10] sm:$0xf] %vm4585, %v4582
        %4594 = vst.msk [vmem:[%s4590 + $0x18] sm:$0xff] %vm2295, %v4580
        %4595 = vst.msk [vmem:[%s4590 + $0x20] sm:$0xff] %vm2295, %v4581
        %4596 = vst.msk [vmem:[%s4590 + $0x28] sm:$0xf] %vm4585, %v4582
        %v4597 = vld [vmem:[#allocation2] sm:$0xff]
        %v4598 = vld [vmem:[#allocation2 + $0x8] sm:$0xff]
        %v4599 = vld [vmem:[#allocation2 + $0x18] sm:$0xff]
        %v4600 = vld [vmem:[#allocation2 + $0x20] sm:$0xff]
        %v4601 = vld [vmem:[#allocation2 + $0x30] sm:$0xff]
        %v4602 = vld [vmem:[#allocation2 + $0x38] sm:$0xff]
        %v4603 = vld [vmem:[#allocation2 + $0x48] sm:$0xff]
        %v4604 = vld [vmem:[#allocation2 + $0x50] sm:$0xff]
        %v4605 = vld [vmem:[#allocation2 + $0x60] sm:$0xff]
        %v4606 = vld [vmem:[#allocation2 + $0x68] sm:$0xff]
        %v4607 = vld [vmem:[#allocation2 + $0x78] sm:$0xff]
        %v4608 = vld [vmem:[#allocation2 + $0x80] sm:$0xff]
        %v4609 = vld [vmem:[#allocation2 + $0x90] sm:$0xff]
        %v4610 = vld [vmem:[#allocation2 + $0x98] sm:$0xff]
        %v4611 = vld [vmem:[#allocation2 + $0xa8] sm:$0xff]
        %v4612 = vld [vmem:[#allocation2 + $0xb0] sm:$0xff]
        %v4613 = vld [vmem:[#allocation2 + $0xc0] sm:$0xff]
        %v4614 = vld [vmem:[#allocation2 + $0xc8] sm:$0xff]
        %v4615 = vld [vmem:[#allocation2 + $0xd8] sm:$0xff]
        %v4616 = vld [vmem:[#allocation2 + $0xe0] sm:$0xff]
        %v4617 = vld [vmem:[#allocation2 + $0xf0] sm:$0xff]
        %v4618 = vld [vmem:[#allocation2 + $0xf8] sm:$0xff]
        %v4619 = vld [vmem:[#allocation2 + $0x108] sm:$0xff]
        %v4620 = vld [vmem:[#allocation2 + $0x110] sm:$0xff]
        %v4621 = vld [vmem:[#allocation2 + $0x120] sm:$0xff]
        %v4622 = vld [vmem:[#allocation2 + $0x128] sm:$0xff]
        %v4623 = vld [vmem:[#allocation2 + $0x138] sm:$0xff]
        %v4624 = vld [vmem:[#allocation2 + $0x140] sm:$0xff]
        %v4625 = vld [vmem:[#allocation2 + $0x150] sm:$0xff]
        %v4626 = vld [vmem:[#allocation2 + $0x158] sm:$0xff]
        %v4627 = vld [vmem:[#allocation2 + $0x168] sm:$0xff]
        %v4628 = vld [vmem:[#allocation2 + $0x170] sm:$0xff]
        %4629 = vst.msk [vmem:[#allocation3] sm:$0xff] %vm2295, %v4597
        %4630 = vst.msk [vmem:[#allocation3 + $0x10] sm:$0xff] %vm2295, %v4598
        %4631 = vst.msk [vmem:[#allocation3 + $0x20] sm:$0xff] %vm2295, %v4599
        %4632 = vst.msk [vmem:[#allocation3 + $0x30] sm:$0xff] %vm2295, %v4600
        %4633 = vst.msk [vmem:[#allocation3 + $0x40] sm:$0xff] %vm2295, %v4601
        %4634 = vst.msk [vmem:[#allocation3 + $0x50] sm:$0xff] %vm2295, %v4602
        %4635 = vst.msk [vmem:[#allocation3 + $0x60] sm:$0xff] %vm2295, %v4603
        %4636 = vst.msk [vmem:[#allocation3 + $0x70] sm:$0xff] %vm2295, %v4604
        %4637 = vst.msk [vmem:[#allocation3 + $0x80] sm:$0xff] %vm2295, %v4605
        %4638 = vst.msk [vmem:[#allocation3 + $0x90] sm:$0xff] %vm2295, %v4606
        %4639 = vst.msk [vmem:[#allocation3 + $0xa0] sm:$0xff] %vm2295, %v4607
        %4640 = vst.msk [vmem:[#allocation3 + $0xb0] sm:$0xff] %vm2295, %v4608
        %4641 = vst.msk [vmem:[#allocation3 + $0xc0] sm:$0xff] %vm2295, %v4609
        %4642 = vst.msk [vmem:[#allocation3 + $0xd0] sm:$0xff] %vm2295, %v4610
        %4643 = vst.msk [vmem:[#allocation3 + $0xe0] sm:$0xff] %vm2295, %v4611
        %4644 = vst.msk [vmem:[#allocation3 + $0xf0] sm:$0xff] %vm2295, %v4612
        %4645 = vst.msk [vmem:[#allocation3 + $0x100] sm:$0xff] %vm2295, %v4613
        %4646 = vst.msk [vmem:[#allocation3 + $0x110] sm:$0xff] %vm2295, %v4614
        %4647 = vst.msk [vmem:[#allocation3 + $0x120] sm:$0xff] %vm2295, %v4615
        %4648 = vst.msk [vmem:[#allocation3 + $0x130] sm:$0xff] %vm2295, %v4616
        %4649 = vst.msk [vmem:[#allocation3 + $0x140] sm:$0xff] %vm2295, %v4617
        %4650 = vst.msk [vmem:[#allocation3 + $0x150] sm:$0xff] %vm2295, %v4618
        %4651 = vst.msk [vmem:[#allocation3 + $0x160] sm:$0xff] %vm2295, %v4619
        %4652 = vst.msk [vmem:[#allocation3 + $0x170] sm:$0xff] %vm2295, %v4620
        %4653 = vst.msk [vmem:[#allocation3 + $0x180] sm:$0xff] %vm2295, %v4621
        %4654 = vst.msk [vmem:[#allocation3 + $0x190] sm:$0xff] %vm2295, %v4622
        %4655 = vst.msk [vmem:[#allocation3 + $0x1a0] sm:$0xff] %vm2295, %v4623
        %4656 = vst.msk [vmem:[#allocation3 + $0x1b0] sm:$0xff] %vm2295, %v4624
        %4657 = vst.msk [vmem:[#allocation3 + $0x1c0] sm:$0xff] %vm2295, %v4625
        %4658 = vst.msk [vmem:[#allocation3 + $0x1d0] sm:$0xff] %vm2295, %v4626
        %4659 = vst.msk [vmem:[#allocation3 + $0x1e0] sm:$0xff] %vm2295, %v4627
        %4660 = vst.msk [vmem:[#allocation3 + $0x1f0] sm:$0xff] %vm2295, %v4628
        %v4661 = vld [vmem:[#allocation2 + $0x2] sm:$0xff]
        %v4662 = vld [vmem:[#allocation2 + $0xa] sm:$0xff]
        %v4663 = vld [vmem:[#allocation2 + $0x1a] sm:$0xff]
        %v4664 = vld [vmem:[#allocation2 + $0x22] sm:$0xff]
        %v4665 = vld [vmem:[#allocation2 + $0x32] sm:$0xff]
        %v4666 = vld [vmem:[#allocation2 + $0x3a] sm:$0xff]
        %v4667 = vld [vmem:[#allocation2 + $0x4a] sm:$0xff]
        %v4668 = vld [vmem:[#allocation2 + $0x52] sm:$0xff]
        %v4669 = vld [vmem:[#allocation2 + $0x62] sm:$0xff]
        %v4670 = vld [vmem:[#allocation2 + $0x6a] sm:$0xff]
        %v4671 = vld [vmem:[#allocation2 + $0x7a] sm:$0xff]
        %v4672 = vld [vmem:[#allocation2 + $0x82] sm:$0xff]
        %v4673 = vld [vmem:[#allocation2 + $0x92] sm:$0xff]
        %v4674 = vld [vmem:[#allocation2 + $0x9a] sm:$0xff]
        %v4675 = vld [vmem:[#allocation2 + $0xaa] sm:$0xff]
        %v4676 = vld [vmem:[#allocation2 + $0xb2] sm:$0xff]
        %v4677 = vld [vmem:[#allocation2 + $0xc2] sm:$0xff]
        %v4678 = vld [vmem:[#allocation2 + $0xca] sm:$0xff]
        %v4679 = vld [vmem:[#allocation2 + $0xda] sm:$0xff]
        %v4680 = vld [vmem:[#allocation2 + $0xe2] sm:$0xff]
        %v4681 = vld [vmem:[#allocation2 + $0xf2] sm:$0xff]
        %v4682 = vld [vmem:[#allocation2 + $0xfa] sm:$0xff]
        %v4683 = vld [vmem:[#allocation2 + $0x10a] sm:$0xff]
        %v4684 = vld [vmem:[#allocation2 + $0x112] sm:$0xff]
        %v4685 = vld [vmem:[#allocation2 + $0x122] sm:$0xff]
        %v4686 = vld [vmem:[#allocation2 + $0x12a] sm:$0xff]
        %v4687 = vld [vmem:[#allocation2 + $0x13a] sm:$0xff]
        %v4688 = vld [vmem:[#allocation2 + $0x142] sm:$0xff]
        %v4689 = vld [vmem:[#allocation2 + $0x152] sm:$0xff]
        %v4690 = vld [vmem:[#allocation2 + $0x15a] sm:$0xff]
        %v4691 = vld [vmem:[#allocation2 + $0x16a] sm:$0xff]
        %v4692 = vld [vmem:[#allocation2 + $0x172] sm:$0xff]
        %4725 = vrot.lane.b32.xlu0 %v4661, 8
        %v4726 = vpop.permute.xlu0 %4725
        %4727 = vrot.lane.b32.xlu0 %v4662, 8
        %v4728 = vpop.permute.xlu0 %4727
        %4729 = vrot.lane.b32.xlu0 %v4663, 8
        %v4730 = vpop.permute.xlu0 %4729
        %4731 = vrot.lane.b32.xlu0 %v4664, 8
        %v4732 = vpop.permute.xlu0 %4731
        %4733 = vrot.lane.b32.xlu0 %v4665, 8
        %v4734 = vpop.permute.xlu0 %4733
        %4735 = vrot.lane.b32.xlu0 %v4666, 8
        %v4736 = vpop.permute.xlu0 %4735
        %4737 = vrot.lane.b32.xlu0 %v4667, 8
        %v4738 = vpop.permute.xlu0 %4737
        %4739 = vrot.lane.b32.xlu0 %v4668, 8
        %v4740 = vpop.permute.xlu0 %4739
        %4741 = vrot.lane.b32.xlu0 %v4669, 8
        %v4742 = vpop.permute.xlu0 %4741
        %4743 = vrot.lane.b32.xlu0 %v4670, 8
        %v4744 = vpop.permute.xlu0 %4743
        %4745 = vrot.lane.b32.xlu0 %v4671, 8
        %v4746 = vpop.permute.xlu0 %4745
        %4747 = vrot.lane.b32.xlu0 %v4672, 8
        %v4748 = vpop.permute.xlu0 %4747
        %4749 = vrot.lane.b32.xlu0 %v4673, 8
        %v4750 = vpop.permute.xlu0 %4749
        %4751 = vrot.lane.b32.xlu0 %v4674, 8
        %v4752 = vpop.permute.xlu0 %4751
        %4753 = vrot.lane.b32.xlu0 %v4675, 8
        %v4754 = vpop.permute.xlu0 %4753
        %4755 = vrot.lane.b32.xlu0 %v4676, 8
        %v4756 = vpop.permute.xlu0 %4755
        %4757 = vrot.lane.b32.xlu0 %v4677, 8
        %v4758 = vpop.permute.xlu0 %4757
        %4759 = vrot.lane.b32.xlu0 %v4678, 8
        %v4760 = vpop.permute.xlu0 %4759
        %4761 = vrot.lane.b32.xlu0 %v4679, 8
        %v4762 = vpop.permute.xlu0 %4761
        %4763 = vrot.lane.b32.xlu0 %v4680, 8
        %v4764 = vpop.permute.xlu0 %4763
        %4765 = vrot.lane.b32.xlu0 %v4681, 8
        %v4766 = vpop.permute.xlu0 %4765
        %4767 = vrot.lane.b32.xlu0 %v4682, 8
        %v4768 = vpop.permute.xlu0 %4767
        %4769 = vrot.lane.b32.xlu0 %v4683, 8
        %v4770 = vpop.permute.xlu0 %4769
        %4771 = vrot.lane.b32.xlu0 %v4684, 8
        %v4772 = vpop.permute.xlu0 %4771
        %4773 = vrot.lane.b32.xlu0 %v4685, 8
        %v4774 = vpop.permute.xlu0 %4773
        %4775 = vrot.lane.b32.xlu0 %v4686, 8
        %v4776 = vpop.permute.xlu0 %4775
        %4777 = vrot.lane.b32.xlu0 %v4687, 8
        %v4778 = vpop.permute.xlu0 %4777
        %4779 = vrot.lane.b32.xlu0 %v4688, 8
        %v4780 = vpop.permute.xlu0 %4779
        %4781 = vrot.lane.b32.xlu0 %v4689, 8
        %v4782 = vpop.permute.xlu0 %4781
        %4783 = vrot.lane.b32.xlu0 %v4690, 8
        %v4784 = vpop.permute.xlu0 %4783
        %4785 = vrot.lane.b32.xlu0 %v4691, 8
        %v4786 = vpop.permute.xlu0 %4785
        %4787 = vrot.lane.b32.xlu0 %v4692, 8
        %v4788 = vpop.permute.xlu0 %4787
        %4821 = vst.msk [vmem:[#allocation3] sm:$0xff] %vm2599, %v4726
        %4822 = vst.msk [vmem:[#allocation3 + $0x10] sm:$0xff] %vm2599, %v4728
        %4823 = vst.msk [vmem:[#allocation3 + $0x20] sm:$0xff] %vm2599, %v4730
        %4824 = vst.msk [vmem:[#allocation3 + $0x30] sm:$0xff] %vm2599, %v4732
        %4825 = vst.msk [vmem:[#allocation3 + $0x40] sm:$0xff] %vm2599, %v4734
        %4826 = vst.msk [vmem:[#allocation3 + $0x50] sm:$0xff] %vm2599, %v4736
        %4827 = vst.msk [vmem:[#allocation3 + $0x60] sm:$0xff] %vm2599, %v4738
        %4828 = vst.msk [vmem:[#allocation3 + $0x70] sm:$0xff] %vm2599, %v4740
        %4829 = vst.msk [vmem:[#allocation3 + $0x80] sm:$0xff] %vm2599, %v4742
        %4830 = vst.msk [vmem:[#allocation3 + $0x90] sm:$0xff] %vm2599, %v4744
        %4831 = vst.msk [vmem:[#allocation3 + $0xa0] sm:$0xff] %vm2599, %v4746
        %4832 = vst.msk [vmem:[#allocation3 + $0xb0] sm:$0xff] %vm2599, %v4748
        %4833 = vst.msk [vmem:[#allocation3 + $0xc0] sm:$0xff] %vm2599, %v4750
        %4834 = vst.msk [vmem:[#allocation3 + $0xd0] sm:$0xff] %vm2599, %v4752
        %4835 = vst.msk [vmem:[#allocation3 + $0xe0] sm:$0xff] %vm2599, %v4754
        %4836 = vst.msk [vmem:[#allocation3 + $0xf0] sm:$0xff] %vm2599, %v4756
        %4837 = vst.msk [vmem:[#allocation3 + $0x100] sm:$0xff] %vm2599, %v4758
        %4838 = vst.msk [vmem:[#allocation3 + $0x110] sm:$0xff] %vm2599, %v4760
        %4839 = vst.msk [vmem:[#allocation3 + $0x120] sm:$0xff] %vm2599, %v4762
        %4840 = vst.msk [vmem:[#allocation3 + $0x130] sm:$0xff] %vm2599, %v4764
        %4841 = vst.msk [vmem:[#allocation3 + $0x140] sm:$0xff] %vm2599, %v4766
        %4842 = vst.msk [vmem:[#allocation3 + $0x150] sm:$0xff] %vm2599, %v4768
        %4843 = vst.msk [vmem:[#allocation3 + $0x160] sm:$0xff] %vm2599, %v4770
        %4844 = vst.msk [vmem:[#allocation3 + $0x170] sm:$0xff] %vm2599, %v4772
        %4845 = vst.msk [vmem:[#allocation3 + $0x180] sm:$0xff] %vm2599, %v4774
        %4846 = vst.msk [vmem:[#allocation3 + $0x190] sm:$0xff] %vm2599, %v4776
        %4847 = vst.msk [vmem:[#allocation3 + $0x1a0] sm:$0xff] %vm2599, %v4778
        %4848 = vst.msk [vmem:[#allocation3 + $0x1b0] sm:$0xff] %vm2599, %v4780
        %4849 = vst.msk [vmem:[#allocation3 + $0x1c0] sm:$0xff] %vm2599, %v4782
        %4850 = vst.msk [vmem:[#allocation3 + $0x1d0] sm:$0xff] %vm2599, %v4784
        %4851 = vst.msk [vmem:[#allocation3 + $0x1e0] sm:$0xff] %vm2599, %v4786
        %4852 = vst.msk [vmem:[#allocation3 + $0x1f0] sm:$0xff] %vm2599, %v4788
        %v4853 = vld [vmem:[#allocation2 + $0x4] sm:$0xff]
        %v4854 = vld [vmem:[#allocation2 + $0xc] sm:$0xff]
        %v4855 = vld [vmem:[#allocation2 + $0x1c] sm:$0xff]
        %v4856 = vld [vmem:[#allocation2 + $0x24] sm:$0xff]
        %v4857 = vld [vmem:[#allocation2 + $0x34] sm:$0xff]
        %v4858 = vld [vmem:[#allocation2 + $0x3c] sm:$0xff]
        %v4859 = vld [vmem:[#allocation2 + $0x4c] sm:$0xff]
        %v4860 = vld [vmem:[#allocation2 + $0x54] sm:$0xff]
        %v4861 = vld [vmem:[#allocation2 + $0x64] sm:$0xff]
        %v4862 = vld [vmem:[#allocation2 + $0x6c] sm:$0xff]
        %v4863 = vld [vmem:[#allocation2 + $0x7c] sm:$0xff]
        %v4864 = vld [vmem:[#allocation2 + $0x84] sm:$0xff]
        %v4865 = vld [vmem:[#allocation2 + $0x94] sm:$0xff]
        %v4866 = vld [vmem:[#allocation2 + $0x9c] sm:$0xff]
        %v4867 = vld [vmem:[#allocation2 + $0xac] sm:$0xff]
        %v4868 = vld [vmem:[#allocation2 + $0xb4] sm:$0xff]
        %v4869 = vld [vmem:[#allocation2 + $0xc4] sm:$0xff]
        %v4870 = vld [vmem:[#allocation2 + $0xcc] sm:$0xff]
        %v4871 = vld [vmem:[#allocation2 + $0xdc] sm:$0xff]
        %v4872 = vld [vmem:[#allocation2 + $0xe4] sm:$0xff]
        %v4873 = vld [vmem:[#allocation2 + $0xf4] sm:$0xff]
        %v4874 = vld [vmem:[#allocation2 + $0xfc] sm:$0xff]
        %v4875 = vld [vmem:[#allocation2 + $0x10c] sm:$0xff]
        %v4876 = vld [vmem:[#allocation2 + $0x114] sm:$0xff]
        %v4877 = vld [vmem:[#allocation2 + $0x124] sm:$0xff]
        %v4878 = vld [vmem:[#allocation2 + $0x12c] sm:$0xff]
        %v4879 = vld [vmem:[#allocation2 + $0x13c] sm:$0xff]
        %v4880 = vld [vmem:[#allocation2 + $0x144] sm:$0xff]
        %v4881 = vld [vmem:[#allocation2 + $0x154] sm:$0xff]
        %v4882 = vld [vmem:[#allocation2 + $0x15c] sm:$0xff]
        %v4883 = vld [vmem:[#allocation2 + $0x16c] sm:$0xff]
        %v4884 = vld [vmem:[#allocation2 + $0x174] sm:$0xff]
        %4917 = vrot.lane.b32.xlu0 %v4853, 16
        %v4918 = vpop.permute.xlu0 %4917
        %4919 = vrot.lane.b32.xlu0 %v4854, 16
        %v4920 = vpop.permute.xlu0 %4919
        %4921 = vrot.lane.b32.xlu0 %v4855, 16
        %v4922 = vpop.permute.xlu0 %4921
        %4923 = vrot.lane.b32.xlu0 %v4856, 16
        %v4924 = vpop.permute.xlu0 %4923
        %4925 = vrot.lane.b32.xlu0 %v4857, 16
        %v4926 = vpop.permute.xlu0 %4925
        %4927 = vrot.lane.b32.xlu0 %v4858, 16
        %v4928 = vpop.permute.xlu0 %4927
        %4929 = vrot.lane.b32.xlu0 %v4859, 16
        %v4930 = vpop.permute.xlu0 %4929
        %4931 = vrot.lane.b32.xlu0 %v4860, 16
        %v4932 = vpop.permute.xlu0 %4931
        %4933 = vrot.lane.b32.xlu0 %v4861, 16
        %v4934 = vpop.permute.xlu0 %4933
        %4935 = vrot.lane.b32.xlu0 %v4862, 16
        %v4936 = vpop.permute.xlu0 %4935
        %4937 = vrot.lane.b32.xlu0 %v4863, 16
        %v4938 = vpop.permute.xlu0 %4937
        %4939 = vrot.lane.b32.xlu0 %v4864, 16
        %v4940 = vpop.permute.xlu0 %4939
        %4941 = vrot.lane.b32.xlu0 %v4865, 16
        %v4942 = vpop.permute.xlu0 %4941
        %4943 = vrot.lane.b32.xlu0 %v4866, 16
        %v4944 = vpop.permute.xlu0 %4943
        %4945 = vrot.lane.b32.xlu0 %v4867, 16
        %v4946 = vpop.permute.xlu0 %4945
        %4947 = vrot.lane.b32.xlu0 %v4868, 16
        %v4948 = vpop.permute.xlu0 %4947
        %4949 = vrot.lane.b32.xlu0 %v4869, 16
        %v4950 = vpop.permute.xlu0 %4949
        %4951 = vrot.lane.b32.xlu0 %v4870, 16
        %v4952 = vpop.permute.xlu0 %4951
        %4953 = vrot.lane.b32.xlu0 %v4871, 16
        %v4954 = vpop.permute.xlu0 %4953
        %4955 = vrot.lane.b32.xlu0 %v4872, 16
        %v4956 = vpop.permute.xlu0 %4955
        %4957 = vrot.lane.b32.xlu0 %v4873, 16
        %v4958 = vpop.permute.xlu0 %4957
        %4959 = vrot.lane.b32.xlu0 %v4874, 16
        %v4960 = vpop.permute.xlu0 %4959
        %4961 = vrot.lane.b32.xlu0 %v4875, 16
        %v4962 = vpop.permute.xlu0 %4961
        %4963 = vrot.lane.b32.xlu0 %v4876, 16
        %v4964 = vpop.permute.xlu0 %4963
        %4965 = vrot.lane.b32.xlu0 %v4877, 16
        %v4966 = vpop.permute.xlu0 %4965
        %4967 = vrot.lane.b32.xlu0 %v4878, 16
        %v4968 = vpop.permute.xlu0 %4967
        %4969 = vrot.lane.b32.xlu0 %v4879, 16
        %v4970 = vpop.permute.xlu0 %4969
        %4971 = vrot.lane.b32.xlu0 %v4880, 16
        %v4972 = vpop.permute.xlu0 %4971
        %4973 = vrot.lane.b32.xlu0 %v4881, 16
        %v4974 = vpop.permute.xlu0 %4973
        %4975 = vrot.lane.b32.xlu0 %v4882, 16
        %v4976 = vpop.permute.xlu0 %4975
        %4977 = vrot.lane.b32.xlu0 %v4883, 16
        %v4978 = vpop.permute.xlu0 %4977
        %4979 = vrot.lane.b32.xlu0 %v4884, 16
        %v4980 = vpop.permute.xlu0 %4979
        %5013 = vst.msk [vmem:[#allocation3] sm:$0xff] %vm2792, %v4918
        %5014 = vst.msk [vmem:[#allocation3 + $0x10] sm:$0xff] %vm2792, %v4920
        %5015 = vst.msk [vmem:[#allocation3 + $0x20] sm:$0xff] %vm2792, %v4922
        %5016 = vst.msk [vmem:[#allocation3 + $0x30] sm:$0xff] %vm2792, %v4924
        %5017 = vst.msk [vmem:[#allocation3 + $0x40] sm:$0xff] %vm2792, %v4926
        %5018 = vst.msk [vmem:[#allocation3 + $0x50] sm:$0xff] %vm2792, %v4928
        %5019 = vst.msk [vmem:[#allocation3 + $0x60] sm:$0xff] %vm2792, %v4930
        %5020 = vst.msk [vmem:[#allocation3 + $0x70] sm:$0xff] %vm2792, %v4932
        %5021 = vst.msk [vmem:[#allocation3 + $0x80] sm:$0xff] %vm2792, %v4934
        %5022 = vst.msk [vmem:[#allocation3 + $0x90] sm:$0xff] %vm2792, %v4936
        %5023 = vst.msk [vmem:[#allocation3 + $0xa0] sm:$0xff] %vm2792, %v4938
        %5024 = vst.msk [vmem:[#allocation3 + $0xb0] sm:$0xff] %vm2792, %v4940
        %5025 = vst.msk [vmem:[#allocation3 + $0xc0] sm:$0xff] %vm2792, %v4942
        %5026 = vst.msk [vmem:[#allocation3 + $0xd0] sm:$0xff] %vm2792, %v4944
        %5027 = vst.msk [vmem:[#allocation3 + $0xe0] sm:$0xff] %vm2792, %v4946
        %5028 = vst.msk [vmem:[#allocation3 + $0xf0] sm:$0xff] %vm2792, %v4948
        %5029 = vst.msk [vmem:[#allocation3 + $0x100] sm:$0xff] %vm2792, %v4950
        %5030 = vst.msk [vmem:[#allocation3 + $0x110] sm:$0xff] %vm2792, %v4952
        %5031 = vst.msk [vmem:[#allocation3 + $0x120] sm:$0xff] %vm2792, %v4954
        %5032 = vst.msk [vmem:[#allocation3 + $0x130] sm:$0xff] %vm2792, %v4956
        %5033 = vst.msk [vmem:[#allocation3 + $0x140] sm:$0xff] %vm2792, %v4958
        %5034 = vst.msk [vmem:[#allocation3 + $0x150] sm:$0xff] %vm2792, %v4960
        %5035 = vst.msk [vmem:[#allocation3 + $0x160] sm:$0xff] %vm2792, %v4962
        %5036 = vst.msk [vmem:[#allocation3 + $0x170] sm:$0xff] %vm2792, %v4964
        %5037 = vst.msk [vmem:[#allocation3 + $0x180] sm:$0xff] %vm2792, %v4966
        %5038 = vst.msk [vmem:[#allocation3 + $0x190] sm:$0xff] %vm2792, %v4968
        %5039 = vst.msk [vmem:[#allocation3 + $0x1a0] sm:$0xff] %vm2792, %v4970
        %5040 = vst.msk [vmem:[#allocation3 + $0x1b0] sm:$0xff] %vm2792, %v4972
        %5041 = vst.msk [vmem:[#allocation3 + $0x1c0] sm:$0xff] %vm2792, %v4974
        %5042 = vst.msk [vmem:[#allocation3 + $0x1d0] sm:$0xff] %vm2792, %v4976
        %5043 = vst.msk [vmem:[#allocation3 + $0x1e0] sm:$0xff] %vm2792, %v4978
        %5044 = vst.msk [vmem:[#allocation3 + $0x1f0] sm:$0xff] %vm2792, %v4980
        %v5045 = vld [vmem:[%s1313] sm:$0xff]
        %v5046 = vld [vmem:[%s1313 + $0x8] sm:$0xff]
        %v5047 = vld [vmem:[%s1313 + $0x18] sm:$0xff]
        %v5048 = vld [vmem:[%s1313 + $0x20] sm:$0xff]
        %v5049 = vld [vmem:[%s1313 + $0x30] sm:$0xff]
        %v5050 = vld [vmem:[%s1313 + $0x38] sm:$0xff]
        %v5051 = vld [vmem:[%s1313 + $0x48] sm:$0xff]
        %v5052 = vld [vmem:[%s1313 + $0x50] sm:$0xff]
        %v5053 = vld [vmem:[%s1313 + $0x60] sm:$0xff]
        %v5054 = vld [vmem:[%s1313 + $0x68] sm:$0xff]
        %v5055 = vld [vmem:[%s1313 + $0x78] sm:$0xff]
        %v5056 = vld [vmem:[%s1313 + $0x80] sm:$0xff]
        %v5057 = vld [vmem:[%s1313 + $0x90] sm:$0xff]
        %v5058 = vld [vmem:[%s1313 + $0x98] sm:$0xff]
        %v5059 = vld [vmem:[%s1313 + $0xa8] sm:$0xff]
        %v5060 = vld [vmem:[%s1313 + $0xb0] sm:$0xff]
        %v5061 = vld [vmem:[%s1313 + $0xc0] sm:$0xff]
        %v5062 = vld [vmem:[%s1313 + $0xc8] sm:$0xff]
        %v5063 = vld [vmem:[%s1313 + $0xd8] sm:$0xff]
        %v5064 = vld [vmem:[%s1313 + $0xe0] sm:$0xff]
        %v5065 = vld [vmem:[%s1313 + $0xf0] sm:$0xff]
        %v5066 = vld [vmem:[%s1313 + $0xf8] sm:$0xff]
        %v5067 = vld [vmem:[%s1313 + $0x108] sm:$0xff]
        %v5068 = vld [vmem:[%s1313 + $0x110] sm:$0xff]
        %v5069 = vld [vmem:[%s1313 + $0x120] sm:$0xff]
        %v5070 = vld [vmem:[%s1313 + $0x128] sm:$0xff]
        %v5071 = vld [vmem:[%s1313 + $0x138] sm:$0xff]
        %v5072 = vld [vmem:[%s1313 + $0x140] sm:$0xff]
        %v5073 = vld [vmem:[%s1313 + $0x150] sm:$0xff]
        %v5074 = vld [vmem:[%s1313 + $0x158] sm:$0xff]
        %v5075 = vld [vmem:[%s1313 + $0x168] sm:$0xff]
        %v5076 = vld [vmem:[%s1313 + $0x170] sm:$0xff]
        %5109 = vrot.lane.b32.xlu0 %v5045, 24
        %v5110 = vpop.permute.xlu0 %5109
        %5111 = vrot.lane.b32.xlu0 %v5046, 24
        %v5112 = vpop.permute.xlu0 %5111
        %5113 = vrot.lane.b32.xlu0 %v5047, 24
        %v5114 = vpop.permute.xlu0 %5113
        %5115 = vrot.lane.b32.xlu0 %v5048, 24
        %v5116 = vpop.permute.xlu0 %5115
        %5117 = vrot.lane.b32.xlu0 %v5049, 24
        %v5118 = vpop.permute.xlu0 %5117
        %5119 = vrot.lane.b32.xlu0 %v5050, 24
        %v5120 = vpop.permute.xlu0 %5119
        %5121 = vrot.lane.b32.xlu0 %v5051, 24
        %v5122 = vpop.permute.xlu0 %5121
        %5123 = vrot.lane.b32.xlu0 %v5052, 24
        %v5124 = vpop.permute.xlu0 %5123
        %5125 = vrot.lane.b32.xlu0 %v5053, 24
        %v5126 = vpop.permute.xlu0 %5125
        %5127 = vrot.lane.b32.xlu0 %v5054, 24
        %v5128 = vpop.permute.xlu0 %5127
        %5129 = vrot.lane.b32.xlu0 %v5055, 24
        %v5130 = vpop.permute.xlu0 %5129
        %5131 = vrot.lane.b32.xlu0 %v5056, 24
        %v5132 = vpop.permute.xlu0 %5131
        %5133 = vrot.lane.b32.xlu0 %v5057, 24
        %v5134 = vpop.permute.xlu0 %5133
        %5135 = vrot.lane.b32.xlu0 %v5058, 24
        %v5136 = vpop.permute.xlu0 %5135
        %5137 = vrot.lane.b32.xlu0 %v5059, 24
        %v5138 = vpop.permute.xlu0 %5137
        %5139 = vrot.lane.b32.xlu0 %v5060, 24
        %v5140 = vpop.permute.xlu0 %5139
        %5141 = vrot.lane.b32.xlu0 %v5061, 24
        %v5142 = vpop.permute.xlu0 %5141
        %5143 = vrot.lane.b32.xlu0 %v5062, 24
        %v5144 = vpop.permute.xlu0 %5143
        %5145 = vrot.lane.b32.xlu0 %v5063, 24
        %v5146 = vpop.permute.xlu0 %5145
        %5147 = vrot.lane.b32.xlu0 %v5064, 24
        %v5148 = vpop.permute.xlu0 %5147
        %5149 = vrot.lane.b32.xlu0 %v5065, 24
        %v5150 = vpop.permute.xlu0 %5149
        %5151 = vrot.lane.b32.xlu0 %v5066, 24
        %v5152 = vpop.permute.xlu0 %5151
        %5153 = vrot.lane.b32.xlu0 %v5067, 24
        %v5154 = vpop.permute.xlu0 %5153
        %5155 = vrot.lane.b32.xlu0 %v5068, 24
        %v5156 = vpop.permute.xlu0 %5155
        %5157 = vrot.lane.b32.xlu0 %v5069, 24
        %v5158 = vpop.permute.xlu0 %5157
        %5159 = vrot.lane.b32.xlu0 %v5070, 24
        %v5160 = vpop.permute.xlu0 %5159
        %5161 = vrot.lane.b32.xlu0 %v5071, 24
        %v5162 = vpop.permute.xlu0 %5161
        %5163 = vrot.lane.b32.xlu0 %v5072, 24
        %v5164 = vpop.permute.xlu0 %5163
        %5165 = vrot.lane.b32.xlu0 %v5073, 24
        %v5166 = vpop.permute.xlu0 %5165
        %5167 = vrot.lane.b32.xlu0 %v5074, 24
        %v5168 = vpop.permute.xlu0 %5167
        %5169 = vrot.lane.b32.xlu0 %v5075, 24
        %v5170 = vpop.permute.xlu0 %5169
        %5171 = vrot.lane.b32.xlu0 %v5076, 24
        %v5172 = vpop.permute.xlu0 %5171
        %5205 = vst.msk [vmem:[#allocation3] sm:$0xff] %vm2985, %v5110
        %5206 = vst.msk [vmem:[#allocation3 + $0x10] sm:$0xff] %vm2985, %v5112
        %5207 = vst.msk [vmem:[#allocation3 + $0x20] sm:$0xff] %vm2985, %v5114
        %5208 = vst.msk [vmem:[#allocation3 + $0x30] sm:$0xff] %vm2985, %v5116
        %5209 = vst.msk [vmem:[#allocation3 + $0x40] sm:$0xff] %vm2985, %v5118
        %5210 = vst.msk [vmem:[#allocation3 + $0x50] sm:$0xff] %vm2985, %v5120
        %5211 = vst.msk [vmem:[#allocation3 + $0x60] sm:$0xff] %vm2985, %v5122
        %5212 = vst.msk [vmem:[#allocation3 + $0x70] sm:$0xff] %vm2985, %v5124
        %5213 = vst.msk [vmem:[#allocation3 + $0x80] sm:$0xff] %vm2985, %v5126
        %5214 = vst.msk [vmem:[#allocation3 + $0x90] sm:$0xff] %vm2985, %v5128
        %5215 = vst.msk [vmem:[#allocation3 + $0xa0] sm:$0xff] %vm2985, %v5130
        %5216 = vst.msk [vmem:[#allocation3 + $0xb0] sm:$0xff] %vm2985, %v5132
        %5217 = vst.msk [vmem:[#allocation3 + $0xc0] sm:$0xff] %vm2985, %v5134
        %5218 = vst.msk [vmem:[#allocation3 + $0xd0] sm:$0xff] %vm2985, %v5136
        %5219 = vst.msk [vmem:[#allocation3 + $0xe0] sm:$0xff] %vm2985, %v5138
        %5220 = vst.msk [vmem:[#allocation3 + $0xf0] sm:$0xff] %vm2985, %v5140
        %5221 = vst.msk [vmem:[#allocation3 + $0x100] sm:$0xff] %vm2985, %v5142
        %5222 = vst.msk [vmem:[#allocation3 + $0x110] sm:$0xff] %vm2985, %v5144
        %5223 = vst.msk [vmem:[#allocation3 + $0x120] sm:$0xff] %vm2985, %v5146
        %5224 = vst.msk [vmem:[#allocation3 + $0x130] sm:$0xff] %vm2985, %v5148
        %5225 = vst.msk [vmem:[#allocation3 + $0x140] sm:$0xff] %vm2985, %v5150
        %5226 = vst.msk [vmem:[#allocation3 + $0x150] sm:$0xff] %vm2985, %v5152
        %5227 = vst.msk [vmem:[#allocation3 + $0x160] sm:$0xff] %vm2985, %v5154
        %5228 = vst.msk [vmem:[#allocation3 + $0x170] sm:$0xff] %vm2985, %v5156
        %5229 = vst.msk [vmem:[#allocation3 + $0x180] sm:$0xff] %vm2985, %v5158
        %5230 = vst.msk [vmem:[#allocation3 + $0x190] sm:$0xff] %vm2985, %v5160
        %5231 = vst.msk [vmem:[#allocation3 + $0x1a0] sm:$0xff] %vm2985, %v5162
        %5232 = vst.msk [vmem:[#allocation3 + $0x1b0] sm:$0xff] %vm2985, %v5164
        %5233 = vst.msk [vmem:[#allocation3 + $0x1c0] sm:$0xff] %vm2985, %v5166
        %5234 = vst.msk [vmem:[#allocation3 + $0x1d0] sm:$0xff] %vm2985, %v5168
        %5235 = vst.msk [vmem:[#allocation3 + $0x1e0] sm:$0xff] %vm2985, %v5170
        %5236 = vst.msk [vmem:[#allocation3 + $0x1f0] sm:$0xff] %vm2985, %v5172
        %v5237 = vld [vmem:[%s1313 + $0x2] sm:$0xff]
        %v5238 = vld [vmem:[%s1313 + $0xa] sm:$0xff]
        %v5239 = vld [vmem:[%s1313 + $0x1a] sm:$0xff]
        %v5240 = vld [vmem:[%s1313 + $0x22] sm:$0xff]
        %v5241 = vld [vmem:[%s1313 + $0x32] sm:$0xff]
        %v5242 = vld [vmem:[%s1313 + $0x3a] sm:$0xff]
        %v5243 = vld [vmem:[%s1313 + $0x4a] sm:$0xff]
        %v5244 = vld [vmem:[%s1313 + $0x52] sm:$0xff]
        %v5245 = vld [vmem:[%s1313 + $0x62] sm:$0xff]
        %v5246 = vld [vmem:[%s1313 + $0x6a] sm:$0xff]
        %v5247 = vld [vmem:[%s1313 + $0x7a] sm:$0xff]
        %v5248 = vld [vmem:[%s1313 + $0x82] sm:$0xff]
        %v5249 = vld [vmem:[%s1313 + $0x92] sm:$0xff]
        %v5250 = vld [vmem:[%s1313 + $0x9a] sm:$0xff]
        %v5251 = vld [vmem:[%s1313 + $0xaa] sm:$0xff]
        %v5252 = vld [vmem:[%s1313 + $0xb2] sm:$0xff]
        %v5253 = vld [vmem:[%s1313 + $0xc2] sm:$0xff]
        %v5254 = vld [vmem:[%s1313 + $0xca] sm:$0xff]
        %v5255 = vld [vmem:[%s1313 + $0xda] sm:$0xff]
        %v5256 = vld [vmem:[%s1313 + $0xe2] sm:$0xff]
        %v5257 = vld [vmem:[%s1313 + $0xf2] sm:$0xff]
        %v5258 = vld [vmem:[%s1313 + $0xfa] sm:$0xff]
        %v5259 = vld [vmem:[%s1313 + $0x10a] sm:$0xff]
        %v5260 = vld [vmem:[%s1313 + $0x112] sm:$0xff]
        %v5261 = vld [vmem:[%s1313 + $0x122] sm:$0xff]
        %v5262 = vld [vmem:[%s1313 + $0x12a] sm:$0xff]
        %v5263 = vld [vmem:[%s1313 + $0x13a] sm:$0xff]
        %v5264 = vld [vmem:[%s1313 + $0x142] sm:$0xff]
        %v5265 = vld [vmem:[%s1313 + $0x152] sm:$0xff]
        %v5266 = vld [vmem:[%s1313 + $0x15a] sm:$0xff]
        %v5267 = vld [vmem:[%s1313 + $0x16a] sm:$0xff]
        %v5268 = vld [vmem:[%s1313 + $0x172] sm:$0xff]
        %5301 = vrot.lane.b32.xlu0 %v5237, 32
        %v5302 = vpop.permute.xlu0 %5301
        %5303 = vrot.lane.b32.xlu0 %v5238, 32
        %v5304 = vpop.permute.xlu0 %5303
        %5305 = vrot.lane.b32.xlu0 %v5239, 32
        %v5306 = vpop.permute.xlu0 %5305
        %5307 = vrot.lane.b32.xlu0 %v5240, 32
        %v5308 = vpop.permute.xlu0 %5307
        %5309 = vrot.lane.b32.xlu0 %v5241, 32
        %v5310 = vpop.permute.xlu0 %5309
        %5311 = vrot.lane.b32.xlu0 %v5242, 32
        %v5312 = vpop.permute.xlu0 %5311
        %5313 = vrot.lane.b32.xlu0 %v5243, 32
        %v5314 = vpop.permute.xlu0 %5313
        %5315 = vrot.lane.b32.xlu0 %v5244, 32
        %v5316 = vpop.permute.xlu0 %5315
        %5317 = vrot.lane.b32.xlu0 %v5245, 32
        %v5318 = vpop.permute.xlu0 %5317
        %5319 = vrot.lane.b32.xlu0 %v5246, 32
        %v5320 = vpop.permute.xlu0 %5319
        %5321 = vrot.lane.b32.xlu0 %v5247, 32
        %v5322 = vpop.permute.xlu0 %5321
        %5323 = vrot.lane.b32.xlu0 %v5248, 32
        %v5324 = vpop.permute.xlu0 %5323
        %5325 = vrot.lane.b32.xlu0 %v5249, 32
        %v5326 = vpop.permute.xlu0 %5325
        %5327 = vrot.lane.b32.xlu0 %v5250, 32
        %v5328 = vpop.permute.xlu0 %5327
        %5329 = vrot.lane.b32.xlu0 %v5251, 32
        %v5330 = vpop.permute.xlu0 %5329
        %5331 = vrot.lane.b32.xlu0 %v5252, 32
        %v5332 = vpop.permute.xlu0 %5331
        %5333 = vrot.lane.b32.xlu0 %v5253, 32
        %v5334 = vpop.permute.xlu0 %5333
        %5335 = vrot.lane.b32.xlu0 %v5254, 32
        %v5336 = vpop.permute.xlu0 %5335
        %5337 = vrot.lane.b32.xlu0 %v5255, 32
        %v5338 = vpop.permute.xlu0 %5337
        %5339 = vrot.lane.b32.xlu0 %v5256, 32
        %v5340 = vpop.permute.xlu0 %5339
        %5341 = vrot.lane.b32.xlu0 %v5257, 32
        %v5342 = vpop.permute.xlu0 %5341
        %5343 = vrot.lane.b32.xlu0 %v5258, 32
        %v5344 = vpop.permute.xlu0 %5343
        %5345 = vrot.lane.b32.xlu0 %v5259, 32
        %v5346 = vpop.permute.xlu0 %5345
        %5347 = vrot.lane.b32.xlu0 %v5260, 32
        %v5348 = vpop.permute.xlu0 %5347
        %5349 = vrot.lane.b32.xlu0 %v5261, 32
        %v5350 = vpop.permute.xlu0 %5349
        %5351 = vrot.lane.b32.xlu0 %v5262, 32
        %v5352 = vpop.permute.xlu0 %5351
        %5353 = vrot.lane.b32.xlu0 %v5263, 32
        %v5354 = vpop.permute.xlu0 %5353
        %5355 = vrot.lane.b32.xlu0 %v5264, 32
        %v5356 = vpop.permute.xlu0 %5355
        %5357 = vrot.lane.b32.xlu0 %v5265, 32
        %v5358 = vpop.permute.xlu0 %5357
        %5359 = vrot.lane.b32.xlu0 %v5266, 32
        %v5360 = vpop.permute.xlu0 %5359
        %5361 = vrot.lane.b32.xlu0 %v5267, 32
        %v5362 = vpop.permute.xlu0 %5361
        %5363 = vrot.lane.b32.xlu0 %v5268, 32
        %v5364 = vpop.permute.xlu0 %5363
        %5397 = vst.msk [vmem:[#allocation3] sm:$0xff] %vm3178, %v5302
        %5398 = vst.msk [vmem:[#allocation3 + $0x10] sm:$0xff] %vm3178, %v5304
        %5399 = vst.msk [vmem:[#allocation3 + $0x20] sm:$0xff] %vm3178, %v5306
        %5400 = vst.msk [vmem:[#allocation3 + $0x30] sm:$0xff] %vm3178, %v5308
        %5401 = vst.msk [vmem:[#allocation3 + $0x40] sm:$0xff] %vm3178, %v5310
        %5402 = vst.msk [vmem:[#allocation3 + $0x50] sm:$0xff] %vm3178, %v5312
        %5403 = vst.msk [vmem:[#allocation3 + $0x60] sm:$0xff] %vm3178, %v5314
        %5404 = vst.msk [vmem:[#allocation3 + $0x70] sm:$0xff] %vm3178, %v5316
        %5405 = vst.msk [vmem:[#allocation3 + $0x80] sm:$0xff] %vm3178, %v5318
        %5406 = vst.msk [vmem:[#allocation3 + $0x90] sm:$0xff] %vm3178, %v5320
        %5407 = vst.msk [vmem:[#allocation3 + $0xa0] sm:$0xff] %vm3178, %v5322
        %5408 = vst.msk [vmem:[#allocation3 + $0xb0] sm:$0xff] %vm3178, %v5324
        %5409 = vst.msk [vmem:[#allocation3 + $0xc0] sm:$0xff] %vm3178, %v5326
        %5410 = vst.msk [vmem:[#allocation3 + $0xd0] sm:$0xff] %vm3178, %v5328
        %5411 = vst.msk [vmem:[#allocation3 + $0xe0] sm:$0xff] %vm3178, %v5330
        %5412 = vst.msk [vmem:[#allocation3 + $0xf0] sm:$0xff] %vm3178, %v5332
        %5413 = vst.msk [vmem:[#allocation3 + $0x100] sm:$0xff] %vm3178, %v5334
        %5414 = vst.msk [vmem:[#allocation3 + $0x110] sm:$0xff] %vm3178, %v5336
        %5415 = vst.msk [vmem:[#allocation3 + $0x120] sm:$0xff] %vm3178, %v5338
        %5416 = vst.msk [vmem:[#allocation3 + $0x130] sm:$0xff] %vm3178, %v5340
        %5417 = vst.msk [vmem:[#allocation3 + $0x140] sm:$0xff] %vm3178, %v5342
        %5418 = vst.msk [vmem:[#allocation3 + $0x150] sm:$0xff] %vm3178, %v5344
        %5419 = vst.msk [vmem:[#allocation3 + $0x160] sm:$0xff] %vm3178, %v5346
        %5420 = vst.msk [vmem:[#allocation3 + $0x170] sm:$0xff] %vm3178, %v5348
        %5421 = vst.msk [vmem:[#allocation3 + $0x180] sm:$0xff] %vm3178, %v5350
        %5422 = vst.msk [vmem:[#allocation3 + $0x190] sm:$0xff] %vm3178, %v5352
        %5423 = vst.msk [vmem:[#allocation3 + $0x1a0] sm:$0xff] %vm3178, %v5354
        %5424 = vst.msk [vmem:[#allocation3 + $0x1b0] sm:$0xff] %vm3178, %v5356
        %5425 = vst.msk [vmem:[#allocation3 + $0x1c0] sm:$0xff] %vm3178, %v5358
        %5426 = vst.msk [vmem:[#allocation3 + $0x1d0] sm:$0xff] %vm3178, %v5360
        %5427 = vst.msk [vmem:[#allocation3 + $0x1e0] sm:$0xff] %vm3178, %v5362
        %5428 = vst.msk [vmem:[#allocation3 + $0x1f0] sm:$0xff] %vm3178, %v5364
        %v5429 = vld [vmem:[%s1313 + $0x4] sm:$0xff]
        %v5430 = vld [vmem:[%s1313 + $0xc] sm:$0xff]
        %v5431 = vld [vmem:[%s1313 + $0x1c] sm:$0xff]
        %v5432 = vld [vmem:[%s1313 + $0x24] sm:$0xff]
        %v5433 = vld [vmem:[%s1313 + $0x34] sm:$0xff]
        %v5434 = vld [vmem:[%s1313 + $0x3c] sm:$0xff]
        %v5435 = vld [vmem:[%s1313 + $0x4c] sm:$0xff]
        %v5436 = vld [vmem:[%s1313 + $0x54] sm:$0xff]
        %v5437 = vld [vmem:[%s1313 + $0x64] sm:$0xff]
        %v5438 = vld [vmem:[%s1313 + $0x6c] sm:$0xff]
        %v5439 = vld [vmem:[%s1313 + $0x7c] sm:$0xff]
        %v5440 = vld [vmem:[%s1313 + $0x84] sm:$0xff]
        %v5441 = vld [vmem:[%s1313 + $0x94] sm:$0xff]
        %v5442 = vld [vmem:[%s1313 + $0x9c] sm:$0xff]
        %v5443 = vld [vmem:[%s1313 + $0xac] sm:$0xff]
        %v5444 = vld [vmem:[%s1313 + $0xb4] sm:$0xff]
        %v5445 = vld [vmem:[%s1313 + $0xc4] sm:$0xff]
        %v5446 = vld [vmem:[%s1313 + $0xcc] sm:$0xff]
        %v5447 = vld [vmem:[%s1313 + $0xdc] sm:$0xff]
        %v5448 = vld [vmem:[%s1313 + $0xe4] sm:$0xff]
        %v5449 = vld [vmem:[%s1313 + $0xf4] sm:$0xff]
        %v5450 = vld [vmem:[%s1313 + $0xfc] sm:$0xff]
        %v5451 = vld [vmem:[%s1313 + $0x10c] sm:$0xff]
        %v5452 = vld [vmem:[%s1313 + $0x114] sm:$0xff]
        %v5453 = vld [vmem:[%s1313 + $0x124] sm:$0xff]
        %v5454 = vld [vmem:[%s1313 + $0x12c] sm:$0xff]
        %v5455 = vld [vmem:[%s1313 + $0x13c] sm:$0xff]
        %v5456 = vld [vmem:[%s1313 + $0x144] sm:$0xff]
        %v5457 = vld [vmem:[%s1313 + $0x154] sm:$0xff]
        %v5458 = vld [vmem:[%s1313 + $0x15c] sm:$0xff]
        %v5459 = vld [vmem:[%s1313 + $0x16c] sm:$0xff]
        %v5460 = vld [vmem:[%s1313 + $0x174] sm:$0xff]
        %5493 = vrot.lane.b32.xlu0 %v5429, 40
        %v5494 = vpop.permute.xlu0 %5493
        %5495 = vrot.lane.b32.xlu0 %v5430, 40
        %v5496 = vpop.permute.xlu0 %5495
        %5497 = vrot.lane.b32.xlu0 %v5431, 40
        %v5498 = vpop.permute.xlu0 %5497
        %5499 = vrot.lane.b32.xlu0 %v5432, 40
        %v5500 = vpop.permute.xlu0 %5499
        %5501 = vrot.lane.b32.xlu0 %v5433, 40
        %v5502 = vpop.permute.xlu0 %5501
        %5503 = vrot.lane.b32.xlu0 %v5434, 40
        %v5504 = vpop.permute.xlu0 %5503
        %5505 = vrot.lane.b32.xlu0 %v5435, 40
        %v5506 = vpop.permute.xlu0 %5505
        %5507 = vrot.lane.b32.xlu0 %v5436, 40
        %v5508 = vpop.permute.xlu0 %5507
        %5509 = vrot.lane.b32.xlu0 %v5437, 40
        %v5510 = vpop.permute.xlu0 %5509
        %5511 = vrot.lane.b32.xlu0 %v5438, 40
        %v5512 = vpop.permute.xlu0 %5511
        %5513 = vrot.lane.b32.xlu0 %v5439, 40
        %v5514 = vpop.permute.xlu0 %5513
        %5515 = vrot.lane.b32.xlu0 %v5440, 40
        %v5516 = vpop.permute.xlu0 %5515
        %5517 = vrot.lane.b32.xlu0 %v5441, 40
        %v5518 = vpop.permute.xlu0 %5517
        %5519 = vrot.lane.b32.xlu0 %v5442, 40
        %v5520 = vpop.permute.xlu0 %5519
        %5521 = vrot.lane.b32.xlu0 %v5443, 40
        %v5522 = vpop.permute.xlu0 %5521
        %5523 = vrot.lane.b32.xlu0 %v5444, 40
        %v5524 = vpop.permute.xlu0 %5523
        %5525 = vrot.lane.b32.xlu0 %v5445, 40
        %v5526 = vpop.permute.xlu0 %5525
        %5527 = vrot.lane.b32.xlu0 %v5446, 40
        %v5528 = vpop.permute.xlu0 %5527
        %5529 = vrot.lane.b32.xlu0 %v5447, 40
        %v5530 = vpop.permute.xlu0 %5529
        %5531 = vrot.lane.b32.xlu0 %v5448, 40
        %v5532 = vpop.permute.xlu0 %5531
        %5533 = vrot.lane.b32.xlu0 %v5449, 40
        %v5534 = vpop.permute.xlu0 %5533
        %5535 = vrot.lane.b32.xlu0 %v5450, 40
        %v5536 = vpop.permute.xlu0 %5535
        %5537 = vrot.lane.b32.xlu0 %v5451, 40
        %v5538 = vpop.permute.xlu0 %5537
        %5539 = vrot.lane.b32.xlu0 %v5452, 40
        %v5540 = vpop.permute.xlu0 %5539
        %5541 = vrot.lane.b32.xlu0 %v5453, 40
        %v5542 = vpop.permute.xlu0 %5541
        %5543 = vrot.lane.b32.xlu0 %v5454, 40
        %v5544 = vpop.permute.xlu0 %5543
        %5545 = vrot.lane.b32.xlu0 %v5455, 40
        %v5546 = vpop.permute.xlu0 %5545
        %5547 = vrot.lane.b32.xlu0 %v5456, 40
        %v5548 = vpop.permute.xlu0 %5547
        %5549 = vrot.lane.b32.xlu0 %v5457, 40
        %v5550 = vpop.permute.xlu0 %5549
        %5551 = vrot.lane.b32.xlu0 %v5458, 40
        %v5552 = vpop.permute.xlu0 %5551
        %5553 = vrot.lane.b32.xlu0 %v5459, 40
        %v5554 = vpop.permute.xlu0 %5553
        %5555 = vrot.lane.b32.xlu0 %v5460, 40
        %v5556 = vpop.permute.xlu0 %5555
        %5589 = vst.msk [vmem:[#allocation3] sm:$0xff] %vm3371, %v5494
        %5590 = vst.msk [vmem:[#allocation3 + $0x10] sm:$0xff] %vm3371, %v5496
        %5591 = vst.msk [vmem:[#allocation3 + $0x20] sm:$0xff] %vm3371, %v5498
        %5592 = vst.msk [vmem:[#allocation3 + $0x30] sm:$0xff] %vm3371, %v5500
        %5593 = vst.msk [vmem:[#allocation3 + $0x40] sm:$0xff] %vm3371, %v5502
        %5594 = vst.msk [vmem:[#allocation3 + $0x50] sm:$0xff] %vm3371, %v5504
        %5595 = vst.msk [vmem:[#allocation3 + $0x60] sm:$0xff] %vm3371, %v5506
        %5596 = vst.msk [vmem:[#allocation3 + $0x70] sm:$0xff] %vm3371, %v5508
        %5597 = vst.msk [vmem:[#allocation3 + $0x80] sm:$0xff] %vm3371, %v5510
        %5598 = vst.msk [vmem:[#allocation3 + $0x90] sm:$0xff] %vm3371, %v5512
        %5599 = vst.msk [vmem:[#allocation3 + $0xa0] sm:$0xff] %vm3371, %v5514
        %5600 = vst.msk [vmem:[#allocation3 + $0xb0] sm:$0xff] %vm3371, %v5516
        %5601 = vst.msk [vmem:[#allocation3 + $0xc0] sm:$0xff] %vm3371, %v5518
        %5602 = vst.msk [vmem:[#allocation3 + $0xd0] sm:$0xff] %vm3371, %v5520
        %5603 = vst.msk [vmem:[#allocation3 + $0xe0] sm:$0xff] %vm3371, %v5522
        %5604 = vst.msk [vmem:[#allocation3 + $0xf0] sm:$0xff] %vm3371, %v5524
        %5605 = vst.msk [vmem:[#allocation3 + $0x100] sm:$0xff] %vm3371, %v5526
        %5606 = vst.msk [vmem:[#allocation3 + $0x110] sm:$0xff] %vm3371, %v5528
        %5607 = vst.msk [vmem:[#allocation3 + $0x120] sm:$0xff] %vm3371, %v5530
        %5608 = vst.msk [vmem:[#allocation3 + $0x130] sm:$0xff] %vm3371, %v5532
        %5609 = vst.msk [vmem:[#allocation3 + $0x140] sm:$0xff] %vm3371, %v5534
        %5610 = vst.msk [vmem:[#allocation3 + $0x150] sm:$0xff] %vm3371, %v5536
        %5611 = vst.msk [vmem:[#allocation3 + $0x160] sm:$0xff] %vm3371, %v5538
        %5612 = vst.msk [vmem:[#allocation3 + $0x170] sm:$0xff] %vm3371, %v5540
        %5613 = vst.msk [vmem:[#allocation3 + $0x180] sm:$0xff] %vm3371, %v5542
        %5614 = vst.msk [vmem:[#allocation3 + $0x190] sm:$0xff] %vm3371, %v5544
        %5615 = vst.msk [vmem:[#allocation3 + $0x1a0] sm:$0xff] %vm3371, %v5546
        %5616 = vst.msk [vmem:[#allocation3 + $0x1b0] sm:$0xff] %vm3371, %v5548
        %5617 = vst.msk [vmem:[#allocation3 + $0x1c0] sm:$0xff] %vm3371, %v5550
        %5618 = vst.msk [vmem:[#allocation3 + $0x1d0] sm:$0xff] %vm3371, %v5552
        %5619 = vst.msk [vmem:[#allocation3 + $0x1e0] sm:$0xff] %vm3371, %v5554
        %5620 = vst.msk [vmem:[#allocation3 + $0x1f0] sm:$0xff] %vm3371, %v5556
        %s5621 = scalar_lea.vmem [#allocation2], 96
        %v5622 = vld [vmem:[%s5621] sm:$0xff]
        %v5623 = vld [vmem:[%s5621 + $0x8] sm:$0xff]
        %v5624 = vld [vmem:[%s5621 + $0x18] sm:$0xff]
        %v5625 = vld [vmem:[%s5621 + $0x20] sm:$0xff]
        %v5626 = vld [vmem:[%s5621 + $0x30] sm:$0xff]
        %v5627 = vld [vmem:[%s5621 + $0x38] sm:$0xff]
        %v5628 = vld [vmem:[%s5621 + $0x48] sm:$0xff]
        %v5629 = vld [vmem:[%s5621 + $0x50] sm:$0xff]
        %v5630 = vld [vmem:[%s5621 + $0x60] sm:$0xff]
        %v5631 = vld [vmem:[%s5621 + $0x68] sm:$0xff]
        %v5632 = vld [vmem:[%s5621 + $0x78] sm:$0xff]
        %v5633 = vld [vmem:[%s5621 + $0x80] sm:$0xff]
        %v5634 = vld [vmem:[%s5621 + $0x90] sm:$0xff]
        %v5635 = vld [vmem:[%s5621 + $0x98] sm:$0xff]
        %v5636 = vld [vmem:[%s5621 + $0xa8] sm:$0xff]
        %v5637 = vld [vmem:[%s5621 + $0xb0] sm:$0xff]
        %v5638 = vld [vmem:[%s5621 + $0xc0] sm:$0xff]
        %v5639 = vld [vmem:[%s5621 + $0xc8] sm:$0xff]
        %v5640 = vld [vmem:[%s5621 + $0xd8] sm:$0xff]
        %v5641 = vld [vmem:[%s5621 + $0xe0] sm:$0xff]
        %v5642 = vld [vmem:[%s5621 + $0xf0] sm:$0xff]
        %v5643 = vld [vmem:[%s5621 + $0xf8] sm:$0xff]
        %v5644 = vld [vmem:[%s5621 + $0x108] sm:$0xff]
        %v5645 = vld [vmem:[%s5621 + $0x110] sm:$0xff]
        %v5646 = vld [vmem:[%s5621 + $0x120] sm:$0xff]
        %v5647 = vld [vmem:[%s5621 + $0x128] sm:$0xff]
        %v5648 = vld [vmem:[%s5621 + $0x138] sm:$0xff]
        %v5649 = vld [vmem:[%s5621 + $0x140] sm:$0xff]
        %v5650 = vld [vmem:[%s5621 + $0x150] sm:$0xff]
        %v5651 = vld [vmem:[%s5621 + $0x158] sm:$0xff]
        %v5652 = vld [vmem:[%s5621 + $0x168] sm:$0xff]
        %v5653 = vld [vmem:[%s5621 + $0x170] sm:$0xff]
        %5686 = vrot.lane.b32.xlu0 %v5622, 48
        %v5687 = vpop.permute.xlu0 %5686
        %5688 = vrot.lane.b32.xlu0 %v5623, 48
        %v5689 = vpop.permute.xlu0 %5688
        %5690 = vrot.lane.b32.xlu0 %v5624, 48
        %v5691 = vpop.permute.xlu0 %5690
        %5692 = vrot.lane.b32.xlu0 %v5625, 48
        %v5693 = vpop.permute.xlu0 %5692
        %5694 = vrot.lane.b32.xlu0 %v5626, 48
        %v5695 = vpop.permute.xlu0 %5694
        %5696 = vrot.lane.b32.xlu0 %v5627, 48
        %v5697 = vpop.permute.xlu0 %5696
        %5698 = vrot.lane.b32.xlu0 %v5628, 48
        %v5699 = vpop.permute.xlu0 %5698
        %5700 = vrot.lane.b32.xlu0 %v5629, 48
        %v5701 = vpop.permute.xlu0 %5700
        %5702 = vrot.lane.b32.xlu0 %v5630, 48
        %v5703 = vpop.permute.xlu0 %5702
        %5704 = vrot.lane.b32.xlu0 %v5631, 48
        %v5705 = vpop.permute.xlu0 %5704
        %5706 = vrot.lane.b32.xlu0 %v5632, 48
        %v5707 = vpop.permute.xlu0 %5706
        %5708 = vrot.lane.b32.xlu0 %v5633, 48
        %v5709 = vpop.permute.xlu0 %5708
        %5710 = vrot.lane.b32.xlu0 %v5634, 48
        %v5711 = vpop.permute.xlu0 %5710
        %5712 = vrot.lane.b32.xlu0 %v5635, 48
        %v5713 = vpop.permute.xlu0 %5712
        %5714 = vrot.lane.b32.xlu0 %v5636, 48
        %v5715 = vpop.permute.xlu0 %5714
        %5716 = vrot.lane.b32.xlu0 %v5637, 48
        %v5717 = vpop.permute.xlu0 %5716
        %5718 = vrot.lane.b32.xlu0 %v5638, 48
        %v5719 = vpop.permute.xlu0 %5718
        %5720 = vrot.lane.b32.xlu0 %v5639, 48
        %v5721 = vpop.permute.xlu0 %5720
        %5722 = vrot.lane.b32.xlu0 %v5640, 48
        %v5723 = vpop.permute.xlu0 %5722
        %5724 = vrot.lane.b32.xlu0 %v5641, 48
        %v5725 = vpop.permute.xlu0 %5724
        %5726 = vrot.lane.b32.xlu0 %v5642, 48
        %v5727 = vpop.permute.xlu0 %5726
        %5728 = vrot.lane.b32.xlu0 %v5643, 48
        %v5729 = vpop.permute.xlu0 %5728
        %5730 = vrot.lane.b32.xlu0 %v5644, 48
        %v5731 = vpop.permute.xlu0 %5730
        %5732 = vrot.lane.b32.xlu0 %v5645, 48
        %v5733 = vpop.permute.xlu0 %5732
        %5734 = vrot.lane.b32.xlu0 %v5646, 48
        %v5735 = vpop.permute.xlu0 %5734
        %5736 = vrot.lane.b32.xlu0 %v5647, 48
        %v5737 = vpop.permute.xlu0 %5736
        %5738 = vrot.lane.b32.xlu0 %v5648, 48
        %v5739 = vpop.permute.xlu0 %5738
        %5740 = vrot.lane.b32.xlu0 %v5649, 48
        %v5741 = vpop.permute.xlu0 %5740
        %5742 = vrot.lane.b32.xlu0 %v5650, 48
        %v5743 = vpop.permute.xlu0 %5742
        %5744 = vrot.lane.b32.xlu0 %v5651, 48
        %v5745 = vpop.permute.xlu0 %5744
        %5746 = vrot.lane.b32.xlu0 %v5652, 48
        %v5747 = vpop.permute.xlu0 %5746
        %5748 = vrot.lane.b32.xlu0 %v5653, 48
        %v5749 = vpop.permute.xlu0 %5748
        %5782 = vst.msk [vmem:[#allocation3] sm:$0xff] %vm3564, %v5687
        %5783 = vst.msk [vmem:[#allocation3 + $0x10] sm:$0xff] %vm3564, %v5689
        %5784 = vst.msk [vmem:[#allocation3 + $0x20] sm:$0xff] %vm3564, %v5691
        %5785 = vst.msk [vmem:[#allocation3 + $0x30] sm:$0xff] %vm3564, %v5693
        %5786 = vst.msk [vmem:[#allocation3 + $0x40] sm:$0xff] %vm3564, %v5695
        %5787 = vst.msk [vmem:[#allocation3 + $0x50] sm:$0xff] %vm3564, %v5697
        %5788 = vst.msk [vmem:[#allocation3 + $0x60] sm:$0xff] %vm3564, %v5699
        %5789 = vst.msk [vmem:[#allocation3 + $0x70] sm:$0xff] %vm3564, %v5701
        %5790 = vst.msk [vmem:[#allocation3 + $0x80] sm:$0xff] %vm3564, %v5703
        %5791 = vst.msk [vmem:[#allocation3 + $0x90] sm:$0xff] %vm3564, %v5705
        %5792 = vst.msk [vmem:[#allocation3 + $0xa0] sm:$0xff] %vm3564, %v5707
        %5793 = vst.msk [vmem:[#allocation3 + $0xb0] sm:$0xff] %vm3564, %v5709
        %5794 = vst.msk [vmem:[#allocation3 + $0xc0] sm:$0xff] %vm3564, %v5711
        %5795 = vst.msk [vmem:[#allocation3 + $0xd0] sm:$0xff] %vm3564, %v5713
        %5796 = vst.msk [vmem:[#allocation3 + $0xe0] sm:$0xff] %vm3564, %v5715
        %5797 = vst.msk [vmem:[#allocation3 + $0xf0] sm:$0xff] %vm3564, %v5717
        %5798 = vst.msk [vmem:[#allocation3 + $0x100] sm:$0xff] %vm3564, %v5719
        %5799 = vst.msk [vmem:[#allocation3 + $0x110] sm:$0xff] %vm3564, %v5721
        %5800 = vst.msk [vmem:[#allocation3 + $0x120] sm:$0xff] %vm3564, %v5723
        %5801 = vst.msk [vmem:[#allocation3 + $0x130] sm:$0xff] %vm3564, %v5725
        %5802 = vst.msk [vmem:[#allocation3 + $0x140] sm:$0xff] %vm3564, %v5727
        %5803 = vst.msk [vmem:[#allocation3 + $0x150] sm:$0xff] %vm3564, %v5729
        %5804 = vst.msk [vmem:[#allocation3 + $0x160] sm:$0xff] %vm3564, %v5731
        %5805 = vst.msk [vmem:[#allocation3 + $0x170] sm:$0xff] %vm3564, %v5733
        %5806 = vst.msk [vmem:[#allocation3 + $0x180] sm:$0xff] %vm3564, %v5735
        %5807 = vst.msk [vmem:[#allocation3 + $0x190] sm:$0xff] %vm3564, %v5737
        %5808 = vst.msk [vmem:[#allocation3 + $0x1a0] sm:$0xff] %vm3564, %v5739
        %5809 = vst.msk [vmem:[#allocation3 + $0x1b0] sm:$0xff] %vm3564, %v5741
        %5810 = vst.msk [vmem:[#allocation3 + $0x1c0] sm:$0xff] %vm3564, %v5743
        %5811 = vst.msk [vmem:[#allocation3 + $0x1d0] sm:$0xff] %vm3564, %v5745
        %5812 = vst.msk [vmem:[#allocation3 + $0x1e0] sm:$0xff] %vm3564, %v5747
        %5813 = vst.msk [vmem:[#allocation3 + $0x1f0] sm:$0xff] %vm3564, %v5749
        %v5814 = vld [vmem:[%s5621 + $0x2] sm:$0xff]
        %v5815 = vld [vmem:[%s5621 + $0xa] sm:$0xff]
        %v5816 = vld [vmem:[%s5621 + $0x1a] sm:$0xff]
        %v5817 = vld [vmem:[%s5621 + $0x22] sm:$0xff]
        %v5818 = vld [vmem:[%s5621 + $0x32] sm:$0xff]
        %v5819 = vld [vmem:[%s5621 + $0x3a] sm:$0xff]
        %v5820 = vld [vmem:[%s5621 + $0x4a] sm:$0xff]
        %v5821 = vld [vmem:[%s5621 + $0x52] sm:$0xff]
        %v5822 = vld [vmem:[%s5621 + $0x62] sm:$0xff]
        %v5823 = vld [vmem:[%s5621 + $0x6a] sm:$0xff]
        %v5824 = vld [vmem:[%s5621 + $0x7a] sm:$0xff]
        %v5825 = vld [vmem:[%s5621 + $0x82] sm:$0xff]
        %v5826 = vld [vmem:[%s5621 + $0x92] sm:$0xff]
        %v5827 = vld [vmem:[%s5621 + $0x9a] sm:$0xff]
        %v5828 = vld [vmem:[%s5621 + $0xaa] sm:$0xff]
        %v5829 = vld [vmem:[%s5621 + $0xb2] sm:$0xff]
        %v5830 = vld [vmem:[%s5621 + $0xc2] sm:$0xff]
        %v5831 = vld [vmem:[%s5621 + $0xca] sm:$0xff]
        %v5832 = vld [vmem:[%s5621 + $0xda] sm:$0xff]
        %v5833 = vld [vmem:[%s5621 + $0xe2] sm:$0xff]
        %v5834 = vld [vmem:[%s5621 + $0xf2] sm:$0xff]
        %v5835 = vld [vmem:[%s5621 + $0xfa] sm:$0xff]
        %v5836 = vld [vmem:[%s5621 + $0x10a] sm:$0xff]
        %v5837 = vld [vmem:[%s5621 + $0x112] sm:$0xff]
        %v5838 = vld [vmem:[%s5621 + $0x122] sm:$0xff]
        %v5839 = vld [vmem:[%s5621 + $0x12a] sm:$0xff]
        %v5840 = vld [vmem:[%s5621 + $0x13a] sm:$0xff]
        %v5841 = vld [vmem:[%s5621 + $0x142] sm:$0xff]
        %v5842 = vld [vmem:[%s5621 + $0x152] sm:$0xff]
        %v5843 = vld [vmem:[%s5621 + $0x15a] sm:$0xff]
        %v5844 = vld [vmem:[%s5621 + $0x16a] sm:$0xff]
        %v5845 = vld [vmem:[%s5621 + $0x172] sm:$0xff]
        %5878 = vrot.lane.b32.xlu0 %v5814, 56
        %v5879 = vpop.permute.xlu0 %5878
        %5880 = vrot.lane.b32.xlu0 %v5815, 56
        %v5881 = vpop.permute.xlu0 %5880
        %5882 = vrot.lane.b32.xlu0 %v5816, 56
        %v5883 = vpop.permute.xlu0 %5882
        %5884 = vrot.lane.b32.xlu0 %v5817, 56
        %v5885 = vpop.permute.xlu0 %5884
        %5886 = vrot.lane.b32.xlu0 %v5818, 56
        %v5887 = vpop.permute.xlu0 %5886
        %5888 = vrot.lane.b32.xlu0 %v5819, 56
        %v5889 = vpop.permute.xlu0 %5888
        %5890 = vrot.lane.b32.xlu0 %v5820, 56
        %v5891 = vpop.permute.xlu0 %5890
        %5892 = vrot.lane.b32.xlu0 %v5821, 56
        %v5893 = vpop.permute.xlu0 %5892
        %5894 = vrot.lane.b32.xlu0 %v5822, 56
        %v5895 = vpop.permute.xlu0 %5894
        %5896 = vrot.lane.b32.xlu0 %v5823, 56
        %v5897 = vpop.permute.xlu0 %5896
        %5898 = vrot.lane.b32.xlu0 %v5824, 56
        %v5899 = vpop.permute.xlu0 %5898
        %5900 = vrot.lane.b32.xlu0 %v5825, 56
        %v5901 = vpop.permute.xlu0 %5900
        %5902 = vrot.lane.b32.xlu0 %v5826, 56
        %v5903 = vpop.permute.xlu0 %5902
        %5904 = vrot.lane.b32.xlu0 %v5827, 56
        %v5905 = vpop.permute.xlu0 %5904
        %5906 = vrot.lane.b32.xlu0 %v5828, 56
        %v5907 = vpop.permute.xlu0 %5906
        %5908 = vrot.lane.b32.xlu0 %v5829, 56
        %v5909 = vpop.permute.xlu0 %5908
        %5910 = vrot.lane.b32.xlu0 %v5830, 56
        %v5911 = vpop.permute.xlu0 %5910
        %5912 = vrot.lane.b32.xlu0 %v5831, 56
        %v5913 = vpop.permute.xlu0 %5912
        %5914 = vrot.lane.b32.xlu0 %v5832, 56
        %v5915 = vpop.permute.xlu0 %5914
        %5916 = vrot.lane.b32.xlu0 %v5833, 56
        %v5917 = vpop.permute.xlu0 %5916
        %5918 = vrot.lane.b32.xlu0 %v5834, 56
        %v5919 = vpop.permute.xlu0 %5918
        %5920 = vrot.lane.b32.xlu0 %v5835, 56
        %v5921 = vpop.permute.xlu0 %5920
        %5922 = vrot.lane.b32.xlu0 %v5836, 56
        %v5923 = vpop.permute.xlu0 %5922
        %5924 = vrot.lane.b32.xlu0 %v5837, 56
        %v5925 = vpop.permute.xlu0 %5924
        %5926 = vrot.lane.b32.xlu0 %v5838, 56
        %v5927 = vpop.permute.xlu0 %5926
        %5928 = vrot.lane.b32.xlu0 %v5839, 56
        %v5929 = vpop.permute.xlu0 %5928
        %5930 = vrot.lane.b32.xlu0 %v5840, 56
        %v5931 = vpop.permute.xlu0 %5930
        %5932 = vrot.lane.b32.xlu0 %v5841, 56
        %v5933 = vpop.permute.xlu0 %5932
        %5934 = vrot.lane.b32.xlu0 %v5842, 56
        %v5935 = vpop.permute.xlu0 %5934
        %5936 = vrot.lane.b32.xlu0 %v5843, 56
        %v5937 = vpop.permute.xlu0 %5936
        %5938 = vrot.lane.b32.xlu0 %v5844, 56
        %v5939 = vpop.permute.xlu0 %5938
        %5940 = vrot.lane.b32.xlu0 %v5845, 56
        %v5941 = vpop.permute.xlu0 %5940
        %5974 = vst.msk [vmem:[#allocation3] sm:$0xff] %vm3757, %v5879
        %5975 = vst.msk [vmem:[#allocation3 + $0x10] sm:$0xff] %vm3757, %v5881
        %5976 = vst.msk [vmem:[#allocation3 + $0x20] sm:$0xff] %vm3757, %v5883
        %5977 = vst.msk [vmem:[#allocation3 + $0x30] sm:$0xff] %vm3757, %v5885
        %5978 = vst.msk [vmem:[#allocation3 + $0x40] sm:$0xff] %vm3757, %v5887
        %5979 = vst.msk [vmem:[#allocation3 + $0x50] sm:$0xff] %vm3757, %v5889
        %5980 = vst.msk [vmem:[#allocation3 + $0x60] sm:$0xff] %vm3757, %v5891
        %5981 = vst.msk [vmem:[#allocation3 + $0x70] sm:$0xff] %vm3757, %v5893
        %5982 = vst.msk [vmem:[#allocation3 + $0x80] sm:$0xff] %vm3757, %v5895
        %5983 = vst.msk [vmem:[#allocation3 + $0x90] sm:$0xff] %vm3757, %v5897
        %5984 = vst.msk [vmem:[#allocation3 + $0xa0] sm:$0xff] %vm3757, %v5899
        %5985 = vst.msk [vmem:[#allocation3 + $0xb0] sm:$0xff] %vm3757, %v5901
        %5986 = vst.msk [vmem:[#allocation3 + $0xc0] sm:$0xff] %vm3757, %v5903
        %5987 = vst.msk [vmem:[#allocation3 + $0xd0] sm:$0xff] %vm3757, %v5905
        %5988 = vst.msk [vmem:[#allocation3 + $0xe0] sm:$0xff] %vm3757, %v5907
        %5989 = vst.msk [vmem:[#allocation3 + $0xf0] sm:$0xff] %vm3757, %v5909
        %5990 = vst.msk [vmem:[#allocation3 + $0x100] sm:$0xff] %vm3757, %v5911
        %5991 = vst.msk [vmem:[#allocation3 + $0x110] sm:$0xff] %vm3757, %v5913
        %5992 = vst.msk [vmem:[#allocation3 + $0x120] sm:$0xff] %vm3757, %v5915
        %5993 = vst.msk [vmem:[#allocation3 + $0x130] sm:$0xff] %vm3757, %v5917
        %5994 = vst.msk [vmem:[#allocation3 + $0x140] sm:$0xff] %vm3757, %v5919
        %5995 = vst.msk [vmem:[#allocation3 + $0x150] sm:$0xff] %vm3757, %v5921
        %5996 = vst.msk [vmem:[#allocation3 + $0x160] sm:$0xff] %vm3757, %v5923
        %5997 = vst.msk [vmem:[#allocation3 + $0x170] sm:$0xff] %vm3757, %v5925
        %5998 = vst.msk [vmem:[#allocation3 + $0x180] sm:$0xff] %vm3757, %v5927
        %5999 = vst.msk [vmem:[#allocation3 + $0x190] sm:$0xff] %vm3757, %v5929
        %6000 = vst.msk [vmem:[#allocation3 + $0x1a0] sm:$0xff] %vm3757, %v5931
        %6001 = vst.msk [vmem:[#allocation3 + $0x1b0] sm:$0xff] %vm3757, %v5933
        %6002 = vst.msk [vmem:[#allocation3 + $0x1c0] sm:$0xff] %vm3757, %v5935
        %6003 = vst.msk [vmem:[#allocation3 + $0x1d0] sm:$0xff] %vm3757, %v5937
        %6004 = vst.msk [vmem:[#allocation3 + $0x1e0] sm:$0xff] %vm3757, %v5939
        %6005 = vst.msk [vmem:[#allocation3 + $0x1f0] sm:$0xff] %vm3757, %v5941
        %v6006 = vld [vmem:[%s5621 + $0x4] sm:$0xff]
        %v6007 = vld [vmem:[%s5621 + $0xc] sm:$0xff]
        %v6008 = vld [vmem:[%s5621 + $0x1c] sm:$0xff]
        %v6009 = vld [vmem:[%s5621 + $0x24] sm:$0xff]
        %v6010 = vld [vmem:[%s5621 + $0x34] sm:$0xff]
        %v6011 = vld [vmem:[%s5621 + $0x3c] sm:$0xff]
        %v6012 = vld [vmem:[%s5621 + $0x4c] sm:$0xff]
        %v6013 = vld [vmem:[%s5621 + $0x54] sm:$0xff]
        %v6014 = vld [vmem:[%s5621 + $0x64] sm:$0xff]
        %v6015 = vld [vmem:[%s5621 + $0x6c] sm:$0xff]
        %v6016 = vld [vmem:[%s5621 + $0x7c] sm:$0xff]
        %v6017 = vld [vmem:[%s5621 + $0x84] sm:$0xff]
        %v6018 = vld [vmem:[%s5621 + $0x94] sm:$0xff]
        %v6019 = vld [vmem:[%s5621 + $0x9c] sm:$0xff]
        %v6020 = vld [vmem:[%s5621 + $0xac] sm:$0xff]
        %v6021 = vld [vmem:[%s5621 + $0xb4] sm:$0xff]
        %v6022 = vld [vmem:[%s5621 + $0xc4] sm:$0xff]
        %v6023 = vld [vmem:[%s5621 + $0xcc] sm:$0xff]
        %v6024 = vld [vmem:[%s5621 + $0xdc] sm:$0xff]
        %v6025 = vld [vmem:[%s5621 + $0xe4] sm:$0xff]
        %v6026 = vld [vmem:[%s5621 + $0xf4] sm:$0xff]
        %v6027 = vld [vmem:[%s5621 + $0xfc] sm:$0xff]
        %v6028 = vld [vmem:[%s5621 + $0x10c] sm:$0xff]
        %v6029 = vld [vmem:[%s5621 + $0x114] sm:$0xff]
        %v6030 = vld [vmem:[%s5621 + $0x124] sm:$0xff]
        %v6031 = vld [vmem:[%s5621 + $0x12c] sm:$0xff]
        %v6032 = vld [vmem:[%s5621 + $0x13c] sm:$0xff]
        %v6033 = vld [vmem:[%s5621 + $0x144] sm:$0xff]
        %v6034 = vld [vmem:[%s5621 + $0x154] sm:$0xff]
        %v6035 = vld [vmem:[%s5621 + $0x15c] sm:$0xff]
        %v6036 = vld [vmem:[%s5621 + $0x16c] sm:$0xff]
        %v6037 = vld [vmem:[%s5621 + $0x174] sm:$0xff]
        %6070 = vrot.lane.b32.xlu0 %v6006, 64
        %v6071 = vpop.permute.xlu0 %6070
        %6072 = vrot.lane.b32.xlu0 %v6007, 64
        %v6073 = vpop.permute.xlu0 %6072
        %6074 = vrot.lane.b32.xlu0 %v6008, 64
        %v6075 = vpop.permute.xlu0 %6074
        %6076 = vrot.lane.b32.xlu0 %v6009, 64
        %v6077 = vpop.permute.xlu0 %6076
        %6078 = vrot.lane.b32.xlu0 %v6010, 64
        %v6079 = vpop.permute.xlu0 %6078
        %6080 = vrot.lane.b32.xlu0 %v6011, 64
        %v6081 = vpop.permute.xlu0 %6080
        %6082 = vrot.lane.b32.xlu0 %v6012, 64
        %v6083 = vpop.permute.xlu0 %6082
        %6084 = vrot.lane.b32.xlu0 %v6013, 64
        %v6085 = vpop.permute.xlu0 %6084
        %6086 = vrot.lane.b32.xlu0 %v6014, 64
        %v6087 = vpop.permute.xlu0 %6086
        %6088 = vrot.lane.b32.xlu0 %v6015, 64
        %v6089 = vpop.permute.xlu0 %6088
        %6090 = vrot.lane.b32.xlu0 %v6016, 64
        %v6091 = vpop.permute.xlu0 %6090
        %6092 = vrot.lane.b32.xlu0 %v6017, 64
        %v6093 = vpop.permute.xlu0 %6092
        %6094 = vrot.lane.b32.xlu0 %v6018, 64
        %v6095 = vpop.permute.xlu0 %6094
        %6096 = vrot.lane.b32.xlu0 %v6019, 64
        %v6097 = vpop.permute.xlu0 %6096
        %6098 = vrot.lane.b32.xlu0 %v6020, 64
        %v6099 = vpop.permute.xlu0 %6098
        %6100 = vrot.lane.b32.xlu0 %v6021, 64
        %v6101 = vpop.permute.xlu0 %6100
        %6102 = vrot.lane.b32.xlu0 %v6022, 64
        %v6103 = vpop.permute.xlu0 %6102
        %6104 = vrot.lane.b32.xlu0 %v6023, 64
        %v6105 = vpop.permute.xlu0 %6104
        %6106 = vrot.lane.b32.xlu0 %v6024, 64
        %v6107 = vpop.permute.xlu0 %6106
        %6108 = vrot.lane.b32.xlu0 %v6025, 64
        %v6109 = vpop.permute.xlu0 %6108
        %6110 = vrot.lane.b32.xlu0 %v6026, 64
        %v6111 = vpop.permute.xlu0 %6110
        %6112 = vrot.lane.b32.xlu0 %v6027, 64
        %v6113 = vpop.permute.xlu0 %6112
        %6114 = vrot.lane.b32.xlu0 %v6028, 64
        %v6115 = vpop.permute.xlu0 %6114
        %6116 = vrot.lane.b32.xlu0 %v6029, 64
        %v6117 = vpop.permute.xlu0 %6116
        %6118 = vrot.lane.b32.xlu0 %v6030, 64
        %v6119 = vpop.permute.xlu0 %6118
        %6120 = vrot.lane.b32.xlu0 %v6031, 64
        %v6121 = vpop.permute.xlu0 %6120
        %6122 = vrot.lane.b32.xlu0 %v6032, 64
        %v6123 = vpop.permute.xlu0 %6122
        %6124 = vrot.lane.b32.xlu0 %v6033, 64
        %v6125 = vpop.permute.xlu0 %6124
        %6126 = vrot.lane.b32.xlu0 %v6034, 64
        %v6127 = vpop.permute.xlu0 %6126
        %6128 = vrot.lane.b32.xlu0 %v6035, 64
        %v6129 = vpop.permute.xlu0 %6128
        %6130 = vrot.lane.b32.xlu0 %v6036, 64
        %v6131 = vpop.permute.xlu0 %6130
        %6132 = vrot.lane.b32.xlu0 %v6037, 64
        %v6133 = vpop.permute.xlu0 %6132
        %6166 = vst.msk [vmem:[#allocation3] sm:$0xff] %vm3950, %v6071
        %6167 = vst.msk [vmem:[#allocation3 + $0x10] sm:$0xff] %vm3950, %v6073
        %6168 = vst.msk [vmem:[#allocation3 + $0x20] sm:$0xff] %vm3950, %v6075
        %6169 = vst.msk [vmem:[#allocation3 + $0x30] sm:$0xff] %vm3950, %v6077
        %6170 = vst.msk [vmem:[#allocation3 + $0x40] sm:$0xff] %vm3950, %v6079
        %6171 = vst.msk [vmem:[#allocation3 + $0x50] sm:$0xff] %vm3950, %v6081
        %6172 = vst.msk [vmem:[#allocation3 + $0x60] sm:$0xff] %vm3950, %v6083
        %6173 = vst.msk [vmem:[#allocation3 + $0x70] sm:$0xff] %vm3950, %v6085
        %6174 = vst.msk [vmem:[#allocation3 + $0x80] sm:$0xff] %vm3950, %v6087
        %6175 = vst.msk [vmem:[#allocation3 + $0x90] sm:$0xff] %vm3950, %v6089
        %6176 = vst.msk [vmem:[#allocation3 + $0xa0] sm:$0xff] %vm3950, %v6091
        %6177 = vst.msk [vmem:[#allocation3 + $0xb0] sm:$0xff] %vm3950, %v6093
        %6178 = vst.msk [vmem:[#allocation3 + $0xc0] sm:$0xff] %vm3950, %v6095
        %6179 = vst.msk [vmem:[#allocation3 + $0xd0] sm:$0xff] %vm3950, %v6097
        %6180 = vst.msk [vmem:[#allocation3 + $0xe0] sm:$0xff] %vm3950, %v6099
        %6181 = vst.msk [vmem:[#allocation3 + $0xf0] sm:$0xff] %vm3950, %v6101
        %6182 = vst.msk [vmem:[#allocation3 + $0x100] sm:$0xff] %vm3950, %v6103
        %6183 = vst.msk [vmem:[#allocation3 + $0x110] sm:$0xff] %vm3950, %v6105
        %6184 = vst.msk [vmem:[#allocation3 + $0x120] sm:$0xff] %vm3950, %v6107
        %6185 = vst.msk [vmem:[#allocation3 + $0x130] sm:$0xff] %vm3950, %v6109
        %6186 = vst.msk [vmem:[#allocation3 + $0x140] sm:$0xff] %vm3950, %v6111
        %6187 = vst.msk [vmem:[#allocation3 + $0x150] sm:$0xff] %vm3950, %v6113
        %6188 = vst.msk [vmem:[#allocation3 + $0x160] sm:$0xff] %vm3950, %v6115
        %6189 = vst.msk [vmem:[#allocation3 + $0x170] sm:$0xff] %vm3950, %v6117
        %6190 = vst.msk [vmem:[#allocation3 + $0x180] sm:$0xff] %vm3950, %v6119
        %6191 = vst.msk [vmem:[#allocation3 + $0x190] sm:$0xff] %vm3950, %v6121
        %6192 = vst.msk [vmem:[#allocation3 + $0x1a0] sm:$0xff] %vm3950, %v6123
        %6193 = vst.msk [vmem:[#allocation3 + $0x1b0] sm:$0xff] %vm3950, %v6125
        %6194 = vst.msk [vmem:[#allocation3 + $0x1c0] sm:$0xff] %vm3950, %v6127
        %6195 = vst.msk [vmem:[#allocation3 + $0x1d0] sm:$0xff] %vm3950, %v6129
        %6196 = vst.msk [vmem:[#allocation3 + $0x1e0] sm:$0xff] %vm3950, %v6131
        %6197 = vst.msk [vmem:[#allocation3 + $0x1f0] sm:$0xff] %vm3950, %v6133
        %v6198 = vld [vmem:[#allocation3] sm:$0xff]
        %v6199 = vld [vmem:[#allocation3 + $0x10] sm:$0xff]
        %v6200 = vld [vmem:[#allocation3 + $0x20] sm:$0xff]
        %v6201 = vld [vmem:[#allocation3 + $0x30] sm:$0xff]
        %v6202 = vld [vmem:[#allocation3 + $0x40] sm:$0xff]
        %v6203 = vld [vmem:[#allocation3 + $0x50] sm:$0xff]
        %v6204 = vld [vmem:[#allocation3 + $0x60] sm:$0xff]
        %v6205 = vld [vmem:[#allocation3 + $0x70] sm:$0xff]
        %v6206 = vld [vmem:[#allocation3 + $0x80] sm:$0xff]
        %v6207 = vld [vmem:[#allocation3 + $0x90] sm:$0xff]
        %v6208 = vld [vmem:[#allocation3 + $0xa0] sm:$0xff]
        %v6209 = vld [vmem:[#allocation3 + $0xb0] sm:$0xff]
        %v6210 = vld [vmem:[#allocation3 + $0xc0] sm:$0xff]
        %v6211 = vld [vmem:[#allocation3 + $0xd0] sm:$0xff]
        %v6212 = vld [vmem:[#allocation3 + $0xe0] sm:$0xff]
        %v6213 = vld [vmem:[#allocation3 + $0xf0] sm:$0xff]
        %v6214 = vld [vmem:[#allocation3 + $0x100] sm:$0xff]
        %v6215 = vld [vmem:[#allocation3 + $0x110] sm:$0xff]
        %v6216 = vld [vmem:[#allocation3 + $0x120] sm:$0xff]
        %v6217 = vld [vmem:[#allocation3 + $0x130] sm:$0xff]
        %v6218 = vld [vmem:[#allocation3 + $0x140] sm:$0xff]
        %v6219 = vld [vmem:[#allocation3 + $0x150] sm:$0xff]
        %v6220 = vld [vmem:[#allocation3 + $0x160] sm:$0xff]
        %v6221 = vld [vmem:[#allocation3 + $0x170] sm:$0xff]
        %v6222 = vld [vmem:[#allocation3 + $0x180] sm:$0xff]
        %v6223 = vld [vmem:[#allocation3 + $0x190] sm:$0xff]
        %v6224 = vld [vmem:[#allocation3 + $0x1a0] sm:$0xff]
        %v6225 = vld [vmem:[#allocation3 + $0x1b0] sm:$0xff]
        %v6226 = vld [vmem:[#allocation3 + $0x1c0] sm:$0xff]
        %v6227 = vld [vmem:[#allocation3 + $0x1d0] sm:$0xff]
        %v6228 = vld [vmem:[#allocation3 + $0x1e0] sm:$0xff]
        %v6229 = vld [vmem:[#allocation3 + $0x1f0] sm:$0xff]
        %v6230 = vld [vmem:[%s1 + $0x70] sm:$0xff]
        %v6231 = vld [vmem:[%s1 + $0x78] sm:$0xff]
        %v6232 = vld [vmem:[%s1 + $0x80] sm:$0xff]
        %v6233 = vld [vmem:[%s1 + $0x88] sm:$0xff]
        %v6234 = vld [vmem:[%s1 + $0x90] sm:$0xff]
        %v6235 = vld [vmem:[%s1 + $0x98] sm:$0xff]
        %v6236 = vld [vmem:[%s1 + $0xa0] sm:$0xff]
        %v6237 = vld [vmem:[%s1 + $0xa8] sm:$0xff]
        %v6238 = vld [vmem:[%s1 + $0xb0] sm:$0xff]
        %v6239 = vld [vmem:[%s2 + $0x2] sm:$0x1]
        %v6241 = vlaneseq
        %v6242 = vshrl.u32 %v6241, 7
        %v6243 = vsub.s32 0, %v6242
        %v6244 = vrot.slane %v6239, %v6243
        %v6247 = vsel %vm4031, %v6198, 0
        %v6250 = vsel %vm4031, %v6199, 0
        %v6253 = vsel %vm4031, %v6200, 0
        %v6256 = vsel %vm4031, %v6201, 0
        %v6259 = vsel %vm4031, %v6202, 0
        %v6262 = vsel %vm4031, %v6203, 0
        %v6265 = vsel %vm4031, %v6204, 0
        %v6268 = vsel %vm4031, %v6205, 0
        %v6271 = vsel %vm4031, %v6206, 0
        %v6274 = vsel %vm4031, %v6207, 0
        %v6277 = vsel %vm4031, %v6208, 0
        %v6280 = vsel %vm4031, %v6209, 0
        %v6283 = vsel %vm4031, %v6210, 0
        %v6286 = vsel %vm4031, %v6211, 0
        %v6289 = vsel %vm4031, %v6212, 0
        %v6292 = vsel %vm4031, %v6213, 0
        %v6295 = vsel %vm4031, %v6214, 0
        %v6298 = vsel %vm4031, %v6215, 0
        %v6301 = vsel %vm4031, %v6216, 0
        %v6304 = vsel %vm4031, %v6217, 0
        %v6307 = vsel %vm4031, %v6218, 0
        %v6310 = vsel %vm4031, %v6219, 0
        %v6313 = vsel %vm4031, %v6220, 0
        %v6316 = vsel %vm4031, %v6221, 0
        %v6319 = vsel %vm4031, %v6222, 0
        %v6322 = vsel %vm4031, %v6223, 0
        %v6325 = vsel %vm4031, %v6224, 0
        %v6328 = vsel %vm4031, %v6225, 0
        %v6331 = vsel %vm4031, %v6226, 0
        %v6334 = vsel %vm4031, %v6227, 0
        %v6337 = vsel %vm4031, %v6228, 0
        %v6340 = vsel %vm4031, %v6229, 0
        %6342 = vmatprep.subr.mxu0 0.0
        %6343 = vmatpush1.msra.mxu0 0.0
        %6344 = vmatprep.subr.mxu0 0.0
        %6345 = vmatpush1.msra.mxu0 0.0
        %6346 = vmatprep.subr.mxu0 0.0
        %6347 = vmatpush1.msra.mxu0 0.0
        %6348 = vmatprep.subr.mxu0 0.0
        %6349 = vmatpush1.msra.mxu0 0.0
        %6350 = vmatprep.subr.mxu0 0.0
        %6351 = vmatpush1.msra.mxu0 0.0
        %6352 = vmatprep.subr.mxu0 0.0
        %6353 = vmatpush1.msra.mxu0 0.0
        %6354 = vmatprep.subr.mxu0 0.0
        %6355 = vmatpush1.msra.mxu0 0.0
        %6356 = vmatprep.subr.mxu0 0.0
        %6357 = vmatpush1.msra.mxu0 %v6238
        %6358 = vmatprep.subr.mxu0 0.0
        %6359 = vmatpush1.msra.mxu0 %v6237
        %6360 = vmatprep.subr.mxu0 0.0
        %6361 = vmatpush1.msra.mxu0 %v6236
        %6362 = vmatprep.subr.mxu0 0.0
        %6363 = vmatpush1.msra.mxu0 %v6235
        %6364 = vmatprep.subr.mxu0 0.0
        %6365 = vmatpush1.msra.mxu0 %v6234
        %6366 = vmatprep.subr.mxu0 0.0
        %6367 = vmatpush1.msra.mxu0 %v6233
        %6368 = vmatprep.subr.mxu0 0.0
        %6369 = vmatpush1.msra.mxu0 %v6232
        %6370 = vmatprep.subr.mxu0 0.0
        %6371 = vmatpush1.msra.mxu0 %v6231
        %6372 = vmatprep.subr.mxu0 0.0
        %6373 = vmatpush1.msra.mxu0 %v6230
        %6374 = vmatprep.subr.mxu0 0.0
        %6375 = vmatpush2.msra.mxu0 0.0
        %6376 = vmatprep.subr.mxu0 0.0
        %6377 = vmatpush2.msra.mxu0 0.0
        %6378 = vmatprep.subr.mxu0 0.0
        %6379 = vmatpush2.msra.mxu0 0.0
        %6380 = vmatprep.subr.mxu0 0.0
        %6381 = vmatpush2.msra.mxu0 0.0
        %6382 = vmatprep.subr.mxu0 0.0
        %6383 = vmatpush2.msra.mxu0 0.0
        %6384 = vmatprep.subr.mxu0 0.0
        %6385 = vmatpush2.msra.mxu0 0.0
        %6386 = vmatprep.subr.mxu0 0.0
        %6387 = vmatpush2.msra.mxu0 0.0
        %6388 = vmatprep.subr.mxu0 0.0
        %6389 = vmatpush2.msra.mxu0 0.0
        %6390 = vmatprep.subr.mxu0 0.0
        %6391 = vmatpush2.msra.mxu0 0.0
        %6392 = vmatprep.subr.mxu0 0.0
        %6393 = vmatpush2.msra.mxu0 0.0
        %6394 = vmatprep.subr.mxu0 0.0
        %6395 = vmatpush2.msra.mxu0 0.0
        %6396 = vmatprep.subr.mxu0 0.0
        %6397 = vmatpush2.msra.mxu0 0.0
        %6398 = vmatprep.subr.mxu0 0.0
        %6399 = vmatpush2.msra.mxu0 0.0
        %6400 = vmatprep.subr.mxu0 0.0
        %6401 = vmatpush2.msra.mxu0 0.0
        %6402 = vmatprep.subr.mxu0 0.0
        %6403 = vmatpush2.msra.mxu0 0.0
        %6404 = vmatprep.subr.mxu0 0.0
        %6405 = vmatpush2.msra.mxu0 0.0
        %6406 = vmatprep.mubr.f32.mxu0 0.0
        %6407 = vmatmul.mubr.f32.gmra.mxu0 %v6247
        %v6408 = vpop.f32.mrf.mxu0
        %v6409 = vadd.f32 %v6244, %v6408
        %v6410 = vpop.f32.mrf.mxu0
        %6411 = vmatprep.mubr.f32.mxu0 0.0
        %6412 = vmatmul.mubr.f32.gmra.mxu0 %v6250
        %v6413 = vpop.f32.mrf.mxu0
        %v6414 = vadd.f32 %v6244, %v6413
        %v6415 = vpop.f32.mrf.mxu0
        %6416 = vmatprep.mubr.f32.mxu0 0.0
        %6417 = vmatmul.mubr.f32.gmra.mxu0 %v6253
        %v6418 = vpop.f32.mrf.mxu0
        %v6419 = vadd.f32 %v6244, %v6418
        %v6420 = vpop.f32.mrf.mxu0
        %6421 = vmatprep.mubr.f32.mxu0 0.0
        %6422 = vmatmul.mubr.f32.gmra.mxu0 %v6256
        %v6423 = vpop.f32.mrf.mxu0
        %v6424 = vadd.f32 %v6244, %v6423
        %v6425 = vpop.f32.mrf.mxu0
        %6426 = vmatprep.mubr.f32.mxu0 0.0
        %6427 = vmatmul.mubr.f32.gmra.mxu0 %v6259
        %v6428 = vpop.f32.mrf.mxu0
        %v6429 = vadd.f32 %v6244, %v6428
        %v6430 = vpop.f32.mrf.mxu0
        %6431 = vmatprep.mubr.f32.mxu0 0.0
        %6432 = vmatmul.mubr.f32.gmra.mxu0 %v6262
        %v6433 = vpop.f32.mrf.mxu0
        %v6434 = vadd.f32 %v6244, %v6433
        %v6435 = vpop.f32.mrf.mxu0
        %6436 = vmatprep.mubr.f32.mxu0 0.0
        %6437 = vmatmul.mubr.f32.gmra.mxu0 %v6265
        %v6438 = vpop.f32.mrf.mxu0
        %v6439 = vadd.f32 %v6244, %v6438
        %v6440 = vpop.f32.mrf.mxu0
        %6441 = vmatprep.mubr.f32.mxu0 0.0
        %6442 = vmatmul.mubr.f32.gmra.mxu0 %v6268
        %v6443 = vpop.f32.mrf.mxu0
        %v6444 = vadd.f32 %v6244, %v6443
        %v6445 = vpop.f32.mrf.mxu0
        %6446 = vmatprep.mubr.f32.mxu0 0.0
        %6447 = vmatmul.mubr.f32.gmra.mxu0 %v6271
        %v6448 = vpop.f32.mrf.mxu0
        %v6449 = vadd.f32 %v6244, %v6448
        %v6450 = vpop.f32.mrf.mxu0
        %6451 = vmatprep.mubr.f32.mxu0 0.0
        %6452 = vmatmul.mubr.f32.gmra.mxu0 %v6274
        %v6453 = vpop.f32.mrf.mxu0
        %v6454 = vadd.f32 %v6244, %v6453
        %v6455 = vpop.f32.mrf.mxu0
        %6456 = vmatprep.mubr.f32.mxu0 0.0
        %6457 = vmatmul.mubr.f32.gmra.mxu0 %v6277
        %v6458 = vpop.f32.mrf.mxu0
        %v6459 = vadd.f32 %v6244, %v6458
        %v6460 = vpop.f32.mrf.mxu0
        %6461 = vmatprep.mubr.f32.mxu0 0.0
        %6462 = vmatmul.mubr.f32.gmra.mxu0 %v6280
        %v6463 = vpop.f32.mrf.mxu0
        %v6464 = vadd.f32 %v6244, %v6463
        %v6465 = vpop.f32.mrf.mxu0
        %6466 = vmatprep.mubr.f32.mxu0 0.0
        %6467 = vmatmul.mubr.f32.gmra.mxu0 %v6283
        %v6468 = vpop.f32.mrf.mxu0
        %v6469 = vadd.f32 %v6244, %v6468
        %v6470 = vpop.f32.mrf.mxu0
        %6471 = vmatprep.mubr.f32.mxu0 0.0
        %6472 = vmatmul.mubr.f32.gmra.mxu0 %v6286
        %v6473 = vpop.f32.mrf.mxu0
        %v6474 = vadd.f32 %v6244, %v6473
        %v6475 = vpop.f32.mrf.mxu0
        %6476 = vmatprep.mubr.f32.mxu0 0.0
        %6477 = vmatmul.mubr.f32.gmra.mxu0 %v6289
        %v6478 = vpop.f32.mrf.mxu0
        %v6479 = vadd.f32 %v6244, %v6478
        %v6480 = vpop.f32.mrf.mxu0
        %6481 = vmatprep.mubr.f32.mxu0 0.0
        %6482 = vmatmul.mubr.f32.gmra.mxu0 %v6292
        %v6483 = vpop.f32.mrf.mxu0
        %v6484 = vadd.f32 %v6244, %v6483
        %v6485 = vpop.f32.mrf.mxu0
        %6486 = vmatprep.mubr.f32.mxu0 0.0
        %6487 = vmatmul.mubr.f32.gmra.mxu0 %v6295
        %v6488 = vpop.f32.mrf.mxu0
        %v6489 = vadd.f32 %v6244, %v6488
        %v6490 = vpop.f32.mrf.mxu0
        %6491 = vmatprep.mubr.f32.mxu0 0.0
        %6492 = vmatmul.mubr.f32.gmra.mxu0 %v6298
        %v6493 = vpop.f32.mrf.mxu0
        %v6494 = vadd.f32 %v6244, %v6493
        %v6495 = vpop.f32.mrf.mxu0
        %6496 = vmatprep.mubr.f32.mxu0 0.0
        %6497 = vmatmul.mubr.f32.gmra.mxu0 %v6301
        %v6498 = vpop.f32.mrf.mxu0
        %v6499 = vadd.f32 %v6244, %v6498
        %v6500 = vpop.f32.mrf.mxu0
        %6501 = vmatprep.mubr.f32.mxu0 0.0
        %6502 = vmatmul.mubr.f32.gmra.mxu0 %v6304
        %v6503 = vpop.f32.mrf.mxu0
        %v6504 = vadd.f32 %v6244, %v6503
        %v6505 = vpop.f32.mrf.mxu0
        %6506 = vmatprep.mubr.f32.mxu0 0.0
        %6507 = vmatmul.mubr.f32.gmra.mxu0 %v6307
        %v6508 = vpop.f32.mrf.mxu0
        %v6509 = vadd.f32 %v6244, %v6508
        %v6510 = vpop.f32.mrf.mxu0
        %6511 = vmatprep.mubr.f32.mxu0 0.0
        %6512 = vmatmul.mubr.f32.gmra.mxu0 %v6310
        %v6513 = vpop.f32.mrf.mxu0
        %v6514 = vadd.f32 %v6244, %v6513
        %v6515 = vpop.f32.mrf.mxu0
        %6516 = vmatprep.mubr.f32.mxu0 0.0
        %6517 = vmatmul.mubr.f32.gmra.mxu0 %v6313
        %v6518 = vpop.f32.mrf.mxu0
        %v6519 = vadd.f32 %v6244, %v6518
        %v6520 = vpop.f32.mrf.mxu0
        %6521 = vmatprep.mubr.f32.mxu0 0.0
        %6522 = vmatmul.mubr.f32.gmra.mxu0 %v6316
        %v6523 = vpop.f32.mrf.mxu0
        %v6524 = vadd.f32 %v6244, %v6523
        %v6525 = vpop.f32.mrf.mxu0
        %6526 = vmatprep.mubr.f32.mxu0 0.0
        %6527 = vmatmul.mubr.f32.gmra.mxu0 %v6319
        %v6528 = vpop.f32.mrf.mxu0
        %v6529 = vadd.f32 %v6244, %v6528
        %v6530 = vpop.f32.mrf.mxu0
        %6531 = vmatprep.mubr.f32.mxu0 0.0
        %6532 = vmatmul.mubr.f32.gmra.mxu0 %v6322
        %v6533 = vpop.f32.mrf.mxu0
        %v6534 = vadd.f32 %v6244, %v6533
        %v6535 = vpop.f32.mrf.mxu0
        %6536 = vmatprep.mubr.f32.mxu0 0.0
        %6537 = vmatmul.mubr.f32.gmra.mxu0 %v6325
        %v6538 = vpop.f32.mrf.mxu0
        %v6539 = vadd.f32 %v6244, %v6538
        %v6540 = vpop.f32.mrf.mxu0
        %6541 = vmatprep.mubr.f32.mxu0 0.0
        %6542 = vmatmul.mubr.f32.gmra.mxu0 %v6328
        %v6543 = vpop.f32.mrf.mxu0
        %v6544 = vadd.f32 %v6244, %v6543
        %v6545 = vpop.f32.mrf.mxu0
        %6546 = vmatprep.mubr.f32.mxu0 0.0
        %6547 = vmatmul.mubr.f32.gmra.mxu0 %v6331
        %v6548 = vpop.f32.mrf.mxu0
        %v6549 = vadd.f32 %v6244, %v6548
        %v6550 = vpop.f32.mrf.mxu0
        %6551 = vmatprep.mubr.f32.mxu0 0.0
        %6552 = vmatmul.mubr.f32.gmra.mxu0 %v6334
        %v6553 = vpop.f32.mrf.mxu0
        %v6554 = vadd.f32 %v6244, %v6553
        %v6555 = vpop.f32.mrf.mxu0
        %6556 = vmatprep.mubr.f32.mxu0 0.0
        %6557 = vmatmul.mubr.f32.gmra.mxu0 %v6337
        %v6558 = vpop.f32.mrf.mxu0
        %v6559 = vadd.f32 %v6244, %v6558
        %v6560 = vpop.f32.mrf.mxu0
        %6561 = vmatprep.mubr.f32.mxu0 0.0
        %6562 = vmatmul.mubr.f32.gmra.mxu0 %v6340
        %v6563 = vpop.f32.mrf.mxu0
        %v6564 = vadd.f32 %v6244, %v6563
        %v6565 = vpop.f32.mrf.mxu0
        %6566 = vdwg.mxu0
        %v6567 = vmax.f32 %v6409, 0.0
        %v6568 = vmax.f32 %v6414, 0.0
        %v6569 = vmax.f32 %v6419, 0.0
        %v6570 = vmax.f32 %v6424, 0.0
        %v6571 = vmax.f32 %v6429, 0.0
        %v6572 = vmax.f32 %v6434, 0.0
        %v6573 = vmax.f32 %v6439, 0.0
        %v6574 = vmax.f32 %v6444, 0.0
        %v6575 = vmax.f32 %v6449, 0.0
        %v6576 = vmax.f32 %v6454, 0.0
        %v6577 = vmax.f32 %v6459, 0.0
        %v6578 = vmax.f32 %v6464, 0.0
        %v6579 = vmax.f32 %v6469, 0.0
        %v6580 = vmax.f32 %v6474, 0.0
        %v6581 = vmax.f32 %v6479, 0.0
        %v6582 = vmax.f32 %v6484, 0.0
        %v6583 = vmax.f32 %v6489, 0.0
        %v6584 = vmax.f32 %v6494, 0.0
        %v6585 = vmax.f32 %v6499, 0.0
        %v6586 = vmax.f32 %v6504, 0.0
        %v6587 = vmax.f32 %v6509, 0.0
        %v6588 = vmax.f32 %v6514, 0.0
        %v6589 = vmax.f32 %v6519, 0.0
        %v6590 = vmax.f32 %v6524, 0.0
        %v6591 = vmax.f32 %v6529, 0.0
        %v6592 = vmax.f32 %v6534, 0.0
        %v6593 = vmax.f32 %v6539, 0.0
        %v6594 = vmax.f32 %v6544, 0.0
        %v6595 = vmax.f32 %v6549, 0.0
        %v6596 = vmax.f32 %v6554, 0.0
        %v6597 = vmax.f32 %v6559, 0.0
        %v6598 = vmax.f32 %v6564, 0.0
        %vm6599 = vcmask 130048
        %6600 = vst.msk [vmem:[#allocation4] sm:$0xff] %vm6599, %v6567
        %6601 = vst.msk [vmem:[#allocation4 + $0x8] sm:$0xff] %vm6599, %v6568
        %6602 = vst.msk [vmem:[#allocation4 + $0x10] sm:$0xff] %vm6599, %v6569
        %6603 = vst.msk [vmem:[#allocation4 + $0x18] sm:$0xff] %vm6599, %v6570
        %6604 = vst.msk [vmem:[#allocation4 + $0x20] sm:$0xff] %vm6599, %v6571
        %6605 = vst.msk [vmem:[#allocation4 + $0x28] sm:$0xff] %vm6599, %v6572
        %6606 = vst.msk [vmem:[#allocation4 + $0x30] sm:$0xff] %vm6599, %v6573
        %6607 = vst.msk [vmem:[#allocation4 + $0x38] sm:$0xff] %vm6599, %v6574
        %6608 = vst.msk [vmem:[#allocation4 + $0x40] sm:$0xff] %vm6599, %v6575
        %6609 = vst.msk [vmem:[#allocation4 + $0x48] sm:$0xff] %vm6599, %v6576
        %6610 = vst.msk [vmem:[#allocation4 + $0x50] sm:$0xff] %vm6599, %v6577
        %6611 = vst.msk [vmem:[#allocation4 + $0x58] sm:$0xff] %vm6599, %v6578
        %6612 = vst.msk [vmem:[#allocation4 + $0x60] sm:$0xff] %vm6599, %v6579
        %6613 = vst.msk [vmem:[#allocation4 + $0x68] sm:$0xff] %vm6599, %v6580
        %6614 = vst.msk [vmem:[#allocation4 + $0x70] sm:$0xff] %vm6599, %v6581
        %6615 = vst.msk [vmem:[#allocation4 + $0x78] sm:$0xff] %vm6599, %v6582
        %6616 = vst.msk [vmem:[#allocation4 + $0x80] sm:$0xff] %vm6599, %v6583
        %6617 = vst.msk [vmem:[#allocation4 + $0x88] sm:$0xff] %vm6599, %v6584
        %6618 = vst.msk [vmem:[#allocation4 + $0x90] sm:$0xff] %vm6599, %v6585
        %6619 = vst.msk [vmem:[#allocation4 + $0x98] sm:$0xff] %vm6599, %v6586
        %6620 = vst.msk [vmem:[#allocation4 + $0xa0] sm:$0xff] %vm6599, %v6587
        %6621 = vst.msk [vmem:[#allocation4 + $0xa8] sm:$0xff] %vm6599, %v6588
        %6622 = vst.msk [vmem:[#allocation4 + $0xb0] sm:$0xff] %vm6599, %v6589
        %6623 = vst.msk [vmem:[#allocation4 + $0xb8] sm:$0xff] %vm6599, %v6590
        %6624 = vst.msk [vmem:[#allocation4 + $0xc0] sm:$0xff] %vm6599, %v6591
        %6625 = vst.msk [vmem:[#allocation4 + $0xc8] sm:$0xff] %vm6599, %v6592
        %6626 = vst.msk [vmem:[#allocation4 + $0xd0] sm:$0xff] %vm6599, %v6593
        %6627 = vst.msk [vmem:[#allocation4 + $0xd8] sm:$0xff] %vm6599, %v6594
        %6628 = vst.msk [vmem:[#allocation4 + $0xe0] sm:$0xff] %vm6599, %v6595
        %6629 = vst.msk [vmem:[#allocation4 + $0xe8] sm:$0xff] %vm6599, %v6596
        %6630 = vst.msk [vmem:[#allocation4 + $0xf0] sm:$0xff] %vm6599, %v6597
        %6631 = vst.msk [vmem:[#allocation4 + $0xf8] sm:$0xff] %vm6599, %v6598
        %6632 = vst.msk [vmem:[%s5621 + $0x4] sm:$0xff] %vm6599, %v6567
        %6633 = vst.msk [vmem:[%s5621 + $0xc] sm:$0xff] %vm6599, %v6568
        %6634 = vst.msk [vmem:[%s5621 + $0x1c] sm:$0xff] %vm6599, %v6569
        %6635 = vst.msk [vmem:[%s5621 + $0x24] sm:$0xff] %vm6599, %v6570
        %6636 = vst.msk [vmem:[%s5621 + $0x34] sm:$0xff] %vm6599, %v6571
        %6637 = vst.msk [vmem:[%s5621 + $0x3c] sm:$0xff] %vm6599, %v6572
        %6638 = vst.msk [vmem:[%s5621 + $0x4c] sm:$0xff] %vm6599, %v6573
        %6639 = vst.msk [vmem:[%s5621 + $0x54] sm:$0xff] %vm6599, %v6574
        %6640 = vst.msk [vmem:[%s5621 + $0x64] sm:$0xff] %vm6599, %v6575
        %6641 = vst.msk [vmem:[%s5621 + $0x6c] sm:$0xff] %vm6599, %v6576
        %6642 = vst.msk [vmem:[%s5621 + $0x7c] sm:$0xff] %vm6599, %v6577
        %6643 = vst.msk [vmem:[%s5621 + $0x84] sm:$0xff] %vm6599, %v6578
        %6644 = vst.msk [vmem:[%s5621 + $0x94] sm:$0xff] %vm6599, %v6579
        %6645 = vst.msk [vmem:[%s5621 + $0x9c] sm:$0xff] %vm6599, %v6580
        %6646 = vst.msk [vmem:[%s5621 + $0xac] sm:$0xff] %vm6599, %v6581
        %6647 = vst.msk [vmem:[%s5621 + $0xb4] sm:$0xff] %vm6599, %v6582
        %6648 = vst.msk [vmem:[%s5621 + $0xc4] sm:$0xff] %vm6599, %v6583
        %6649 = vst.msk [vmem:[%s5621 + $0xcc] sm:$0xff] %vm6599, %v6584
        %6650 = vst.msk [vmem:[%s5621 + $0xdc] sm:$0xff] %vm6599, %v6585
        %6651 = vst.msk [vmem:[%s5621 + $0xe4] sm:$0xff] %vm6599, %v6586
        %6652 = vst.msk [vmem:[%s5621 + $0xf4] sm:$0xff] %vm6599, %v6587
        %6653 = vst.msk [vmem:[%s5621 + $0xfc] sm:$0xff] %vm6599, %v6588
        %6654 = vst.msk [vmem:[%s5621 + $0x10c] sm:$0xff] %vm6599, %v6589
        %6655 = vst.msk [vmem:[%s5621 + $0x114] sm:$0xff] %vm6599, %v6590
        %6656 = vst.msk [vmem:[%s5621 + $0x124] sm:$0xff] %vm6599, %v6591
        %6657 = vst.msk [vmem:[%s5621 + $0x12c] sm:$0xff] %vm6599, %v6592
        %6658 = vst.msk [vmem:[%s5621 + $0x13c] sm:$0xff] %vm6599, %v6593
        %6659 = vst.msk [vmem:[%s5621 + $0x144] sm:$0xff] %vm6599, %v6594
        %6660 = vst.msk [vmem:[%s5621 + $0x154] sm:$0xff] %vm6599, %v6595
        %6661 = vst.msk [vmem:[%s5621 + $0x15c] sm:$0xff] %vm6599, %v6596
        %6662 = vst.msk [vmem:[%s5621 + $0x16c] sm:$0xff] %vm6599, %v6597
        %6663 = vst.msk [vmem:[%s5621 + $0x174] sm:$0xff] %vm6599, %v6598
        %v6664 = vlaneseq
        %v6665 = vshrl.u32 %v6664, 7
        %v6666 = vsub.s32 0, %v6665
        %v6667 = vrot.slane %v6567, %v6666
        %v6668 = vlaneseq
        %v6669 = vshrl.u32 %v6668, 7
        %v6670 = vsub.s32 0, %v6669
        %v6671 = vrot.slane %v6569, %v6670
        %v6672 = vlaneseq
        %v6673 = vshrl.u32 %v6672, 7
        %v6674 = vsub.s32 0, %v6673
        %v6675 = vrot.slane %v6571, %v6674
        %v6676 = vlaneseq
        %v6677 = vshrl.u32 %v6676, 7
        %v6678 = vsub.s32 0, %v6677
        %v6679 = vrot.slane %v6573, %v6678
        %v6680 = vlaneseq
        %v6681 = vshrl.u32 %v6680, 7
        %v6682 = vsub.s32 0, %v6681
        %v6683 = vrot.slane %v6575, %v6682
        %v6684 = vlaneseq
        %v6685 = vshrl.u32 %v6684, 7
        %v6686 = vsub.s32 0, %v6685
        %v6687 = vrot.slane %v6577, %v6686
        %v6688 = vlaneseq
        %v6689 = vshrl.u32 %v6688, 7
        %v6690 = vsub.s32 0, %v6689
        %v6691 = vrot.slane %v6579, %v6690
        %v6692 = vlaneseq
        %v6693 = vshrl.u32 %v6692, 7
        %v6694 = vsub.s32 0, %v6693
        %v6695 = vrot.slane %v6581, %v6694
        %v6696 = vlaneseq
        %v6697 = vshrl.u32 %v6696, 7
        %v6698 = vsub.s32 0, %v6697
        %v6699 = vrot.slane %v6583, %v6698
        %v6700 = vlaneseq
        %v6701 = vshrl.u32 %v6700, 7
        %v6702 = vsub.s32 0, %v6701
        %v6703 = vrot.slane %v6585, %v6702
        %v6704 = vlaneseq
        %v6705 = vshrl.u32 %v6704, 7
        %v6706 = vsub.s32 0, %v6705
        %v6707 = vrot.slane %v6587, %v6706
        %v6708 = vlaneseq
        %v6709 = vshrl.u32 %v6708, 7
        %v6710 = vsub.s32 0, %v6709
        %v6711 = vrot.slane %v6589, %v6710
        %v6712 = vlaneseq
        %v6713 = vshrl.u32 %v6712, 7
        %v6714 = vsub.s32 0, %v6713
        %v6715 = vrot.slane %v6591, %v6714
        %v6716 = vlaneseq
        %v6717 = vshrl.u32 %v6716, 7
        %v6718 = vsub.s32 0, %v6717
        %v6719 = vrot.slane %v6593, %v6718
        %v6720 = vlaneseq
        %v6721 = vshrl.u32 %v6720, 7
        %v6722 = vsub.s32 0, %v6721
        %v6723 = vrot.slane %v6595, %v6722
        %v6724 = vlaneseq
        %v6725 = vshrl.u32 %v6724, 7
        %v6726 = vsub.s32 0, %v6725
        %v6727 = vrot.slane %v6597, %v6726
        %vm6728 = vcmask 125952
        %6729 = vst.msk [vmem:[%s5621] sm:$0xf] %vm6728, %v6667
        %6730 = vst.msk [vmem:[%s5621 + $0x18] sm:$0xf] %vm6728, %v6671
        %6731 = vst.msk [vmem:[%s5621 + $0x30] sm:$0xf] %vm6728, %v6675
        %6732 = vst.msk [vmem:[%s5621 + $0x48] sm:$0xf] %vm6728, %v6679
        %6733 = vst.msk [vmem:[%s5621 + $0x60] sm:$0xf] %vm6728, %v6683
        %6734 = vst.msk [vmem:[%s5621 + $0x78] sm:$0xf] %vm6728, %v6687
        %6735 = vst.msk [vmem:[%s5621 + $0x90] sm:$0xf] %vm6728, %v6691
        %6736 = vst.msk [vmem:[%s5621 + $0xa8] sm:$0xf] %vm6728, %v6695
        %6737 = vst.msk [vmem:[%s5621 + $0xc0] sm:$0xf] %vm6728, %v6699
        %6738 = vst.msk [vmem:[%s5621 + $0xd8] sm:$0xf] %vm6728, %v6703
        %6739 = vst.msk [vmem:[%s5621 + $0xf0] sm:$0xf] %vm6728, %v6707
        %6740 = vst.msk [vmem:[%s5621 + $0x108] sm:$0xf] %vm6728, %v6711
        %6741 = vst.msk [vmem:[%s5621 + $0x120] sm:$0xf] %vm6728, %v6715
        %6742 = vst.msk [vmem:[%s5621 + $0x138] sm:$0xf] %vm6728, %v6719
        %6743 = vst.msk [vmem:[%s5621 + $0x150] sm:$0xf] %vm6728, %v6723
        %6744 = vst.msk [vmem:[%s5621 + $0x168] sm:$0xf] %vm6728, %v6727
        %v6745 = vlaneseq
        %v6746 = vshrl.u32 %v6745, 7
        %v6747 = vsub.s32 7, %v6746
        %v6748 = vrot.slane %v6568, %v6747
        %v6749 = vlaneseq
        %v6750 = vshrl.u32 %v6749, 7
        %v6751 = vsub.s32 7, %v6750
        %v6752 = vrot.slane %v6570, %v6751
        %v6753 = vlaneseq
        %v6754 = vshrl.u32 %v6753, 7
        %v6755 = vsub.s32 7, %v6754
        %v6756 = vrot.slane %v6572, %v6755
        %v6757 = vlaneseq
        %v6758 = vshrl.u32 %v6757, 7
        %v6759 = vsub.s32 7, %v6758
        %v6760 = vrot.slane %v6574, %v6759
        %v6761 = vlaneseq
        %v6762 = vshrl.u32 %v6761, 7
        %v6763 = vsub.s32 7, %v6762
        %v6764 = vrot.slane %v6576, %v6763
        %v6765 = vlaneseq
        %v6766 = vshrl.u32 %v6765, 7
        %v6767 = vsub.s32 7, %v6766
        %v6768 = vrot.slane %v6578, %v6767
        %v6769 = vlaneseq
        %v6770 = vshrl.u32 %v6769, 7
        %v6771 = vsub.s32 7, %v6770
        %v6772 = vrot.slane %v6580, %v6771
        %v6773 = vlaneseq
        %v6774 = vshrl.u32 %v6773, 7
        %v6775 = vsub.s32 7, %v6774
        %v6776 = vrot.slane %v6582, %v6775
        %v6777 = vlaneseq
        %v6778 = vshrl.u32 %v6777, 7
        %v6779 = vsub.s32 7, %v6778
        %v6780 = vrot.slane %v6584, %v6779
        %v6781 = vlaneseq
        %v6782 = vshrl.u32 %v6781, 7
        %v6783 = vsub.s32 7, %v6782
        %v6784 = vrot.slane %v6586, %v6783
        %v6785 = vlaneseq
        %v6786 = vshrl.u32 %v6785, 7
        %v6787 = vsub.s32 7, %v6786
        %v6788 = vrot.slane %v6588, %v6787
        %v6789 = vlaneseq
        %v6790 = vshrl.u32 %v6789, 7
        %v6791 = vsub.s32 7, %v6790
        %v6792 = vrot.slane %v6590, %v6791
        %v6793 = vlaneseq
        %v6794 = vshrl.u32 %v6793, 7
        %v6795 = vsub.s32 7, %v6794
        %v6796 = vrot.slane %v6592, %v6795
        %v6797 = vlaneseq
        %v6798 = vshrl.u32 %v6797, 7
        %v6799 = vsub.s32 7, %v6798
        %v6800 = vrot.slane %v6594, %v6799
        %v6801 = vlaneseq
        %v6802 = vshrl.u32 %v6801, 7
        %v6803 = vsub.s32 7, %v6802
        %v6804 = vrot.slane %v6596, %v6803
        %v6805 = vlaneseq
        %v6806 = vshrl.u32 %v6805, 7
        %v6807 = vsub.s32 7, %v6806
        %v6808 = vrot.slane %v6598, %v6807
        %6809 = vst.msk [vmem:[%s5621 + $0x14] sm:$0xf] %vm6728, %v6748
        %6810 = vst.msk [vmem:[%s5621 + $0x2c] sm:$0xf] %vm6728, %v6752
        %6811 = vst.msk [vmem:[%s5621 + $0x44] sm:$0xf] %vm6728, %v6756
        %6812 = vst.msk [vmem:[%s5621 + $0x5c] sm:$0xf] %vm6728, %v6760
        %6813 = vst.msk [vmem:[%s5621 + $0x74] sm:$0xf] %vm6728, %v6764
        %6814 = vst.msk [vmem:[%s5621 + $0x8c] sm:$0xf] %vm6728, %v6768
        %6815 = vst.msk [vmem:[%s5621 + $0xa4] sm:$0xf] %vm6728, %v6772
        %6816 = vst.msk [vmem:[%s5621 + $0xbc] sm:$0xf] %vm6728, %v6776
        %6817 = vst.msk [vmem:[%s5621 + $0xd4] sm:$0xf] %vm6728, %v6780
        %6818 = vst.msk [vmem:[%s5621 + $0xec] sm:$0xf] %vm6728, %v6784
        %6819 = vst.msk [vmem:[%s5621 + $0x104] sm:$0xf] %vm6728, %v6788
        %6820 = vst.msk [vmem:[%s5621 + $0x11c] sm:$0xf] %vm6728, %v6792
        %6821 = vst.msk [vmem:[%s5621 + $0x134] sm:$0xf] %vm6728, %v6796
        %6822 = vst.msk [vmem:[%s5621 + $0x14c] sm:$0xf] %vm6728, %v6800
        %6823 = vst.msk [vmem:[%s5621 + $0x164] sm:$0xf] %vm6728, %v6804
        %6824 = vst.msk [vmem:[%s5621 + $0x17c] sm:$0xf] %vm6728, %v6808
        %v6825 = vld [vmem:[%s5621] sm:$0xff]
        %v6826 = vld [vmem:[%s5621 + $0x8] sm:$0xff]
        %v6827 = vld [vmem:[%s5621 + $0x10] sm:$0xff]
        %s6828 = scalar_lea.vmem [#allocation2], 456
        %v6829 = vld [vmem:[%s6828] sm:$0xff]
        %v6830 = vld [vmem:[%s6828 + $0x8] sm:$0xff]
        %v6831 = vld [vmem:[%s6828 + $0x10] sm:$0xff]
        %6832 = vst.msk [vmem:[#allocation2] sm:$0xff] %vm6599, %v6825
        %6833 = vst.msk [vmem:[#allocation2 + $0x8] sm:$0xff] %vm6599, %v6826
        %6834 = vst.msk [vmem:[#allocation2 + $0x10] sm:$0xff] %vm6599, %v6827
        %6835 = vst.msk [vmem:[#allocation2 + $0x18] sm:$0xff] %vm6599, %v6825
        %6836 = vst.msk [vmem:[#allocation2 + $0x20] sm:$0xff] %vm6599, %v6826
        %6837 = vst.msk [vmem:[#allocation2 + $0x28] sm:$0xff] %vm6599, %v6827
        %6838 = vst.msk [vmem:[#allocation2 + $0x30] sm:$0xff] %vm6599, %v6825
        %6839 = vst.msk [vmem:[#allocation2 + $0x38] sm:$0xff] %vm6599, %v6826
        %6840 = vst.msk [vmem:[#allocation2 + $0x40] sm:$0xff] %vm6599, %v6827
        %6841 = vst.msk [vmem:[#allocation2 + $0x48] sm:$0xff] %vm6599, %v6825
        %6842 = vst.msk [vmem:[#allocation2 + $0x50] sm:$0xff] %vm6599, %v6826
        %6843 = vst.msk [vmem:[#allocation2 + $0x58] sm:$0xff] %vm6599, %v6827
        %s6844 = scalar_lea.vmem [#allocation2], 480
        %6845 = vst.msk [vmem:[%s6844] sm:$0xff] %vm6599, %v6829
        %6846 = vst.msk [vmem:[%s6844 + $0x8] sm:$0xff] %vm6599, %v6830
        %6847 = vst.msk [vmem:[%s6844 + $0x10] sm:$0xff] %vm6599, %v6831
        %6848 = vst.msk [vmem:[%s6844 + $0x18] sm:$0xff] %vm6599, %v6829
        %6849 = vst.msk [vmem:[%s6844 + $0x20] sm:$0xff] %vm6599, %v6830
        %6850 = vst.msk [vmem:[%s6844 + $0x28] sm:$0xff] %vm6599, %v6831
        %6851 = vst.msk [vmem:[%s6844 + $0x30] sm:$0xff] %vm6599, %v6829
        %6852 = vst.msk [vmem:[%s6844 + $0x38] sm:$0xff] %vm6599, %v6830
        %6853 = vst.msk [vmem:[%s6844 + $0x40] sm:$0xff] %vm6599, %v6831
        %6854 = vst.msk [vmem:[%s6844 + $0x48] sm:$0xff] %vm6599, %v6829
        %6855 = vst.msk [vmem:[%s6844 + $0x50] sm:$0xff] %vm6599, %v6830
        %6856 = vst.msk [vmem:[%s6844 + $0x58] sm:$0xff] %vm6599, %v6831
        %v6857 = vld [vmem:[#allocation2] sm:$0xff]
        %v6858 = vld [vmem:[#allocation2 + $0x8] sm:$0xff]
        %v6859 = vld [vmem:[#allocation2 + $0x18] sm:$0xff]
        %v6860 = vld [vmem:[#allocation2 + $0x20] sm:$0xff]
        %v6861 = vld [vmem:[#allocation2 + $0x30] sm:$0xff]
        %v6862 = vld [vmem:[#allocation2 + $0x38] sm:$0xff]
        %v6863 = vld [vmem:[#allocation2 + $0x48] sm:$0xff]
        %v6864 = vld [vmem:[#allocation2 + $0x50] sm:$0xff]
        %v6865 = vld [vmem:[#allocation2 + $0x60] sm:$0xff]
        %v6866 = vld [vmem:[#allocation2 + $0x68] sm:$0xff]
        %v6867 = vld [vmem:[#allocation2 + $0x78] sm:$0xff]
        %v6868 = vld [vmem:[#allocation2 + $0x80] sm:$0xff]
        %v6869 = vld [vmem:[#allocation2 + $0x90] sm:$0xff]
        %v6870 = vld [vmem:[#allocation2 + $0x98] sm:$0xff]
        %v6871 = vld [vmem:[#allocation2 + $0xa8] sm:$0xff]
        %v6872 = vld [vmem:[#allocation2 + $0xb0] sm:$0xff]
        %v6873 = vld [vmem:[#allocation2 + $0xc0] sm:$0xff]
        %v6874 = vld [vmem:[#allocation2 + $0xc8] sm:$0xff]
        %v6875 = vld [vmem:[#allocation2 + $0xd8] sm:$0xff]
        %v6876 = vld [vmem:[#allocation2 + $0xe0] sm:$0xff]
        %v6877 = vld [vmem:[#allocation2 + $0xf0] sm:$0xff]
        %v6878 = vld [vmem:[#allocation2 + $0xf8] sm:$0xff]
        %v6879 = vld [vmem:[#allocation2 + $0x108] sm:$0xff]
        %v6880 = vld [vmem:[#allocation2 + $0x110] sm:$0xff]
        %v6881 = vld [vmem:[#allocation2 + $0x120] sm:$0xff]
        %v6882 = vld [vmem:[#allocation2 + $0x128] sm:$0xff]
        %v6883 = vld [vmem:[#allocation2 + $0x138] sm:$0xff]
        %v6884 = vld [vmem:[#allocation2 + $0x140] sm:$0xff]
        %v6885 = vld [vmem:[#allocation2 + $0x150] sm:$0xff]
        %v6886 = vld [vmem:[#allocation2 + $0x158] sm:$0xff]
        %v6887 = vld [vmem:[#allocation2 + $0x168] sm:$0xff]
        %v6888 = vld [vmem:[#allocation2 + $0x170] sm:$0xff]
        %6889 = vst.msk [vmem:[#allocation3] sm:$0xff] %vm6599, %v6857
        %6890 = vst.msk [vmem:[#allocation3 + $0x10] sm:$0xff] %vm6599, %v6858
        %6891 = vst.msk [vmem:[#allocation3 + $0x20] sm:$0xff] %vm6599, %v6859
        %6892 = vst.msk [vmem:[#allocation3 + $0x30] sm:$0xff] %vm6599, %v6860
        %6893 = vst.msk [vmem:[#allocation3 + $0x40] sm:$0xff] %vm6599, %v6861
        %6894 = vst.msk [vmem:[#allocation3 + $0x50] sm:$0xff] %vm6599, %v6862
        %6895 = vst.msk [vmem:[#allocation3 + $0x60] sm:$0xff] %vm6599, %v6863
        %6896 = vst.msk [vmem:[#allocation3 + $0x70] sm:$0xff] %vm6599, %v6864
        %6897 = vst.msk [vmem:[#allocation3 + $0x80] sm:$0xff] %vm6599, %v6865
        %6898 = vst.msk [vmem:[#allocation3 + $0x90] sm:$0xff] %vm6599, %v6866
        %6899 = vst.msk [vmem:[#allocation3 + $0xa0] sm:$0xff] %vm6599, %v6867
        %6900 = vst.msk [vmem:[#allocation3 + $0xb0] sm:$0xff] %vm6599, %v6868
        %6901 = vst.msk [vmem:[#allocation3 + $0xc0] sm:$0xff] %vm6599, %v6869
        %6902 = vst.msk [vmem:[#allocation3 + $0xd0] sm:$0xff] %vm6599, %v6870
        %6903 = vst.msk [vmem:[#allocation3 + $0xe0] sm:$0xff] %vm6599, %v6871
        %6904 = vst.msk [vmem:[#allocation3 + $0xf0] sm:$0xff] %vm6599, %v6872
        %6905 = vst.msk [vmem:[#allocation3 + $0x100] sm:$0xff] %vm6599, %v6873
        %6906 = vst.msk [vmem:[#allocation3 + $0x110] sm:$0xff] %vm6599, %v6874
        %6907 = vst.msk [vmem:[#allocation3 + $0x120] sm:$0xff] %vm6599, %v6875
        %6908 = vst.msk [vmem:[#allocation3 + $0x130] sm:$0xff] %vm6599, %v6876
        %6909 = vst.msk [vmem:[#allocation3 + $0x140] sm:$0xff] %vm6599, %v6877
        %6910 = vst.msk [vmem:[#allocation3 + $0x150] sm:$0xff] %vm6599, %v6878
        %6911 = vst.msk [vmem:[#allocation3 + $0x160] sm:$0xff] %vm6599, %v6879
        %6912 = vst.msk [vmem:[#allocation3 + $0x170] sm:$0xff] %vm6599, %v6880
        %6913 = vst.msk [vmem:[#allocation3 + $0x180] sm:$0xff] %vm6599, %v6881
        %6914 = vst.msk [vmem:[#allocation3 + $0x190] sm:$0xff] %vm6599, %v6882
        %6915 = vst.msk [vmem:[#allocation3 + $0x1a0] sm:$0xff] %vm6599, %v6883
        %6916 = vst.msk [vmem:[#allocation3 + $0x1b0] sm:$0xff] %vm6599, %v6884
        %6917 = vst.msk [vmem:[#allocation3 + $0x1c0] sm:$0xff] %vm6599, %v6885
        %6918 = vst.msk [vmem:[#allocation3 + $0x1d0] sm:$0xff] %vm6599, %v6886
        %6919 = vst.msk [vmem:[#allocation3 + $0x1e0] sm:$0xff] %vm6599, %v6887
        %6920 = vst.msk [vmem:[#allocation3 + $0x1f0] sm:$0xff] %vm6599, %v6888
        %v6921 = vld [vmem:[#allocation2 + $0x4] sm:$0xff]
        %v6922 = vld [vmem:[#allocation2 + $0xc] sm:$0xff]
        %v6923 = vld [vmem:[#allocation2 + $0x1c] sm:$0xff]
        %v6924 = vld [vmem:[#allocation2 + $0x24] sm:$0xff]
        %v6925 = vld [vmem:[#allocation2 + $0x34] sm:$0xff]
        %v6926 = vld [vmem:[#allocation2 + $0x3c] sm:$0xff]
        %v6927 = vld [vmem:[#allocation2 + $0x4c] sm:$0xff]
        %v6928 = vld [vmem:[#allocation2 + $0x54] sm:$0xff]
        %v6929 = vld [vmem:[#allocation2 + $0x64] sm:$0xff]
        %v6930 = vld [vmem:[#allocation2 + $0x6c] sm:$0xff]
        %v6931 = vld [vmem:[#allocation2 + $0x7c] sm:$0xff]
        %v6932 = vld [vmem:[#allocation2 + $0x84] sm:$0xff]
        %v6933 = vld [vmem:[#allocation2 + $0x94] sm:$0xff]
        %v6934 = vld [vmem:[#allocation2 + $0x9c] sm:$0xff]
        %v6935 = vld [vmem:[#allocation2 + $0xac] sm:$0xff]
        %v6936 = vld [vmem:[#allocation2 + $0xb4] sm:$0xff]
        %v6937 = vld [vmem:[#allocation2 + $0xc4] sm:$0xff]
        %v6938 = vld [vmem:[#allocation2 + $0xcc] sm:$0xff]
        %v6939 = vld [vmem:[#allocation2 + $0xdc] sm:$0xff]
        %v6940 = vld [vmem:[#allocation2 + $0xe4] sm:$0xff]
        %v6941 = vld [vmem:[#allocation2 + $0xf4] sm:$0xff]
        %v6942 = vld [vmem:[#allocation2 + $0xfc] sm:$0xff]
        %v6943 = vld [vmem:[#allocation2 + $0x10c] sm:$0xff]
        %v6944 = vld [vmem:[#allocation2 + $0x114] sm:$0xff]
        %v6945 = vld [vmem:[#allocation2 + $0x124] sm:$0xff]
        %v6946 = vld [vmem:[#allocation2 + $0x12c] sm:$0xff]
        %v6947 = vld [vmem:[#allocation2 + $0x13c] sm:$0xff]
        %v6948 = vld [vmem:[#allocation2 + $0x144] sm:$0xff]
        %v6949 = vld [vmem:[#allocation2 + $0x154] sm:$0xff]
        %v6950 = vld [vmem:[#allocation2 + $0x15c] sm:$0xff]
        %v6951 = vld [vmem:[#allocation2 + $0x16c] sm:$0xff]
        %v6952 = vld [vmem:[#allocation2 + $0x174] sm:$0xff]
        %6985 = vrot.lane.b32.xlu0 %v6921, 16
        %v6986 = vpop.permute.xlu0 %6985
        %6987 = vrot.lane.b32.xlu0 %v6922, 16
        %v6988 = vpop.permute.xlu0 %6987
        %6989 = vrot.lane.b32.xlu0 %v6923, 16
        %v6990 = vpop.permute.xlu0 %6989
        %6991 = vrot.lane.b32.xlu0 %v6924, 16
        %v6992 = vpop.permute.xlu0 %6991
        %6993 = vrot.lane.b32.xlu0 %v6925, 16
        %v6994 = vpop.permute.xlu0 %6993
        %6995 = vrot.lane.b32.xlu0 %v6926, 16
        %v6996 = vpop.permute.xlu0 %6995
        %6997 = vrot.lane.b32.xlu0 %v6927, 16
        %v6998 = vpop.permute.xlu0 %6997
        %6999 = vrot.lane.b32.xlu0 %v6928, 16
        %v7000 = vpop.permute.xlu0 %6999
        %7001 = vrot.lane.b32.xlu0 %v6929, 16
        %v7002 = vpop.permute.xlu0 %7001
        %7003 = vrot.lane.b32.xlu0 %v6930, 16
        %v7004 = vpop.permute.xlu0 %7003
        %7005 = vrot.lane.b32.xlu0 %v6931, 16
        %v7006 = vpop.permute.xlu0 %7005
        %7007 = vrot.lane.b32.xlu0 %v6932, 16
        %v7008 = vpop.permute.xlu0 %7007
        %7009 = vrot.lane.b32.xlu0 %v6933, 16
        %v7010 = vpop.permute.xlu0 %7009
        %7011 = vrot.lane.b32.xlu0 %v6934, 16
        %v7012 = vpop.permute.xlu0 %7011
        %7013 = vrot.lane.b32.xlu0 %v6935, 16
        %v7014 = vpop.permute.xlu0 %7013
        %7015 = vrot.lane.b32.xlu0 %v6936, 16
        %v7016 = vpop.permute.xlu0 %7015
        %7017 = vrot.lane.b32.xlu0 %v6937, 16
        %v7018 = vpop.permute.xlu0 %7017
        %7019 = vrot.lane.b32.xlu0 %v6938, 16
        %v7020 = vpop.permute.xlu0 %7019
        %7021 = vrot.lane.b32.xlu0 %v6939, 16
        %v7022 = vpop.permute.xlu0 %7021
        %7023 = vrot.lane.b32.xlu0 %v6940, 16
        %v7024 = vpop.permute.xlu0 %7023
        %7025 = vrot.lane.b32.xlu0 %v6941, 16
        %v7026 = vpop.permute.xlu0 %7025
        %7027 = vrot.lane.b32.xlu0 %v6942, 16
        %v7028 = vpop.permute.xlu0 %7027
        %7029 = vrot.lane.b32.xlu0 %v6943, 16
        %v7030 = vpop.permute.xlu0 %7029
        %7031 = vrot.lane.b32.xlu0 %v6944, 16
        %v7032 = vpop.permute.xlu0 %7031
        %7033 = vrot.lane.b32.xlu0 %v6945, 16
        %v7034 = vpop.permute.xlu0 %7033
        %7035 = vrot.lane.b32.xlu0 %v6946, 16
        %v7036 = vpop.permute.xlu0 %7035
        %7037 = vrot.lane.b32.xlu0 %v6947, 16
        %v7038 = vpop.permute.xlu0 %7037
        %7039 = vrot.lane.b32.xlu0 %v6948, 16
        %v7040 = vpop.permute.xlu0 %7039
        %7041 = vrot.lane.b32.xlu0 %v6949, 16
        %v7042 = vpop.permute.xlu0 %7041
        %7043 = vrot.lane.b32.xlu0 %v6950, 16
        %v7044 = vpop.permute.xlu0 %7043
        %7045 = vrot.lane.b32.xlu0 %v6951, 16
        %v7046 = vpop.permute.xlu0 %7045
        %7047 = vrot.lane.b32.xlu0 %v6952, 16
        %v7048 = vpop.permute.xlu0 %7047
        %vm7081 = vcmask 261248
        %7082 = vst.msk [vmem:[#allocation3] sm:$0xff] %vm7081, %v6986
        %7083 = vst.msk [vmem:[#allocation3 + $0x10] sm:$0xff] %vm7081, %v6988
        %7084 = vst.msk [vmem:[#allocation3 + $0x20] sm:$0xff] %vm7081, %v6990
        %7085 = vst.msk [vmem:[#allocation3 + $0x30] sm:$0xff] %vm7081, %v6992
        %7086 = vst.msk [vmem:[#allocation3 + $0x40] sm:$0xff] %vm7081, %v6994
        %7087 = vst.msk [vmem:[#allocation3 + $0x50] sm:$0xff] %vm7081, %v6996
        %7088 = vst.msk [vmem:[#allocation3 + $0x60] sm:$0xff] %vm7081, %v6998
        %7089 = vst.msk [vmem:[#allocation3 + $0x70] sm:$0xff] %vm7081, %v7000
        %7090 = vst.msk [vmem:[#allocation3 + $0x80] sm:$0xff] %vm7081, %v7002
        %7091 = vst.msk [vmem:[#allocation3 + $0x90] sm:$0xff] %vm7081, %v7004
        %7092 = vst.msk [vmem:[#allocation3 + $0xa0] sm:$0xff] %vm7081, %v7006
        %7093 = vst.msk [vmem:[#allocation3 + $0xb0] sm:$0xff] %vm7081, %v7008
        %7094 = vst.msk [vmem:[#allocation3 + $0xc0] sm:$0xff] %vm7081, %v7010
        %7095 = vst.msk [vmem:[#allocation3 + $0xd0] sm:$0xff] %vm7081, %v7012
        %7096 = vst.msk [vmem:[#allocation3 + $0xe0] sm:$0xff] %vm7081, %v7014
        %7097 = vst.msk [vmem:[#allocation3 + $0xf0] sm:$0xff] %vm7081, %v7016
        %7098 = vst.msk [vmem:[#allocation3 + $0x100] sm:$0xff] %vm7081, %v7018
        %7099 = vst.msk [vmem:[#allocation3 + $0x110] sm:$0xff] %vm7081, %v7020
        %7100 = vst.msk [vmem:[#allocation3 + $0x120] sm:$0xff] %vm7081, %v7022
        %7101 = vst.msk [vmem:[#allocation3 + $0x130] sm:$0xff] %vm7081, %v7024
        %7102 = vst.msk [vmem:[#allocation3 + $0x140] sm:$0xff] %vm7081, %v7026
        %7103 = vst.msk [vmem:[#allocation3 + $0x150] sm:$0xff] %vm7081, %v7028
        %7104 = vst.msk [vmem:[#allocation3 + $0x160] sm:$0xff] %vm7081, %v7030
        %7105 = vst.msk [vmem:[#allocation3 + $0x170] sm:$0xff] %vm7081, %v7032
        %7106 = vst.msk [vmem:[#allocation3 + $0x180] sm:$0xff] %vm7081, %v7034
        %7107 = vst.msk [vmem:[#allocation3 + $0x190] sm:$0xff] %vm7081, %v7036
        %7108 = vst.msk [vmem:[#allocation3 + $0x1a0] sm:$0xff] %vm7081, %v7038
        %7109 = vst.msk [vmem:[#allocation3 + $0x1b0] sm:$0xff] %vm7081, %v7040
        %7110 = vst.msk [vmem:[#allocation3 + $0x1c0] sm:$0xff] %vm7081, %v7042
        %7111 = vst.msk [vmem:[#allocation3 + $0x1d0] sm:$0xff] %vm7081, %v7044
        %7112 = vst.msk [vmem:[#allocation3 + $0x1e0] sm:$0xff] %vm7081, %v7046
        %7113 = vst.msk [vmem:[#allocation3 + $0x1f0] sm:$0xff] %vm7081, %v7048
        %v7114 = vld [vmem:[#allocation2 + $0x8] sm:$0xff]
        %v7115 = vld [vmem:[#allocation2 + $0x10] sm:$0xff]
        %v7116 = vld [vmem:[#allocation2 + $0x20] sm:$0xff]
        %v7117 = vld [vmem:[#allocation2 + $0x28] sm:$0xff]
        %v7118 = vld [vmem:[#allocation2 + $0x38] sm:$0xff]
        %v7119 = vld [vmem:[#allocation2 + $0x40] sm:$0xff]
        %v7120 = vld [vmem:[#allocation2 + $0x50] sm:$0xff]
        %v7121 = vld [vmem:[#allocation2 + $0x58] sm:$0xff]
        %v7122 = vld [vmem:[#allocation2 + $0x68] sm:$0xff]
        %v7123 = vld [vmem:[#allocation2 + $0x70] sm:$0xff]
        %v7124 = vld [vmem:[#allocation2 + $0x80] sm:$0xff]
        %v7125 = vld [vmem:[#allocation2 + $0x88] sm:$0xff]
        %v7126 = vld [vmem:[#allocation2 + $0x98] sm:$0xff]
        %v7127 = vld [vmem:[#allocation2 + $0xa0] sm:$0xff]
        %v7128 = vld [vmem:[#allocation2 + $0xb0] sm:$0xff]
        %v7129 = vld [vmem:[#allocation2 + $0xb8] sm:$0xff]
        %v7130 = vld [vmem:[#allocation2 + $0xc8] sm:$0xff]
        %v7131 = vld [vmem:[#allocation2 + $0xd0] sm:$0xff]
        %v7132 = vld [vmem:[#allocation2 + $0xe0] sm:$0xff]
        %v7133 = vld [vmem:[#allocation2 + $0xe8] sm:$0xff]
        %v7134 = vld [vmem:[#allocation2 + $0xf8] sm:$0xff]
        %v7135 = vld [vmem:[#allocation2 + $0x100] sm:$0xff]
        %v7136 = vld [vmem:[#allocation2 + $0x110] sm:$0xff]
        %v7137 = vld [vmem:[#allocation2 + $0x118] sm:$0xff]
        %v7138 = vld [vmem:[#allocation2 + $0x128] sm:$0xff]
        %v7139 = vld [vmem:[#allocation2 + $0x130] sm:$0xff]
        %v7140 = vld [vmem:[#allocation2 + $0x140] sm:$0xff]
        %v7141 = vld [vmem:[#allocation2 + $0x148] sm:$0xff]
        %v7142 = vld [vmem:[#allocation2 + $0x158] sm:$0xff]
        %v7143 = vld [vmem:[#allocation2 + $0x160] sm:$0xff]
        %v7144 = vld [vmem:[#allocation2 + $0x170] sm:$0xff]
        %v7145 = vld [vmem:[#allocation2 + $0x178] sm:$0xff]
        %7178 = vrot.lane.b32.xlu0 %v7114, 32
        %v7179 = vpop.permute.xlu0 %7178
        %7180 = vrot.lane.b32.xlu0 %v7115, 32
        %v7181 = vpop.permute.xlu0 %7180
        %7182 = vrot.lane.b32.xlu0 %v7116, 32
        %v7183 = vpop.permute.xlu0 %7182
        %7184 = vrot.lane.b32.xlu0 %v7117, 32
        %v7185 = vpop.permute.xlu0 %7184
        %7186 = vrot.lane.b32.xlu0 %v7118, 32
        %v7187 = vpop.permute.xlu0 %7186
        %7188 = vrot.lane.b32.xlu0 %v7119, 32
        %v7189 = vpop.permute.xlu0 %7188
        %7190 = vrot.lane.b32.xlu0 %v7120, 32
        %v7191 = vpop.permute.xlu0 %7190
        %7192 = vrot.lane.b32.xlu0 %v7121, 32
        %v7193 = vpop.permute.xlu0 %7192
        %7194 = vrot.lane.b32.xlu0 %v7122, 32
        %v7195 = vpop.permute.xlu0 %7194
        %7196 = vrot.lane.b32.xlu0 %v7123, 32
        %v7197 = vpop.permute.xlu0 %7196
        %7198 = vrot.lane.b32.xlu0 %v7124, 32
        %v7199 = vpop.permute.xlu0 %7198
        %7200 = vrot.lane.b32.xlu0 %v7125, 32
        %v7201 = vpop.permute.xlu0 %7200
        %7202 = vrot.lane.b32.xlu0 %v7126, 32
        %v7203 = vpop.permute.xlu0 %7202
        %7204 = vrot.lane.b32.xlu0 %v7127, 32
        %v7205 = vpop.permute.xlu0 %7204
        %7206 = vrot.lane.b32.xlu0 %v7128, 32
        %v7207 = vpop.permute.xlu0 %7206
        %7208 = vrot.lane.b32.xlu0 %v7129, 32
        %v7209 = vpop.permute.xlu0 %7208
        %7210 = vrot.lane.b32.xlu0 %v7130, 32
        %v7211 = vpop.permute.xlu0 %7210
        %7212 = vrot.lane.b32.xlu0 %v7131, 32
        %v7213 = vpop.permute.xlu0 %7212
        %7214 = vrot.lane.b32.xlu0 %v7132, 32
        %v7215 = vpop.permute.xlu0 %7214
        %7216 = vrot.lane.b32.xlu0 %v7133, 32
        %v7217 = vpop.permute.xlu0 %7216
        %7218 = vrot.lane.b32.xlu0 %v7134, 32
        %v7219 = vpop.permute.xlu0 %7218
        %7220 = vrot.lane.b32.xlu0 %v7135, 32
        %v7221 = vpop.permute.xlu0 %7220
        %7222 = vrot.lane.b32.xlu0 %v7136, 32
        %v7223 = vpop.permute.xlu0 %7222
        %7224 = vrot.lane.b32.xlu0 %v7137, 32
        %v7225 = vpop.permute.xlu0 %7224
        %7226 = vrot.lane.b32.xlu0 %v7138, 32
        %v7227 = vpop.permute.xlu0 %7226
        %7228 = vrot.lane.b32.xlu0 %v7139, 32
        %v7229 = vpop.permute.xlu0 %7228
        %7230 = vrot.lane.b32.xlu0 %v7140, 32
        %v7231 = vpop.permute.xlu0 %7230
        %7232 = vrot.lane.b32.xlu0 %v7141, 32
        %v7233 = vpop.permute.xlu0 %7232
        %7234 = vrot.lane.b32.xlu0 %v7142, 32
        %v7235 = vpop.permute.xlu0 %7234
        %7236 = vrot.lane.b32.xlu0 %v7143, 32
        %v7237 = vpop.permute.xlu0 %7236
        %7238 = vrot.lane.b32.xlu0 %v7144, 32
        %v7239 = vpop.permute.xlu0 %7238
        %7240 = vrot.lane.b32.xlu0 %v7145, 32
        %v7241 = vpop.permute.xlu0 %7240
        %vm7274 = vcmask 392448
        %7275 = vst.msk [vmem:[#allocation3] sm:$0xff] %vm7274, %v7179
        %7276 = vst.msk [vmem:[#allocation3 + $0x10] sm:$0xff] %vm7274, %v7181
        %7277 = vst.msk [vmem:[#allocation3 + $0x20] sm:$0xff] %vm7274, %v7183
        %7278 = vst.msk [vmem:[#allocation3 + $0x30] sm:$0xff] %vm7274, %v7185
        %7279 = vst.msk [vmem:[#allocation3 + $0x40] sm:$0xff] %vm7274, %v7187
        %7280 = vst.msk [vmem:[#allocation3 + $0x50] sm:$0xff] %vm7274, %v7189
        %7281 = vst.msk [vmem:[#allocation3 + $0x60] sm:$0xff] %vm7274, %v7191
        %7282 = vst.msk [vmem:[#allocation3 + $0x70] sm:$0xff] %vm7274, %v7193
        %7283 = vst.msk [vmem:[#allocation3 + $0x80] sm:$0xff] %vm7274, %v7195
        %7284 = vst.msk [vmem:[#allocation3 + $0x90] sm:$0xff] %vm7274, %v7197
        %7285 = vst.msk [vmem:[#allocation3 + $0xa0] sm:$0xff] %vm7274, %v7199
        %7286 = vst.msk [vmem:[#allocation3 + $0xb0] sm:$0xff] %vm7274, %v7201
        %7287 = vst.msk [vmem:[#allocation3 + $0xc0] sm:$0xff] %vm7274, %v7203
        %7288 = vst.msk [vmem:[#allocation3 + $0xd0] sm:$0xff] %vm7274, %v7205
        %7289 = vst.msk [vmem:[#allocation3 + $0xe0] sm:$0xff] %vm7274, %v7207
        %7290 = vst.msk [vmem:[#allocation3 + $0xf0] sm:$0xff] %vm7274, %v7209
        %7291 = vst.msk [vmem:[#allocation3 + $0x100] sm:$0xff] %vm7274, %v7211
        %7292 = vst.msk [vmem:[#allocation3 + $0x110] sm:$0xff] %vm7274, %v7213
        %7293 = vst.msk [vmem:[#allocation3 + $0x120] sm:$0xff] %vm7274, %v7215
        %7294 = vst.msk [vmem:[#allocation3 + $0x130] sm:$0xff] %vm7274, %v7217
        %7295 = vst.msk [vmem:[#allocation3 + $0x140] sm:$0xff] %vm7274, %v7219
        %7296 = vst.msk [vmem:[#allocation3 + $0x150] sm:$0xff] %vm7274, %v7221
        %7297 = vst.msk [vmem:[#allocation3 + $0x160] sm:$0xff] %vm7274, %v7223
        %7298 = vst.msk [vmem:[#allocation3 + $0x170] sm:$0xff] %vm7274, %v7225
        %7299 = vst.msk [vmem:[#allocation3 + $0x180] sm:$0xff] %vm7274, %v7227
        %7300 = vst.msk [vmem:[#allocation3 + $0x190] sm:$0xff] %vm7274, %v7229
        %7301 = vst.msk [vmem:[#allocation3 + $0x1a0] sm:$0xff] %vm7274, %v7231
        %7302 = vst.msk [vmem:[#allocation3 + $0x1b0] sm:$0xff] %vm7274, %v7233
        %7303 = vst.msk [vmem:[#allocation3 + $0x1c0] sm:$0xff] %vm7274, %v7235
        %7304 = vst.msk [vmem:[#allocation3 + $0x1d0] sm:$0xff] %vm7274, %v7237
        %7305 = vst.msk [vmem:[#allocation3 + $0x1e0] sm:$0xff] %vm7274, %v7239
        %7306 = vst.msk [vmem:[#allocation3 + $0x1f0] sm:$0xff] %vm7274, %v7241
        %v7307 = vld [vmem:[%s5621] sm:$0xff]
        %v7308 = vld [vmem:[%s5621 + $0x8] sm:$0xff]
        %v7309 = vld [vmem:[%s5621 + $0x18] sm:$0xff]
        %v7310 = vld [vmem:[%s5621 + $0x20] sm:$0xff]
        %v7311 = vld [vmem:[%s5621 + $0x30] sm:$0xff]
        %v7312 = vld [vmem:[%s5621 + $0x38] sm:$0xff]
        %v7313 = vld [vmem:[%s5621 + $0x48] sm:$0xff]
        %v7314 = vld [vmem:[%s5621 + $0x50] sm:$0xff]
        %v7315 = vld [vmem:[%s5621 + $0x60] sm:$0xff]
        %v7316 = vld [vmem:[%s5621 + $0x68] sm:$0xff]
        %v7317 = vld [vmem:[%s5621 + $0x78] sm:$0xff]
        %v7318 = vld [vmem:[%s5621 + $0x80] sm:$0xff]
        %v7319 = vld [vmem:[%s5621 + $0x90] sm:$0xff]
        %v7320 = vld [vmem:[%s5621 + $0x98] sm:$0xff]
        %v7321 = vld [vmem:[%s5621 + $0xa8] sm:$0xff]
        %v7322 = vld [vmem:[%s5621 + $0xb0] sm:$0xff]
        %v7323 = vld [vmem:[%s5621 + $0xc0] sm:$0xff]
        %v7324 = vld [vmem:[%s5621 + $0xc8] sm:$0xff]
        %v7325 = vld [vmem:[%s5621 + $0xd8] sm:$0xff]
        %v7326 = vld [vmem:[%s5621 + $0xe0] sm:$0xff]
        %v7327 = vld [vmem:[%s5621 + $0xf0] sm:$0xff]
        %v7328 = vld [vmem:[%s5621 + $0xf8] sm:$0xff]
        %v7329 = vld [vmem:[%s5621 + $0x108] sm:$0xff]
        %v7330 = vld [vmem:[%s5621 + $0x110] sm:$0xff]
        %v7331 = vld [vmem:[%s5621 + $0x120] sm:$0xff]
        %v7332 = vld [vmem:[%s5621 + $0x128] sm:$0xff]
        %v7333 = vld [vmem:[%s5621 + $0x138] sm:$0xff]
        %v7334 = vld [vmem:[%s5621 + $0x140] sm:$0xff]
        %v7335 = vld [vmem:[%s5621 + $0x150] sm:$0xff]
        %v7336 = vld [vmem:[%s5621 + $0x158] sm:$0xff]
        %v7337 = vld [vmem:[%s5621 + $0x168] sm:$0xff]
        %v7338 = vld [vmem:[%s5621 + $0x170] sm:$0xff]
        %7371 = vrot.lane.b32.xlu0 %v7307, 48
        %v7372 = vpop.permute.xlu0 %7371
        %7373 = vrot.lane.b32.xlu0 %v7308, 48
        %v7374 = vpop.permute.xlu0 %7373
        %7375 = vrot.lane.b32.xlu0 %v7309, 48
        %v7376 = vpop.permute.xlu0 %7375
        %7377 = vrot.lane.b32.xlu0 %v7310, 48
        %v7378 = vpop.permute.xlu0 %7377
        %7379 = vrot.lane.b32.xlu0 %v7311, 48
        %v7380 = vpop.permute.xlu0 %7379
        %7381 = vrot.lane.b32.xlu0 %v7312, 48
        %v7382 = vpop.permute.xlu0 %7381
        %7383 = vrot.lane.b32.xlu0 %v7313, 48
        %v7384 = vpop.permute.xlu0 %7383
        %7385 = vrot.lane.b32.xlu0 %v7314, 48
        %v7386 = vpop.permute.xlu0 %7385
        %7387 = vrot.lane.b32.xlu0 %v7315, 48
        %v7388 = vpop.permute.xlu0 %7387
        %7389 = vrot.lane.b32.xlu0 %v7316, 48
        %v7390 = vpop.permute.xlu0 %7389
        %7391 = vrot.lane.b32.xlu0 %v7317, 48
        %v7392 = vpop.permute.xlu0 %7391
        %7393 = vrot.lane.b32.xlu0 %v7318, 48
        %v7394 = vpop.permute.xlu0 %7393
        %7395 = vrot.lane.b32.xlu0 %v7319, 48
        %v7396 = vpop.permute.xlu0 %7395
        %7397 = vrot.lane.b32.xlu0 %v7320, 48
        %v7398 = vpop.permute.xlu0 %7397
        %7399 = vrot.lane.b32.xlu0 %v7321, 48
        %v7400 = vpop.permute.xlu0 %7399
        %7401 = vrot.lane.b32.xlu0 %v7322, 48
        %v7402 = vpop.permute.xlu0 %7401
        %7403 = vrot.lane.b32.xlu0 %v7323, 48
        %v7404 = vpop.permute.xlu0 %7403
        %7405 = vrot.lane.b32.xlu0 %v7324, 48
        %v7406 = vpop.permute.xlu0 %7405
        %7407 = vrot.lane.b32.xlu0 %v7325, 48
        %v7408 = vpop.permute.xlu0 %7407
        %7409 = vrot.lane.b32.xlu0 %v7326, 48
        %v7410 = vpop.permute.xlu0 %7409
        %7411 = vrot.lane.b32.xlu0 %v7327, 48
        %v7412 = vpop.permute.xlu0 %7411
        %7413 = vrot.lane.b32.xlu0 %v7328, 48
        %v7414 = vpop.permute.xlu0 %7413
        %7415 = vrot.lane.b32.xlu0 %v7329, 48
        %v7416 = vpop.permute.xlu0 %7415
        %7417 = vrot.lane.b32.xlu0 %v7330, 48
        %v7418 = vpop.permute.xlu0 %7417
        %7419 = vrot.lane.b32.xlu0 %v7331, 48
        %v7420 = vpop.permute.xlu0 %7419
        %7421 = vrot.lane.b32.xlu0 %v7332, 48
        %v7422 = vpop.permute.xlu0 %7421
        %7423 = vrot.lane.b32.xlu0 %v7333, 48
        %v7424 = vpop.permute.xlu0 %7423
        %7425 = vrot.lane.b32.xlu0 %v7334, 48
        %v7426 = vpop.permute.xlu0 %7425
        %7427 = vrot.lane.b32.xlu0 %v7335, 48
        %v7428 = vpop.permute.xlu0 %7427
        %7429 = vrot.lane.b32.xlu0 %v7336, 48
        %v7430 = vpop.permute.xlu0 %7429
        %7431 = vrot.lane.b32.xlu0 %v7337, 48
        %v7432 = vpop.permute.xlu0 %7431
        %7433 = vrot.lane.b32.xlu0 %v7338, 48
        %v7434 = vpop.permute.xlu0 %7433
        %vm7467 = vcmask 523648
        %7468 = vst.msk [vmem:[#allocation3] sm:$0xff] %vm7467, %v7372
        %7469 = vst.msk [vmem:[#allocation3 + $0x10] sm:$0xff] %vm7467, %v7374
        %7470 = vst.msk [vmem:[#allocation3 + $0x20] sm:$0xff] %vm7467, %v7376
        %7471 = vst.msk [vmem:[#allocation3 + $0x30] sm:$0xff] %vm7467, %v7378
        %7472 = vst.msk [vmem:[#allocation3 + $0x40] sm:$0xff] %vm7467, %v7380
        %7473 = vst.msk [vmem:[#allocation3 + $0x50] sm:$0xff] %vm7467, %v7382
        %7474 = vst.msk [vmem:[#allocation3 + $0x60] sm:$0xff] %vm7467, %v7384
        %7475 = vst.msk [vmem:[#allocation3 + $0x70] sm:$0xff] %vm7467, %v7386
        %7476 = vst.msk [vmem:[#allocation3 + $0x80] sm:$0xff] %vm7467, %v7388
        %7477 = vst.msk [vmem:[#allocation3 + $0x90] sm:$0xff] %vm7467, %v7390
        %7478 = vst.msk [vmem:[#allocation3 + $0xa0] sm:$0xff] %vm7467, %v7392
        %7479 = vst.msk [vmem:[#allocation3 + $0xb0] sm:$0xff] %vm7467, %v7394
        %7480 = vst.msk [vmem:[#allocation3 + $0xc0] sm:$0xff] %vm7467, %v7396
        %7481 = vst.msk [vmem:[#allocation3 + $0xd0] sm:$0xff] %vm7467, %v7398
        %7482 = vst.msk [vmem:[#allocation3 + $0xe0] sm:$0xff] %vm7467, %v7400
        %7483 = vst.msk [vmem:[#allocation3 + $0xf0] sm:$0xff] %vm7467, %v7402
        %7484 = vst.msk [vmem:[#allocation3 + $0x100] sm:$0xff] %vm7467, %v7404
        %7485 = vst.msk [vmem:[#allocation3 + $0x110] sm:$0xff] %vm7467, %v7406
        %7486 = vst.msk [vmem:[#allocation3 + $0x120] sm:$0xff] %vm7467, %v7408
        %7487 = vst.msk [vmem:[#allocation3 + $0x130] sm:$0xff] %vm7467, %v7410
        %7488 = vst.msk [vmem:[#allocation3 + $0x140] sm:$0xff] %vm7467, %v7412
        %7489 = vst.msk [vmem:[#allocation3 + $0x150] sm:$0xff] %vm7467, %v7414
        %7490 = vst.msk [vmem:[#allocation3 + $0x160] sm:$0xff] %vm7467, %v7416
        %7491 = vst.msk [vmem:[#allocation3 + $0x170] sm:$0xff] %vm7467, %v7418
        %7492 = vst.msk [vmem:[#allocation3 + $0x180] sm:$0xff] %vm7467, %v7420
        %7493 = vst.msk [vmem:[#allocation3 + $0x190] sm:$0xff] %vm7467, %v7422
        %7494 = vst.msk [vmem:[#allocation3 + $0x1a0] sm:$0xff] %vm7467, %v7424
        %7495 = vst.msk [vmem:[#allocation3 + $0x1b0] sm:$0xff] %vm7467, %v7426
        %7496 = vst.msk [vmem:[#allocation3 + $0x1c0] sm:$0xff] %vm7467, %v7428
        %7497 = vst.msk [vmem:[#allocation3 + $0x1d0] sm:$0xff] %vm7467, %v7430
        %7498 = vst.msk [vmem:[#allocation3 + $0x1e0] sm:$0xff] %vm7467, %v7432
        %7499 = vst.msk [vmem:[#allocation3 + $0x1f0] sm:$0xff] %vm7467, %v7434
        %v7500 = vld [vmem:[%s5621 + $0x4] sm:$0xff]
        %v7501 = vld [vmem:[%s5621 + $0xc] sm:$0xff]
        %v7502 = vld [vmem:[%s5621 + $0x1c] sm:$0xff]
        %v7503 = vld [vmem:[%s5621 + $0x24] sm:$0xff]
        %v7504 = vld [vmem:[%s5621 + $0x34] sm:$0xff]
        %v7505 = vld [vmem:[%s5621 + $0x3c] sm:$0xff]
        %v7506 = vld [vmem:[%s5621 + $0x4c] sm:$0xff]
        %v7507 = vld [vmem:[%s5621 + $0x54] sm:$0xff]
        %v7508 = vld [vmem:[%s5621 + $0x64] sm:$0xff]
        %v7509 = vld [vmem:[%s5621 + $0x6c] sm:$0xff]
        %v7510 = vld [vmem:[%s5621 + $0x7c] sm:$0xff]
        %v7511 = vld [vmem:[%s5621 + $0x84] sm:$0xff]
        %v7512 = vld [vmem:[%s5621 + $0x94] sm:$0xff]
        %v7513 = vld [vmem:[%s5621 + $0x9c] sm:$0xff]
        %v7514 = vld [vmem:[%s5621 + $0xac] sm:$0xff]
        %v7515 = vld [vmem:[%s5621 + $0xb4] sm:$0xff]
        %v7516 = vld [vmem:[%s5621 + $0xc4] sm:$0xff]
        %v7517 = vld [vmem:[%s5621 + $0xcc] sm:$0xff]
        %v7518 = vld [vmem:[%s5621 + $0xdc] sm:$0xff]
        %v7519 = vld [vmem:[%s5621 + $0xe4] sm:$0xff]
        %v7520 = vld [vmem:[%s5621 + $0xf4] sm:$0xff]
        %v7521 = vld [vmem:[%s5621 + $0xfc] sm:$0xff]
        %v7522 = vld [vmem:[%s5621 + $0x10c] sm:$0xff]
        %v7523 = vld [vmem:[%s5621 + $0x114] sm:$0xff]
        %v7524 = vld [vmem:[%s5621 + $0x124] sm:$0xff]
        %v7525 = vld [vmem:[%s5621 + $0x12c] sm:$0xff]
        %v7526 = vld [vmem:[%s5621 + $0x13c] sm:$0xff]
        %v7527 = vld [vmem:[%s5621 + $0x144] sm:$0xff]
        %v7528 = vld [vmem:[%s5621 + $0x154] sm:$0xff]
        %v7529 = vld [vmem:[%s5621 + $0x15c] sm:$0xff]
        %v7530 = vld [vmem:[%s5621 + $0x16c] sm:$0xff]
        %v7531 = vld [vmem:[%s5621 + $0x174] sm:$0xff]
        %7564 = vrot.lane.b32.xlu0 %v7500, 64
        %v7565 = vpop.permute.xlu0 %7564
        %7566 = vrot.lane.b32.xlu0 %v7501, 64
        %v7567 = vpop.permute.xlu0 %7566
        %7568 = vrot.lane.b32.xlu0 %v7502, 64
        %v7569 = vpop.permute.xlu0 %7568
        %7570 = vrot.lane.b32.xlu0 %v7503, 64
        %v7571 = vpop.permute.xlu0 %7570
        %7572 = vrot.lane.b32.xlu0 %v7504, 64
        %v7573 = vpop.permute.xlu0 %7572
        %7574 = vrot.lane.b32.xlu0 %v7505, 64
        %v7575 = vpop.permute.xlu0 %7574
        %7576 = vrot.lane.b32.xlu0 %v7506, 64
        %v7577 = vpop.permute.xlu0 %7576
        %7578 = vrot.lane.b32.xlu0 %v7507, 64
        %v7579 = vpop.permute.xlu0 %7578
        %7580 = vrot.lane.b32.xlu0 %v7508, 64
        %v7581 = vpop.permute.xlu0 %7580
        %7582 = vrot.lane.b32.xlu0 %v7509, 64
        %v7583 = vpop.permute.xlu0 %7582
        %7584 = vrot.lane.b32.xlu0 %v7510, 64
        %v7585 = vpop.permute.xlu0 %7584
        %7586 = vrot.lane.b32.xlu0 %v7511, 64
        %v7587 = vpop.permute.xlu0 %7586
        %7588 = vrot.lane.b32.xlu0 %v7512, 64
        %v7589 = vpop.permute.xlu0 %7588
        %7590 = vrot.lane.b32.xlu0 %v7513, 64
        %v7591 = vpop.permute.xlu0 %7590
        %7592 = vrot.lane.b32.xlu0 %v7514, 64
        %v7593 = vpop.permute.xlu0 %7592
        %7594 = vrot.lane.b32.xlu0 %v7515, 64
        %v7595 = vpop.permute.xlu0 %7594
        %7596 = vrot.lane.b32.xlu0 %v7516, 64
        %v7597 = vpop.permute.xlu0 %7596
        %7598 = vrot.lane.b32.xlu0 %v7517, 64
        %v7599 = vpop.permute.xlu0 %7598
        %7600 = vrot.lane.b32.xlu0 %v7518, 64
        %v7601 = vpop.permute.xlu0 %7600
        %7602 = vrot.lane.b32.xlu0 %v7519, 64
        %v7603 = vpop.permute.xlu0 %7602
        %7604 = vrot.lane.b32.xlu0 %v7520, 64
        %v7605 = vpop.permute.xlu0 %7604
        %7606 = vrot.lane.b32.xlu0 %v7521, 64
        %v7607 = vpop.permute.xlu0 %7606
        %7608 = vrot.lane.b32.xlu0 %v7522, 64
        %v7609 = vpop.permute.xlu0 %7608
        %7610 = vrot.lane.b32.xlu0 %v7523, 64
        %v7611 = vpop.permute.xlu0 %7610
        %7612 = vrot.lane.b32.xlu0 %v7524, 64
        %v7613 = vpop.permute.xlu0 %7612
        %7614 = vrot.lane.b32.xlu0 %v7525, 64
        %v7615 = vpop.permute.xlu0 %7614
        %7616 = vrot.lane.b32.xlu0 %v7526, 64
        %v7617 = vpop.permute.xlu0 %7616
        %7618 = vrot.lane.b32.xlu0 %v7527, 64
        %v7619 = vpop.permute.xlu0 %7618
        %7620 = vrot.lane.b32.xlu0 %v7528, 64
        %v7621 = vpop.permute.xlu0 %7620
        %7622 = vrot.lane.b32.xlu0 %v7529, 64
        %v7623 = vpop.permute.xlu0 %7622
        %7624 = vrot.lane.b32.xlu0 %v7530, 64
        %v7625 = vpop.permute.xlu0 %7624
        %7626 = vrot.lane.b32.xlu0 %v7531, 64
        %v7627 = vpop.permute.xlu0 %7626
        %vm7660 = vcmask 654848
        %7661 = vst.msk [vmem:[#allocation3] sm:$0xff] %vm7660, %v7565
        %7662 = vst.msk [vmem:[#allocation3 + $0x10] sm:$0xff] %vm7660, %v7567
        %7663 = vst.msk [vmem:[#allocation3 + $0x20] sm:$0xff] %vm7660, %v7569
        %7664 = vst.msk [vmem:[#allocation3 + $0x30] sm:$0xff] %vm7660, %v7571
        %7665 = vst.msk [vmem:[#allocation3 + $0x40] sm:$0xff] %vm7660, %v7573
        %7666 = vst.msk [vmem:[#allocation3 + $0x50] sm:$0xff] %vm7660, %v7575
        %7667 = vst.msk [vmem:[#allocation3 + $0x60] sm:$0xff] %vm7660, %v7577
        %7668 = vst.msk [vmem:[#allocation3 + $0x70] sm:$0xff] %vm7660, %v7579
        %7669 = vst.msk [vmem:[#allocation3 + $0x80] sm:$0xff] %vm7660, %v7581
        %7670 = vst.msk [vmem:[#allocation3 + $0x90] sm:$0xff] %vm7660, %v7583
        %7671 = vst.msk [vmem:[#allocation3 + $0xa0] sm:$0xff] %vm7660, %v7585
        %7672 = vst.msk [vmem:[#allocation3 + $0xb0] sm:$0xff] %vm7660, %v7587
        %7673 = vst.msk [vmem:[#allocation3 + $0xc0] sm:$0xff] %vm7660, %v7589
        %7674 = vst.msk [vmem:[#allocation3 + $0xd0] sm:$0xff] %vm7660, %v7591
        %7675 = vst.msk [vmem:[#allocation3 + $0xe0] sm:$0xff] %vm7660, %v7593
        %7676 = vst.msk [vmem:[#allocation3 + $0xf0] sm:$0xff] %vm7660, %v7595
        %7677 = vst.msk [vmem:[#allocation3 + $0x100] sm:$0xff] %vm7660, %v7597
        %7678 = vst.msk [vmem:[#allocation3 + $0x110] sm:$0xff] %vm7660, %v7599
        %7679 = vst.msk [vmem:[#allocation3 + $0x120] sm:$0xff] %vm7660, %v7601
        %7680 = vst.msk [vmem:[#allocation3 + $0x130] sm:$0xff] %vm7660, %v7603
        %7681 = vst.msk [vmem:[#allocation3 + $0x140] sm:$0xff] %vm7660, %v7605
        %7682 = vst.msk [vmem:[#allocation3 + $0x150] sm:$0xff] %vm7660, %v7607
        %7683 = vst.msk [vmem:[#allocation3 + $0x160] sm:$0xff] %vm7660, %v7609
        %7684 = vst.msk [vmem:[#allocation3 + $0x170] sm:$0xff] %vm7660, %v7611
        %7685 = vst.msk [vmem:[#allocation3 + $0x180] sm:$0xff] %vm7660, %v7613
        %7686 = vst.msk [vmem:[#allocation3 + $0x190] sm:$0xff] %vm7660, %v7615
        %7687 = vst.msk [vmem:[#allocation3 + $0x1a0] sm:$0xff] %vm7660, %v7617
        %7688 = vst.msk [vmem:[#allocation3 + $0x1b0] sm:$0xff] %vm7660, %v7619
        %7689 = vst.msk [vmem:[#allocation3 + $0x1c0] sm:$0xff] %vm7660, %v7621
        %7690 = vst.msk [vmem:[#allocation3 + $0x1d0] sm:$0xff] %vm7660, %v7623
        %7691 = vst.msk [vmem:[#allocation3 + $0x1e0] sm:$0xff] %vm7660, %v7625
        %7692 = vst.msk [vmem:[#allocation3 + $0x1f0] sm:$0xff] %vm7660, %v7627
        %v7693 = vld [vmem:[%s5621 + $0x8] sm:$0xff]
        %v7694 = vld [vmem:[%s5621 + $0x10] sm:$0xff]
        %v7695 = vld [vmem:[%s5621 + $0x20] sm:$0xff]
        %v7696 = vld [vmem:[%s5621 + $0x28] sm:$0xff]
        %v7697 = vld [vmem:[%s5621 + $0x38] sm:$0xff]
        %v7698 = vld [vmem:[%s5621 + $0x40] sm:$0xff]
        %v7699 = vld [vmem:[%s5621 + $0x50] sm:$0xff]
        %v7700 = vld [vmem:[%s5621 + $0x58] sm:$0xff]
        %v7701 = vld [vmem:[%s5621 + $0x68] sm:$0xff]
        %v7702 = vld [vmem:[%s5621 + $0x70] sm:$0xff]
        %v7703 = vld [vmem:[%s5621 + $0x80] sm:$0xff]
        %v7704 = vld [vmem:[%s5621 + $0x88] sm:$0xff]
        %v7705 = vld [vmem:[%s5621 + $0x98] sm:$0xff]
        %v7706 = vld [vmem:[%s5621 + $0xa0] sm:$0xff]
        %v7707 = vld [vmem:[%s5621 + $0xb0] sm:$0xff]
        %v7708 = vld [vmem:[%s5621 + $0xb8] sm:$0xff]
        %v7709 = vld [vmem:[%s5621 + $0xc8] sm:$0xff]
        %v7710 = vld [vmem:[%s5621 + $0xd0] sm:$0xff]
        %v7711 = vld [vmem:[%s5621 + $0xe0] sm:$0xff]
        %v7712 = vld [vmem:[%s5621 + $0xe8] sm:$0xff]
        %v7713 = vld [vmem:[%s5621 + $0xf8] sm:$0xff]
        %v7714 = vld [vmem:[%s5621 + $0x100] sm:$0xff]
        %v7715 = vld [vmem:[%s5621 + $0x110] sm:$0xff]
        %v7716 = vld [vmem:[%s5621 + $0x118] sm:$0xff]
        %v7717 = vld [vmem:[%s5621 + $0x128] sm:$0xff]
        %v7718 = vld [vmem:[%s5621 + $0x130] sm:$0xff]
        %v7719 = vld [vmem:[%s5621 + $0x140] sm:$0xff]
        %v7720 = vld [vmem:[%s5621 + $0x148] sm:$0xff]
        %v7721 = vld [vmem:[%s5621 + $0x158] sm:$0xff]
        %v7722 = vld [vmem:[%s5621 + $0x160] sm:$0xff]
        %v7723 = vld [vmem:[%s5621 + $0x170] sm:$0xff]
        %v7724 = vld [vmem:[%s5621 + $0x178] sm:$0xff]
        %7757 = vrot.lane.b32.xlu0 %v7693, 80
        %v7758 = vpop.permute.xlu0 %7757
        %7759 = vrot.lane.b32.xlu0 %v7694, 80
        %v7760 = vpop.permute.xlu0 %7759
        %7761 = vrot.lane.b32.xlu0 %v7695, 80
        %v7762 = vpop.permute.xlu0 %7761
        %7763 = vrot.lane.b32.xlu0 %v7696, 80
        %v7764 = vpop.permute.xlu0 %7763
        %7765 = vrot.lane.b32.xlu0 %v7697, 80
        %v7766 = vpop.permute.xlu0 %7765
        %7767 = vrot.lane.b32.xlu0 %v7698, 80
        %v7768 = vpop.permute.xlu0 %7767
        %7769 = vrot.lane.b32.xlu0 %v7699, 80
        %v7770 = vpop.permute.xlu0 %7769
        %7771 = vrot.lane.b32.xlu0 %v7700, 80
        %v7772 = vpop.permute.xlu0 %7771
        %7773 = vrot.lane.b32.xlu0 %v7701, 80
        %v7774 = vpop.permute.xlu0 %7773
        %7775 = vrot.lane.b32.xlu0 %v7702, 80
        %v7776 = vpop.permute.xlu0 %7775
        %7777 = vrot.lane.b32.xlu0 %v7703, 80
        %v7778 = vpop.permute.xlu0 %7777
        %7779 = vrot.lane.b32.xlu0 %v7704, 80
        %v7780 = vpop.permute.xlu0 %7779
        %7781 = vrot.lane.b32.xlu0 %v7705, 80
        %v7782 = vpop.permute.xlu0 %7781
        %7783 = vrot.lane.b32.xlu0 %v7706, 80
        %v7784 = vpop.permute.xlu0 %7783
        %7785 = vrot.lane.b32.xlu0 %v7707, 80
        %v7786 = vpop.permute.xlu0 %7785
        %7787 = vrot.lane.b32.xlu0 %v7708, 80
        %v7788 = vpop.permute.xlu0 %7787
        %7789 = vrot.lane.b32.xlu0 %v7709, 80
        %v7790 = vpop.permute.xlu0 %7789
        %7791 = vrot.lane.b32.xlu0 %v7710, 80
        %v7792 = vpop.permute.xlu0 %7791
        %7793 = vrot.lane.b32.xlu0 %v7711, 80
        %v7794 = vpop.permute.xlu0 %7793
        %7795 = vrot.lane.b32.xlu0 %v7712, 80
        %v7796 = vpop.permute.xlu0 %7795
        %7797 = vrot.lane.b32.xlu0 %v7713, 80
        %v7798 = vpop.permute.xlu0 %7797
        %7799 = vrot.lane.b32.xlu0 %v7714, 80
        %v7800 = vpop.permute.xlu0 %7799
        %7801 = vrot.lane.b32.xlu0 %v7715, 80
        %v7802 = vpop.permute.xlu0 %7801
        %7803 = vrot.lane.b32.xlu0 %v7716, 80
        %v7804 = vpop.permute.xlu0 %7803
        %7805 = vrot.lane.b32.xlu0 %v7717, 80
        %v7806 = vpop.permute.xlu0 %7805
        %7807 = vrot.lane.b32.xlu0 %v7718, 80
        %v7808 = vpop.permute.xlu0 %7807
        %7809 = vrot.lane.b32.xlu0 %v7719, 80
        %v7810 = vpop.permute.xlu0 %7809
        %7811 = vrot.lane.b32.xlu0 %v7720, 80
        %v7812 = vpop.permute.xlu0 %7811
        %7813 = vrot.lane.b32.xlu0 %v7721, 80
        %v7814 = vpop.permute.xlu0 %7813
        %7815 = vrot.lane.b32.xlu0 %v7722, 80
        %v7816 = vpop.permute.xlu0 %7815
        %7817 = vrot.lane.b32.xlu0 %v7723, 80
        %v7818 = vpop.permute.xlu0 %7817
        %7819 = vrot.lane.b32.xlu0 %v7724, 80
        %v7820 = vpop.permute.xlu0 %7819
        %vm7853 = vcmask 786048
        %7854 = vst.msk [vmem:[#allocation3] sm:$0xff] %vm7853, %v7758
        %7855 = vst.msk [vmem:[#allocation3 + $0x10] sm:$0xff] %vm7853, %v7760
        %7856 = vst.msk [vmem:[#allocation3 + $0x20] sm:$0xff] %vm7853, %v7762
        %7857 = vst.msk [vmem:[#allocation3 + $0x30] sm:$0xff] %vm7853, %v7764
        %7858 = vst.msk [vmem:[#allocation3 + $0x40] sm:$0xff] %vm7853, %v7766
        %7859 = vst.msk [vmem:[#allocation3 + $0x50] sm:$0xff] %vm7853, %v7768
        %7860 = vst.msk [vmem:[#allocation3 + $0x60] sm:$0xff] %vm7853, %v7770
        %7861 = vst.msk [vmem:[#allocation3 + $0x70] sm:$0xff] %vm7853, %v7772
        %7862 = vst.msk [vmem:[#allocation3 + $0x80] sm:$0xff] %vm7853, %v7774
        %7863 = vst.msk [vmem:[#allocation3 + $0x90] sm:$0xff] %vm7853, %v7776
        %7864 = vst.msk [vmem:[#allocation3 + $0xa0] sm:$0xff] %vm7853, %v7778
        %7865 = vst.msk [vmem:[#allocation3 + $0xb0] sm:$0xff] %vm7853, %v7780
        %7866 = vst.msk [vmem:[#allocation3 + $0xc0] sm:$0xff] %vm7853, %v7782
        %7867 = vst.msk [vmem:[#allocation3 + $0xd0] sm:$0xff] %vm7853, %v7784
        %7868 = vst.msk [vmem:[#allocation3 + $0xe0] sm:$0xff] %vm7853, %v7786
        %7869 = vst.msk [vmem:[#allocation3 + $0xf0] sm:$0xff] %vm7853, %v7788
        %7870 = vst.msk [vmem:[#allocation3 + $0x100] sm:$0xff] %vm7853, %v7790
        %7871 = vst.msk [vmem:[#allocation3 + $0x110] sm:$0xff] %vm7853, %v7792
        %7872 = vst.msk [vmem:[#allocation3 + $0x120] sm:$0xff] %vm7853, %v7794
        %7873 = vst.msk [vmem:[#allocation3 + $0x130] sm:$0xff] %vm7853, %v7796
        %7874 = vst.msk [vmem:[#allocation3 + $0x140] sm:$0xff] %vm7853, %v7798
        %7875 = vst.msk [vmem:[#allocation3 + $0x150] sm:$0xff] %vm7853, %v7800
        %7876 = vst.msk [vmem:[#allocation3 + $0x160] sm:$0xff] %vm7853, %v7802
        %7877 = vst.msk [vmem:[#allocation3 + $0x170] sm:$0xff] %vm7853, %v7804
        %7878 = vst.msk [vmem:[#allocation3 + $0x180] sm:$0xff] %vm7853, %v7806
        %7879 = vst.msk [vmem:[#allocation3 + $0x190] sm:$0xff] %vm7853, %v7808
        %7880 = vst.msk [vmem:[#allocation3 + $0x1a0] sm:$0xff] %vm7853, %v7810
        %7881 = vst.msk [vmem:[#allocation3 + $0x1b0] sm:$0xff] %vm7853, %v7812
        %7882 = vst.msk [vmem:[#allocation3 + $0x1c0] sm:$0xff] %vm7853, %v7814
        %7883 = vst.msk [vmem:[#allocation3 + $0x1d0] sm:$0xff] %vm7853, %v7816
        %7884 = vst.msk [vmem:[#allocation3 + $0x1e0] sm:$0xff] %vm7853, %v7818
        %7885 = vst.msk [vmem:[#allocation3 + $0x1f0] sm:$0xff] %vm7853, %v7820
        %s7886 = scalar_lea.vmem [#allocation2], 192
        %v7887 = vld [vmem:[%s7886] sm:$0xff]
        %v7888 = vld [vmem:[%s7886 + $0x8] sm:$0xff]
        %v7889 = vld [vmem:[%s7886 + $0x18] sm:$0xff]
        %v7890 = vld [vmem:[%s7886 + $0x20] sm:$0xff]
        %v7891 = vld [vmem:[%s7886 + $0x30] sm:$0xff]
        %v7892 = vld [vmem:[%s7886 + $0x38] sm:$0xff]
        %v7893 = vld [vmem:[%s7886 + $0x48] sm:$0xff]
        %v7894 = vld [vmem:[%s7886 + $0x50] sm:$0xff]
        %v7895 = vld [vmem:[%s7886 + $0x60] sm:$0xff]
        %v7896 = vld [vmem:[%s7886 + $0x68] sm:$0xff]
        %v7897 = vld [vmem:[%s7886 + $0x78] sm:$0xff]
        %v7898 = vld [vmem:[%s7886 + $0x80] sm:$0xff]
        %v7899 = vld [vmem:[%s7886 + $0x90] sm:$0xff]
        %v7900 = vld [vmem:[%s7886 + $0x98] sm:$0xff]
        %v7901 = vld [vmem:[%s7886 + $0xa8] sm:$0xff]
        %v7902 = vld [vmem:[%s7886 + $0xb0] sm:$0xff]
        %v7903 = vld [vmem:[%s7886 + $0xc0] sm:$0xff]
        %v7904 = vld [vmem:[%s7886 + $0xc8] sm:$0xff]
        %v7905 = vld [vmem:[%s7886 + $0xd8] sm:$0xff]
        %v7906 = vld [vmem:[%s7886 + $0xe0] sm:$0xff]
        %v7907 = vld [vmem:[%s7886 + $0xf0] sm:$0xff]
        %v7908 = vld [vmem:[%s7886 + $0xf8] sm:$0xff]
        %v7909 = vld [vmem:[%s7886 + $0x108] sm:$0xff]
        %v7910 = vld [vmem:[%s7886 + $0x110] sm:$0xff]
        %v7911 = vld [vmem:[%s7886 + $0x120] sm:$0xff]
        %v7912 = vld [vmem:[%s7886 + $0x128] sm:$0xff]
        %v7913 = vld [vmem:[%s7886 + $0x138] sm:$0xff]
        %v7914 = vld [vmem:[%s7886 + $0x140] sm:$0xff]
        %v7915 = vld [vmem:[%s7886 + $0x150] sm:$0xff]
        %v7916 = vld [vmem:[%s7886 + $0x158] sm:$0xff]
        %v7917 = vld [vmem:[%s7886 + $0x168] sm:$0xff]
        %v7918 = vld [vmem:[%s7886 + $0x170] sm:$0xff]
        %7951 = vrot.lane.b32.xlu0 %v7887, 96
        %v7952 = vpop.permute.xlu0 %7951
        %7953 = vrot.lane.b32.xlu0 %v7888, 96
        %v7954 = vpop.permute.xlu0 %7953
        %7955 = vrot.lane.b32.xlu0 %v7889, 96
        %v7956 = vpop.permute.xlu0 %7955
        %7957 = vrot.lane.b32.xlu0 %v7890, 96
        %v7958 = vpop.permute.xlu0 %7957
        %7959 = vrot.lane.b32.xlu0 %v7891, 96
        %v7960 = vpop.permute.xlu0 %7959
        %7961 = vrot.lane.b32.xlu0 %v7892, 96
        %v7962 = vpop.permute.xlu0 %7961
        %7963 = vrot.lane.b32.xlu0 %v7893, 96
        %v7964 = vpop.permute.xlu0 %7963
        %7965 = vrot.lane.b32.xlu0 %v7894, 96
        %v7966 = vpop.permute.xlu0 %7965
        %7967 = vrot.lane.b32.xlu0 %v7895, 96
        %v7968 = vpop.permute.xlu0 %7967
        %7969 = vrot.lane.b32.xlu0 %v7896, 96
        %v7970 = vpop.permute.xlu0 %7969
        %7971 = vrot.lane.b32.xlu0 %v7897, 96
        %v7972 = vpop.permute.xlu0 %7971
        %7973 = vrot.lane.b32.xlu0 %v7898, 96
        %v7974 = vpop.permute.xlu0 %7973
        %7975 = vrot.lane.b32.xlu0 %v7899, 96
        %v7976 = vpop.permute.xlu0 %7975
        %7977 = vrot.lane.b32.xlu0 %v7900, 96
        %v7978 = vpop.permute.xlu0 %7977
        %7979 = vrot.lane.b32.xlu0 %v7901, 96
        %v7980 = vpop.permute.xlu0 %7979
        %7981 = vrot.lane.b32.xlu0 %v7902, 96
        %v7982 = vpop.permute.xlu0 %7981
        %7983 = vrot.lane.b32.xlu0 %v7903, 96
        %v7984 = vpop.permute.xlu0 %7983
        %7985 = vrot.lane.b32.xlu0 %v7904, 96
        %v7986 = vpop.permute.xlu0 %7985
        %7987 = vrot.lane.b32.xlu0 %v7905, 96
        %v7988 = vpop.permute.xlu0 %7987
        %7989 = vrot.lane.b32.xlu0 %v7906, 96
        %v7990 = vpop.permute.xlu0 %7989
        %7991 = vrot.lane.b32.xlu0 %v7907, 96
        %v7992 = vpop.permute.xlu0 %7991
        %7993 = vrot.lane.b32.xlu0 %v7908, 96
        %v7994 = vpop.permute.xlu0 %7993
        %7995 = vrot.lane.b32.xlu0 %v7909, 96
        %v7996 = vpop.permute.xlu0 %7995
        %7997 = vrot.lane.b32.xlu0 %v7910, 96
        %v7998 = vpop.permute.xlu0 %7997
        %7999 = vrot.lane.b32.xlu0 %v7911, 96
        %v8000 = vpop.permute.xlu0 %7999
        %8001 = vrot.lane.b32.xlu0 %v7912, 96
        %v8002 = vpop.permute.xlu0 %8001
        %8003 = vrot.lane.b32.xlu0 %v7913, 96
        %v8004 = vpop.permute.xlu0 %8003
        %8005 = vrot.lane.b32.xlu0 %v7914, 96
        %v8006 = vpop.permute.xlu0 %8005
        %8007 = vrot.lane.b32.xlu0 %v7915, 96
        %v8008 = vpop.permute.xlu0 %8007
        %8009 = vrot.lane.b32.xlu0 %v7916, 96
        %v8010 = vpop.permute.xlu0 %8009
        %8011 = vrot.lane.b32.xlu0 %v7917, 96
        %v8012 = vpop.permute.xlu0 %8011
        %8013 = vrot.lane.b32.xlu0 %v7918, 96
        %v8014 = vpop.permute.xlu0 %8013
        %vm8047 = vcmask 917248
        %8048 = vst.msk [vmem:[#allocation3] sm:$0xff] %vm8047, %v7952
        %8049 = vst.msk [vmem:[#allocation3 + $0x10] sm:$0xff] %vm8047, %v7954
        %8050 = vst.msk [vmem:[#allocation3 + $0x20] sm:$0xff] %vm8047, %v7956
        %8051 = vst.msk [vmem:[#allocation3 + $0x30] sm:$0xff] %vm8047, %v7958
        %8052 = vst.msk [vmem:[#allocation3 + $0x40] sm:$0xff] %vm8047, %v7960
        %8053 = vst.msk [vmem:[#allocation3 + $0x50] sm:$0xff] %vm8047, %v7962
        %8054 = vst.msk [vmem:[#allocation3 + $0x60] sm:$0xff] %vm8047, %v7964
        %8055 = vst.msk [vmem:[#allocation3 + $0x70] sm:$0xff] %vm8047, %v7966
        %8056 = vst.msk [vmem:[#allocation3 + $0x80] sm:$0xff] %vm8047, %v7968
        %8057 = vst.msk [vmem:[#allocation3 + $0x90] sm:$0xff] %vm8047, %v7970
        %8058 = vst.msk [vmem:[#allocation3 + $0xa0] sm:$0xff] %vm8047, %v7972
        %8059 = vst.msk [vmem:[#allocation3 + $0xb0] sm:$0xff] %vm8047, %v7974
        %8060 = vst.msk [vmem:[#allocation3 + $0xc0] sm:$0xff] %vm8047, %v7976
        %8061 = vst.msk [vmem:[#allocation3 + $0xd0] sm:$0xff] %vm8047, %v7978
        %8062 = vst.msk [vmem:[#allocation3 + $0xe0] sm:$0xff] %vm8047, %v7980
        %8063 = vst.msk [vmem:[#allocation3 + $0xf0] sm:$0xff] %vm8047, %v7982
        %8064 = vst.msk [vmem:[#allocation3 + $0x100] sm:$0xff] %vm8047, %v7984
        %8065 = vst.msk [vmem:[#allocation3 + $0x110] sm:$0xff] %vm8047, %v7986
        %8066 = vst.msk [vmem:[#allocation3 + $0x120] sm:$0xff] %vm8047, %v7988
        %8067 = vst.msk [vmem:[#allocation3 + $0x130] sm:$0xff] %vm8047, %v7990
        %8068 = vst.msk [vmem:[#allocation3 + $0x140] sm:$0xff] %vm8047, %v7992
        %8069 = vst.msk [vmem:[#allocation3 + $0x150] sm:$0xff] %vm8047, %v7994
        %8070 = vst.msk [vmem:[#allocation3 + $0x160] sm:$0xff] %vm8047, %v7996
        %8071 = vst.msk [vmem:[#allocation3 + $0x170] sm:$0xff] %vm8047, %v7998
        %8072 = vst.msk [vmem:[#allocation3 + $0x180] sm:$0xff] %vm8047, %v8000
        %8073 = vst.msk [vmem:[#allocation3 + $0x190] sm:$0xff] %vm8047, %v8002
        %8074 = vst.msk [vmem:[#allocation3 + $0x1a0] sm:$0xff] %vm8047, %v8004
        %8075 = vst.msk [vmem:[#allocation3 + $0x1b0] sm:$0xff] %vm8047, %v8006
        %8076 = vst.msk [vmem:[#allocation3 + $0x1c0] sm:$0xff] %vm8047, %v8008
        %8077 = vst.msk [vmem:[#allocation3 + $0x1d0] sm:$0xff] %vm8047, %v8010
        %8078 = vst.msk [vmem:[#allocation3 + $0x1e0] sm:$0xff] %vm8047, %v8012
        %8079 = vst.msk [vmem:[#allocation3 + $0x1f0] sm:$0xff] %vm8047, %v8014
        %v8080 = vld [vmem:[%s7886 + $0x4] sm:$0xff]
        %v8081 = vld [vmem:[%s7886 + $0xc] sm:$0xff]
        %v8082 = vld [vmem:[%s7886 + $0x1c] sm:$0xff]
        %v8083 = vld [vmem:[%s7886 + $0x24] sm:$0xff]
        %v8084 = vld [vmem:[%s7886 + $0x34] sm:$0xff]
        %v8085 = vld [vmem:[%s7886 + $0x3c] sm:$0xff]
        %v8086 = vld [vmem:[%s7886 + $0x4c] sm:$0xff]
        %v8087 = vld [vmem:[%s7886 + $0x54] sm:$0xff]
        %v8088 = vld [vmem:[%s7886 + $0x64] sm:$0xff]
        %v8089 = vld [vmem:[%s7886 + $0x6c] sm:$0xff]
        %v8090 = vld [vmem:[%s7886 + $0x7c] sm:$0xff]
        %v8091 = vld [vmem:[%s7886 + $0x84] sm:$0xff]
        %v8092 = vld [vmem:[%s7886 + $0x94] sm:$0xff]
        %v8093 = vld [vmem:[%s7886 + $0x9c] sm:$0xff]
        %v8094 = vld [vmem:[%s7886 + $0xac] sm:$0xff]
        %v8095 = vld [vmem:[%s7886 + $0xb4] sm:$0xff]
        %v8096 = vld [vmem:[%s7886 + $0xc4] sm:$0xff]
        %v8097 = vld [vmem:[%s7886 + $0xcc] sm:$0xff]
        %v8098 = vld [vmem:[%s7886 + $0xdc] sm:$0xff]
        %v8099 = vld [vmem:[%s7886 + $0xe4] sm:$0xff]
        %v8100 = vld [vmem:[%s7886 + $0xf4] sm:$0xff]
        %v8101 = vld [vmem:[%s7886 + $0xfc] sm:$0xff]
        %v8102 = vld [vmem:[%s7886 + $0x10c] sm:$0xff]
        %v8103 = vld [vmem:[%s7886 + $0x114] sm:$0xff]
        %v8104 = vld [vmem:[%s7886 + $0x124] sm:$0xff]
        %v8105 = vld [vmem:[%s7886 + $0x12c] sm:$0xff]
        %v8106 = vld [vmem:[%s7886 + $0x13c] sm:$0xff]
        %v8107 = vld [vmem:[%s7886 + $0x144] sm:$0xff]
        %v8108 = vld [vmem:[%s7886 + $0x154] sm:$0xff]
        %v8109 = vld [vmem:[%s7886 + $0x15c] sm:$0xff]
        %v8110 = vld [vmem:[%s7886 + $0x16c] sm:$0xff]
        %v8111 = vld [vmem:[%s7886 + $0x174] sm:$0xff]
        %8144 = vrot.lane.b32.xlu0 %v8080, 112
        %v8145 = vpop.permute.xlu0 %8144
        %8146 = vrot.lane.b32.xlu0 %v8081, 112
        %v8147 = vpop.permute.xlu0 %8146
        %8148 = vrot.lane.b32.xlu0 %v8082, 112
        %v8149 = vpop.permute.xlu0 %8148
        %8150 = vrot.lane.b32.xlu0 %v8083, 112
        %v8151 = vpop.permute.xlu0 %8150
        %8152 = vrot.lane.b32.xlu0 %v8084, 112
        %v8153 = vpop.permute.xlu0 %8152
        %8154 = vrot.lane.b32.xlu0 %v8085, 112
        %v8155 = vpop.permute.xlu0 %8154
        %8156 = vrot.lane.b32.xlu0 %v8086, 112
        %v8157 = vpop.permute.xlu0 %8156
        %8158 = vrot.lane.b32.xlu0 %v8087, 112
        %v8159 = vpop.permute.xlu0 %8158
        %8160 = vrot.lane.b32.xlu0 %v8088, 112
        %v8161 = vpop.permute.xlu0 %8160
        %8162 = vrot.lane.b32.xlu0 %v8089, 112
        %v8163 = vpop.permute.xlu0 %8162
        %8164 = vrot.lane.b32.xlu0 %v8090, 112
        %v8165 = vpop.permute.xlu0 %8164
        %8166 = vrot.lane.b32.xlu0 %v8091, 112
        %v8167 = vpop.permute.xlu0 %8166
        %8168 = vrot.lane.b32.xlu0 %v8092, 112
        %v8169 = vpop.permute.xlu0 %8168
        %8170 = vrot.lane.b32.xlu0 %v8093, 112
        %v8171 = vpop.permute.xlu0 %8170
        %8172 = vrot.lane.b32.xlu0 %v8094, 112
        %v8173 = vpop.permute.xlu0 %8172
        %8174 = vrot.lane.b32.xlu0 %v8095, 112
        %v8175 = vpop.permute.xlu0 %8174
        %8176 = vrot.lane.b32.xlu0 %v8096, 112
        %v8177 = vpop.permute.xlu0 %8176
        %8178 = vrot.lane.b32.xlu0 %v8097, 112
        %v8179 = vpop.permute.xlu0 %8178
        %8180 = vrot.lane.b32.xlu0 %v8098, 112
        %v8181 = vpop.permute.xlu0 %8180
        %8182 = vrot.lane.b32.xlu0 %v8099, 112
        %v8183 = vpop.permute.xlu0 %8182
        %8184 = vrot.lane.b32.xlu0 %v8100, 112
        %v8185 = vpop.permute.xlu0 %8184
        %8186 = vrot.lane.b32.xlu0 %v8101, 112
        %v8187 = vpop.permute.xlu0 %8186
        %8188 = vrot.lane.b32.xlu0 %v8102, 112
        %v8189 = vpop.permute.xlu0 %8188
        %8190 = vrot.lane.b32.xlu0 %v8103, 112
        %v8191 = vpop.permute.xlu0 %8190
        %8192 = vrot.lane.b32.xlu0 %v8104, 112
        %v8193 = vpop.permute.xlu0 %8192
        %8194 = vrot.lane.b32.xlu0 %v8105, 112
        %v8195 = vpop.permute.xlu0 %8194
        %8196 = vrot.lane.b32.xlu0 %v8106, 112
        %v8197 = vpop.permute.xlu0 %8196
        %8198 = vrot.lane.b32.xlu0 %v8107, 112
        %v8199 = vpop.permute.xlu0 %8198
        %8200 = vrot.lane.b32.xlu0 %v8108, 112
        %v8201 = vpop.permute.xlu0 %8200
        %8202 = vrot.lane.b32.xlu0 %v8109, 112
        %v8203 = vpop.permute.xlu0 %8202
        %8204 = vrot.lane.b32.xlu0 %v8110, 112
        %v8205 = vpop.permute.xlu0 %8204
        %8206 = vrot.lane.b32.xlu0 %v8111, 112
        %v8207 = vpop.permute.xlu0 %8206
        %vm8240 = vcmask 1048448
        %8241 = vst.msk [vmem:[#allocation3] sm:$0xff] %vm8240, %v8145
        %8242 = vst.msk [vmem:[#allocation3 + $0x10] sm:$0xff] %vm8240, %v8147
        %8243 = vst.msk [vmem:[#allocation3 + $0x20] sm:$0xff] %vm8240, %v8149
        %8244 = vst.msk [vmem:[#allocation3 + $0x30] sm:$0xff] %vm8240, %v8151
        %8245 = vst.msk [vmem:[#allocation3 + $0x40] sm:$0xff] %vm8240, %v8153
        %8246 = vst.msk [vmem:[#allocation3 + $0x50] sm:$0xff] %vm8240, %v8155
        %8247 = vst.msk [vmem:[#allocation3 + $0x60] sm:$0xff] %vm8240, %v8157
        %8248 = vst.msk [vmem:[#allocation3 + $0x70] sm:$0xff] %vm8240, %v8159
        %8249 = vst.msk [vmem:[#allocation3 + $0x80] sm:$0xff] %vm8240, %v8161
        %8250 = vst.msk [vmem:[#allocation3 + $0x90] sm:$0xff] %vm8240, %v8163
        %8251 = vst.msk [vmem:[#allocation3 + $0xa0] sm:$0xff] %vm8240, %v8165
        %8252 = vst.msk [vmem:[#allocation3 + $0xb0] sm:$0xff] %vm8240, %v8167
        %8253 = vst.msk [vmem:[#allocation3 + $0xc0] sm:$0xff] %vm8240, %v8169
        %8254 = vst.msk [vmem:[#allocation3 + $0xd0] sm:$0xff] %vm8240, %v8171
        %8255 = vst.msk [vmem:[#allocation3 + $0xe0] sm:$0xff] %vm8240, %v8173
        %8256 = vst.msk [vmem:[#allocation3 + $0xf0] sm:$0xff] %vm8240, %v8175
        %8257 = vst.msk [vmem:[#allocation3 + $0x100] sm:$0xff] %vm8240, %v8177
        %8258 = vst.msk [vmem:[#allocation3 + $0x110] sm:$0xff] %vm8240, %v8179
        %8259 = vst.msk [vmem:[#allocation3 + $0x120] sm:$0xff] %vm8240, %v8181
        %8260 = vst.msk [vmem:[#allocation3 + $0x130] sm:$0xff] %vm8240, %v8183
        %8261 = vst.msk [vmem:[#allocation3 + $0x140] sm:$0xff] %vm8240, %v8185
        %8262 = vst.msk [vmem:[#allocation3 + $0x150] sm:$0xff] %vm8240, %v8187
        %8263 = vst.msk [vmem:[#allocation3 + $0x160] sm:$0xff] %vm8240, %v8189
        %8264 = vst.msk [vmem:[#allocation3 + $0x170] sm:$0xff] %vm8240, %v8191
        %8265 = vst.msk [vmem:[#allocation3 + $0x180] sm:$0xff] %vm8240, %v8193
        %8266 = vst.msk [vmem:[#allocation3 + $0x190] sm:$0xff] %vm8240, %v8195
        %8267 = vst.msk [vmem:[#allocation3 + $0x1a0] sm:$0xff] %vm8240, %v8197
        %8268 = vst.msk [vmem:[#allocation3 + $0x1b0] sm:$0xff] %vm8240, %v8199
        %8269 = vst.msk [vmem:[#allocation3 + $0x1c0] sm:$0xff] %vm8240, %v8201
        %8270 = vst.msk [vmem:[#allocation3 + $0x1d0] sm:$0xff] %vm8240, %v8203
        %8271 = vst.msk [vmem:[#allocation3 + $0x1e0] sm:$0xff] %vm8240, %v8205
        %8272 = vst.msk [vmem:[#allocation3 + $0x1f0] sm:$0xff] %vm8240, %v8207
        %v8273 = vld [vmem:[%s7886 + $0x8] sm:$0xff]
        %v8274 = vld [vmem:[%s7886 + $0x10] sm:$0xff]
        %v8275 = vld [vmem:[%s7886 + $0x20] sm:$0xff]
        %v8276 = vld [vmem:[%s7886 + $0x28] sm:$0xff]
        %v8277 = vld [vmem:[%s7886 + $0x38] sm:$0xff]
        %v8278 = vld [vmem:[%s7886 + $0x40] sm:$0xff]
        %v8279 = vld [vmem:[%s7886 + $0x50] sm:$0xff]
        %v8280 = vld [vmem:[%s7886 + $0x58] sm:$0xff]
        %v8281 = vld [vmem:[%s7886 + $0x68] sm:$0xff]
        %v8282 = vld [vmem:[%s7886 + $0x70] sm:$0xff]
        %v8283 = vld [vmem:[%s7886 + $0x80] sm:$0xff]
        %v8284 = vld [vmem:[%s7886 + $0x88] sm:$0xff]
        %v8285 = vld [vmem:[%s7886 + $0x98] sm:$0xff]
        %v8286 = vld [vmem:[%s7886 + $0xa0] sm:$0xff]
        %v8287 = vld [vmem:[%s7886 + $0xb0] sm:$0xff]
        %v8288 = vld [vmem:[%s7886 + $0xb8] sm:$0xff]
        %v8289 = vld [vmem:[%s7886 + $0xc8] sm:$0xff]
        %v8290 = vld [vmem:[%s7886 + $0xd0] sm:$0xff]
        %v8291 = vld [vmem:[%s7886 + $0xe0] sm:$0xff]
        %v8292 = vld [vmem:[%s7886 + $0xe8] sm:$0xff]
        %v8293 = vld [vmem:[%s7886 + $0xf8] sm:$0xff]
        %v8294 = vld [vmem:[%s7886 + $0x100] sm:$0xff]
        %v8295 = vld [vmem:[%s7886 + $0x110] sm:$0xff]
        %v8296 = vld [vmem:[%s7886 + $0x118] sm:$0xff]
        %v8297 = vld [vmem:[%s7886 + $0x128] sm:$0xff]
        %v8298 = vld [vmem:[%s7886 + $0x130] sm:$0xff]
        %v8299 = vld [vmem:[%s7886 + $0x140] sm:$0xff]
        %v8300 = vld [vmem:[%s7886 + $0x148] sm:$0xff]
        %v8301 = vld [vmem:[%s7886 + $0x158] sm:$0xff]
        %v8302 = vld [vmem:[%s7886 + $0x160] sm:$0xff]
        %v8303 = vld [vmem:[%s7886 + $0x170] sm:$0xff]
        %v8304 = vld [vmem:[%s7886 + $0x178] sm:$0xff]
        %8305 = vst.msk [vmem:[#allocation3 + $0x8] sm:$0xff] %vm6599, %v8273
        %8306 = vst.msk [vmem:[#allocation3 + $0x18] sm:$0xff] %vm6599, %v8274
        %8307 = vst.msk [vmem:[#allocation3 + $0x28] sm:$0xff] %vm6599, %v8275
        %8308 = vst.msk [vmem:[#allocation3 + $0x38] sm:$0xff] %vm6599, %v8276
        %8309 = vst.msk [vmem:[#allocation3 + $0x48] sm:$0xff] %vm6599, %v8277
        %8310 = vst.msk [vmem:[#allocation3 + $0x58] sm:$0xff] %vm6599, %v8278
        %8311 = vst.msk [vmem:[#allocation3 + $0x68] sm:$0xff] %vm6599, %v8279
        %8312 = vst.msk [vmem:[#allocation3 + $0x78] sm:$0xff] %vm6599, %v8280
        %8313 = vst.msk [vmem:[#allocation3 + $0x88] sm:$0xff] %vm6599, %v8281
        %8314 = vst.msk [vmem:[#allocation3 + $0x98] sm:$0xff] %vm6599, %v8282
        %8315 = vst.msk [vmem:[#allocation3 + $0xa8] sm:$0xff] %vm6599, %v8283
        %8316 = vst.msk [vmem:[#allocation3 + $0xb8] sm:$0xff] %vm6599, %v8284
        %8317 = vst.msk [vmem:[#allocation3 + $0xc8] sm:$0xff] %vm6599, %v8285
        %8318 = vst.msk [vmem:[#allocation3 + $0xd8] sm:$0xff] %vm6599, %v8286
        %8319 = vst.msk [vmem:[#allocation3 + $0xe8] sm:$0xff] %vm6599, %v8287
        %8320 = vst.msk [vmem:[#allocation3 + $0xf8] sm:$0xff] %vm6599, %v8288
        %8321 = vst.msk [vmem:[#allocation3 + $0x108] sm:$0xff] %vm6599, %v8289
        %8322 = vst.msk [vmem:[#allocation3 + $0x118] sm:$0xff] %vm6599, %v8290
        %8323 = vst.msk [vmem:[#allocation3 + $0x128] sm:$0xff] %vm6599, %v8291
        %8324 = vst.msk [vmem:[#allocation3 + $0x138] sm:$0xff] %vm6599, %v8292
        %8325 = vst.msk [vmem:[#allocation3 + $0x148] sm:$0xff] %vm6599, %v8293
        %8326 = vst.msk [vmem:[#allocation3 + $0x158] sm:$0xff] %vm6599, %v8294
        %8327 = vst.msk [vmem:[#allocation3 + $0x168] sm:$0xff] %vm6599, %v8295
        %8328 = vst.msk [vmem:[#allocation3 + $0x178] sm:$0xff] %vm6599, %v8296
        %8329 = vst.msk [vmem:[#allocation3 + $0x188] sm:$0xff] %vm6599, %v8297
        %8330 = vst.msk [vmem:[#allocation3 + $0x198] sm:$0xff] %vm6599, %v8298
        %8331 = vst.msk [vmem:[#allocation3 + $0x1a8] sm:$0xff] %vm6599, %v8299
        %8332 = vst.msk [vmem:[#allocation3 + $0x1b8] sm:$0xff] %vm6599, %v8300
        %8333 = vst.msk [vmem:[#allocation3 + $0x1c8] sm:$0xff] %vm6599, %v8301
        %8334 = vst.msk [vmem:[#allocation3 + $0x1d8] sm:$0xff] %vm6599, %v8302
        %8335 = vst.msk [vmem:[#allocation3 + $0x1e8] sm:$0xff] %vm6599, %v8303
        %8336 = vst.msk [vmem:[#allocation3 + $0x1f8] sm:$0xff] %vm6599, %v8304
        %v8337 = vld [vmem:[#allocation3] sm:$0xff]
        %v8338 = vld [vmem:[#allocation3 + $0x8] sm:$0xff]
        %v8339 = vld [vmem:[#allocation3 + $0x10] sm:$0xff]
        %v8340 = vld [vmem:[#allocation3 + $0x18] sm:$0xff]
        %v8341 = vld [vmem:[#allocation3 + $0x20] sm:$0xff]
        %v8342 = vld [vmem:[#allocation3 + $0x28] sm:$0xff]
        %v8343 = vld [vmem:[#allocation3 + $0x30] sm:$0xff]
        %v8344 = vld [vmem:[#allocation3 + $0x38] sm:$0xff]
        %v8345 = vld [vmem:[#allocation3 + $0x40] sm:$0xff]
        %v8346 = vld [vmem:[#allocation3 + $0x48] sm:$0xff]
        %v8347 = vld [vmem:[#allocation3 + $0x50] sm:$0xff]
        %v8348 = vld [vmem:[#allocation3 + $0x58] sm:$0xff]
        %v8349 = vld [vmem:[#allocation3 + $0x60] sm:$0xff]
        %v8350 = vld [vmem:[#allocation3 + $0x68] sm:$0xff]
        %v8351 = vld [vmem:[#allocation3 + $0x70] sm:$0xff]
        %v8352 = vld [vmem:[#allocation3 + $0x78] sm:$0xff]
        %v8353 = vld [vmem:[#allocation3 + $0x80] sm:$0xff]
        %v8354 = vld [vmem:[#allocation3 + $0x88] sm:$0xff]
        %v8355 = vld [vmem:[#allocation3 + $0x90] sm:$0xff]
        %v8356 = vld [vmem:[#allocation3 + $0x98] sm:$0xff]
        %v8357 = vld [vmem:[#allocation3 + $0xa0] sm:$0xff]
        %v8358 = vld [vmem:[#allocation3 + $0xa8] sm:$0xff]
        %v8359 = vld [vmem:[#allocation3 + $0xb0] sm:$0xff]
        %v8360 = vld [vmem:[#allocation3 + $0xb8] sm:$0xff]
        %v8361 = vld [vmem:[#allocation3 + $0xc0] sm:$0xff]
        %v8362 = vld [vmem:[#allocation3 + $0xc8] sm:$0xff]
        %v8363 = vld [vmem:[#allocation3 + $0xd0] sm:$0xff]
        %v8364 = vld [vmem:[#allocation3 + $0xd8] sm:$0xff]
        %v8365 = vld [vmem:[#allocation3 + $0xe0] sm:$0xff]
        %v8366 = vld [vmem:[#allocation3 + $0xe8] sm:$0xff]
        %v8367 = vld [vmem:[#allocation3 + $0xf0] sm:$0xff]
        %v8368 = vld [vmem:[#allocation3 + $0xf8] sm:$0xff]
        %v8369 = vld [vmem:[#allocation3 + $0x100] sm:$0xff]
        %v8370 = vld [vmem:[#allocation3 + $0x108] sm:$0xff]
        %v8371 = vld [vmem:[#allocation3 + $0x110] sm:$0xff]
        %v8372 = vld [vmem:[#allocation3 + $0x118] sm:$0xff]
        %v8373 = vld [vmem:[#allocation3 + $0x120] sm:$0xff]
        %v8374 = vld [vmem:[#allocation3 + $0x128] sm:$0xff]
        %v8375 = vld [vmem:[#allocation3 + $0x130] sm:$0xff]
        %v8376 = vld [vmem:[#allocation3 + $0x138] sm:$0xff]
        %v8377 = vld [vmem:[#allocation3 + $0x140] sm:$0xff]
        %v8378 = vld [vmem:[#allocation3 + $0x148] sm:$0xff]
        %v8379 = vld [vmem:[#allocation3 + $0x150] sm:$0xff]
        %v8380 = vld [vmem:[#allocation3 + $0x158] sm:$0xff]
        %v8381 = vld [vmem:[#allocation3 + $0x160] sm:$0xff]
        %v8382 = vld [vmem:[#allocation3 + $0x168] sm:$0xff]
        %v8383 = vld [vmem:[#allocation3 + $0x170] sm:$0xff]
        %v8384 = vld [vmem:[#allocation3 + $0x178] sm:$0xff]
        %v8385 = vld [vmem:[#allocation3 + $0x180] sm:$0xff]
        %v8386 = vld [vmem:[#allocation3 + $0x188] sm:$0xff]
        %v8387 = vld [vmem:[#allocation3 + $0x190] sm:$0xff]
        %v8388 = vld [vmem:[#allocation3 + $0x198] sm:$0xff]
        %v8389 = vld [vmem:[#allocation3 + $0x1a0] sm:$0xff]
        %v8390 = vld [vmem:[#allocation3 + $0x1a8] sm:$0xff]
        %v8391 = vld [vmem:[#allocation3 + $0x1b0] sm:$0xff]
        %v8392 = vld [vmem:[#allocation3 + $0x1b8] sm:$0xff]
        %v8393 = vld [vmem:[#allocation3 + $0x1c0] sm:$0xff]
        %v8394 = vld [vmem:[#allocation3 + $0x1c8] sm:$0xff]
        %v8395 = vld [vmem:[#allocation3 + $0x1d0] sm:$0xff]
        %v8396 = vld [vmem:[#allocation3 + $0x1d8] sm:$0xff]
        %v8397 = vld [vmem:[#allocation3 + $0x1e0] sm:$0xff]
        %v8398 = vld [vmem:[#allocation3 + $0x1e8] sm:$0xff]
        %v8399 = vld [vmem:[#allocation3 + $0x1f0] sm:$0xff]
        %v8400 = vld [vmem:[#allocation3 + $0x1f8] sm:$0xff]
        %v8401 = vld [vmem:[%s1 + $0xb8] sm:$0xff]
        %v8402 = vld [vmem:[%s1 + $0xc0] sm:$0xff]
        %v8403 = vld [vmem:[%s1 + $0xc8] sm:$0xff]
        %v8404 = vld [vmem:[%s1 + $0xd0] sm:$0xff]
        %v8405 = vld [vmem:[%s1 + $0xd8] sm:$0xff]
        %v8406 = vld [vmem:[%s1 + $0xe0] sm:$0xff]
        %v8407 = vld [vmem:[%s1 + $0xe8] sm:$0xff]
        %v8408 = vld [vmem:[%s1 + $0xf0] sm:$0xff]
        %v8409 = vld [vmem:[%s1 + $0xf8] sm:$0xff]
        %v8410 = vld [vmem:[%s1 + $0x100] sm:$0xff]
        %v8411 = vld [vmem:[%s1 + $0x108] sm:$0xff]
        %v8412 = vld [vmem:[%s1 + $0x110] sm:$0xff]
        %v8413 = vld [vmem:[%s1 + $0x118] sm:$0xff]
        %v8414 = vld [vmem:[%s1 + $0x120] sm:$0xff]
        %v8415 = vld [vmem:[%s1 + $0x128] sm:$0xff]
        %v8416 = vld [vmem:[%s1 + $0x130] sm:$0xff]
        %v8417 = vld [vmem:[%s1 + $0x138] sm:$0xff]
        %v8418 = vld [vmem:[%s1 + $0x140] sm:$0xff]
        %v8419 = vld [vmem:[%s2 + $0x3] sm:$0x1]
        %v8421 = vlaneseq
        %v8422 = vshrl.u32 %v8421, 7
        %v8423 = vsub.s32 0, %v8422
        %v8424 = vrot.slane %v8419, %v8423
        %v8427 = vsel %vm6599, %v8338, 0
        %v8430 = vsel %vm6599, %v8340, 0
        %v8433 = vsel %vm6599, %v8342, 0
        %v8436 = vsel %vm6599, %v8344, 0
        %v8439 = vsel %vm6599, %v8346, 0
        %v8442 = vsel %vm6599, %v8348, 0
        %v8445 = vsel %vm6599, %v8350, 0
        %v8448 = vsel %vm6599, %v8352, 0
        %v8451 = vsel %vm6599, %v8354, 0
        %v8454 = vsel %vm6599, %v8356, 0
        %v8457 = vsel %vm6599, %v8358, 0
        %v8460 = vsel %vm6599, %v8360, 0
        %v8463 = vsel %vm6599, %v8362, 0
        %v8466 = vsel %vm6599, %v8364, 0
        %v8469 = vsel %vm6599, %v8366, 0
        %v8472 = vsel %vm6599, %v8368, 0
        %v8475 = vsel %vm6599, %v8370, 0
        %v8478 = vsel %vm6599, %v8372, 0
        %v8481 = vsel %vm6599, %v8374, 0
        %v8484 = vsel %vm6599, %v8376, 0
        %v8487 = vsel %vm6599, %v8378, 0
        %v8490 = vsel %vm6599, %v8380, 0
        %v8493 = vsel %vm6599, %v8382, 0
        %v8496 = vsel %vm6599, %v8384, 0
        %v8499 = vsel %vm6599, %v8386, 0
        %v8502 = vsel %vm6599, %v8388, 0
        %v8505 = vsel %vm6599, %v8390, 0
        %v8508 = vsel %vm6599, %v8392, 0
        %v8511 = vsel %vm6599, %v8394, 0
        %v8514 = vsel %vm6599, %v8396, 0
        %v8517 = vsel %vm6599, %v8398, 0
        %v8520 = vsel %vm6599, %v8400, 0
        %8522 = vmatprep.subr.mxu0 0.0
        %8523 = vmatpush1.msra.mxu0 %v8416
        %8524 = vmatprep.subr.mxu0 0.0
        %8525 = vmatpush1.msra.mxu0 %v8415
        %8526 = vmatprep.subr.mxu0 0.0
        %8527 = vmatpush1.msra.mxu0 %v8414
        %8528 = vmatprep.subr.mxu0 0.0
        %8529 = vmatpush1.msra.mxu0 %v8413
        %8530 = vmatprep.subr.mxu0 0.0
        %8531 = vmatpush1.msra.mxu0 %v8412
        %8532 = vmatprep.subr.mxu0 0.0
        %8533 = vmatpush1.msra.mxu0 %v8411
        %8534 = vmatprep.subr.mxu0 0.0
        %8535 = vmatpush1.msra.mxu0 %v8410
        %8536 = vmatprep.subr.mxu0 0.0
        %8537 = vmatpush1.msra.mxu0 %v8409
        %8538 = vmatprep.subr.mxu0 0.0
        %8539 = vmatpush1.msra.mxu0 %v8408
        %8540 = vmatprep.subr.mxu0 0.0
        %8541 = vmatpush1.msra.mxu0 %v8407
        %8542 = vmatprep.subr.mxu0 0.0
        %8543 = vmatpush1.msra.mxu0 %v8406
        %8544 = vmatprep.subr.mxu0 0.0
        %8545 = vmatpush1.msra.mxu0 %v8405
        %8546 = vmatprep.subr.mxu0 0.0
        %8547 = vmatpush1.msra.mxu0 %v8404
        %8548 = vmatprep.subr.mxu0 0.0
        %8549 = vmatpush1.msra.mxu0 %v8403
        %8550 = vmatprep.subr.mxu0 0.0
        %8551 = vmatpush1.msra.mxu0 %v8402
        %8552 = vmatprep.subr.mxu0 0.0
        %8553 = vmatpush1.msra.mxu0 %v8401
        %8554 = vmatprep.subr.mxu0 0.0
        %8555 = vmatpush2.msra.mxu0 0.0
        %8556 = vmatprep.subr.mxu0 0.0
        %8557 = vmatpush2.msra.mxu0 0.0
        %8558 = vmatprep.subr.mxu0 0.0
        %8559 = vmatpush2.msra.mxu0 0.0
        %8560 = vmatprep.subr.mxu0 0.0
        %8561 = vmatpush2.msra.mxu0 0.0
        %8562 = vmatprep.subr.mxu0 0.0
        %8563 = vmatpush2.msra.mxu0 0.0
        %8564 = vmatprep.subr.mxu0 0.0
        %8565 = vmatpush2.msra.mxu0 0.0
        %8566 = vmatprep.subr.mxu0 0.0
        %8567 = vmatpush2.msra.mxu0 0.0
        %8568 = vmatprep.subr.mxu0 0.0
        %8569 = vmatpush2.msra.mxu0 0.0
        %8570 = vmatprep.subr.mxu0 0.0
        %8571 = vmatpush2.msra.mxu0 0.0
        %8572 = vmatprep.subr.mxu0 0.0
        %8573 = vmatpush2.msra.mxu0 0.0
        %8574 = vmatprep.subr.mxu0 0.0
        %8575 = vmatpush2.msra.mxu0 0.0
        %8576 = vmatprep.subr.mxu0 0.0
        %8577 = vmatpush2.msra.mxu0 0.0
        %8578 = vmatprep.subr.mxu0 0.0
        %8579 = vmatpush2.msra.mxu0 0.0
        %8580 = vmatprep.subr.mxu0 0.0
        %8581 = vmatpush2.msra.mxu0 0.0
        %8582 = vmatprep.subr.mxu0 0.0
        %8583 = vmatpush2.msra.mxu0 %v8418
        %8584 = vmatprep.subr.mxu0 0.0
        %8585 = vmatpush2.msra.mxu0 %v8417
        %8586 = vmatprep.mubr.f32.mxu0 %v8427
        %8587 = vmatmul.mubr.f32.gmra.mxu0 %v8337
        %v8588 = vpop.f32.mrf.mxu0
        %v8589 = vadd.f32 %v8424, %v8588
        %v8590 = vpop.f32.mrf.mxu0
        %8591 = vmatprep.mubr.f32.mxu0 %v8430
        %8592 = vmatmul.mubr.f32.gmra.mxu0 %v8339
        %v8593 = vpop.f32.mrf.mxu0
        %v8594 = vadd.f32 %v8424, %v8593
        %v8595 = vpop.f32.mrf.mxu0
        %8596 = vmatprep.mubr.f32.mxu0 %v8433
        %8597 = vmatmul.mubr.f32.gmra.mxu0 %v8341
        %v8598 = vpop.f32.mrf.mxu0
        %v8599 = vadd.f32 %v8424, %v8598
        %v8600 = vpop.f32.mrf.mxu0
        %8601 = vmatprep.mubr.f32.mxu0 %v8436
        %8602 = vmatmul.mubr.f32.gmra.mxu0 %v8343
        %v8603 = vpop.f32.mrf.mxu0
        %v8604 = vadd.f32 %v8424, %v8603
        %v8605 = vpop.f32.mrf.mxu0
        %8606 = vmatprep.mubr.f32.mxu0 %v8439
        %8607 = vmatmul.mubr.f32.gmra.mxu0 %v8345
        %v8608 = vpop.f32.mrf.mxu0
        %v8609 = vadd.f32 %v8424, %v8608
        %v8610 = vpop.f32.mrf.mxu0
        %8611 = vmatprep.mubr.f32.mxu0 %v8442
        %8612 = vmatmul.mubr.f32.gmra.mxu0 %v8347
        %v8613 = vpop.f32.mrf.mxu0
        %v8614 = vadd.f32 %v8424, %v8613
        %v8615 = vpop.f32.mrf.mxu0
        %8616 = vmatprep.mubr.f32.mxu0 %v8445
        %8617 = vmatmul.mubr.f32.gmra.mxu0 %v8349
        %v8618 = vpop.f32.mrf.mxu0
        %v8619 = vadd.f32 %v8424, %v8618
        %v8620 = vpop.f32.mrf.mxu0
        %8621 = vmatprep.mubr.f32.mxu0 %v8448
        %8622 = vmatmul.mubr.f32.gmra.mxu0 %v8351
        %v8623 = vpop.f32.mrf.mxu0
        %v8624 = vadd.f32 %v8424, %v8623
        %v8625 = vpop.f32.mrf.mxu0
        %8626 = vmatprep.mubr.f32.mxu0 %v8451
        %8627 = vmatmul.mubr.f32.gmra.mxu0 %v8353
        %v8628 = vpop.f32.mrf.mxu0
        %v8629 = vadd.f32 %v8424, %v8628
        %v8630 = vpop.f32.mrf.mxu0
        %8631 = vmatprep.mubr.f32.mxu0 %v8454
        %8632 = vmatmul.mubr.f32.gmra.mxu0 %v8355
        %v8633 = vpop.f32.mrf.mxu0
        %v8634 = vadd.f32 %v8424, %v8633
        %v8635 = vpop.f32.mrf.mxu0
        %8636 = vmatprep.mubr.f32.mxu0 %v8457
        %8637 = vmatmul.mubr.f32.gmra.mxu0 %v8357
        %v8638 = vpop.f32.mrf.mxu0
        %v8639 = vadd.f32 %v8424, %v8638
        %v8640 = vpop.f32.mrf.mxu0
        %8641 = vmatprep.mubr.f32.mxu0 %v8460
        %8642 = vmatmul.mubr.f32.gmra.mxu0 %v8359
        %v8643 = vpop.f32.mrf.mxu0
        %v8644 = vadd.f32 %v8424, %v8643
        %v8645 = vpop.f32.mrf.mxu0
        %8646 = vmatprep.mubr.f32.mxu0 %v8463
        %8647 = vmatmul.mubr.f32.gmra.mxu0 %v8361
        %v8648 = vpop.f32.mrf.mxu0
        %v8649 = vadd.f32 %v8424, %v8648
        %v8650 = vpop.f32.mrf.mxu0
        %8651 = vmatprep.mubr.f32.mxu0 %v8466
        %8652 = vmatmul.mubr.f32.gmra.mxu0 %v8363
        %v8653 = vpop.f32.mrf.mxu0
        %v8654 = vadd.f32 %v8424, %v8653
        %v8655 = vpop.f32.mrf.mxu0
        %8656 = vmatprep.mubr.f32.mxu0 %v8469
        %8657 = vmatmul.mubr.f32.gmra.mxu0 %v8365
        %v8658 = vpop.f32.mrf.mxu0
        %v8659 = vadd.f32 %v8424, %v8658
        %v8660 = vpop.f32.mrf.mxu0
        %8661 = vmatprep.mubr.f32.mxu0 %v8472
        %8662 = vmatmul.mubr.f32.gmra.mxu0 %v8367
        %v8663 = vpop.f32.mrf.mxu0
        %v8664 = vadd.f32 %v8424, %v8663
        %v8665 = vpop.f32.mrf.mxu0
        %8666 = vmatprep.mubr.f32.mxu0 %v8475
        %8667 = vmatmul.mubr.f32.gmra.mxu0 %v8369
        %v8668 = vpop.f32.mrf.mxu0
        %v8669 = vadd.f32 %v8424, %v8668
        %v8670 = vpop.f32.mrf.mxu0
        %8671 = vmatprep.mubr.f32.mxu0 %v8478
        %8672 = vmatmul.mubr.f32.gmra.mxu0 %v8371
        %v8673 = vpop.f32.mrf.mxu0
        %v8674 = vadd.f32 %v8424, %v8673
        %v8675 = vpop.f32.mrf.mxu0
        %8676 = vmatprep.mubr.f32.mxu0 %v8481
        %8677 = vmatmul.mubr.f32.gmra.mxu0 %v8373
        %v8678 = vpop.f32.mrf.mxu0
        %v8679 = vadd.f32 %v8424, %v8678
        %v8680 = vpop.f32.mrf.mxu0
        %8681 = vmatprep.mubr.f32.mxu0 %v8484
        %8682 = vmatmul.mubr.f32.gmra.mxu0 %v8375
        %v8683 = vpop.f32.mrf.mxu0
        %v8684 = vadd.f32 %v8424, %v8683
        %v8685 = vpop.f32.mrf.mxu0
        %8686 = vmatprep.mubr.f32.mxu0 %v8487
        %8687 = vmatmul.mubr.f32.gmra.mxu0 %v8377
        %v8688 = vpop.f32.mrf.mxu0
        %v8689 = vadd.f32 %v8424, %v8688
        %v8690 = vpop.f32.mrf.mxu0
        %8691 = vmatprep.mubr.f32.mxu0 %v8490
        %8692 = vmatmul.mubr.f32.gmra.mxu0 %v8379
        %v8693 = vpop.f32.mrf.mxu0
        %v8694 = vadd.f32 %v8424, %v8693
        %v8695 = vpop.f32.mrf.mxu0
        %8696 = vmatprep.mubr.f32.mxu0 %v8493
        %8697 = vmatmul.mubr.f32.gmra.mxu0 %v8381
        %v8698 = vpop.f32.mrf.mxu0
        %v8699 = vadd.f32 %v8424, %v8698
        %v8700 = vpop.f32.mrf.mxu0
        %8701 = vmatprep.mubr.f32.mxu0 %v8496
        %8702 = vmatmul.mubr.f32.gmra.mxu0 %v8383
        %v8703 = vpop.f32.mrf.mxu0
        %v8704 = vadd.f32 %v8424, %v8703
        %v8705 = vpop.f32.mrf.mxu0
        %8706 = vmatprep.mubr.f32.mxu0 %v8499
        %8707 = vmatmul.mubr.f32.gmra.mxu0 %v8385
        %v8708 = vpop.f32.mrf.mxu0
        %v8709 = vadd.f32 %v8424, %v8708
        %v8710 = vpop.f32.mrf.mxu0
        %8711 = vmatprep.mubr.f32.mxu0 %v8502
        %8712 = vmatmul.mubr.f32.gmra.mxu0 %v8387
        %v8713 = vpop.f32.mrf.mxu0
        %v8714 = vadd.f32 %v8424, %v8713
        %v8715 = vpop.f32.mrf.mxu0
        %8716 = vmatprep.mubr.f32.mxu0 %v8505
        %8717 = vmatmul.mubr.f32.gmra.mxu0 %v8389
        %v8718 = vpop.f32.mrf.mxu0
        %v8719 = vadd.f32 %v8424, %v8718
        %v8720 = vpop.f32.mrf.mxu0
        %8721 = vmatprep.mubr.f32.mxu0 %v8508
        %8722 = vmatmul.mubr.f32.gmra.mxu0 %v8391
        %v8723 = vpop.f32.mrf.mxu0
        %v8724 = vadd.f32 %v8424, %v8723
        %v8725 = vpop.f32.mrf.mxu0
        %8726 = vmatprep.mubr.f32.mxu0 %v8511
        %8727 = vmatmul.mubr.f32.gmra.mxu0 %v8393
        %v8728 = vpop.f32.mrf.mxu0
        %v8729 = vadd.f32 %v8424, %v8728
        %v8730 = vpop.f32.mrf.mxu0
        %8731 = vmatprep.mubr.f32.mxu0 %v8514
        %8732 = vmatmul.mubr.f32.gmra.mxu0 %v8395
        %v8733 = vpop.f32.mrf.mxu0
        %v8734 = vadd.f32 %v8424, %v8733
        %v8735 = vpop.f32.mrf.mxu0
        %8736 = vmatprep.mubr.f32.mxu0 %v8517
        %8737 = vmatmul.mubr.f32.gmra.mxu0 %v8397
        %v8738 = vpop.f32.mrf.mxu0
        %v8739 = vadd.f32 %v8424, %v8738
        %v8740 = vpop.f32.mrf.mxu0
        %8741 = vmatprep.mubr.f32.mxu0 %v8520
        %8742 = vmatmul.mubr.f32.gmra.mxu0 %v8399
        %v8743 = vpop.f32.mrf.mxu0
        %v8744 = vadd.f32 %v8424, %v8743
        %v8745 = vpop.f32.mrf.mxu0
        %8746 = vdwg.mxu0
        %v8747 = vmax.f32 %v8589, 0.0
        %v8748 = vmax.f32 %v8594, 0.0
        %v8749 = vmax.f32 %v8599, 0.0
        %v8750 = vmax.f32 %v8604, 0.0
        %v8751 = vmax.f32 %v8609, 0.0
        %v8752 = vmax.f32 %v8614, 0.0
        %v8753 = vmax.f32 %v8619, 0.0
        %v8754 = vmax.f32 %v8624, 0.0
        %v8755 = vmax.f32 %v8629, 0.0
        %v8756 = vmax.f32 %v8634, 0.0
        %v8757 = vmax.f32 %v8639, 0.0
        %v8758 = vmax.f32 %v8644, 0.0
        %v8759 = vmax.f32 %v8649, 0.0
        %v8760 = vmax.f32 %v8654, 0.0
        %v8761 = vmax.f32 %v8659, 0.0
        %v8762 = vmax.f32 %v8664, 0.0
        %v8763 = vmax.f32 %v8669, 0.0
        %v8764 = vmax.f32 %v8674, 0.0
        %v8765 = vmax.f32 %v8679, 0.0
        %v8766 = vmax.f32 %v8684, 0.0
        %v8767 = vmax.f32 %v8689, 0.0
        %v8768 = vmax.f32 %v8694, 0.0
        %v8769 = vmax.f32 %v8699, 0.0
        %v8770 = vmax.f32 %v8704, 0.0
        %v8771 = vmax.f32 %v8709, 0.0
        %v8772 = vmax.f32 %v8714, 0.0
        %v8773 = vmax.f32 %v8719, 0.0
        %v8774 = vmax.f32 %v8724, 0.0
        %v8775 = vmax.f32 %v8729, 0.0
        %v8776 = vmax.f32 %v8734, 0.0
        %v8777 = vmax.f32 %v8739, 0.0
        %v8778 = vmax.f32 %v8744, 0.0
        %8811 = vrot.lane.b32.xlu0 %v8747, 16
        %v8812 = vpop.permute.xlu0 %8811
        %8813 = vrot.lane.b32.xlu0 %v8748, 16
        %v8814 = vpop.permute.xlu0 %8813
        %8815 = vrot.lane.b32.xlu0 %v8749, 16
        %v8816 = vpop.permute.xlu0 %8815
        %8817 = vrot.lane.b32.xlu0 %v8750, 16
        %v8818 = vpop.permute.xlu0 %8817
        %8819 = vrot.lane.b32.xlu0 %v8751, 16
        %v8820 = vpop.permute.xlu0 %8819
        %8821 = vrot.lane.b32.xlu0 %v8752, 16
        %v8822 = vpop.permute.xlu0 %8821
        %8823 = vrot.lane.b32.xlu0 %v8753, 16
        %v8824 = vpop.permute.xlu0 %8823
        %8825 = vrot.lane.b32.xlu0 %v8754, 16
        %v8826 = vpop.permute.xlu0 %8825
        %8827 = vrot.lane.b32.xlu0 %v8755, 16
        %v8828 = vpop.permute.xlu0 %8827
        %8829 = vrot.lane.b32.xlu0 %v8756, 16
        %v8830 = vpop.permute.xlu0 %8829
        %8831 = vrot.lane.b32.xlu0 %v8757, 16
        %v8832 = vpop.permute.xlu0 %8831
        %8833 = vrot.lane.b32.xlu0 %v8758, 16
        %v8834 = vpop.permute.xlu0 %8833
        %8835 = vrot.lane.b32.xlu0 %v8759, 16
        %v8836 = vpop.permute.xlu0 %8835
        %8837 = vrot.lane.b32.xlu0 %v8760, 16
        %v8838 = vpop.permute.xlu0 %8837
        %8839 = vrot.lane.b32.xlu0 %v8761, 16
        %v8840 = vpop.permute.xlu0 %8839
        %8841 = vrot.lane.b32.xlu0 %v8762, 16
        %v8842 = vpop.permute.xlu0 %8841
        %8843 = vrot.lane.b32.xlu0 %v8763, 16
        %v8844 = vpop.permute.xlu0 %8843
        %8845 = vrot.lane.b32.xlu0 %v8764, 16
        %v8846 = vpop.permute.xlu0 %8845
        %8847 = vrot.lane.b32.xlu0 %v8765, 16
        %v8848 = vpop.permute.xlu0 %8847
        %8849 = vrot.lane.b32.xlu0 %v8766, 16
        %v8850 = vpop.permute.xlu0 %8849
        %8851 = vrot.lane.b32.xlu0 %v8767, 16
        %v8852 = vpop.permute.xlu0 %8851
        %8853 = vrot.lane.b32.xlu0 %v8768, 16
        %v8854 = vpop.permute.xlu0 %8853
        %8855 = vrot.lane.b32.xlu0 %v8769, 16
        %v8856 = vpop.permute.xlu0 %8855
        %8857 = vrot.lane.b32.xlu0 %v8770, 16
        %v8858 = vpop.permute.xlu0 %8857
        %8859 = vrot.lane.b32.xlu0 %v8771, 16
        %v8860 = vpop.permute.xlu0 %8859
        %8861 = vrot.lane.b32.xlu0 %v8772, 16
        %v8862 = vpop.permute.xlu0 %8861
        %8863 = vrot.lane.b32.xlu0 %v8773, 16
        %v8864 = vpop.permute.xlu0 %8863
        %8865 = vrot.lane.b32.xlu0 %v8774, 16
        %v8866 = vpop.permute.xlu0 %8865
        %8867 = vrot.lane.b32.xlu0 %v8775, 16
        %v8868 = vpop.permute.xlu0 %8867
        %8869 = vrot.lane.b32.xlu0 %v8776, 16
        %v8870 = vpop.permute.xlu0 %8869
        %8871 = vrot.lane.b32.xlu0 %v8777, 16
        %v8872 = vpop.permute.xlu0 %8871
        %8873 = vrot.lane.b32.xlu0 %v8778, 16
        %v8874 = vpop.permute.xlu0 %8873
        %8907 = vst.msk [vmem:[#allocation4] sm:$0xff] %vm7081, %v8812
        %8908 = vst.msk [vmem:[#allocation4 + $0x8] sm:$0xff] %vm7081, %v8814
        %8909 = vst.msk [vmem:[#allocation4 + $0x10] sm:$0xff] %vm7081, %v8816
        %8910 = vst.msk [vmem:[#allocation4 + $0x18] sm:$0xff] %vm7081, %v8818
        %8911 = vst.msk [vmem:[#allocation4 + $0x20] sm:$0xff] %vm7081, %v8820
        %8912 = vst.msk [vmem:[#allocation4 + $0x28] sm:$0xff] %vm7081, %v8822
        %8913 = vst.msk [vmem:[#allocation4 + $0x30] sm:$0xff] %vm7081, %v8824
        %8914 = vst.msk [vmem:[#allocation4 + $0x38] sm:$0xff] %vm7081, %v8826
        %8915 = vst.msk [vmem:[#allocation4 + $0x40] sm:$0xff] %vm7081, %v8828
        %8916 = vst.msk [vmem:[#allocation4 + $0x48] sm:$0xff] %vm7081, %v8830
        %8917 = vst.msk [vmem:[#allocation4 + $0x50] sm:$0xff] %vm7081, %v8832
        %8918 = vst.msk [vmem:[#allocation4 + $0x58] sm:$0xff] %vm7081, %v8834
        %8919 = vst.msk [vmem:[#allocation4 + $0x60] sm:$0xff] %vm7081, %v8836
        %8920 = vst.msk [vmem:[#allocation4 + $0x68] sm:$0xff] %vm7081, %v8838
        %8921 = vst.msk [vmem:[#allocation4 + $0x70] sm:$0xff] %vm7081, %v8840
        %8922 = vst.msk [vmem:[#allocation4 + $0x78] sm:$0xff] %vm7081, %v8842
        %8923 = vst.msk [vmem:[#allocation4 + $0x80] sm:$0xff] %vm7081, %v8844
        %8924 = vst.msk [vmem:[#allocation4 + $0x88] sm:$0xff] %vm7081, %v8846
        %8925 = vst.msk [vmem:[#allocation4 + $0x90] sm:$0xff] %vm7081, %v8848
        %8926 = vst.msk [vmem:[#allocation4 + $0x98] sm:$0xff] %vm7081, %v8850
        %8927 = vst.msk [vmem:[#allocation4 + $0xa0] sm:$0xff] %vm7081, %v8852
        %8928 = vst.msk [vmem:[#allocation4 + $0xa8] sm:$0xff] %vm7081, %v8854
        %8929 = vst.msk [vmem:[#allocation4 + $0xb0] sm:$0xff] %vm7081, %v8856
        %8930 = vst.msk [vmem:[#allocation4 + $0xb8] sm:$0xff] %vm7081, %v8858
        %8931 = vst.msk [vmem:[#allocation4 + $0xc0] sm:$0xff] %vm7081, %v8860
        %8932 = vst.msk [vmem:[#allocation4 + $0xc8] sm:$0xff] %vm7081, %v8862
        %8933 = vst.msk [vmem:[#allocation4 + $0xd0] sm:$0xff] %vm7081, %v8864
        %8934 = vst.msk [vmem:[#allocation4 + $0xd8] sm:$0xff] %vm7081, %v8866
        %8935 = vst.msk [vmem:[#allocation4 + $0xe0] sm:$0xff] %vm7081, %v8868
        %8936 = vst.msk [vmem:[#allocation4 + $0xe8] sm:$0xff] %vm7081, %v8870
        %8937 = vst.msk [vmem:[#allocation4 + $0xf0] sm:$0xff] %vm7081, %v8872
        %8938 = vst.msk [vmem:[#allocation4 + $0xf8] sm:$0xff] %vm7081, %v8874
        %v8939 = vld [vmem:[#allocation4] sm:$0xff]
        %v8940 = vld [vmem:[#allocation4 + $0x8] sm:$0xff]
        %v8941 = vld [vmem:[#allocation4 + $0x10] sm:$0xff]
        %v8942 = vld [vmem:[#allocation4 + $0x18] sm:$0xff]
        %v8943 = vld [vmem:[#allocation4 + $0x20] sm:$0xff]
        %v8944 = vld [vmem:[#allocation4 + $0x28] sm:$0xff]
        %v8945 = vld [vmem:[#allocation4 + $0x30] sm:$0xff]
        %v8946 = vld [vmem:[#allocation4 + $0x38] sm:$0xff]
        %v8947 = vld [vmem:[#allocation4 + $0x40] sm:$0xff]
        %v8948 = vld [vmem:[#allocation4 + $0x48] sm:$0xff]
        %v8949 = vld [vmem:[#allocation4 + $0x50] sm:$0xff]
        %v8950 = vld [vmem:[#allocation4 + $0x58] sm:$0xff]
        %v8951 = vld [vmem:[#allocation4 + $0x60] sm:$0xff]
        %v8952 = vld [vmem:[#allocation4 + $0x68] sm:$0xff]
        %v8953 = vld [vmem:[#allocation4 + $0x70] sm:$0xff]
        %v8954 = vld [vmem:[#allocation4 + $0x78] sm:$0xff]
        %v8955 = vld [vmem:[#allocation4 + $0x80] sm:$0xff]
        %v8956 = vld [vmem:[#allocation4 + $0x88] sm:$0xff]
        %v8957 = vld [vmem:[#allocation4 + $0x90] sm:$0xff]
        %v8958 = vld [vmem:[#allocation4 + $0x98] sm:$0xff]
        %v8959 = vld [vmem:[#allocation4 + $0xa0] sm:$0xff]
        %v8960 = vld [vmem:[#allocation4 + $0xa8] sm:$0xff]
        %v8961 = vld [vmem:[#allocation4 + $0xb0] sm:$0xff]
        %v8962 = vld [vmem:[#allocation4 + $0xb8] sm:$0xff]
        %v8963 = vld [vmem:[#allocation4 + $0xc0] sm:$0xff]
        %v8964 = vld [vmem:[#allocation4 + $0xc8] sm:$0xff]
        %v8965 = vld [vmem:[#allocation4 + $0xd0] sm:$0xff]
        %v8966 = vld [vmem:[#allocation4 + $0xd8] sm:$0xff]
        %v8967 = vld [vmem:[#allocation4 + $0xe0] sm:$0xff]
        %v8968 = vld [vmem:[#allocation4 + $0xe8] sm:$0xff]
        %v8969 = vld [vmem:[#allocation4 + $0xf0] sm:$0xff]
        %v8970 = vld [vmem:[#allocation4 + $0xf8] sm:$0xff]
        %v8971 = vld [vmem:[%s1 + $0x148] sm:$0xff]
        %v8972 = vld [vmem:[%s1 + $0x150] sm:$0xff]
        %v8973 = vld [vmem:[%s1 + $0x158] sm:$0xff]
        %v8974 = vld [vmem:[%s1 + $0x160] sm:$0xff]
        %v8975 = vld [vmem:[%s2 + $0x4] sm:$0x1]
        %v8977 = vlaneseq
        %v8978 = vshrl.u32 %v8977, 7
        %v8979 = vsub.s32 0, %v8978
        %v8980 = vrot.slane %v8975, %v8979
        %vm8982 = vcmask 261120
        %v8984 = vsel %vm8982, %v8939, 0
        %v8987 = vsel %vm8982, %v8940, 0
        %v8990 = vsel %vm8982, %v8941, 0
        %v8993 = vsel %vm8982, %v8942, 0
        %v8996 = vsel %vm8982, %v8943, 0
        %v8999 = vsel %vm8982, %v8944, 0
        %v9002 = vsel %vm8982, %v8945, 0
        %v9005 = vsel %vm8982, %v8946, 0
        %v9008 = vsel %vm8982, %v8947, 0
        %v9011 = vsel %vm8982, %v8948, 0
        %v9014 = vsel %vm8982, %v8949, 0
        %v9017 = vsel %vm8982, %v8950, 0
        %v9020 = vsel %vm8982, %v8951, 0
        %v9023 = vsel %vm8982, %v8952, 0
        %v9026 = vsel %vm8982, %v8953, 0
        %v9029 = vsel %vm8982, %v8954, 0
        %v9032 = vsel %vm8982, %v8955, 0
        %v9035 = vsel %vm8982, %v8956, 0
        %v9038 = vsel %vm8982, %v8957, 0
        %v9041 = vsel %vm8982, %v8958, 0
        %v9044 = vsel %vm8982, %v8959, 0
        %v9047 = vsel %vm8982, %v8960, 0
        %v9050 = vsel %vm8982, %v8961, 0
        %v9053 = vsel %vm8982, %v8962, 0
        %v9056 = vsel %vm8982, %v8963, 0
        %v9059 = vsel %vm8982, %v8964, 0
        %v9062 = vsel %vm8982, %v8965, 0
        %v9065 = vsel %vm8982, %v8966, 0
        %v9068 = vsel %vm8982, %v8967, 0
        %v9071 = vsel %vm8982, %v8968, 0
        %v9074 = vsel %vm8982, %v8969, 0
        %v9077 = vsel %vm8982, %v8970, 0
        %9079 = vmatprep.subr.mxu0 0.0
        %9080 = vmatpush1.msra.mxu0 0.0
        %9081 = vmatprep.subr.mxu0 0.0
        %9082 = vmatpush1.msra.mxu0 0.0
        %9083 = vmatprep.subr.mxu0 0.0
        %9084 = vmatpush1.msra.mxu0 0.0
        %9085 = vmatprep.subr.mxu0 0.0
        %9086 = vmatpush1.msra.mxu0 0.0
        %9087 = vmatprep.subr.mxu0 0.0
        %9088 = vmatpush1.msra.mxu0 0.0
        %9089 = vmatprep.subr.mxu0 0.0
        %9090 = vmatpush1.msra.mxu0 0.0
        %9091 = vmatprep.subr.mxu0 0.0
        %9092 = vmatpush1.msra.mxu0 0.0
        %9093 = vmatprep.subr.mxu0 0.0
        %9094 = vmatpush1.msra.mxu0 0.0
        %9095 = vmatprep.subr.mxu0 0.0
        %9096 = vmatpush1.msra.mxu0 0.0
        %9097 = vmatprep.subr.mxu0 0.0
        %9098 = vmatpush1.msra.mxu0 0.0
        %9099 = vmatprep.subr.mxu0 0.0
        %9100 = vmatpush1.msra.mxu0 0.0
        %9101 = vmatprep.subr.mxu0 0.0
        %9102 = vmatpush1.msra.mxu0 0.0
        %9103 = vmatprep.subr.mxu0 0.0
        %9104 = vmatpush1.msra.mxu0 %v8974
        %9105 = vmatprep.subr.mxu0 0.0
        %9106 = vmatpush1.msra.mxu0 %v8973
        %9107 = vmatprep.subr.mxu0 0.0
        %9108 = vmatpush1.msra.mxu0 %v8972
        %9109 = vmatprep.subr.mxu0 0.0
        %9110 = vmatpush1.msra.mxu0 %v8971
        %9111 = vmatprep.subr.mxu0 0.0
        %9112 = vmatpush2.msra.mxu0 0.0
        %9113 = vmatprep.subr.mxu0 0.0
        %9114 = vmatpush2.msra.mxu0 0.0
        %9115 = vmatprep.subr.mxu0 0.0
        %9116 = vmatpush2.msra.mxu0 0.0
        %9117 = vmatprep.subr.mxu0 0.0
        %9118 = vmatpush2.msra.mxu0 0.0
        %9119 = vmatprep.subr.mxu0 0.0
        %9120 = vmatpush2.msra.mxu0 0.0
        %9121 = vmatprep.subr.mxu0 0.0
        %9122 = vmatpush2.msra.mxu0 0.0
        %9123 = vmatprep.subr.mxu0 0.0
        %9124 = vmatpush2.msra.mxu0 0.0
        %9125 = vmatprep.subr.mxu0 0.0
        %9126 = vmatpush2.msra.mxu0 0.0
        %9127 = vmatprep.subr.mxu0 0.0
        %9128 = vmatpush2.msra.mxu0 0.0
        %9129 = vmatprep.subr.mxu0 0.0
        %9130 = vmatpush2.msra.mxu0 0.0
        %9131 = vmatprep.subr.mxu0 0.0
        %9132 = vmatpush2.msra.mxu0 0.0
        %9133 = vmatprep.subr.mxu0 0.0
        %9134 = vmatpush2.msra.mxu0 0.0
        %9135 = vmatprep.subr.mxu0 0.0
        %9136 = vmatpush2.msra.mxu0 0.0
        %9137 = vmatprep.subr.mxu0 0.0
        %9138 = vmatpush2.msra.mxu0 0.0
        %9139 = vmatprep.subr.mxu0 0.0
        %9140 = vmatpush2.msra.mxu0 0.0
        %9141 = vmatprep.subr.mxu0 0.0
        %9142 = vmatpush2.msra.mxu0 0.0
        %9143 = vmatprep.mubr.f32.mxu0 0.0
        %9144 = vmatmul.mubr.f32.gmra.mxu0 %v8984
        %v9145 = vpop.f32.mrf.mxu0
        %v9146 = vadd.f32 %v8980, %v9145
        %v9147 = vpop.f32.mrf.mxu0
        %9148 = vmatprep.mubr.f32.mxu0 0.0
        %9149 = vmatmul.mubr.f32.gmra.mxu0 %v8987
        %v9150 = vpop.f32.mrf.mxu0
        %v9151 = vadd.f32 %v8980, %v9150
        %v9152 = vpop.f32.mrf.mxu0
        %9153 = vmatprep.mubr.f32.mxu0 0.0
        %9154 = vmatmul.mubr.f32.gmra.mxu0 %v8990
        %v9155 = vpop.f32.mrf.mxu0
        %v9156 = vadd.f32 %v8980, %v9155
        %v9157 = vpop.f32.mrf.mxu0
        %9158 = vmatprep.mubr.f32.mxu0 0.0
        %9159 = vmatmul.mubr.f32.gmra.mxu0 %v8993
        %v9160 = vpop.f32.mrf.mxu0
        %v9161 = vadd.f32 %v8980, %v9160
        %v9162 = vpop.f32.mrf.mxu0
        %9163 = vmatprep.mubr.f32.mxu0 0.0
        %9164 = vmatmul.mubr.f32.gmra.mxu0 %v8996
        %v9165 = vpop.f32.mrf.mxu0
        %v9166 = vadd.f32 %v8980, %v9165
        %v9167 = vpop.f32.mrf.mxu0
        %9168 = vmatprep.mubr.f32.mxu0 0.0
        %9169 = vmatmul.mubr.f32.gmra.mxu0 %v8999
        %v9170 = vpop.f32.mrf.mxu0
        %v9171 = vadd.f32 %v8980, %v9170
        %v9172 = vpop.f32.mrf.mxu0
        %9173 = vmatprep.mubr.f32.mxu0 0.0
        %9174 = vmatmul.mubr.f32.gmra.mxu0 %v9002
        %v9175 = vpop.f32.mrf.mxu0
        %v9176 = vadd.f32 %v8980, %v9175
        %v9177 = vpop.f32.mrf.mxu0
        %9178 = vmatprep.mubr.f32.mxu0 0.0
        %9179 = vmatmul.mubr.f32.gmra.mxu0 %v9005
        %v9180 = vpop.f32.mrf.mxu0
        %v9181 = vadd.f32 %v8980, %v9180
        %v9182 = vpop.f32.mrf.mxu0
        %9183 = vmatprep.mubr.f32.mxu0 0.0
        %9184 = vmatmul.mubr.f32.gmra.mxu0 %v9008
        %v9185 = vpop.f32.mrf.mxu0
        %v9186 = vadd.f32 %v8980, %v9185
        %v9187 = vpop.f32.mrf.mxu0
        %9188 = vmatprep.mubr.f32.mxu0 0.0
        %9189 = vmatmul.mubr.f32.gmra.mxu0 %v9011
        %v9190 = vpop.f32.mrf.mxu0
        %v9191 = vadd.f32 %v8980, %v9190
        %v9192 = vpop.f32.mrf.mxu0
        %9193 = vmatprep.mubr.f32.mxu0 0.0
        %9194 = vmatmul.mubr.f32.gmra.mxu0 %v9014
        %v9195 = vpop.f32.mrf.mxu0
        %v9196 = vadd.f32 %v8980, %v9195
        %v9197 = vpop.f32.mrf.mxu0
        %9198 = vmatprep.mubr.f32.mxu0 0.0
        %9199 = vmatmul.mubr.f32.gmra.mxu0 %v9017
        %v9200 = vpop.f32.mrf.mxu0
        %v9201 = vadd.f32 %v8980, %v9200
        %v9202 = vpop.f32.mrf.mxu0
        %9203 = vmatprep.mubr.f32.mxu0 0.0
        %9204 = vmatmul.mubr.f32.gmra.mxu0 %v9020
        %v9205 = vpop.f32.mrf.mxu0
        %v9206 = vadd.f32 %v8980, %v9205
        %v9207 = vpop.f32.mrf.mxu0
        %9208 = vmatprep.mubr.f32.mxu0 0.0
        %9209 = vmatmul.mubr.f32.gmra.mxu0 %v9023
        %v9210 = vpop.f32.mrf.mxu0
        %v9211 = vadd.f32 %v8980, %v9210
        %v9212 = vpop.f32.mrf.mxu0
        %9213 = vmatprep.mubr.f32.mxu0 0.0
        %9214 = vmatmul.mubr.f32.gmra.mxu0 %v9026
        %v9215 = vpop.f32.mrf.mxu0
        %v9216 = vadd.f32 %v8980, %v9215
        %v9217 = vpop.f32.mrf.mxu0
        %9218 = vmatprep.mubr.f32.mxu0 0.0
        %9219 = vmatmul.mubr.f32.gmra.mxu0 %v9029
        %v9220 = vpop.f32.mrf.mxu0
        %v9221 = vadd.f32 %v8980, %v9220
        %v9222 = vpop.f32.mrf.mxu0
        %9223 = vmatprep.mubr.f32.mxu0 0.0
        %9224 = vmatmul.mubr.f32.gmra.mxu0 %v9032
        %v9225 = vpop.f32.mrf.mxu0
        %v9226 = vadd.f32 %v8980, %v9225
        %v9227 = vpop.f32.mrf.mxu0
        %9228 = vmatprep.mubr.f32.mxu0 0.0
        %9229 = vmatmul.mubr.f32.gmra.mxu0 %v9035
        %v9230 = vpop.f32.mrf.mxu0
        %v9231 = vadd.f32 %v8980, %v9230
        %v9232 = vpop.f32.mrf.mxu0
        %9233 = vmatprep.mubr.f32.mxu0 0.0
        %9234 = vmatmul.mubr.f32.gmra.mxu0 %v9038
        %v9235 = vpop.f32.mrf.mxu0
        %v9236 = vadd.f32 %v8980, %v9235
        %v9237 = vpop.f32.mrf.mxu0
        %9238 = vmatprep.mubr.f32.mxu0 0.0
        %9239 = vmatmul.mubr.f32.gmra.mxu0 %v9041
        %v9240 = vpop.f32.mrf.mxu0
        %v9241 = vadd.f32 %v8980, %v9240
        %v9242 = vpop.f32.mrf.mxu0
        %9243 = vmatprep.mubr.f32.mxu0 0.0
        %9244 = vmatmul.mubr.f32.gmra.mxu0 %v9044
        %v9245 = vpop.f32.mrf.mxu0
        %v9246 = vadd.f32 %v8980, %v9245
        %v9247 = vpop.f32.mrf.mxu0
        %9248 = vmatprep.mubr.f32.mxu0 0.0
        %9249 = vmatmul.mubr.f32.gmra.mxu0 %v9047
        %v9250 = vpop.f32.mrf.mxu0
        %v9251 = vadd.f32 %v8980, %v9250
        %v9252 = vpop.f32.mrf.mxu0
        %9253 = vmatprep.mubr.f32.mxu0 0.0
        %9254 = vmatmul.mubr.f32.gmra.mxu0 %v9050
        %v9255 = vpop.f32.mrf.mxu0
        %v9256 = vadd.f32 %v8980, %v9255
        %v9257 = vpop.f32.mrf.mxu0
        %9258 = vmatprep.mubr.f32.mxu0 0.0
        %9259 = vmatmul.mubr.f32.gmra.mxu0 %v9053
        %v9260 = vpop.f32.mrf.mxu0
        %v9261 = vadd.f32 %v8980, %v9260
        %v9262 = vpop.f32.mrf.mxu0
        %9263 = vmatprep.mubr.f32.mxu0 0.0
        %9264 = vmatmul.mubr.f32.gmra.mxu0 %v9056
        %v9265 = vpop.f32.mrf.mxu0
        %v9266 = vadd.f32 %v8980, %v9265
        %v9267 = vpop.f32.mrf.mxu0
        %9268 = vmatprep.mubr.f32.mxu0 0.0
        %9269 = vmatmul.mubr.f32.gmra.mxu0 %v9059
        %v9270 = vpop.f32.mrf.mxu0
        %v9271 = vadd.f32 %v8980, %v9270
        %v9272 = vpop.f32.mrf.mxu0
        %9273 = vmatprep.mubr.f32.mxu0 0.0
        %9274 = vmatmul.mubr.f32.gmra.mxu0 %v9062
        %v9275 = vpop.f32.mrf.mxu0
        %v9276 = vadd.f32 %v8980, %v9275
        %v9277 = vpop.f32.mrf.mxu0
        %9278 = vmatprep.mubr.f32.mxu0 0.0
        %9279 = vmatmul.mubr.f32.gmra.mxu0 %v9065
        %v9280 = vpop.f32.mrf.mxu0
        %v9281 = vadd.f32 %v8980, %v9280
        %v9282 = vpop.f32.mrf.mxu0
        %9283 = vmatprep.mubr.f32.mxu0 0.0
        %9284 = vmatmul.mubr.f32.gmra.mxu0 %v9068
        %v9285 = vpop.f32.mrf.mxu0
        %v9286 = vadd.f32 %v8980, %v9285
        %v9287 = vpop.f32.mrf.mxu0
        %9288 = vmatprep.mubr.f32.mxu0 0.0
        %9289 = vmatmul.mubr.f32.gmra.mxu0 %v9071
        %v9290 = vpop.f32.mrf.mxu0
        %v9291 = vadd.f32 %v8980, %v9290
        %v9292 = vpop.f32.mrf.mxu0
        %9293 = vmatprep.mubr.f32.mxu0 0.0
        %9294 = vmatmul.mubr.f32.gmra.mxu0 %v9074
        %v9295 = vpop.f32.mrf.mxu0
        %v9296 = vadd.f32 %v8980, %v9295
        %v9297 = vpop.f32.mrf.mxu0
        %9298 = vmatprep.mubr.f32.mxu0 0.0
        %9299 = vmatmul.mubr.f32.gmra.mxu0 %v9077
        %v9300 = vpop.f32.mrf.mxu0
        %v9301 = vadd.f32 %v8980, %v9300
        %v9302 = vpop.f32.mrf.mxu0
        %9303 = vdwg.mxu0
        %v9304 = vmax.f32 %v9146, 0.0
        %v9305 = vmax.f32 %v9151, 0.0
        %v9306 = vmax.f32 %v9156, 0.0
        %v9307 = vmax.f32 %v9161, 0.0
        %v9308 = vmax.f32 %v9166, 0.0
        %v9309 = vmax.f32 %v9171, 0.0
        %v9310 = vmax.f32 %v9176, 0.0
        %v9311 = vmax.f32 %v9181, 0.0
        %v9312 = vmax.f32 %v9186, 0.0
        %v9313 = vmax.f32 %v9191, 0.0
        %v9314 = vmax.f32 %v9196, 0.0
        %v9315 = vmax.f32 %v9201, 0.0
        %v9316 = vmax.f32 %v9206, 0.0
        %v9317 = vmax.f32 %v9211, 0.0
        %v9318 = vmax.f32 %v9216, 0.0
        %v9319 = vmax.f32 %v9221, 0.0
        %v9320 = vmax.f32 %v9226, 0.0
        %v9321 = vmax.f32 %v9231, 0.0
        %v9322 = vmax.f32 %v9236, 0.0
        %v9323 = vmax.f32 %v9241, 0.0
        %v9324 = vmax.f32 %v9246, 0.0
        %v9325 = vmax.f32 %v9251, 0.0
        %v9326 = vmax.f32 %v9256, 0.0
        %v9327 = vmax.f32 %v9261, 0.0
        %v9328 = vmax.f32 %v9266, 0.0
        %v9329 = vmax.f32 %v9271, 0.0
        %v9330 = vmax.f32 %v9276, 0.0
        %v9331 = vmax.f32 %v9281, 0.0
        %v9332 = vmax.f32 %v9286, 0.0
        %v9333 = vmax.f32 %v9291, 0.0
        %v9334 = vmax.f32 %v9296, 0.0
        %v9335 = vmax.f32 %v9301, 0.0
        %9336 = vxpose.xlu0.b32.start [1/16] %v9304, 128
        %9337 = vxpose.xlu0.b32.cont [2/16] %v9305, 128
        %9338 = vxpose.xlu0.b32.cont [3/16] %v9306, 128
        %9339 = vxpose.xlu0.b32.cont [4/16] %v9307, 128
        %9340 = vxpose.xlu0.b32.cont [5/16] %v9308, 128
        %9341 = vxpose.xlu0.b32.cont [6/16] %v9309, 128
        %9342 = vxpose.xlu0.b32.cont [7/16] %v9310, 128
        %9343 = vxpose.xlu0.b32.cont [8/16] %v9311, 128
        %9344 = vxpose.xlu0.b32.cont [9/16] %v9312, 128
        %9345 = vxpose.xlu0.b32.cont [10/16] %v9313, 128
        %9346 = vxpose.xlu0.b32.cont [11/16] %v9314, 128
        %9347 = vxpose.xlu0.b32.cont [12/16] %v9315, 128
        %9348 = vxpose.xlu0.b32.cont [13/16] %v9316, 128
        %9349 = vxpose.xlu0.b32.cont [14/16] %v9317, 128
        %9350 = vxpose.xlu0.b32.cont [15/16] %v9318, 128
        %9351 = vxpose.xlu0.b32.end [16/16] %v9319, 128
        %v9352 = vpop.trf.xlu0
        %v9353 = vpop.trf.xlu0
        %v9354 = vpop.trf.xlu0
        %v9355 = vpop.trf.xlu0
        %v9356 = vpop.trf.xlu0
        %v9357 = vpop.trf.xlu0
        %v9358 = vpop.trf.xlu0
        %v9359 = vpop.trf.xlu0
        %v9360 = vpop.trf.xlu0
        %v9361 = vpop.trf.xlu0
        %v9362 = vpop.trf.xlu0
        %v9363 = vpop.trf.xlu0
        %v9364 = vpop.trf.xlu0
        %v9365 = vpop.trf.xlu0
        %v9366 = vpop.trf.xlu0
        %v9367 = vpop.trf.xlu0
        %9368 = vxpose.xlu0.b32.start [1/16] %v9320, 128
        %9369 = vxpose.xlu0.b32.cont [2/16] %v9321, 128
        %9370 = vxpose.xlu0.b32.cont [3/16] %v9322, 128
        %9371 = vxpose.xlu0.b32.cont [4/16] %v9323, 128
        %9372 = vxpose.xlu0.b32.cont [5/16] %v9324, 128
        %9373 = vxpose.xlu0.b32.cont [6/16] %v9325, 128
        %9374 = vxpose.xlu0.b32.cont [7/16] %v9326, 128
        %9375 = vxpose.xlu0.b32.cont [8/16] %v9327, 128
        %9376 = vxpose.xlu0.b32.cont [9/16] %v9328, 128
        %9377 = vxpose.xlu0.b32.cont [10/16] %v9329, 128
        %9378 = vxpose.xlu0.b32.cont [11/16] %v9330, 128
        %9379 = vxpose.xlu0.b32.cont [12/16] %v9331, 128
        %9380 = vxpose.xlu0.b32.cont [13/16] %v9332, 128
        %9381 = vxpose.xlu0.b32.cont [14/16] %v9333, 128
        %9382 = vxpose.xlu0.b32.cont [15/16] %v9334, 128
        %9383 = vxpose.xlu0.b32.end [16/16] %v9335, 128
        %v9384 = vpop.trf.xlu0
        %v9385 = vpop.trf.xlu0
        %v9386 = vpop.trf.xlu0
        %v9387 = vpop.trf.xlu0
        %v9388 = vpop.trf.xlu0
        %v9389 = vpop.trf.xlu0
        %v9390 = vpop.trf.xlu0
        %v9391 = vpop.trf.xlu0
        %v9392 = vpop.trf.xlu0
        %v9393 = vpop.trf.xlu0
        %v9394 = vpop.trf.xlu0
        %v9395 = vpop.trf.xlu0
        %v9396 = vpop.trf.xlu0
        %v9397 = vpop.trf.xlu0
        %v9398 = vpop.trf.xlu0
        %v9399 = vpop.trf.xlu0
        %9400 = vst [vmem:[%s163] sm:$0xff] %v9352
        %9401 = vst [vmem:[%s163 + $0x8] sm:$0xff] %v9384
        %9402 = vst [vmem:[%s163 + $0x10] sm:$0xff] %v9353
        %9403 = vst [vmem:[%s163 + $0x18] sm:$0xff] %v9385
        %9404 = vst [vmem:[%s163 + $0x20] sm:$0xff] %v9354
        %9405 = vst [vmem:[%s163 + $0x28] sm:$0xff] %v9386
        %9406 = vst [vmem:[%s163 + $0x30] sm:$0xff] %v9355
        %9407 = vst [vmem:[%s163 + $0x38] sm:$0xff] %v9387
        %s9408 = sand.u32 %s93, 1
        %s9409 = scalar_lea.sflag [#allocation6], %s9408
        %s9410 = sand.u32 %s93, 1
        %s9411 = smul.addr %s9410, 64
        %s9412 = scalar_lea.vmem [#allocation5], %s9411
        // Predicated region
        $region33: #{tpu_custom_call.1} parent=31 // pred_check
          %p9413 = pneg %p103
        $region34: #{tpu_custom_call.1} parent=31 // pred_check_branch
          %9415 = sbr.rel (%p9413) target = $region36
        $region35: #{tpu_custom_call.1} parent=31 // pred_region
          %s9417 = ssub.s32 1024, 1024
          %9418 = vsyncadd %s9409, %s9417
          %s9419 = smul.addr %s17, 8
          %s9420 = smul.addr %s9419, 128
          %s9421 = scalar_lea.hbm %s3, %s9420
          %s9422 = sshll.u32 %s9412, 4
          %s9423 = int_to_ptr.vmem [resolvable:$true] %s9422
          %9428 = dma.vmem_to_hbm [thread:$0]  %s9423, 1024, %s9421, %s9409, 256, 256, 16
        $region36: #{tpu_custom_call.1} parent=31 // pred_fallthru
          _
      $region32: #{tpu_custom_call.1} parent=5 // pred_fallthru
        _
      %p9429 = scmp.le.s32.totalorder 2, %s12
      // Predicated region
      $region37: #{tpu_custom_call.1} parent=5 // pred_check
        %p9430 = pneg %p9429
      $region38: #{tpu_custom_call.1} parent=5 // pred_check_branch
        %9432 = sbr.rel (%p9430) target = $region40
      $region39: #{tpu_custom_call.1} parent=5 // pred_region
        %s9433 = ssub.s32 %s12, 2
        // Predicated region
        $region41: #{tpu_custom_call.1} parent=39 // pred_check
          %p9434 = pneg %p109
        $region42: #{tpu_custom_call.1} parent=39 // pred_check_branch
          %9436 = sbr.rel (%p9434) target = $region44
        $region43: #{tpu_custom_call.1} parent=39 // pred_region
          %s9437 = sand.u32 %s94, 1
          %s9438 = scalar_lea.sflag [#allocation6], %s9437
          %s9439 = sand.u32 %s94, 1
          %s9440 = smul.addr %s9439, 64
          %s9441 = scalar_lea.vmem [#allocation5], %s9440
          %9442 = dma.done %s9438, 1024
        $region44: #{tpu_custom_call.1} parent=39 // pred_fallthru
          _
      $region40: #{tpu_custom_call.1} parent=5 // pred_fallthru
        _
    $region6: #{tpu_custom_call.1} parent=1 // loop_footer
      %s16 = sadd.s32 1, %s12
    $region7: #{tpu_custom_call.1} parent=1 // loop_footer_branch
      %11 = sbr.rel target = $region3
    $region8: #{tpu_custom_call.1} parent=1 // loop_exit
      _
    %9443 = vsyncpa [#allocation6], 1
    %s9444 = scalar_lea.sflag [#allocation6], 1
    %9445 = vsyncpa %s9444, 1

</llo_original>
